<compile_context>
chip_gen: v5e
topology: v5e:2x2
jax: 0.10.0
libtpu: 0.0.40
codegen_flags: <defaults>
</compile_context>

<pallas_src>
import math

import numpy as np
import jax
import jax.numpy as jnp
from jax.experimental import pallas as pl
from jax.experimental.pallas import tpu as pltpu


def _round_up(x, m):
    return ((x + m - 1) // m) * m


# ----------------------------------------------------------------------------
# Static geometry + constant operands (0/1 upsample matrices, valid masks).
# Canvas 1: pad1(up2(x))           -> (2H+2) x (2W+2)   (18x18 for 8x8 input)
# Canvas 2/3: shared (4H+4)x(4W+4) -> 36x36; conv2's padded grid sits at
#   rows/cols [1, 4H], conv3's padded grid is the full canvas, so the
#   conv2->conv3 crop+re-pad is a single lane shift (+Wc2+1) and a mask.
# Flat canvases are lane-padded to multiples of 128.
# ----------------------------------------------------------------------------
def _build_static_operands(H, W):
    H1, W1 = 2 * H, 2 * W                 # conv1 output spatial
    Hc1, Wc1 = H1 + 2, W1 + 2             # stage-1 canvas
    L1 = Hc1 * Wc1
    L1p = _round_up(L1, 128)
    H2, W2 = 2 * H1, 2 * W1               # conv2 / conv3 output spatial
    Hc2, Wc2 = H2 + 4, W2 + 4             # shared stage-2/3 canvas
    L2 = Hc2 * Wc2
    L2p = _round_up(L2, 128)

    # U0: flat (H*W) input -> canvas1 = zero-pad1(nearest_up2(x)).
    U0 = np.zeros((H * W, L1p), np.float32)
    for h in range(1, H1 + 1):
        for w in range(1, W1 + 1):
            src = ((h - 1) // 2) * W + ((w - 1) // 2)
            U0[src, h * Wc1 + w] = 1.0

    # U1: canvas1 valid region (conv1 output) -> canvas2 = zero-pad1(up2(y1)).
    U1 = np.zeros((L1p, L2p), np.float32)
    for h in range(1, H2 + 1):
        for w in range(1, W2 + 1):
            src = ((h - 1) // 2 + 1) * Wc1 + ((w - 1) // 2 + 1)
            U1[src, h * Wc2 + w] = 1.0

    def box_mask(Hc, Wc, Lp, lo_h, hi_h, lo_w, hi_w):
        m = np.zeros((Hc, Wc), np.float32)
        m[lo_h:hi_h + 1, lo_w:hi_w + 1] = 1.0
        mp = np.zeros((1, Lp), np.float32)
        mp[0, :Hc * Wc] = m.reshape(-1)
        return mp

    m1 = box_mask(Hc1, Wc1, L1p, 1, H1, 1, W1)            # conv1 valid outputs
    m2 = box_mask(Hc2, Wc2, L2p, 1, H2, 1, W2)            # conv2 valid outputs
    m3 = box_mask(Hc2, Wc2, L2p, 2, H2 + 1, 2, W2 + 1)    # conv3 padded input

    # Flat lane offsets of the conv taps on their canvases.
    d1 = tuple((kh - 1) * Wc1 + (kw - 1) for kh in range(3) for kw in range(3))
    d2 = tuple((kh - 1) * Wc2 + (kw - 1) for kh in range(3) for kw in range(3))
    d3 = tuple((kh - 2) * Wc2 + (kw - 2) for kh in range(5) for kw in range(5))
    shift23 = Wc2 + 1                                     # canvas2 -> canvas3

    # Static safety (review concern): every tap read of a VALID output position
    # must stay inside the unpadded flat canvas, so roll wrap-around can only
    # ever land in masked / cropped / dead lanes.
    q1_min, q1_max = Wc1 + 1, H1 * Wc1 + W1
    assert q1_min + min(d1) >= 0 and q1_max + max(d1) < L1
    q2_min, q2_max = Wc2 + 1, H2 * Wc2 + W2
    assert q2_min + min(d2) >= 0 and q2_max + max(d2) < L2
    q3_min, q3_max = 2 * Wc2 + 2, (H2 + 1) * Wc2 + W2 + 1
    assert q3_min + min(d3) >= 0 and q3_max + max(d3) < L2
    assert q3_min - shift23 >= 0 and q3_max - shift23 < L2
    assert (H2 + 2) * Wc2 <= L2          # in-kernel contiguous row crop fits

    geom = dict(H1=H1, W1=W1, L1p=L1p,
                H2=H2, W2=W2, Wc2=Wc2, L2p=L2p,
                d1=d1, d2=d2, d3=d3, shift23=shift23)
    # U0/U1 hold only 0/1 -> exact in bf16; halves the dominant constant DMA.
    return (geom,
            jnp.asarray(U0, jnp.bfloat16), jnp.asarray(U1, jnp.bfloat16),
            jnp.asarray(m1), jnp.asarray(m2), jnp.asarray(m3))


# ----------------------------------------------------------------------------
# Fused decoder kernel: one grid step == one batch sample, all intermediates in
# VMEM/vregs, pixels-on-lanes (C, Npix) layout throughout.
# ----------------------------------------------------------------------------
def _make_decoder_kernel(geom, C0, C1, C2, C3, eps=1e-5):
    L1p, L2p = geom["L1p"], geom["L2p"]
    d1, d2, d3 = geom["d1"], geom["d2"], geom["d3"]
    shift23 = geom["shift23"]
    Wc2, H2 = geom["Wc2"], geom["H2"]
    n1 = float(C1 * geom["H1"] * geom["W1"])      # LN1 element count (valid px)
    n2 = float(C2 * geom["H2"] * geom["W2"])      # LN2 element count
    crop = 2 * Wc2                                # first valid conv3 output row
    Lout = H2 * Wc2                               # contiguous valid-row lanes
    f32 = jnp.float32

    def im2col(x, cin, shifts, L, stk_ref):
        # stk_ref[t*cin:(t+1)*cin, q] = x[:, q + d_t]  (mod L; wrap only ever
        # lands in masked border / dead lanes -- see static asserts).
        for t, d in enumerate(shifts):
            s = (-d) % L
            stk_ref[t * cin:(t + 1) * cin, :] = (
                pltpu.roll(x, shift=s, axis=1) if s else x)

    def ln_relu(a, mask, n, gamma, beta):
        # MUNIT-style LayerNorm: per-sample stats over the whole (C,H,W)
        # tensor, unbiased variance, eps added to the std, per-channel affine.
        # One-pass masked moments -> mean/var reductions are independent; the
        # normalization is a broadcast multiply by a precomputed scalar.
        am = a * mask
        s1 = jnp.sum(am)
        s2 = jnp.sum(am * a)
        mean = s1 / n
        var = jnp.maximum((s2 - s1 * mean) / (n - 1.0), 0.0)
        inv = 1.0 / (jnp.sqrt(var) + eps)
        return jnp.maximum((a - mean) * inv * gamma + beta, 0.0)

    def kernel(x_ref, u0_ref, w1_ref, b1_ref, g1_ref, be1_ref, m1_ref,
               u1_ref, w2_ref, b2_ref, g2_ref, be2_ref, m2_ref, m3_ref,
               w3_ref, b3_ref, o_ref, stk1, stk2, stk3):
        x0 = x_ref[0]                                               # (C0, H*W)

        # stage 1: up2x + zero-pad folded into a 0/1 selection matmul,
        # then 3x3 conv as im2col-on-input + ONE matmul.
        x1 = jnp.dot(x0, u0_ref[...].astype(f32),
                     preferred_element_type=f32)                    # (C0, L1p)
        im2col(x1, C0, d1, L1p, stk1)                               # (9C0, L1p)
        a1 = jnp.dot(w1_ref[...], stk1[...],
                     preferred_element_type=f32) + b1_ref[...]      # (C1, L1p)
        y1 = ln_relu(a1, m1_ref[...], n1, g1_ref[...], be1_ref[...])

        # stage 2: crop + up2x + zero-pad folded into the U1 selection matmul,
        # then 3x3 conv as im2col + ONE matmul.
        x2 = jnp.dot(y1, u1_ref[...].astype(f32),
                     preferred_element_type=f32)                    # (C1, L2p)
        im2col(x2, C1, d2, L2p, stk2)                               # (9C1, L2p)
        a2 = jnp.dot(w2_ref[...], stk2[...],
                     preferred_element_type=f32) + b2_ref[...]      # (C2, L2p)
        y2 = ln_relu(a2, m2_ref[...], n2, g2_ref[...], be2_ref[...])

        # stage 3 (norm='none', tanh): canvas2 valid -> canvas3 pad-2 placement
        # is a single lane shift + mask, then 5x5 conv as im2col + ONE matmul.
        x3 = m3_ref[...] * pltpu.roll(y2, shift=shift23, axis=1)    # (C2, L2p)
        im2col(x3, C2, d3, L2p, stk3)                               # (25C2,L2p)
        a3 = jnp.dot(w3_ref[...], stk3[...],
                     preferred_element_type=f32) + b3_ref[...]      # (C3, L2p)
        out = jnp.tanh(a3)

        # In-kernel row crop: valid rows [2, H2+2) are the contiguous lane
        # range [2*Wc2, (H2+2)*Wc2); rotate them to lane 0 so the HBM store is
        # a dense, 128-aligned slab (Lout = H2*Wc2 is a multiple of 128).
        out = pltpu.roll(out, shift=(L2p - crop) % L2p, axis=1)
        o_ref[0] = out[:, :Lout]

    return kernel


# ----------------------------------------------------------------------------
# Public forward (NCHW in / NCHW out, matching the PyTorch module).
# ----------------------------------------------------------------------------
def cnn_decoder_forward(x_nchw, params):
    N, C0, H, W = x_nchw.shape
    w1, b1, g1, be1 = params["w1"], params["b1"], params["g1"], params["beta1"]
    w2, b2, g2, be2 = params["w2"], params["b2"], params["g2"], params["beta2"]
    w3, b3 = params["w3"], params["b3"]
    C1, C2, C3 = w1.shape[-1], w2.shape[-1], w3.shape[-1]

    geom, U0, U1, m1, m2, m3 = _build_static_operands(H, W)
    L1p, L2p = geom["L1p"], geom["L2p"]
    H2, W2, Wc2 = geom["H2"], geom["W2"], geom["Wc2"]

    # im2col weight layout: row = cout, column = tap*Cin + cin (tap kh-major),
    # matching the stacking order written by im2col() in the kernel.
    w1s = jnp.transpose(w1, (3, 0, 1, 2)).reshape(C1, 9 * C0)
    w2s = jnp.transpose(w2, (3, 0, 1, 2)).reshape(C2, 9 * C1)
    w3s = jnp.transpose(w3, (3, 0, 1, 2)).reshape(C3, 25 * C2)

    x0 = x_nchw.reshape(N, C0, H * W)     # pixels-on-lanes, NCHW-native

    kernel = _make_decoder_kernel(geom, C0, C1, C2, C3)

    const = lambda n: (0, 0)              # constants: fetched once, reused
    per_n = lambda n: (n, 0, 0)

    out = pl.pallas_call(
        kernel,
        out_shape=jax.ShapeDtypeStruct((N, C3, H2 * Wc2), jnp.float32),
        grid=(N,),
        in_specs=[
            pl.BlockSpec((1, C0, H * W), per_n),
            pl.BlockSpec(U0.shape, const),
            pl.BlockSpec(w1s.shape, const),
            pl.BlockSpec((C1, 1), const),
            pl.BlockSpec((C1, 1), const),
            pl.BlockSpec((C1, 1), const),
            pl.BlockSpec((1, L1p), const),
            pl.BlockSpec(U1.shape, const),
            pl.BlockSpec(w2s.shape, const),
            pl.BlockSpec((C2, 1), const),
            pl.BlockSpec((C2, 1), const),
            pl.BlockSpec((C2, 1), const),
            pl.BlockSpec((1, L2p), const),
            pl.BlockSpec((1, L2p), const),
            pl.BlockSpec(w3s.shape, const),
            pl.BlockSpec((C3, 1), const),
        ],
        out_specs=pl.BlockSpec((1, C3, H2 * Wc2), per_n),
        scratch_shapes=[
            pltpu.VMEM((9 * C0, L1p), jnp.float32),    # im2col stack, stage 1
            pltpu.VMEM((9 * C1, L2p), jnp.float32),    # im2col stack, stage 2
            pltpu.VMEM((25 * C2, L2p), jnp.float32),   # im2col stack, stage 3
        ],
        compiler_params=pltpu.CompilerParams(
            dimension_semantics=("parallel",)),
    )(
        x0, U0, w1s,
        b1.reshape(C1, 1), g1.reshape(C1, 1), be1.reshape(C1, 1), m1,
        U1, w2s,
        b2.reshape(C2, 1), g2.reshape(C2, 1), be2.reshape(C2, 1), m2, m3,
        w3s, b3.reshape(C3, 1),
    )

    # Only the cheap per-row column crop remains outside the kernel.
    out = out.reshape(N, C3, H2, Wc2)[:, :, :, 2:2 + W2]
    return out


# ----------------------------------------------------------------------------
# Parameter initialization (deterministic, PyTorch-default-like).
# ----------------------------------------------------------------------------
def _init_conv(key, cin, cout, k):
    kw_key, kb_key = jax.random.split(key)
    fan_in = cin * k * k
    bound = 1.0 / math.sqrt(fan_in)
    w = jax.random.uniform(kw_key, (k, k, cin, cout), jnp.float32, -bound, bound)
    b = jax.random.uniform(kb_key, (cout,), jnp.float32, -bound, bound)
    return w, b


def init_cnn_decoder_params(key, input_dim, output_dim):
    dim = input_dim
    k1, k2, k3, kg1, kg2 = jax.random.split(key, 5)
    params = {}
    # conv1: Upsample + Conv2dBlock(dim -> dim//2, 3, 1, 1, norm='ln', relu)
    params["w1"], params["b1"] = _init_conv(k1, dim, dim // 2, 3)
    params["g1"] = jax.random.uniform(kg1, (dim // 2,), jnp.float32)   # LN gamma ~ U[0,1)
    params["beta1"] = jnp.zeros((dim // 2,), jnp.float32)
    dim //= 2
    # conv2: Upsample + Conv2dBlock(dim -> dim//2, 3, 1, 1, norm='ln', relu)
    params["w2"], params["b2"] = _init_conv(k2, dim, dim // 2, 3)
    params["g2"] = jax.random.uniform(kg2, (dim // 2,), jnp.float32)
    params["beta2"] = jnp.zeros((dim // 2,), jnp.float32)
    # conv3: Conv2dBlock(dim//2 -> output_dim, 5, 1, 2, norm='none', tanh)
    params["w3"], params["b3"] = _init_conv(k3, dim // 2, output_dim, 5)
    return params


if __name__ == "__main__":
    key = jax.random.PRNGKey(0)
    k_in, k_par = jax.random.split(key)

    # Small shapes: batch=2, input_dim=16, spatial 8x8, output_dim=3.
    N, input_dim, H, W = 2, 16, 8, 8
    output_dim = 3

    x = jax.random.normal(k_in, (N, input_dim, H, W), jnp.float32)
    params = init_cnn_decoder_params(k_par, input_dim, output_dim)

    out = jax.jit(cnn_decoder_forward)(x, params)
    jax.block_until_ready(out)

    assert out.shape == (N, output_dim, 4 * H, 4 * W), out.shape
    assert bool(jnp.all(jnp.isfinite(out)))
    assert bool(jnp.all(jnp.abs(out) <= 1.0))   # tanh output range
    print("KERNEL_OK")
</pallas_src>

<mosaic_0001>
module attributes {stable_mosaic.version = 11 : i64} {
  func.func @kernel(%arg0: i32, %arg1: memref<1x16x64xf32, #tpu.memory_space<vmem>>, %arg2: memref<64x384xbf16, #tpu.memory_space<vmem>>, %arg3: memref<8x144xf32, #tpu.memory_space<vmem>>, %arg4: memref<8x1xf32, #tpu.memory_space<vmem>>, %arg5: memref<8x1xf32, #tpu.memory_space<vmem>>, %arg6: memref<8x1xf32, #tpu.memory_space<vmem>>, %arg7: memref<1x384xf32, #tpu.memory_space<vmem>>, %arg8: memref<384x1408xbf16, #tpu.memory_space<vmem>>, %arg9: memref<4x72xf32, #tpu.memory_space<vmem>>, %arg10: memref<4x1xf32, #tpu.memory_space<vmem>>, %arg11: memref<4x1xf32, #tpu.memory_space<vmem>>, %arg12: memref<4x1xf32, #tpu.memory_space<vmem>>, %arg13: memref<1x1408xf32, #tpu.memory_space<vmem>>, %arg14: memref<1x1408xf32, #tpu.memory_space<vmem>>, %arg15: memref<3x100xf32, #tpu.memory_space<vmem>>, %arg16: memref<3x1xf32, #tpu.memory_space<vmem>>, %arg17: memref<1x3x1152xf32, #tpu.memory_space<vmem>>, %arg18: memref<144x384xf32, #tpu.memory_space<vmem>>, %arg19: memref<72x1408xf32, #tpu.memory_space<vmem>>, %arg20: memref<100x1408xf32, #tpu.memory_space<vmem>>) attributes {dimension_semantics = [#tpu.dimension_semantics<parallel>], iteration_bounds = array<i64: 2>, scalar_prefetch = 0 : i64, scratch_operands = 3 : i64, tpu.core_type = #tpu.core_type<tc>, window_params = [{transform_indices = @transform_0, window_bounds = array<i64: 1, 16, 64>}, {pipeline_mode = #tpu.pipeline_mode<synchronous>, transform_indices = @transform_1, window_bounds = array<i64: 64, 384>}, {pipeline_mode = #tpu.pipeline_mode<synchronous>, transform_indices = @transform_2, window_bounds = array<i64: 8, 144>}, {pipeline_mode = #tpu.pipeline_mode<synchronous>, transform_indices = @transform_3, window_bounds = array<i64: 8, 1>}, {pipeline_mode = #tpu.pipeline_mode<synchronous>, transform_indices = @transform_4, window_bounds = array<i64: 8, 1>}, {pipeline_mode = #tpu.pipeline_mode<synchronous>, transform_indices = @transform_5, window_bounds = array<i64: 8, 1>}, {pipeline_mode = #tpu.pipeline_mode<synchronous>, transform_indices = @transform_6, window_bounds = array<i64: 1, 384>}, {pipeline_mode = #tpu.pipeline_mode<synchronous>, transform_indices = @transform_7, window_bounds = array<i64: 384, 1408>}, {pipeline_mode = #tpu.pipeline_mode<synchronous>, transform_indices = @transform_8, window_bounds = array<i64: 4, 72>}, {pipeline_mode = #tpu.pipeline_mode<synchronous>, transform_indices = @transform_9, window_bounds = array<i64: 4, 1>}, {pipeline_mode = #tpu.pipeline_mode<synchronous>, transform_indices = @transform_10, window_bounds = array<i64: 4, 1>}, {pipeline_mode = #tpu.pipeline_mode<synchronous>, transform_indices = @transform_11, window_bounds = array<i64: 4, 1>}, {pipeline_mode = #tpu.pipeline_mode<synchronous>, transform_indices = @transform_12, window_bounds = array<i64: 1, 1408>}, {pipeline_mode = #tpu.pipeline_mode<synchronous>, transform_indices = @transform_13, window_bounds = array<i64: 1, 1408>}, {pipeline_mode = #tpu.pipeline_mode<synchronous>, transform_indices = @transform_14, window_bounds = array<i64: 3, 100>}, {pipeline_mode = #tpu.pipeline_mode<synchronous>, transform_indices = @transform_15, window_bounds = array<i64: 3, 1>}, {transform_indices = @transform_16, window_bounds = array<i64: 1, 3, 1152>}]} {
    %c0 = arith.constant 0 : index
    %c0_0 = arith.constant 0 : index
    %c0_1 = arith.constant 0 : index
    %0 = vector.load %arg1[%c0, %c0_0, %c0_1] : memref<1x16x64xf32, #tpu.memory_space<vmem>>, vector<1x16x64xf32>
    %1 = vector.shape_cast %0 : vector<1x16x64xf32> to vector<16x64xf32>
    %c0_2 = arith.constant 0 : index
    %c0_3 = arith.constant 0 : index
    %2 = vector.load %arg2[%c0_2, %c0_3] : memref<64x384xbf16, #tpu.memory_space<vmem>>, vector<64x384xbf16>
    %3 = arith.extf %2 : vector<64x384xbf16> to vector<64x384xf32>
    %cst = arith.constant dense<0.000000e+00> : vector<16x384xf32>
    %4 = tpu.matmul %1, %3, %cst {dimension_numbers = #tpu.dot_dimension_numbers<[1], [0], [0], [1], [0, 0, 1, 1], [], []>} : vector<16x64xf32>, vector<64x384xf32>, vector<16x384xf32> -> vector<16x384xf32>
    %c19_i32 = arith.constant 19 : i32
    %5 = tpu.dynamic_rotate %4 by %c19_i32 dim 1 : vector<16x384xf32>, i32 -> vector<16x384xf32>
    %c0_4 = arith.constant 0 : index
    %c0_5 = arith.constant 0 : index
    %6 = vector.load %arg18[%c0_4, %c0_5] : memref<144x384xf32, #tpu.memory_space<vmem>>, vector<16x384xf32>
    tpu.vector_store %arg18[%c0_4, %c0_5], %5 {strides = array<i32>} : memref<144x384xf32, #tpu.memory_space<vmem>>, vector<16x384xf32>,
    %c18_i32 = arith.constant 18 : i32
    %7 = tpu.dynamic_rotate %4 by %c18_i32 dim 1 : vector<16x384xf32>, i32 -> vector<16x384xf32>
    %c16 = arith.constant 16 : index
    %c0_6 = arith.constant 0 : index
    %8 = vector.load %arg18[%c16, %c0_6] : memref<144x384xf32, #tpu.memory_space<vmem>>, vector<16x384xf32>
    tpu.vector_store %arg18[%c16, %c0_6], %7 {strides = array<i32>} : memref<144x384xf32, #tpu.memory_space<vmem>>, vector<16x384xf32>,
    %c17_i32 = arith.constant 17 : i32
    %9 = tpu.dynamic_rotate %4 by %c17_i32 dim 1 : vector<16x384xf32>, i32 -> vector<16x384xf32>
    %c32 = arith.constant 32 : index
    %c0_7 = arith.constant 0 : index
    %10 = vector.load %arg18[%c32, %c0_7] : memref<144x384xf32, #tpu.memory_space<vmem>>, vector<16x384xf32>
    tpu.vector_store %arg18[%c32, %c0_7], %9 {strides = array<i32>} : memref<144x384xf32, #tpu.memory_space<vmem>>, vector<16x384xf32>,
    %c1_i32 = arith.constant 1 : i32
    %11 = tpu.dynamic_rotate %4 by %c1_i32 dim 1 : vector<16x384xf32>, i32 -> vector<16x384xf32>
    %c48 = arith.constant 48 : index
    %c0_8 = arith.constant 0 : index
    %12 = vector.load %arg18[%c48, %c0_8] : memref<144x384xf32, #tpu.memory_space<vmem>>, vector<16x384xf32>
    tpu.vector_store %arg18[%c48, %c0_8], %11 {strides = array<i32>} : memref<144x384xf32, #tpu.memory_space<vmem>>, vector<16x384xf32>,
    %c64 = arith.constant 64 : index
    %c0_9 = arith.constant 0 : index
    %13 = vector.load %arg18[%c64, %c0_9] : memref<144x384xf32, #tpu.memory_space<vmem>>, vector<16x384xf32>
    tpu.vector_store %arg18[%c64, %c0_9], %4 {strides = array<i32>} : memref<144x384xf32, #tpu.memory_space<vmem>>, vector<16x384xf32>,
    %c383_i32 = arith.constant 383 : i32
    %14 = tpu.dynamic_rotate %4 by %c383_i32 dim 1 : vector<16x384xf32>, i32 -> vector<16x384xf32>
    %c80 = arith.constant 80 : index
    %c0_10 = arith.constant 0 : index
    %15 = vector.load %arg18[%c80, %c0_10] : memref<144x384xf32, #tpu.memory_space<vmem>>, vector<16x384xf32>
    tpu.vector_store %arg18[%c80, %c0_10], %14 {strides = array<i32>} : memref<144x384xf32, #tpu.memory_space<vmem>>, vector<16x384xf32>,
    %c367_i32 = arith.constant 367 : i32
    %16 = tpu.dynamic_rotate %4 by %c367_i32 dim 1 : vector<16x384xf32>, i32 -> vector<16x384xf32>
    %c96 = arith.constant 96 : index
    %c0_11 = arith.constant 0 : index
    %17 = vector.load %arg18[%c96, %c0_11] : memref<144x384xf32, #tpu.memory_space<vmem>>, vector<16x384xf32>
    tpu.vector_store %arg18[%c96, %c0_11], %16 {strides = array<i32>} : memref<144x384xf32, #tpu.memory_space<vmem>>, vector<16x384xf32>,
    %c366_i32 = arith.constant 366 : i32
    %18 = tpu.dynamic_rotate %4 by %c366_i32 dim 1 : vector<16x384xf32>, i32 -> vector<16x384xf32>
    %c112 = arith.constant 112 : index
    %c0_12 = arith.constant 0 : index
    %19 = vector.load %arg18[%c112, %c0_12] : memref<144x384xf32, #tpu.memory_space<vmem>>, vector<16x384xf32>
    tpu.vector_store %arg18[%c112, %c0_12], %18 {strides = array<i32>} : memref<144x384xf32, #tpu.memory_space<vmem>>, vector<16x384xf32>,
    %c365_i32 = arith.constant 365 : i32
    %20 = tpu.dynamic_rotate %4 by %c365_i32 dim 1 : vector<16x384xf32>, i32 -> vector<16x384xf32>
    %c128 = arith.constant 128 : index
    %c0_13 = arith.constant 0 : index
    %21 = vector.load %arg18[%c128, %c0_13] : memref<144x384xf32, #tpu.memory_space<vmem>>, vector<16x384xf32>
    tpu.vector_store %arg18[%c128, %c0_13], %20 {strides = array<i32>} : memref<144x384xf32, #tpu.memory_space<vmem>>, vector<16x384xf32>,
    %c0_14 = arith.constant 0 : index
    %c0_15 = arith.constant 0 : index
    %22 = vector.load %arg3[%c0_14, %c0_15] : memref<8x144xf32, #tpu.memory_space<vmem>>, vector<8x144xf32>
    %c0_16 = arith.constant 0 : index
    %c0_17 = arith.constant 0 : index
    %23 = vector.load %arg18[%c0_16, %c0_17] : memref<144x384xf32, #tpu.memory_space<vmem>>, vector<144x384xf32>
    %cst_18 = arith.constant dense<0.000000e+00> : vector<8x384xf32>
    %24 = tpu.matmul %22, %23, %cst_18 {dimension_numbers = #tpu.dot_dimension_numbers<[1], [0], [0], [1], [0, 0, 1, 1], [], []>} : vector<8x144xf32>, vector<144x384xf32>, vector<8x384xf32> -> vector<8x384xf32>
    %c0_19 = arith.constant 0 : index
    %c0_20 = arith.constant 0 : index
    %25 = vector.load %arg4[%c0_19, %c0_20] : memref<8x1xf32, #tpu.memory_space<vmem>>, vector<8x1xf32>
    %26 = vector.broadcast %25 : vector<8x1xf32> to vector<8x384xf32>
    %27 = arith.addf %24, %26 : vector<8x384xf32>
    %c0_21 = arith.constant 0 : index
    %c0_22 = arith.constant 0 : index
    %28 = vector.load %arg7[%c0_21, %c0_22] : memref<1x384xf32, #tpu.memory_space<vmem>>, vector<1x384xf32>
    %c0_23 = arith.constant 0 : index
    %c0_24 = arith.constant 0 : index
    %29 = vector.load %arg5[%c0_23, %c0_24] : memref<8x1xf32, #tpu.memory_space<vmem>>, vector<8x1xf32>
    %c0_25 = arith.constant 0 : index
    %c0_26 = arith.constant 0 : index
    %30 = vector.load %arg6[%c0_25, %c0_26] : memref<8x1xf32, #tpu.memory_space<vmem>>, vector<8x1xf32>
    %31 = vector.broadcast %28 : vector<1x384xf32> to vector<8x384xf32>
    %32 = arith.mulf %27, %31 : vector<8x384xf32>
    %33 = vector.shape_cast %32 : vector<8x384xf32> to vector<1x8x384xf32>
    %cst_27 = arith.constant dense<0.000000e+00> : vector<1xf32>
    %34 = vector.multi_reduction <add>, %33, %cst_27 [1, 2] : vector<1x8x384xf32> to vector<1xf32>
    %35 = vector.shape_cast %34 : vector<1xf32> to vector<1x1x1xf32>
    %36 = vector.extract %35[0, 0, 0] : f32 from vector<1x1x1xf32>
    %37 = arith.mulf %32, %27 : vector<8x384xf32>
    %38 = vector.shape_cast %37 : vector<8x384xf32> to vector<1x8x384xf32>
    %cst_28 = arith.constant dense<0.000000e+00> : vector<1xf32>
    %39 = vector.multi_reduction <add>, %38, %cst_28 [1, 2] : vector<1x8x384xf32> to vector<1xf32>
    %40 = vector.shape_cast %39 : vector<1xf32> to vector<1x1x1xf32>
    %41 = vector.extract %40[0, 0, 0] : f32 from vector<1x1x1xf32>
    %cst_29 = arith.constant 2.048000e+03 : f32
    %42 = arith.divf %36, %cst_29 : f32
    %43 = arith.mulf %36, %42 : f32
    %44 = arith.subf %41, %43 : f32
    %cst_30 = arith.constant 2.047000e+03 : f32
    %45 = arith.divf %44, %cst_30 : f32
    %cst_31 = arith.constant 0.000000e+00 : f32
    %46 = arith.maximumf %45, %cst_31 : f32
    %47 = math.sqrt %46 : f32
    %cst_32 = arith.constant 9.99999974E-6 : f32
    %48 = arith.addf %47, %cst_32 : f32
    %cst_33 = arith.constant 1.000000e+00 : f32
    %49 = arith.divf %cst_33, %48 : f32
    %50 = vector.broadcast %42 : f32 to vector<8x384xf32>
    %51 = arith.subf %27, %50 : vector<8x384xf32>
    %52 = vector.broadcast %49 : f32 to vector<8x384xf32>
    %53 = arith.mulf %51, %52 : vector<8x384xf32>
    %54 = vector.broadcast %29 : vector<8x1xf32> to vector<8x384xf32>
    %55 = arith.mulf %53, %54 : vector<8x384xf32>
    %56 = vector.broadcast %30 : vector<8x1xf32> to vector<8x384xf32>
    %57 = arith.addf %55, %56 : vector<8x384xf32>
    %cst_34 = arith.constant 0.000000e+00 : f32
    %58 = vector.broadcast %cst_34 : f32 to vector<8x384xf32>
    %59 = arith.maximumf %57, %58 : vector<8x384xf32>
    %c0_35 = arith.constant 0 : index
    %c0_36 = arith.constant 0 : index
    %60 = vector.load %arg8[%c0_35, %c0_36] : memref<384x1408xbf16, #tpu.memory_space<vmem>>, vector<384x1408xbf16>
    %61 = arith.extf %60 : vector<384x1408xbf16> to vector<384x1408xf32>
    %cst_37 = arith.constant dense<0.000000e+00> : vector<8x1408xf32>
    %62 = tpu.matmul %59, %61, %cst_37 {dimension_numbers = #tpu.dot_dimension_numbers<[1], [0], [0], [1], [0, 0, 1, 1], [], []>} : vector<8x384xf32>, vector<384x1408xf32>, vector<8x1408xf32> -> vector<8x1408xf32>
    %c37_i32 = arith.constant 37 : i32
    %63 = tpu.dynamic_rotate %62 by %c37_i32 dim 1 : vector<8x1408xf32>, i32 -> vector<8x1408xf32>
    %c0_38 = arith.constant 0 : index
    %c0_39 = arith.constant 0 : index
    %64 = vector.load %arg19[%c0_38, %c0_39] : memref<72x1408xf32, #tpu.memory_space<vmem>>, vector<8x1408xf32>
    tpu.vector_store %arg19[%c0_38, %c0_39], %63 {strides = array<i32>} : memref<72x1408xf32, #tpu.memory_space<vmem>>, vector<8x1408xf32>,
    %c36_i32 = arith.constant 36 : i32
    %65 = tpu.dynamic_rotate %62 by %c36_i32 dim 1 : vector<8x1408xf32>, i32 -> vector<8x1408xf32>
    %c8 = arith.constant 8 : index
    %c0_40 = arith.constant 0 : index
    %66 = vector.load %arg19[%c8, %c0_40] : memref<72x1408xf32, #tpu.memory_space<vmem>>, vector<8x1408xf32>
    tpu.vector_store %arg19[%c8, %c0_40], %65 {strides = array<i32>} : memref<72x1408xf32, #tpu.memory_space<vmem>>, vector<8x1408xf32>,
    %c35_i32 = arith.constant 35 : i32
    %67 = tpu.dynamic_rotate %62 by %c35_i32 dim 1 : vector<8x1408xf32>, i32 -> vector<8x1408xf32>
    %c16_41 = arith.constant 16 : index
    %c0_42 = arith.constant 0 : index
    %68 = vector.load %arg19[%c16_41, %c0_42] : memref<72x1408xf32, #tpu.memory_space<vmem>>, vector<8x1408xf32>
    tpu.vector_store %arg19[%c16_41, %c0_42], %67 {strides = array<i32>} : memref<72x1408xf32, #tpu.memory_space<vmem>>, vector<8x1408xf32>,
    %c1_i32_43 = arith.constant 1 : i32
    %69 = tpu.dynamic_rotate %62 by %c1_i32_43 dim 1 : vector<8x1408xf32>, i32 -> vector<8x1408xf32>
    %c24 = arith.constant 24 : index
    %c0_44 = arith.constant 0 : index
    %70 = vector.load %arg19[%c24, %c0_44] : memref<72x1408xf32, #tpu.memory_space<vmem>>, vector<8x1408xf32>
    tpu.vector_store %arg19[%c24, %c0_44], %69 {strides = array<i32>} : memref<72x1408xf32, #tpu.memory_space<vmem>>, vector<8x1408xf32>,
    %c32_45 = arith.constant 32 : index
    %c0_46 = arith.constant 0 : index
    %71 = vector.load %arg19[%c32_45, %c0_46] : memref<72x1408xf32, #tpu.memory_space<vmem>>, vector<8x1408xf32>
    tpu.vector_store %arg19[%c32_45, %c0_46], %62 {strides = array<i32>} : memref<72x1408xf32, #tpu.memory_space<vmem>>, vector<8x1408xf32>,
    %c1407_i32 = arith.constant 1407 : i32
    %72 = tpu.dynamic_rotate %62 by %c1407_i32 dim 1 : vector<8x1408xf32>, i32 -> vector<8x1408xf32>
    %c40 = arith.constant 40 : index
    %c0_47 = arith.constant 0 : index
    %73 = vector.load %arg19[%c40, %c0_47] : memref<72x1408xf32, #tpu.memory_space<vmem>>, vector<8x1408xf32>
    tpu.vector_store %arg19[%c40, %c0_47], %72 {strides = array<i32>} : memref<72x1408xf32, #tpu.memory_space<vmem>>, vector<8x1408xf32>,
    %c1373_i32 = arith.constant 1373 : i32
    %74 = tpu.dynamic_rotate %62 by %c1373_i32 dim 1 : vector<8x1408xf32>, i32 -> vector<8x1408xf32>
    %c48_48 = arith.constant 48 : index
    %c0_49 = arith.constant 0 : index
    %75 = vector.load %arg19[%c48_48, %c0_49] : memref<72x1408xf32, #tpu.memory_space<vmem>>, vector<8x1408xf32>
    tpu.vector_store %arg19[%c48_48, %c0_49], %74 {strides = array<i32>} : memref<72x1408xf32, #tpu.memory_space<vmem>>, vector<8x1408xf32>,
    %c1372_i32 = arith.constant 1372 : i32
    %76 = tpu.dynamic_rotate %62 by %c1372_i32 dim 1 : vector<8x1408xf32>, i32 -> vector<8x1408xf32>
    %c56 = arith.constant 56 : index
    %c0_50 = arith.constant 0 : index
    %77 = vector.load %arg19[%c56, %c0_50] : memref<72x1408xf32, #tpu.memory_space<vmem>>, vector<8x1408xf32>
    tpu.vector_store %arg19[%c56, %c0_50], %76 {strides = array<i32>} : memref<72x1408xf32, #tpu.memory_space<vmem>>, vector<8x1408xf32>,
    %c1371_i32 = arith.constant 1371 : i32
    %78 = tpu.dynamic_rotate %62 by %c1371_i32 dim 1 : vector<8x1408xf32>, i32 -> vector<8x1408xf32>
    %c64_51 = arith.constant 64 : index
    %c0_52 = arith.constant 0 : index
    %79 = vector.load %arg19[%c64_51, %c0_52] : memref<72x1408xf32, #tpu.memory_space<vmem>>, vector<8x1408xf32>
    tpu.vector_store %arg19[%c64_51, %c0_52], %78 {strides = array<i32>} : memref<72x1408xf32, #tpu.memory_space<vmem>>, vector<8x1408xf32>,
    %c0_53 = arith.constant 0 : index
    %c0_54 = arith.constant 0 : index
    %80 = vector.load %arg9[%c0_53, %c0_54] : memref<4x72xf32, #tpu.memory_space<vmem>>, vector<4x72xf32>
    %c0_55 = arith.constant 0 : index
    %c0_56 = arith.constant 0 : index
    %81 = vector.load %arg19[%c0_55, %c0_56] : memref<72x1408xf32, #tpu.memory_space<vmem>>, vector<72x1408xf32>
    %cst_57 = arith.constant dense<0.000000e+00> : vector<4x1408xf32>
    %82 = tpu.matmul %80, %81, %cst_57 {dimension_numbers = #tpu.dot_dimension_numbers<[1], [0], [0], [1], [0, 0, 1, 1], [], []>} : vector<4x72xf32>, vector<72x1408xf32>, vector<4x1408xf32> -> vector<4x1408xf32>
    %c0_58 = arith.constant 0 : index
    %c0_59 = arith.constant 0 : index
    %83 = vector.load %arg10[%c0_58, %c0_59] : memref<4x1xf32, #tpu.memory_space<vmem>>, vector<4x1xf32>
    %84 = vector.broadcast %83 : vector<4x1xf32> to vector<4x1408xf32>
    %85 = arith.addf %82, %84 : vector<4x1408xf32>
    %c0_60 = arith.constant 0 : index
    %c0_61 = arith.constant 0 : index
    %86 = vector.load %arg13[%c0_60, %c0_61] : memref<1x1408xf32, #tpu.memory_space<vmem>>, vector<1x1408xf32>
    %c0_62 = arith.constant 0 : index
    %c0_63 = arith.constant 0 : index
    %87 = vector.load %arg11[%c0_62, %c0_63] : memref<4x1xf32, #tpu.memory_space<vmem>>, vector<4x1xf32>
    %c0_64 = arith.constant 0 : index
    %c0_65 = arith.constant 0 : index
    %88 = vector.load %arg12[%c0_64, %c0_65] : memref<4x1xf32, #tpu.memory_space<vmem>>, vector<4x1xf32>
    %89 = vector.broadcast %86 : vector<1x1408xf32> to vector<4x1408xf32>
    %90 = arith.mulf %85, %89 : vector<4x1408xf32>
    %91 = vector.shape_cast %90 : vector<4x1408xf32> to vector<1x4x1408xf32>
    %cst_66 = arith.constant dense<0.000000e+00> : vector<1xf32>
    %92 = vector.multi_reduction <add>, %91, %cst_66 [1, 2] : vector<1x4x1408xf32> to vector<1xf32>
    %93 = vector.shape_cast %92 : vector<1xf32> to vector<1x1x1xf32>
    %94 = vector.extract %93[0, 0, 0] : f32 from vector<1x1x1xf32>
    %95 = arith.mulf %90, %85 : vector<4x1408xf32>
    %96 = vector.shape_cast %95 : vector<4x1408xf32> to vector<1x4x1408xf32>
    %cst_67 = arith.constant dense<0.000000e+00> : vector<1xf32>
    %97 = vector.multi_reduction <add>, %96, %cst_67 [1, 2] : vector<1x4x1408xf32> to vector<1xf32>
    %98 = vector.shape_cast %97 : vector<1xf32> to vector<1x1x1xf32>
    %99 = vector.extract %98[0, 0, 0] : f32 from vector<1x1x1xf32>
    %cst_68 = arith.constant 4.096000e+03 : f32
    %100 = arith.divf %94, %cst_68 : f32
    %101 = arith.mulf %94, %100 : f32
    %102 = arith.subf %99, %101 : f32
    %cst_69 = arith.constant 4.095000e+03 : f32
    %103 = arith.divf %102, %cst_69 : f32
    %cst_70 = arith.constant 0.000000e+00 : f32
    %104 = arith.maximumf %103, %cst_70 : f32
    %105 = math.sqrt %104 : f32
    %cst_71 = arith.constant 9.99999974E-6 : f32
    %106 = arith.addf %105, %cst_71 : f32
    %cst_72 = arith.constant 1.000000e+00 : f32
    %107 = arith.divf %cst_72, %106 : f32
    %108 = vector.broadcast %100 : f32 to vector<4x1408xf32>
    %109 = arith.subf %85, %108 : vector<4x1408xf32>
    %110 = vector.broadcast %107 : f32 to vector<4x1408xf32>
    %111 = arith.mulf %109, %110 : vector<4x1408xf32>
    %112 = vector.broadcast %87 : vector<4x1xf32> to vector<4x1408xf32>
    %113 = arith.mulf %111, %112 : vector<4x1408xf32>
    %114 = vector.broadcast %88 : vector<4x1xf32> to vector<4x1408xf32>
    %115 = arith.addf %113, %114 : vector<4x1408xf32>
    %cst_73 = arith.constant 0.000000e+00 : f32
    %116 = vector.broadcast %cst_73 : f32 to vector<4x1408xf32>
    %117 = arith.maximumf %115, %116 : vector<4x1408xf32>
    %c0_74 = arith.constant 0 : index
    %c0_75 = arith.constant 0 : index
    %118 = vector.load %arg14[%c0_74, %c0_75] : memref<1x1408xf32, #tpu.memory_space<vmem>>, vector<1x1408xf32>
    %c37_i32_76 = arith.constant 37 : i32
    %119 = tpu.dynamic_rotate %117 by %c37_i32_76 dim 1 : vector<4x1408xf32>, i32 -> vector<4x1408xf32>
    %120 = vector.broadcast %118 : vector<1x1408xf32> to vector<4x1408xf32>
    %121 = arith.mulf %120, %119 : vector<4x1408xf32>
    %c74_i32 = arith.constant 74 : i32
    %122 = tpu.dynamic_rotate %121 by %c74_i32 dim 1 : vector<4x1408xf32>, i32 -> vector<4x1408xf32>
    %c0_77 = arith.constant 0 : index
    %c0_78 = arith.constant 0 : index
    %123 = vector.load %arg20[%c0_77, %c0_78] : memref<100x1408xf32, #tpu.memory_space<vmem>>, vector<4x1408xf32>
    tpu.vector_store %arg20[%c0_77, %c0_78], %122 {strides = array<i32>} : memref<100x1408xf32, #tpu.memory_space<vmem>>, vector<4x1408xf32>,
    %c73_i32 = arith.constant 73 : i32
    %124 = tpu.dynamic_rotate %121 by %c73_i32 dim 1 : vector<4x1408xf32>, i32 -> vector<4x1408xf32>
    %c4 = arith.constant 4 : index
    %c0_79 = arith.constant 0 : index
    %125 = vector.load %arg20[%c4, %c0_79] : memref<100x1408xf32, #tpu.memory_space<vmem>>, vector<4x1408xf32>
    tpu.vector_store %arg20[%c4, %c0_79], %124 {strides = array<i32>} : memref<100x1408xf32, #tpu.memory_space<vmem>>, vector<4x1408xf32>,
    %c72_i32 = arith.constant 72 : i32
    %126 = tpu.dynamic_rotate %121 by %c72_i32 dim 1 : vector<4x1408xf32>, i32 -> vector<4x1408xf32>
    %c8_80 = arith.constant 8 : index
    %c0_81 = arith.constant 0 : index
    %127 = vector.load %arg20[%c8_80, %c0_81] : memref<100x1408xf32, #tpu.memory_space<vmem>>, vector<4x1408xf32>
    tpu.vector_store %arg20[%c8_80, %c0_81], %126 {strides = array<i32>} : memref<100x1408xf32, #tpu.memory_space<vmem>>, vector<4x1408xf32>,
    %c71_i32 = arith.constant 71 : i32
    %128 = tpu.dynamic_rotate %121 by %c71_i32 dim 1 : vector<4x1408xf32>, i32 -> vector<4x1408xf32>
    %c12 = arith.constant 12 : index
    %c0_82 = arith.constant 0 : index
    %129 = vector.load %arg20[%c12, %c0_82] : memref<100x1408xf32, #tpu.memory_space<vmem>>, vector<4x1408xf32>
    tpu.vector_store %arg20[%c12, %c0_82], %128 {strides = array<i32>} : memref<100x1408xf32, #tpu.memory_space<vmem>>, vector<4x1408xf32>,
    %c70_i32 = arith.constant 70 : i32
    %130 = tpu.dynamic_rotate %121 by %c70_i32 dim 1 : vector<4x1408xf32>, i32 -> vector<4x1408xf32>
    %c16_83 = arith.constant 16 : index
    %c0_84 = arith.constant 0 : index
    %131 = vector.load %arg20[%c16_83, %c0_84] : memref<100x1408xf32, #tpu.memory_space<vmem>>, vector<4x1408xf32>
    tpu.vector_store %arg20[%c16_83, %c0_84], %130 {strides = array<i32>} : memref<100x1408xf32, #tpu.memory_space<vmem>>, vector<4x1408xf32>,
    %c38_i32 = arith.constant 38 : i32
    %132 = tpu.dynamic_rotate %121 by %c38_i32 dim 1 : vector<4x1408xf32>, i32 -> vector<4x1408xf32>
    %c20 = arith.constant 20 : index
    %c0_85 = arith.constant 0 : index
    %133 = vector.load %arg20[%c20, %c0_85] : memref<100x1408xf32, #tpu.memory_space<vmem>>, vector<4x1408xf32>
    tpu.vector_store %arg20[%c20, %c0_85], %132 {strides = array<i32>} : memref<100x1408xf32, #tpu.memory_space<vmem>>, vector<4x1408xf32>,
    %c37_i32_86 = arith.constant 37 : i32
    %134 = tpu.dynamic_rotate %121 by %c37_i32_86 dim 1 : vector<4x1408xf32>, i32 -> vector<4x1408xf32>
    %c24_87 = arith.constant 24 : index
    %c0_88 = arith.constant 0 : index
    %135 = vector.load %arg20[%c24_87, %c0_88] : memref<100x1408xf32, #tpu.memory_space<vmem>>, vector<4x1408xf32>
    tpu.vector_store %arg20[%c24_87, %c0_88], %134 {strides = array<i32>} : memref<100x1408xf32, #tpu.memory_space<vmem>>, vector<4x1408xf32>,
    %c36_i32_89 = arith.constant 36 : i32
    %136 = tpu.dynamic_rotate %121 by %c36_i32_89 dim 1 : vector<4x1408xf32>, i32 -> vector<4x1408xf32>
    %c28 = arith.constant 28 : index
    %c0_90 = arith.constant 0 : index
    %137 = vector.load %arg20[%c28, %c0_90] : memref<100x1408xf32, #tpu.memory_space<vmem>>, vector<4x1408xf32>
    tpu.vector_store %arg20[%c28, %c0_90], %136 {strides = array<i32>} : memref<100x1408xf32, #tpu.memory_space<vmem>>, vector<4x1408xf32>,
    %c35_i32_91 = arith.constant 35 : i32
    %138 = tpu.dynamic_rotate %121 by %c35_i32_91 dim 1 : vector<4x1408xf32>, i32 -> vector<4x1408xf32>
    %c32_92 = arith.constant 32 : index
    %c0_93 = arith.constant 0 : index
    %139 = vector.load %arg20[%c32_92, %c0_93] : memref<100x1408xf32, #tpu.memory_space<vmem>>, vector<4x1408xf32>
    tpu.vector_store %arg20[%c32_92, %c0_93], %138 {strides = array<i32>} : memref<100x1408xf32, #tpu.memory_space<vmem>>, vector<4x1408xf32>,
    %c34_i32 = arith.constant 34 : i32
    %140 = tpu.dynamic_rotate %121 by %c34_i32 dim 1 : vector<4x1408xf32>, i32 -> vector<4x1408xf32>
    %c36 = arith.constant 36 : index
    %c0_94 = arith.constant 0 : index
    %141 = vector.load %arg20[%c36, %c0_94] : memref<100x1408xf32, #tpu.memory_space<vmem>>, vector<4x1408xf32>
    tpu.vector_store %arg20[%c36, %c0_94], %140 {strides = array<i32>} : memref<100x1408xf32, #tpu.memory_space<vmem>>, vector<4x1408xf32>,
    %c2_i32 = arith.constant 2 : i32
    %142 = tpu.dynamic_rotate %121 by %c2_i32 dim 1 : vector<4x1408xf32>, i32 -> vector<4x1408xf32>
    %c40_95 = arith.constant 40 : index
    %c0_96 = arith.constant 0 : index
    %143 = vector.load %arg20[%c40_95, %c0_96] : memref<100x1408xf32, #tpu.memory_space<vmem>>, vector<4x1408xf32>
    tpu.vector_store %arg20[%c40_95, %c0_96], %142 {strides = array<i32>} : memref<100x1408xf32, #tpu.memory_space<vmem>>, vector<4x1408xf32>,
    %c1_i32_97 = arith.constant 1 : i32
    %144 = tpu.dynamic_rotate %121 by %c1_i32_97 dim 1 : vector<4x1408xf32>, i32 -> vector<4x1408xf32>
    %c44 = arith.constant 44 : index
    %c0_98 = arith.constant 0 : index
    %145 = vector.load %arg20[%c44, %c0_98] : memref<100x1408xf32, #tpu.memory_space<vmem>>, vector<4x1408xf32>
    tpu.vector_store %arg20[%c44, %c0_98], %144 {strides = array<i32>} : memref<100x1408xf32, #tpu.memory_space<vmem>>, vector<4x1408xf32>,
    %c48_99 = arith.constant 48 : index
    %c0_100 = arith.constant 0 : index
    %146 = vector.load %arg20[%c48_99, %c0_100] : memref<100x1408xf32, #tpu.memory_space<vmem>>, vector<4x1408xf32>
    tpu.vector_store %arg20[%c48_99, %c0_100], %121 {strides = array<i32>} : memref<100x1408xf32, #tpu.memory_space<vmem>>, vector<4x1408xf32>,
    %c1407_i32_101 = arith.constant 1407 : i32
    %147 = tpu.dynamic_rotate %121 by %c1407_i32_101 dim 1 : vector<4x1408xf32>, i32 -> vector<4x1408xf32>
    %c52 = arith.constant 52 : index
    %c0_102 = arith.constant 0 : index
    %148 = vector.load %arg20[%c52, %c0_102] : memref<100x1408xf32, #tpu.memory_space<vmem>>, vector<4x1408xf32>
    tpu.vector_store %arg20[%c52, %c0_102], %147 {strides = array<i32>} : memref<100x1408xf32, #tpu.memory_space<vmem>>, vector<4x1408xf32>,
    %c1406_i32 = arith.constant 1406 : i32
    %149 = tpu.dynamic_rotate %121 by %c1406_i32 dim 1 : vector<4x1408xf32>, i32 -> vector<4x1408xf32>
    %c56_103 = arith.constant 56 : index
    %c0_104 = arith.constant 0 : index
    %150 = vector.load %arg20[%c56_103, %c0_104] : memref<100x1408xf32, #tpu.memory_space<vmem>>, vector<4x1408xf32>
    tpu.vector_store %arg20[%c56_103, %c0_104], %149 {strides = array<i32>} : memref<100x1408xf32, #tpu.memory_space<vmem>>, vector<4x1408xf32>,
    %c1374_i32 = arith.constant 1374 : i32
    %151 = tpu.dynamic_rotate %121 by %c1374_i32 dim 1 : vector<4x1408xf32>, i32 -> vector<4x1408xf32>
    %c60 = arith.constant 60 : index
    %c0_105 = arith.constant 0 : index
    %152 = vector.load %arg20[%c60, %c0_105] : memref<100x1408xf32, #tpu.memory_space<vmem>>, vector<4x1408xf32>
    tpu.vector_store %arg20[%c60, %c0_105], %151 {strides = array<i32>} : memref<100x1408xf32, #tpu.memory_space<vmem>>, vector<4x1408xf32>,
    %c1373_i32_106 = arith.constant 1373 : i32
    %153 = tpu.dynamic_rotate %121 by %c1373_i32_106 dim 1 : vector<4x1408xf32>, i32 -> vector<4x1408xf32>
    %c64_107 = arith.constant 64 : index
    %c0_108 = arith.constant 0 : index
    %154 = vector.load %arg20[%c64_107, %c0_108] : memref<100x1408xf32, #tpu.memory_space<vmem>>, vector<4x1408xf32>
    tpu.vector_store %arg20[%c64_107, %c0_108], %153 {strides = array<i32>} : memref<100x1408xf32, #tpu.memory_space<vmem>>, vector<4x1408xf32>,
    %c1372_i32_109 = arith.constant 1372 : i32
    %155 = tpu.dynamic_rotate %121 by %c1372_i32_109 dim 1 : vector<4x1408xf32>, i32 -> vector<4x1408xf32>
    %c68 = arith.constant 68 : index
    %c0_110 = arith.constant 0 : index
    %156 = vector.load %arg20[%c68, %c0_110] : memref<100x1408xf32, #tpu.memory_space<vmem>>, vector<4x1408xf32>
    tpu.vector_store %arg20[%c68, %c0_110], %155 {strides = array<i32>} : memref<100x1408xf32, #tpu.memory_space<vmem>>, vector<4x1408xf32>,
    %c1371_i32_111 = arith.constant 1371 : i32
    %157 = tpu.dynamic_rotate %121 by %c1371_i32_111 dim 1 : vector<4x1408xf32>, i32 -> vector<4x1408xf32>
    %c72 = arith.constant 72 : index
    %c0_112 = arith.constant 0 : index
    %158 = vector.load %arg20[%c72, %c0_112] : memref<100x1408xf32, #tpu.memory_space<vmem>>, vector<4x1408xf32>
    tpu.vector_store %arg20[%c72, %c0_112], %157 {strides = array<i32>} : memref<100x1408xf32, #tpu.memory_space<vmem>>, vector<4x1408xf32>,
    %c1370_i32 = arith.constant 1370 : i32
    %159 = tpu.dynamic_rotate %121 by %c1370_i32 dim 1 : vector<4x1408xf32>, i32 -> vector<4x1408xf32>
    %c76 = arith.constant 76 : index
    %c0_113 = arith.constant 0 : index
    %160 = vector.load %arg20[%c76, %c0_113] : memref<100x1408xf32, #tpu.memory_space<vmem>>, vector<4x1408xf32>
    tpu.vector_store %arg20[%c76, %c0_113], %159 {strides = array<i32>} : memref<100x1408xf32, #tpu.memory_space<vmem>>, vector<4x1408xf32>,
    %c1338_i32 = arith.constant 1338 : i32
    %161 = tpu.dynamic_rotate %121 by %c1338_i32 dim 1 : vector<4x1408xf32>, i32 -> vector<4x1408xf32>
    %c80_114 = arith.constant 80 : index
    %c0_115 = arith.constant 0 : index
    %162 = vector.load %arg20[%c80_114, %c0_115] : memref<100x1408xf32, #tpu.memory_space<vmem>>, vector<4x1408xf32>
    tpu.vector_store %arg20[%c80_114, %c0_115], %161 {strides = array<i32>} : memref<100x1408xf32, #tpu.memory_space<vmem>>, vector<4x1408xf32>,
    %c1337_i32 = arith.constant 1337 : i32
    %163 = tpu.dynamic_rotate %121 by %c1337_i32 dim 1 : vector<4x1408xf32>, i32 -> vector<4x1408xf32>
    %c84 = arith.constant 84 : index
    %c0_116 = arith.constant 0 : index
    %164 = vector.load %arg20[%c84, %c0_116] : memref<100x1408xf32, #tpu.memory_space<vmem>>, vector<4x1408xf32>
    tpu.vector_store %arg20[%c84, %c0_116], %163 {strides = array<i32>} : memref<100x1408xf32, #tpu.memory_space<vmem>>, vector<4x1408xf32>,
    %c1336_i32 = arith.constant 1336 : i32
    %165 = tpu.dynamic_rotate %121 by %c1336_i32 dim 1 : vector<4x1408xf32>, i32 -> vector<4x1408xf32>
    %c88 = arith.constant 88 : index
    %c0_117 = arith.constant 0 : index
    %166 = vector.load %arg20[%c88, %c0_117] : memref<100x1408xf32, #tpu.memory_space<vmem>>, vector<4x1408xf32>
    tpu.vector_store %arg20[%c88, %c0_117], %165 {strides = array<i32>} : memref<100x1408xf32, #tpu.memory_space<vmem>>, vector<4x1408xf32>,
    %c1335_i32 = arith.constant 1335 : i32
    %167 = tpu.dynamic_rotate %121 by %c1335_i32 dim 1 : vector<4x1408xf32>, i32 -> vector<4x1408xf32>
    %c92 = arith.constant 92 : index
    %c0_118 = arith.constant 0 : index
    %168 = vector.load %arg20[%c92, %c0_118] : memref<100x1408xf32, #tpu.memory_space<vmem>>, vector<4x1408xf32>
    tpu.vector_store %arg20[%c92, %c0_118], %167 {strides = array<i32>} : memref<100x1408xf32, #tpu.memory_space<vmem>>, vector<4x1408xf32>,
    %c1334_i32 = arith.constant 1334 : i32
    %169 = tpu.dynamic_rotate %121 by %c1334_i32 dim 1 : vector<4x1408xf32>, i32 -> vector<4x1408xf32>
    %c96_119 = arith.constant 96 : index
    %c0_120 = arith.constant 0 : index
    %170 = vector.load %arg20[%c96_119, %c0_120] : memref<100x1408xf32, #tpu.memory_space<vmem>>, vector<4x1408xf32>
    tpu.vector_store %arg20[%c96_119, %c0_120], %169 {strides = array<i32>} : memref<100x1408xf32, #tpu.memory_space<vmem>>, vector<4x1408xf32>,
    %c0_121 = arith.constant 0 : index
    %c0_122 = arith.constant 0 : index
    %171 = vector.load %arg15[%c0_121, %c0_122] : memref<3x100xf32, #tpu.memory_space<vmem>>, vector<3x100xf32>
    %c0_123 = arith.constant 0 : index
    %c0_124 = arith.constant 0 : index
    %172 = vector.load %arg20[%c0_123, %c0_124] : memref<100x1408xf32, #tpu.memory_space<vmem>>, vector<100x1408xf32>
    %cst_125 = arith.constant dense<0.000000e+00> : vector<3x1408xf32>
    %173 = tpu.matmul %171, %172, %cst_125 {dimension_numbers = #tpu.dot_dimension_numbers<[1], [0], [0], [1], [0, 0, 1, 1], [], []>} : vector<3x100xf32>, vector<100x1408xf32>, vector<3x1408xf32> -> vector<3x1408xf32>
    %c0_126 = arith.constant 0 : index
    %c0_127 = arith.constant 0 : index
    %174 = vector.load %arg16[%c0_126, %c0_127] : memref<3x1xf32, #tpu.memory_space<vmem>>, vector<3x1xf32>
    %175 = vector.broadcast %174 : vector<3x1xf32> to vector<3x1408xf32>
    %176 = arith.addf %173, %175 : vector<3x1408xf32>
    %177 = math.tanh %176 : vector<3x1408xf32>
    %c1336_i32_128 = arith.constant 1336 : i32
    %178 = tpu.dynamic_rotate %177 by %c1336_i32_128 dim 1 : vector<3x1408xf32>, i32 -> vector<3x1408xf32>
    %179 = vector.extract_strided_slice %178 {offsets = [0, 0], sizes = [3, 1152], strides = [1, 1]} : vector<3x1408xf32> to vector<3x1152xf32>
    %c0_129 = arith.constant 0 : index
    %c0_130 = arith.constant 0 : index
    %c0_131 = arith.constant 0 : index
    %180 = vector.load %arg17[%c0_129, %c0_130, %c0_131] : memref<1x3x1152xf32, #tpu.memory_space<vmem>>, vector<1x3x1152xf32>
    %181 = vector.shape_cast %180 : vector<1x3x1152xf32> to vector<3x1152xf32>
    %182 = vector.shape_cast %179 : vector<3x1152xf32> to vector<1x3x1152xf32>
    tpu.vector_store %arg17[%c0_129, %c0_130, %c0_131], %182 {strides = array<i32>} : memref<1x3x1152xf32, #tpu.memory_space<vmem>>, vector<1x3x1152xf32>,
    return
  }
  func.func @transform_0(%arg0: i32) -> (i32, i32, i32) {
    %c0_i32 = arith.constant 0 : i32
    %c0_i32_0 = arith.constant 0 : i32
    %c0_i32_1 = arith.constant 0 : i32
    return %arg0, %c0_i32, %c0_i32_0 : i32, i32, i32
  }
  func.func @transform_1(%arg0: i32) -> (i32, i32) {
    %c0_i32 = arith.constant 0 : i32
    %c0_i32_0 = arith.constant 0 : i32
    %c0_i32_1 = arith.constant 0 : i32
    return %c0_i32, %c0_i32_0 : i32, i32
  }
  func.func @transform_2(%arg0: i32) -> (i32, i32) {
    %c0_i32 = arith.constant 0 : i32
    %c0_i32_0 = arith.constant 0 : i32
    %c0_i32_1 = arith.constant 0 : i32
    return %c0_i32, %c0_i32_0 : i32, i32
  }
  func.func @transform_3(%arg0: i32) -> (i32, i32) {
    %c0_i32 = arith.constant 0 : i32
    %c0_i32_0 = arith.constant 0 : i32
    %c0_i32_1 = arith.constant 0 : i32
    return %c0_i32, %c0_i32_0 : i32, i32
  }
  func.func @transform_4(%arg0: i32) -> (i32, i32) {
    %c0_i32 = arith.constant 0 : i32
    %c0_i32_0 = arith.constant 0 : i32
    %c0_i32_1 = arith.constant 0 : i32
    return %c0_i32, %c0_i32_0 : i32, i32
  }
  func.func @transform_5(%arg0: i32) -> (i32, i32) {
    %c0_i32 = arith.constant 0 : i32
    %c0_i32_0 = arith.constant 0 : i32
    %c0_i32_1 = arith.constant 0 : i32
    return %c0_i32, %c0_i32_0 : i32, i32
  }
  func.func @transform_6(%arg0: i32) -> (i32, i32) {
    %c0_i32 = arith.constant 0 : i32
    %c0_i32_0 = arith.constant 0 : i32
    %c0_i32_1 = arith.constant 0 : i32
    return %c0_i32, %c0_i32_0 : i32, i32
  }
  func.func @transform_7(%arg0: i32) -> (i32, i32) {
    %c0_i32 = arith.constant 0 : i32
    %c0_i32_0 = arith.constant 0 : i32
    %c0_i32_1 = arith.constant 0 : i32
    return %c0_i32, %c0_i32_0 : i32, i32
  }
  func.func @transform_8(%arg0: i32) -> (i32, i32) {
    %c0_i32 = arith.constant 0 : i32
    %c0_i32_0 = arith.constant 0 : i32
    %c0_i32_1 = arith.constant 0 : i32
    return %c0_i32, %c0_i32_0 : i32, i32
  }
  func.func @transform_9(%arg0: i32) -> (i32, i32) {
    %c0_i32 = arith.constant 0 : i32
    %c0_i32_0 = arith.constant 0 : i32
    %c0_i32_1 = arith.constant 0 : i32
    return %c0_i32, %c0_i32_0 : i32, i32
  }
  func.func @transform_10(%arg0: i32) -> (i32, i32) {
    %c0_i32 = arith.constant 0 : i32
    %c0_i32_0 = arith.constant 0 : i32
    %c0_i32_1 = arith.constant 0 : i32
    return %c0_i32, %c0_i32_0 : i32, i32
  }
  func.func @transform_11(%arg0: i32) -> (i32, i32) {
    %c0_i32 = arith.constant 0 : i32
    %c0_i32_0 = arith.constant 0 : i32
    %c0_i32_1 = arith.constant 0 : i32
    return %c0_i32, %c0_i32_0 : i32, i32
  }
  func.func @transform_12(%arg0: i32) -> (i32, i32) {
    %c0_i32 = arith.constant 0 : i32
    %c0_i32_0 = arith.constant 0 : i32
    %c0_i32_1 = arith.constant 0 : i32
    return %c0_i32, %c0_i32_0 : i32, i32
  }
  func.func @transform_13(%arg0: i32) -> (i32, i32) {
    %c0_i32 = arith.constant 0 : i32
    %c0_i32_0 = arith.constant 0 : i32
    %c0_i32_1 = arith.constant 0 : i32
    return %c0_i32, %c0_i32_0 : i32, i32
  }
  func.func @transform_14(%arg0: i32) -> (i32, i32) {
    %c0_i32 = arith.constant 0 : i32
    %c0_i32_0 = arith.constant 0 : i32
    %c0_i32_1 = arith.constant 0 : i32
    return %c0_i32, %c0_i32_0 : i32, i32
  }
  func.func @transform_15(%arg0: i32) -> (i32, i32) {
    %c0_i32 = arith.constant 0 : i32
    %c0_i32_0 = arith.constant 0 : i32
    %c0_i32_1 = arith.constant 0 : i32
    return %c0_i32, %c0_i32_0 : i32, i32
  }
  func.func @transform_16(%arg0: i32) -> (i32, i32, i32) {
    %c0_i32 = arith.constant 0 : i32
    %c0_i32_0 = arith.constant 0 : i32
    %c0_i32_1 = arith.constant 0 : i32
    return %arg0, %c0_i32, %c0_i32_0 : i32, i32, i32
  }
}

</mosaic_0001>

<llo_original>
// kernel: cnn_decoder_forward.1
$region0: #{cnn_decoder_forward.1}
  #allocation0 [shape = 'u32[]', space=smem, size = 0x4, offset = 0x4, fixed_abs, tag = 'smem constant byte address 0x4 - core index']
  #allocation1 [shape = 'u32[72,128]{1,0:T(1,128)}', space=vmem, size = 0x9000, scoped, tag = 'internal scratch']
  #allocation2 [shape = 'f32[144,384]{1,0:T(8,128)}', space=vmem, size = 0x36000, scoped, tag = 'scratch operand']
  #allocation3 [shape = 'f32[72,1408]{1,0:T(8,128)}', space=vmem, size = 0x63000, scoped, tag = 'scratch operand']
  #allocation4 [shape = 'f32[100,1408]{1,0:T(8,128)}', space=vmem, size = 0x8f000, scoped, tag = 'scratch operand']
  %s0 = inlined_call_operand.vmem [shape: f32[2,16,64], index: 0, kind: input, shape index: {}]
  %s1 = inlined_call_operand.hbm [shape: bf16[64,384], index: 1, kind: input, shape index: {}]
  %s2 = inlined_call_operand.vmem [shape: f32[8,144], index: 2, kind: input, shape index: {}]
  %s3 = inlined_call_operand.vmem [shape: f32[8,1], index: 3, kind: input, shape index: {}]
  %s4 = inlined_call_operand.vmem [shape: f32[8,1], index: 4, kind: input, shape index: {}]
  %s5 = inlined_call_operand.vmem [shape: f32[8,1], index: 5, kind: input, shape index: {}]
  %s6 = inlined_call_operand.hbm [shape: f32[1,384], index: 6, kind: input, shape index: {}]
  %s7 = inlined_call_operand.hbm [shape: bf16[384,1408], index: 7, kind: input, shape index: {}]
  %s8 = inlined_call_operand.vmem [shape: f32[4,72], index: 8, kind: input, shape index: {}]
  %s9 = inlined_call_operand.vmem [shape: f32[4,1], index: 9, kind: input, shape index: {}]
  %s10 = inlined_call_operand.vmem [shape: f32[4,1], index: 10, kind: input, shape index: {}]
  %s11 = inlined_call_operand.vmem [shape: f32[4,1], index: 11, kind: input, shape index: {}]
  %s12 = inlined_call_operand.hbm [shape: f32[1,1408], index: 12, kind: input, shape index: {}]
  %s13 = inlined_call_operand.hbm [shape: f32[1,1408], index: 13, kind: input, shape index: {}]
  %s14 = inlined_call_operand.vmem [shape: f32[3,100], index: 14, kind: input, shape index: {}]
  %s15 = inlined_call_operand.vmem [shape: f32[3,1], index: 15, kind: input, shape index: {}]
  %s16 = inlined_call_operand.vmem [shape: f32[2,3,1152], index: 16, kind: output, shape index: {}]
  %s17 = sld [smem:[#allocation0]]
  $region117: #{cnn_decoder_forward.1} parent=0
    _
  %s19 = ssub.s32 1, %s17
  %s20 = scalar_select 0, %s19, %s17
  $region1: #{cnn_decoder_forward.1} parent=0
    #allocation5 [shape = 'u8[49152]{0}', space=vmem, size = 0xc000, scoped, tag = 'input window, operand 1, single buffered']
    #allocation6 [shape = 's32[2]{0}', space=sflag, size = 0x8, scoped, tag = 'scoped memory for cnn_decoder_forward.1']
    #allocation7 [shape = 'u8[1536]{0}', space=vmem, size = 0x800, scoped, tag = 'input window, operand 6, single buffered']
    #allocation8 [shape = 's32[1]{0}', space=sflag, size = 0x4, scoped, tag = 'scoped memory for cnn_decoder_forward.1']
    #allocation9 [shape = 'u8[1081344]{0}', space=vmem, size = 0x108000, scoped, tag = 'input window, operand 7, single buffered']
    #allocation10 [shape = 'u8[5632]{0}', space=vmem, size = 0x1800, scoped, tag = 'input window, operand 12, single buffered']
    #allocation11 [shape = 's32[1]{0}', space=sflag, size = 0x4, scoped, tag = 'scoped memory for cnn_decoder_forward.1']
    #allocation12 [shape = 'u8[5632]{0}', space=vmem, size = 0x1800, scoped, tag = 'input window, operand 13, single buffered']
    %21 = vsyncpa [#allocation6], 0
    %22 = vsyncpa [#allocation8], 0
    %23 = vsyncpa [#allocation11], 0
    loop: start=0, step=1, limit=4
    $region2: #{cnn_decoder_forward.1} parent=1 // loop_pre_header
      _
    $region3: #{cnn_decoder_forward.1} parent=1 // loop_header
      %s25 = sphi 0, %s29
      %p26 = scmp.ge.s32.totalorder %s25, 4
      %s35 = sphi 0, %s37
      %s38 = sphi 0, %s35
      %s39 = sphi 0, %s38
      %s55 = sphi 0, %s39
      %s59 = sphi 0, %s59
      %s61 = sphi 0, %s59
      %s62 = sphi 0, %s61
      %s76 = sphi 0, %s62
      %s80 = sphi 0, %s80
      %s82 = sphi 0, %s80
      %s83 = sphi 0, %s82
      %s97 = sphi 0, %s83
      %s101 = sphi 0, %s101
      %s103 = sphi 0, %s101
      %s104 = sphi 0, %s103
      %s118 = sphi 0, %s104
      %s122 = sphi 0, %s122
      %s124 = sphi 0, %s122
      %s125 = sphi 0, %s124
      %s139 = sphi 0, %s125
      %s143 = sphi 0, %s143
      %s145 = sphi 0, %s143
      %s146 = sphi 0, %s145
      %s160 = sphi 0, %s146
      %s164 = sphi 0, %s164
      %s166 = sphi 0, %s164
      %s167 = sphi 0, %s166
      %s181 = sphi 0, %s167
      %s185 = sphi 0, %s185
      %s187 = sphi 0, %s185
      %s188 = sphi 0, %s187
      %s202 = sphi 0, %s188
      %s206 = sphi 0, %s206
      %s208 = sphi 0, %s206
      %s209 = sphi 0, %s208
      %s223 = sphi 0, %s209
      %s227 = sphi 0, %s227
      %s229 = sphi 0, %s227
      %s230 = sphi 0, %s229
      %s244 = sphi 0, %s230
      %s248 = sphi 0, %s248
      %s250 = sphi 0, %s248
      %s251 = sphi 0, %s250
      %s265 = sphi 0, %s251
      %s269 = sphi 0, %s269
      %s271 = sphi 0, %s269
      %s272 = sphi 0, %s271
      %s286 = sphi 0, %s272
      %s290 = sphi 0, %s290
      %s292 = sphi 0, %s290
      %s293 = sphi 0, %s292
      %s307 = sphi 0, %s293
      %s311 = sphi 0, %s311
      %s313 = sphi 0, %s311
      %s314 = sphi 0, %s313
      %s328 = sphi 0, %s314
      %s332 = sphi 0, %s332
      %s334 = sphi 0, %s332
      %s335 = sphi 0, %s334
      %s349 = sphi 0, %s335
      %s353 = sphi 0, %s353
      %s355 = sphi 0, %s353
      %s356 = sphi 0, %s355
      %s370 = sphi 0, %s356
      %s376 = sphi 0, %s378
      %s379 = sphi 0, %s376
      %s380 = sphi 0, %s379
      %s396 = sphi 0, %s380
    $region4: #{cnn_decoder_forward.1} parent=1 // loop_header_branch
      %28 = sbr.rel (%p26) target = $region8
    $region5: #{cnn_decoder_forward.1} parent=1 // loop_body
      %s30 = ssub.s32 %s25, 1
      %s31 = ssub.s32 %s25, 2
      %s32 = sadd.s32 %s25, 1
      %s33 = ssub.s32 %s25, %s32
      %p34 = scmp.eq.s32.totalorder %s33, 0
      %s36 = sadd.s32 %s35, 1
      %s37 = scalar_select %p34, %s35, %s36
      %p40 = pneg %p34
      %p41 = scmp.eq.s32.totalorder %s25, 1
      %p42 = por %p40, %p41
      %p43 = scmp.ne.s32.totalorder %s35, %s38
      %p44 = scmp.eq.s32.totalorder %s25, 0
      %p45 = por %p43, %p44
      %p46 = scmp.ne.s32.totalorder %s35, %s38
      %p47 = scmp.eq.s32.totalorder %s30, 1
      %p48 = por %p46, %p47
      %p49 = scmp.ne.s32.totalorder %s38, %s39
      %p50 = scmp.eq.s32.totalorder %s30, 0
      %p51 = por %p49, %p50
      %p52 = scmp.ne.s32.totalorder %s38, %s39
      %p53 = scmp.eq.s32.totalorder %s31, 1
      %p54 = por %p52, %p53
      %p56 = scmp.ne.s32.totalorder %s39, %s55
      %p57 = scmp.eq.s32.totalorder %s31, 0
      %p58 = por %p56, %p57
      %s60 = sadd.s32 %s59, 1
      %p63 = scmp.eq.s32.totalorder %s25, 1
      %p64 = scmp.ne.s32.totalorder %s59, %s61
      %p65 = scmp.eq.s32.totalorder %s25, 0
      %p66 = por %p64, %p65
      %p67 = scmp.ne.s32.totalorder %s59, %s61
      %p68 = scmp.eq.s32.totalorder %s30, 1
      %p69 = por %p67, %p68
      %p70 = scmp.ne.s32.totalorder %s61, %s62
      %p71 = scmp.eq.s32.totalorder %s30, 0
      %p72 = por %p70, %p71
      %p73 = scmp.ne.s32.totalorder %s61, %s62
      %p74 = scmp.eq.s32.totalorder %s31, 1
      %p75 = por %p73, %p74
      %p77 = scmp.ne.s32.totalorder %s62, %s76
      %p78 = scmp.eq.s32.totalorder %s31, 0
      %p79 = por %p77, %p78
      %s81 = sadd.s32 %s80, 1
      %p84 = scmp.eq.s32.totalorder %s25, 1
      %p85 = scmp.ne.s32.totalorder %s80, %s82
      %p86 = scmp.eq.s32.totalorder %s25, 0
      %p87 = por %p85, %p86
      %p88 = scmp.ne.s32.totalorder %s80, %s82
      %p89 = scmp.eq.s32.totalorder %s30, 1
      %p90 = por %p88, %p89
      %p91 = scmp.ne.s32.totalorder %s82, %s83
      %p92 = scmp.eq.s32.totalorder %s30, 0
      %p93 = por %p91, %p92
      %p94 = scmp.ne.s32.totalorder %s82, %s83
      %p95 = scmp.eq.s32.totalorder %s31, 1
      %p96 = por %p94, %p95
      %p98 = scmp.ne.s32.totalorder %s83, %s97
      %p99 = scmp.eq.s32.totalorder %s31, 0
      %p100 = por %p98, %p99
      %s102 = sadd.s32 %s101, 1
      %p105 = scmp.eq.s32.totalorder %s25, 1
      %p106 = scmp.ne.s32.totalorder %s101, %s103
      %p107 = scmp.eq.s32.totalorder %s25, 0
      %p108 = por %p106, %p107
      %p109 = scmp.ne.s32.totalorder %s101, %s103
      %p110 = scmp.eq.s32.totalorder %s30, 1
      %p111 = por %p109, %p110
      %p112 = scmp.ne.s32.totalorder %s103, %s104
      %p113 = scmp.eq.s32.totalorder %s30, 0
      %p114 = por %p112, %p113
      %p115 = scmp.ne.s32.totalorder %s103, %s104
      %p116 = scmp.eq.s32.totalorder %s31, 1
      %p117 = por %p115, %p116
      %p119 = scmp.ne.s32.totalorder %s104, %s118
      %p120 = scmp.eq.s32.totalorder %s31, 0
      %p121 = por %p119, %p120
      %s123 = sadd.s32 %s122, 1
      %p126 = scmp.eq.s32.totalorder %s25, 1
      %p127 = scmp.ne.s32.totalorder %s122, %s124
      %p128 = scmp.eq.s32.totalorder %s25, 0
      %p129 = por %p127, %p128
      %p130 = scmp.ne.s32.totalorder %s122, %s124
      %p131 = scmp.eq.s32.totalorder %s30, 1
      %p132 = por %p130, %p131
      %p133 = scmp.ne.s32.totalorder %s124, %s125
      %p134 = scmp.eq.s32.totalorder %s30, 0
      %p135 = por %p133, %p134
      %p136 = scmp.ne.s32.totalorder %s124, %s125
      %p137 = scmp.eq.s32.totalorder %s31, 1
      %p138 = por %p136, %p137
      %p140 = scmp.ne.s32.totalorder %s125, %s139
      %p141 = scmp.eq.s32.totalorder %s31, 0
      %p142 = por %p140, %p141
      %s144 = sadd.s32 %s143, 1
      %p147 = scmp.eq.s32.totalorder %s25, 1
      %p148 = scmp.ne.s32.totalorder %s143, %s145
      %p149 = scmp.eq.s32.totalorder %s25, 0
      %p150 = por %p148, %p149
      %p151 = scmp.ne.s32.totalorder %s143, %s145
      %p152 = scmp.eq.s32.totalorder %s30, 1
      %p153 = por %p151, %p152
      %p154 = scmp.ne.s32.totalorder %s145, %s146
      %p155 = scmp.eq.s32.totalorder %s30, 0
      %p156 = por %p154, %p155
      %p157 = scmp.ne.s32.totalorder %s145, %s146
      %p158 = scmp.eq.s32.totalorder %s31, 1
      %p159 = por %p157, %p158
      %p161 = scmp.ne.s32.totalorder %s146, %s160
      %p162 = scmp.eq.s32.totalorder %s31, 0
      %p163 = por %p161, %p162
      %s165 = sadd.s32 %s164, 1
      %p168 = scmp.eq.s32.totalorder %s25, 1
      %p169 = scmp.ne.s32.totalorder %s164, %s166
      %p170 = scmp.eq.s32.totalorder %s25, 0
      %p171 = por %p169, %p170
      %p172 = scmp.ne.s32.totalorder %s164, %s166
      %p173 = scmp.eq.s32.totalorder %s30, 1
      %p174 = por %p172, %p173
      %p175 = scmp.ne.s32.totalorder %s166, %s167
      %p176 = scmp.eq.s32.totalorder %s30, 0
      %p177 = por %p175, %p176
      %p178 = scmp.ne.s32.totalorder %s166, %s167
      %p179 = scmp.eq.s32.totalorder %s31, 1
      %p180 = por %p178, %p179
      %p182 = scmp.ne.s32.totalorder %s167, %s181
      %p183 = scmp.eq.s32.totalorder %s31, 0
      %p184 = por %p182, %p183
      %s186 = sadd.s32 %s185, 1
      %p189 = scmp.eq.s32.totalorder %s25, 1
      %p190 = scmp.ne.s32.totalorder %s185, %s187
      %p191 = scmp.eq.s32.totalorder %s25, 0
      %p192 = por %p190, %p191
      %p193 = scmp.ne.s32.totalorder %s185, %s187
      %p194 = scmp.eq.s32.totalorder %s30, 1
      %p195 = por %p193, %p194
      %p196 = scmp.ne.s32.totalorder %s187, %s188
      %p197 = scmp.eq.s32.totalorder %s30, 0
      %p198 = por %p196, %p197
      %p199 = scmp.ne.s32.totalorder %s187, %s188
      %p200 = scmp.eq.s32.totalorder %s31, 1
      %p201 = por %p199, %p200
      %p203 = scmp.ne.s32.totalorder %s188, %s202
      %p204 = scmp.eq.s32.totalorder %s31, 0
      %p205 = por %p203, %p204
      %s207 = sadd.s32 %s206, 1
      %p210 = scmp.eq.s32.totalorder %s25, 1
      %p211 = scmp.ne.s32.totalorder %s206, %s208
      %p212 = scmp.eq.s32.totalorder %s25, 0
      %p213 = por %p211, %p212
      %p214 = scmp.ne.s32.totalorder %s206, %s208
      %p215 = scmp.eq.s32.totalorder %s30, 1
      %p216 = por %p214, %p215
      %p217 = scmp.ne.s32.totalorder %s208, %s209
      %p218 = scmp.eq.s32.totalorder %s30, 0
      %p219 = por %p217, %p218
      %p220 = scmp.ne.s32.totalorder %s208, %s209
      %p221 = scmp.eq.s32.totalorder %s31, 1
      %p222 = por %p220, %p221
      %p224 = scmp.ne.s32.totalorder %s209, %s223
      %p225 = scmp.eq.s32.totalorder %s31, 0
      %p226 = por %p224, %p225
      %s228 = sadd.s32 %s227, 1
      %p231 = scmp.eq.s32.totalorder %s25, 1
      %p232 = scmp.ne.s32.totalorder %s227, %s229
      %p233 = scmp.eq.s32.totalorder %s25, 0
      %p234 = por %p232, %p233
      %p235 = scmp.ne.s32.totalorder %s227, %s229
      %p236 = scmp.eq.s32.totalorder %s30, 1
      %p237 = por %p235, %p236
      %p238 = scmp.ne.s32.totalorder %s229, %s230
      %p239 = scmp.eq.s32.totalorder %s30, 0
      %p240 = por %p238, %p239
      %p241 = scmp.ne.s32.totalorder %s229, %s230
      %p242 = scmp.eq.s32.totalorder %s31, 1
      %p243 = por %p241, %p242
      %p245 = scmp.ne.s32.totalorder %s230, %s244
      %p246 = scmp.eq.s32.totalorder %s31, 0
      %p247 = por %p245, %p246
      %s249 = sadd.s32 %s248, 1
      %p252 = scmp.eq.s32.totalorder %s25, 1
      %p253 = scmp.ne.s32.totalorder %s248, %s250
      %p254 = scmp.eq.s32.totalorder %s25, 0
      %p255 = por %p253, %p254
      %p256 = scmp.ne.s32.totalorder %s248, %s250
      %p257 = scmp.eq.s32.totalorder %s30, 1
      %p258 = por %p256, %p257
      %p259 = scmp.ne.s32.totalorder %s250, %s251
      %p260 = scmp.eq.s32.totalorder %s30, 0
      %p261 = por %p259, %p260
      %p262 = scmp.ne.s32.totalorder %s250, %s251
      %p263 = scmp.eq.s32.totalorder %s31, 1
      %p264 = por %p262, %p263
      %p266 = scmp.ne.s32.totalorder %s251, %s265
      %p267 = scmp.eq.s32.totalorder %s31, 0
      %p268 = por %p266, %p267
      %s270 = sadd.s32 %s269, 1
      %p273 = scmp.eq.s32.totalorder %s25, 1
      %p274 = scmp.ne.s32.totalorder %s269, %s271
      %p275 = scmp.eq.s32.totalorder %s25, 0
      %p276 = por %p274, %p275
      %p277 = scmp.ne.s32.totalorder %s269, %s271
      %p278 = scmp.eq.s32.totalorder %s30, 1
      %p279 = por %p277, %p278
      %p280 = scmp.ne.s32.totalorder %s271, %s272
      %p281 = scmp.eq.s32.totalorder %s30, 0
      %p282 = por %p280, %p281
      %p283 = scmp.ne.s32.totalorder %s271, %s272
      %p284 = scmp.eq.s32.totalorder %s31, 1
      %p285 = por %p283, %p284
      %p287 = scmp.ne.s32.totalorder %s272, %s286
      %p288 = scmp.eq.s32.totalorder %s31, 0
      %p289 = por %p287, %p288
      %s291 = sadd.s32 %s290, 1
      %p294 = scmp.eq.s32.totalorder %s25, 1
      %p295 = scmp.ne.s32.totalorder %s290, %s292
      %p296 = scmp.eq.s32.totalorder %s25, 0
      %p297 = por %p295, %p296
      %p298 = scmp.ne.s32.totalorder %s290, %s292
      %p299 = scmp.eq.s32.totalorder %s30, 1
      %p300 = por %p298, %p299
      %p301 = scmp.ne.s32.totalorder %s292, %s293
      %p302 = scmp.eq.s32.totalorder %s30, 0
      %p303 = por %p301, %p302
      %p304 = scmp.ne.s32.totalorder %s292, %s293
      %p305 = scmp.eq.s32.totalorder %s31, 1
      %p306 = por %p304, %p305
      %p308 = scmp.ne.s32.totalorder %s293, %s307
      %p309 = scmp.eq.s32.totalorder %s31, 0
      %p310 = por %p308, %p309
      %s312 = sadd.s32 %s311, 1
      %p315 = scmp.eq.s32.totalorder %s25, 1
      %p316 = scmp.ne.s32.totalorder %s311, %s313
      %p317 = scmp.eq.s32.totalorder %s25, 0
      %p318 = por %p316, %p317
      %p319 = scmp.ne.s32.totalorder %s311, %s313
      %p320 = scmp.eq.s32.totalorder %s30, 1
      %p321 = por %p319, %p320
      %p322 = scmp.ne.s32.totalorder %s313, %s314
      %p323 = scmp.eq.s32.totalorder %s30, 0
      %p324 = por %p322, %p323
      %p325 = scmp.ne.s32.totalorder %s313, %s314
      %p326 = scmp.eq.s32.totalorder %s31, 1
      %p327 = por %p325, %p326
      %p329 = scmp.ne.s32.totalorder %s314, %s328
      %p330 = scmp.eq.s32.totalorder %s31, 0
      %p331 = por %p329, %p330
      %s333 = sadd.s32 %s332, 1
      %p336 = scmp.eq.s32.totalorder %s25, 1
      %p337 = scmp.ne.s32.totalorder %s332, %s334
      %p338 = scmp.eq.s32.totalorder %s25, 0
      %p339 = por %p337, %p338
      %p340 = scmp.ne.s32.totalorder %s332, %s334
      %p341 = scmp.eq.s32.totalorder %s30, 1
      %p342 = por %p340, %p341
      %p343 = scmp.ne.s32.totalorder %s334, %s335
      %p344 = scmp.eq.s32.totalorder %s30, 0
      %p345 = por %p343, %p344
      %p346 = scmp.ne.s32.totalorder %s334, %s335
      %p347 = scmp.eq.s32.totalorder %s31, 1
      %p348 = por %p346, %p347
      %p350 = scmp.ne.s32.totalorder %s335, %s349
      %p351 = scmp.eq.s32.totalorder %s31, 0
      %p352 = por %p350, %p351
      %s354 = sadd.s32 %s353, 1
      %p357 = scmp.eq.s32.totalorder %s25, 1
      %p358 = scmp.ne.s32.totalorder %s353, %s355
      %p359 = scmp.eq.s32.totalorder %s25, 0
      %p360 = por %p358, %p359
      %p361 = scmp.ne.s32.totalorder %s353, %s355
      %p362 = scmp.eq.s32.totalorder %s30, 1
      %p363 = por %p361, %p362
      %p364 = scmp.ne.s32.totalorder %s355, %s356
      %p365 = scmp.eq.s32.totalorder %s30, 0
      %p366 = por %p364, %p365
      %p367 = scmp.ne.s32.totalorder %s355, %s356
      %p368 = scmp.eq.s32.totalorder %s31, 1
      %p369 = por %p367, %p368
      %p371 = scmp.ne.s32.totalorder %s356, %s370
      %p372 = scmp.eq.s32.totalorder %s31, 0
      %p373 = por %p371, %p372
      %s374 = ssub.s32 %s25, %s32
      %p375 = scmp.eq.s32.totalorder %s374, 0
      %s377 = sadd.s32 %s376, 1
      %s378 = scalar_select %p375, %s376, %s377
      %p381 = pneg %p375
      %p382 = scmp.eq.s32.totalorder %s25, 1
      %p383 = por %p381, %p382
      %p384 = scmp.ne.s32.totalorder %s376, %s379
      %p385 = scmp.eq.s32.totalorder %s25, 0
      %p386 = por %p384, %p385
      %p387 = scmp.ne.s32.totalorder %s376, %s379
      %p388 = scmp.eq.s32.totalorder %s30, 1
      %p389 = por %p387, %p388
      %p390 = scmp.ne.s32.totalorder %s379, %s380
      %p391 = scmp.eq.s32.totalorder %s30, 0
      %p392 = por %p390, %p391
      %p393 = scmp.ne.s32.totalorder %s379, %s380
      %p394 = scmp.eq.s32.totalorder %s31, 1
      %p395 = por %p393, %p394
      %p397 = scmp.ne.s32.totalorder %s380, %s396
      %p398 = scmp.eq.s32.totalorder %s31, 0
      %p399 = por %p397, %p398
      %p400 = scmp.le.s32.totalorder 1, %s25
      %p401 = scmp.lt.s32.totalorder %s25, 3
      %p402 = pnand %p400, %p401
      %p403 = pneg %p402
      // Predicated region
      $region9: #{cnn_decoder_forward.1} parent=5 // pred_check
        _
      $region10: #{cnn_decoder_forward.1} parent=5 // pred_check_branch
        %405 = sbr.rel (%p402) target = $region12
      $region11: #{cnn_decoder_forward.1} parent=5 // pred_region
        %s406 = ssub.s32 %s25, 1
        // Predicated region
        $region13: #{cnn_decoder_forward.1} parent=11 // pred_check
          %p407 = pneg %p72
        $region14: #{cnn_decoder_forward.1} parent=11 // pred_check_branch
          %409 = sbr.rel (%p407) target = $region16
        $region15: #{cnn_decoder_forward.1} parent=11 // pred_region
          %411 = vsyncadd [#allocation6], 0
          %s412 = sshll.u32 %s1, 4
          %s413 = int_to_ptr.hbm [resolvable:$true] %s412
          %s414 = sshll.u32 [#allocation5], 4
          %s415 = int_to_ptr.vmem [resolvable:$true] %s414
          %420 = dma.hbm_to_vmem [thread:$0]  %s413, 1536, %s415, [#allocation6], 192, 192, 12
        $region16: #{cnn_decoder_forward.1} parent=11 // pred_fallthru
          _
        // Predicated region
        $region17: #{cnn_decoder_forward.1} parent=11 // pred_check
          %p421 = pneg %p93
        $region18: #{cnn_decoder_forward.1} parent=11 // pred_check_branch
          %423 = sbr.rel (%p421) target = $region20
        $region19: #{cnn_decoder_forward.1} parent=11 // pred_region
          _
        $region20: #{cnn_decoder_forward.1} parent=11 // pred_fallthru
          _
        // Predicated region
        $region21: #{cnn_decoder_forward.1} parent=11 // pred_check
          %p424 = pneg %p114
        $region22: #{cnn_decoder_forward.1} parent=11 // pred_check_branch
          %426 = sbr.rel (%p424) target = $region24
        $region23: #{cnn_decoder_forward.1} parent=11 // pred_region
          _
        $region24: #{cnn_decoder_forward.1} parent=11 // pred_fallthru
          _
        // Predicated region
        $region25: #{cnn_decoder_forward.1} parent=11 // pred_check
          %p427 = pneg %p135
        $region26: #{cnn_decoder_forward.1} parent=11 // pred_check_branch
          %429 = sbr.rel (%p427) target = $region28
        $region27: #{cnn_decoder_forward.1} parent=11 // pred_region
          _
        $region28: #{cnn_decoder_forward.1} parent=11 // pred_fallthru
          _
        // Predicated region
        $region29: #{cnn_decoder_forward.1} parent=11 // pred_check
          %p430 = pneg %p156
        $region30: #{cnn_decoder_forward.1} parent=11 // pred_check_branch
          %432 = sbr.rel (%p430) target = $region32
        $region31: #{cnn_decoder_forward.1} parent=11 // pred_region
          _
        $region32: #{cnn_decoder_forward.1} parent=11 // pred_fallthru
          _
        // Predicated region
        $region33: #{cnn_decoder_forward.1} parent=11 // pred_check
          %p433 = pneg %p177
        $region34: #{cnn_decoder_forward.1} parent=11 // pred_check_branch
          %435 = sbr.rel (%p433) target = $region36
        $region35: #{cnn_decoder_forward.1} parent=11 // pred_region
          %437 = vsyncadd [#allocation8], 0
          %s439 = sshll.u32 %s6, 4
          %s440 = int_to_ptr.hbm [resolvable:$true] %s439
          %s441 = sshll.u32 [#allocation7], 4
          %s442 = int_to_ptr.vmem [resolvable:$true] %s441
          %444 = dma.hbm_to_vmem [thread:$0]  %s440, 48, %s442, [#allocation8]
        $region36: #{cnn_decoder_forward.1} parent=11 // pred_fallthru
          _
        // Predicated region
        $region37: #{cnn_decoder_forward.1} parent=11 // pred_check
          %p445 = pneg %p198
        $region38: #{cnn_decoder_forward.1} parent=11 // pred_check_branch
          %447 = sbr.rel (%p445) target = $region40
        $region39: #{cnn_decoder_forward.1} parent=11 // pred_region
          %449 = vsyncadd [#allocation8], 0
          %s450 = sshll.u32 %s7, 4
          %s451 = int_to_ptr.hbm [resolvable:$true] %s450
          %s452 = sshll.u32 [#allocation9], 4
          %s453 = int_to_ptr.vmem [resolvable:$true] %s452
          %458 = dma.hbm_to_vmem [thread:$0]  %s451, 33792, %s453, [#allocation8], 704, 704, 44
        $region40: #{cnn_decoder_forward.1} parent=11 // pred_fallthru
          _
        // Predicated region
        $region41: #{cnn_decoder_forward.1} parent=11 // pred_check
          %p459 = pneg %p219
        $region42: #{cnn_decoder_forward.1} parent=11 // pred_check_branch
          %461 = sbr.rel (%p459) target = $region44
        $region43: #{cnn_decoder_forward.1} parent=11 // pred_region
          _
        $region44: #{cnn_decoder_forward.1} parent=11 // pred_fallthru
          _
        // Predicated region
        $region45: #{cnn_decoder_forward.1} parent=11 // pred_check
          %p462 = pneg %p240
        $region46: #{cnn_decoder_forward.1} parent=11 // pred_check_branch
          %464 = sbr.rel (%p462) target = $region48
        $region47: #{cnn_decoder_forward.1} parent=11 // pred_region
          _
        $region48: #{cnn_decoder_forward.1} parent=11 // pred_fallthru
          _
        // Predicated region
        $region49: #{cnn_decoder_forward.1} parent=11 // pred_check
          %p465 = pneg %p261
        $region50: #{cnn_decoder_forward.1} parent=11 // pred_check_branch
          %467 = sbr.rel (%p465) target = $region52
        $region51: #{cnn_decoder_forward.1} parent=11 // pred_region
          _
        $region52: #{cnn_decoder_forward.1} parent=11 // pred_fallthru
          _
        // Predicated region
        $region53: #{cnn_decoder_forward.1} parent=11 // pred_check
          %p468 = pneg %p282
        $region54: #{cnn_decoder_forward.1} parent=11 // pred_check_branch
          %470 = sbr.rel (%p468) target = $region56
        $region55: #{cnn_decoder_forward.1} parent=11 // pred_region
          _
        $region56: #{cnn_decoder_forward.1} parent=11 // pred_fallthru
          _
        // Predicated region
        $region57: #{cnn_decoder_forward.1} parent=11 // pred_check
          %p471 = pneg %p303
        $region58: #{cnn_decoder_forward.1} parent=11 // pred_check_branch
          %473 = sbr.rel (%p471) target = $region60
        $region59: #{cnn_decoder_forward.1} parent=11 // pred_region
          %475 = vsyncadd [#allocation11], 0
          %s477 = sshll.u32 %s12, 4
          %s478 = int_to_ptr.hbm [resolvable:$true] %s477
          %s479 = sshll.u32 [#allocation10], 4
          %s480 = int_to_ptr.vmem [resolvable:$true] %s479
          %482 = dma.hbm_to_vmem [thread:$0]  %s478, 176, %s480, [#allocation11]
        $region60: #{cnn_decoder_forward.1} parent=11 // pred_fallthru
          _
        // Predicated region
        $region61: #{cnn_decoder_forward.1} parent=11 // pred_check
          %p483 = pneg %p324
        $region62: #{cnn_decoder_forward.1} parent=11 // pred_check_branch
          %485 = sbr.rel (%p483) target = $region64
        $region63: #{cnn_decoder_forward.1} parent=11 // pred_region
          %487 = vsyncadd [#allocation11], 0
          %s489 = sshll.u32 %s13, 4
          %s490 = int_to_ptr.hbm [resolvable:$true] %s489
          %s491 = sshll.u32 [#allocation12], 4
          %s492 = int_to_ptr.vmem [resolvable:$true] %s491
          %494 = dma.hbm_to_vmem [thread:$0]  %s490, 176, %s492, [#allocation11]
        $region64: #{cnn_decoder_forward.1} parent=11 // pred_fallthru
          _
        // Predicated region
        $region65: #{cnn_decoder_forward.1} parent=11 // pred_check
          %p495 = pneg %p345
        $region66: #{cnn_decoder_forward.1} parent=11 // pred_check_branch
          %497 = sbr.rel (%p495) target = $region68
        $region67: #{cnn_decoder_forward.1} parent=11 // pred_region
          _
        $region68: #{cnn_decoder_forward.1} parent=11 // pred_fallthru
          _
        // Predicated region
        $region69: #{cnn_decoder_forward.1} parent=11 // pred_check
          %p498 = pneg %p366
        $region70: #{cnn_decoder_forward.1} parent=11 // pred_check_branch
          %500 = sbr.rel (%p498) target = $region72
        $region71: #{cnn_decoder_forward.1} parent=11 // pred_region
          _
        $region72: #{cnn_decoder_forward.1} parent=11 // pred_fallthru
          _
      $region12: #{cnn_decoder_forward.1} parent=5 // pred_fallthru
        _
      %p501 = scmp.lt.s32.totalorder %s25, 2
      // Predicated region
      $region73: #{cnn_decoder_forward.1} parent=5 // pred_check
        %p502 = pneg %p501
      $region74: #{cnn_decoder_forward.1} parent=5 // pred_check_branch
        %504 = sbr.rel (%p502) target = $region76
      $region75: #{cnn_decoder_forward.1} parent=5 // pred_region
        // Predicated region
        $region77: #{cnn_decoder_forward.1} parent=75 // pred_check
          %p505 = pneg %p45
        $region78: #{cnn_decoder_forward.1} parent=75 // pred_check_branch
          %507 = sbr.rel (%p505) target = $region80
        $region79: #{cnn_decoder_forward.1} parent=75 // pred_region
          %p508 = scmp.lt.s32.totalorder %s25, 1
          %s509 = scalar_select %p508, %s25, 1
          %s510 = smul.addr %s509, 2
          %s511 = smul.addr %s510, 8
          %s512 = scalar_lea.vmem %s0, %s511
        $region80: #{cnn_decoder_forward.1} parent=75 // pred_fallthru
          _
      $region76: #{cnn_decoder_forward.1} parent=5 // pred_fallthru
        _
      %p513 = scmp.le.s32.totalorder 1, %s25
      %p514 = scmp.lt.s32.totalorder %s25, 3
      %p515 = pnand %p513, %p514
      %p516 = pneg %p515
      // Predicated region
      $region81: #{cnn_decoder_forward.1} parent=5 // pred_check
        _
      $region82: #{cnn_decoder_forward.1} parent=5 // pred_check_branch
        %518 = sbr.rel (%p515) target = $region84
      $region83: #{cnn_decoder_forward.1} parent=5 // pred_region
        %s519 = ssub.s32 %s25, 1
        // Predicated region
        $region85: #{cnn_decoder_forward.1} parent=83 // pred_check
          %p520 = pneg %p72
        $region86: #{cnn_decoder_forward.1} parent=83 // pred_check_branch
          %522 = sbr.rel (%p520) target = $region88
        $region87: #{cnn_decoder_forward.1} parent=83 // pred_region
          %524 = dma.done [#allocation6], 1536
        $region88: #{cnn_decoder_forward.1} parent=83 // pred_fallthru
          _
        // Predicated region
        $region89: #{cnn_decoder_forward.1} parent=83 // pred_check
          %p525 = pneg %p177
        $region90: #{cnn_decoder_forward.1} parent=83 // pred_check_branch
          %527 = sbr.rel (%p525) target = $region92
        $region91: #{cnn_decoder_forward.1} parent=83 // pred_region
          %529 = dma.done [#allocation8], 48
        $region92: #{cnn_decoder_forward.1} parent=83 // pred_fallthru
          _
        // Predicated region
        $region93: #{cnn_decoder_forward.1} parent=83 // pred_check
          %p530 = pneg %p198
        $region94: #{cnn_decoder_forward.1} parent=83 // pred_check_branch
          %532 = sbr.rel (%p530) target = $region96
        $region95: #{cnn_decoder_forward.1} parent=83 // pred_region
          %534 = dma.done [#allocation8], 33792
        $region96: #{cnn_decoder_forward.1} parent=83 // pred_fallthru
          _
        // Predicated region
        $region97: #{cnn_decoder_forward.1} parent=83 // pred_check
          %p535 = pneg %p303
        $region98: #{cnn_decoder_forward.1} parent=83 // pred_check_branch
          %537 = sbr.rel (%p535) target = $region100
        $region99: #{cnn_decoder_forward.1} parent=83 // pred_region
          %539 = dma.done [#allocation11], 176
        $region100: #{cnn_decoder_forward.1} parent=83 // pred_fallthru
          _
        // Predicated region
        $region101: #{cnn_decoder_forward.1} parent=83 // pred_check
          %p540 = pneg %p324
        $region102: #{cnn_decoder_forward.1} parent=83 // pred_check_branch
          %542 = sbr.rel (%p540) target = $region104
        $region103: #{cnn_decoder_forward.1} parent=83 // pred_region
          %544 = dma.done [#allocation11], 176
        $region104: #{cnn_decoder_forward.1} parent=83 // pred_fallthru
          _
        %p545 = scmp.lt.s32.totalorder %s30, 1
        %s546 = scalar_select %p545, %s30, 1
        %s547 = smul.addr %s546, 2
        %s548 = smul.addr %s547, 8
        %s549 = scalar_lea.vmem %s0, %s548
        %p550 = pneg %p51
        %p551 = pneg %p48
        %p552 = pneg %p72
        %p553 = pneg %p69
        %p554 = pneg %p93
        %p555 = pneg %p90
        %p556 = pneg %p114
        %p557 = pneg %p111
        %p558 = pneg %p135
        %p559 = pneg %p132
        %p560 = pneg %p156
        %p561 = pneg %p153
        %p562 = pneg %p177
        %p563 = pneg %p174
        %p564 = pneg %p198
        %p565 = pneg %p195
        %p566 = pneg %p219
        %p567 = pneg %p216
        %p568 = pneg %p240
        %p569 = pneg %p237
        %p570 = pneg %p261
        %p571 = pneg %p258
        %p572 = pneg %p282
        %p573 = pneg %p279
        %p574 = pneg %p303
        %p575 = pneg %p300
        %p576 = pneg %p324
        %p577 = pneg %p321
        %p578 = pneg %p345
        %p579 = pneg %p342
        %p580 = pneg %p366
        %p581 = pneg %p363
        %p582 = pneg %p392
        %p583 = pneg %p389
        %p584 = scmp.lt.s32.totalorder %s30, 1
        %s585 = scalar_select %p584, %s30, 1
        %s586 = smul.addr %s585, 9
        %s587 = smul.addr %s586, 4
        %s588 = scalar_lea.vmem %s16, %s587
        %p589 = scmp.lt.s32.totalorder %s30, 1
        %s590 = scalar_select %p589, %s30, 1
        %s591 = smul.addr %s590, 2
        %s592 = smul.addr %s591, 8
        %s593 = scalar_lea.vmem %s0, %s592
        %p594 = scmp.lt.s32.totalorder %s30, 1
        %s595 = scalar_select %p594, %s30, 1
        %s596 = smul.addr %s595, 9
        %s597 = smul.addr %s596, 4
        %s598 = scalar_lea.vmem %s16, %s597
        %v599 = vld [vmem:[%s593] sm:$0xff]
        %v600 = vld [vmem:[%s593 + $0x8] sm:$0xff]
        %v601 = vld [vmem:[#allocation5] sm:$0xff]
        %v602 = vld [vmem:[#allocation5 + $0x8] sm:$0xf]
        %v603 = vld [vmem:[#allocation5 + $0xc] sm:$0xff]
        %v604 = vld [vmem:[#allocation5 + $0x14] sm:$0xf]
        %v605 = vld [vmem:[#allocation5 + $0x18] sm:$0xff]
        %v606 = vld [vmem:[#allocation5 + $0x20] sm:$0xf]
        %v607 = vld [vmem:[#allocation5 + $0x24] sm:$0xff]
        %v608 = vld [vmem:[#allocation5 + $0x2c] sm:$0xf]
        %v609 = vld [vmem:[#allocation5 + $0x30] sm:$0xff]
        %v610 = vld [vmem:[#allocation5 + $0x38] sm:$0xf]
        %v611 = vld [vmem:[#allocation5 + $0x3c] sm:$0xff]
        %v612 = vld [vmem:[#allocation5 + $0x44] sm:$0xf]
        %v613 = vld [vmem:[#allocation5 + $0x48] sm:$0xff]
        %v614 = vld [vmem:[#allocation5 + $0x50] sm:$0xf]
        %v615 = vld [vmem:[#allocation5 + $0x54] sm:$0xff]
        %v616 = vld [vmem:[#allocation5 + $0x5c] sm:$0xf]
        %v617 = vunpack.c.l.bf16 %v601
        %v618 = vunpack.c.h.bf16 %v601
        %v619 = vunpack.c.l.bf16 %v602
        %v620 = vunpack.c.l.bf16 %v603
        %v621 = vunpack.c.h.bf16 %v603
        %v622 = vunpack.c.l.bf16 %v604
        %v623 = vunpack.c.l.bf16 %v605
        %v624 = vunpack.c.h.bf16 %v605
        %v625 = vunpack.c.l.bf16 %v606
        %v626 = vunpack.c.l.bf16 %v607
        %v627 = vunpack.c.h.bf16 %v607
        %v628 = vunpack.c.l.bf16 %v608
        %v629 = vunpack.c.l.bf16 %v609
        %v630 = vunpack.c.h.bf16 %v609
        %v631 = vunpack.c.l.bf16 %v610
        %v632 = vunpack.c.l.bf16 %v611
        %v633 = vunpack.c.h.bf16 %v611
        %v634 = vunpack.c.l.bf16 %v612
        %v635 = vunpack.c.l.bf16 %v613
        %v636 = vunpack.c.h.bf16 %v613
        %v637 = vunpack.c.l.bf16 %v614
        %v638 = vunpack.c.l.bf16 %v615
        %v639 = vunpack.c.h.bf16 %v615
        %v640 = vunpack.c.l.bf16 %v616
        %vm641 = vcmask 523264
        %v643 = vsel %vm641, %v599, 0
        %v646 = vsel %vm641, %v600, 0
        %648 = vmatpush.msra.mxu0 0.0
        %649 = vmatpush.msra.mxu0 0.0
        %650 = vmatpush.msra.mxu0 0.0
        %651 = vmatpush.msra.mxu0 0.0
        %652 = vmatpush.msra.mxu0 0.0
        %653 = vmatpush.msra.mxu0 0.0
        %654 = vmatpush.msra.mxu0 0.0
        %655 = vmatpush.msra.mxu0 0.0
        %656 = vmatpush.msra.mxu0 %v638
        %657 = vmatpush.msra.mxu0 %v635
        %658 = vmatpush.msra.mxu0 %v632
        %659 = vmatpush.msra.mxu0 %v629
        %660 = vmatpush.msra.mxu0 %v626
        %661 = vmatpush.msra.mxu0 %v623
        %662 = vmatpush.msra.mxu0 %v620
        %663 = vmatpush.msra.mxu0 %v617
        %664 = vmatmul.f32.gmra.mxu0 %v643
        %v665 = vpop.f32.mrf.mxu0
        %v666 = vadd.f32 0.0, %v665
        %667 = vmatmul.f32.gmra.mxu0 %v646
        %v668 = vpop.f32.mrf.mxu0
        %v669 = vadd.f32 0.0, %v668
        %670 = vdwg.mxu0
        %671 = vmatpush.msra.mxu0 0.0
        %672 = vmatpush.msra.mxu0 0.0
        %673 = vmatpush.msra.mxu0 0.0
        %674 = vmatpush.msra.mxu0 0.0
        %675 = vmatpush.msra.mxu0 0.0
        %676 = vmatpush.msra.mxu0 0.0
        %677 = vmatpush.msra.mxu0 0.0
        %678 = vmatpush.msra.mxu0 0.0
        %679 = vmatpush.msra.mxu0 %v639
        %680 = vmatpush.msra.mxu0 %v636
        %681 = vmatpush.msra.mxu0 %v633
        %682 = vmatpush.msra.mxu0 %v630
        %683 = vmatpush.msra.mxu0 %v627
        %684 = vmatpush.msra.mxu0 %v624
        %685 = vmatpush.msra.mxu0 %v621
        %686 = vmatpush.msra.mxu0 %v618
        %687 = vmatmul.f32.gmra.mxu0 %v643
        %v688 = vpop.f32.mrf.mxu0
        %v689 = vadd.f32 0.0, %v688
        %690 = vmatmul.f32.gmra.mxu0 %v646
        %v691 = vpop.f32.mrf.mxu0
        %v692 = vadd.f32 0.0, %v691
        %693 = vdwg.mxu0
        %694 = vmatpush.msra.mxu0 0.0
        %695 = vmatpush.msra.mxu0 0.0
        %696 = vmatpush.msra.mxu0 0.0
        %697 = vmatpush.msra.mxu0 0.0
        %698 = vmatpush.msra.mxu0 0.0
        %699 = vmatpush.msra.mxu0 0.0
        %700 = vmatpush.msra.mxu0 0.0
        %701 = vmatpush.msra.mxu0 0.0
        %702 = vmatpush.msra.mxu0 %v640
        %703 = vmatpush.msra.mxu0 %v637
        %704 = vmatpush.msra.mxu0 %v634
        %705 = vmatpush.msra.mxu0 %v631
        %706 = vmatpush.msra.mxu0 %v628
        %707 = vmatpush.msra.mxu0 %v625
        %708 = vmatpush.msra.mxu0 %v622
        %709 = vmatpush.msra.mxu0 %v619
        %710 = vmatmul.f32.gmra.mxu0 %v643
        %v711 = vpop.f32.mrf.mxu0
        %v712 = vadd.f32 0.0, %v711
        %713 = vmatmul.f32.gmra.mxu0 %v646
        %v714 = vpop.f32.mrf.mxu0
        %v715 = vadd.f32 0.0, %v714
        %716 = vdwg.mxu0
        %717 = vrot.lane.b32.xlu0 %v666, 19
        %v718 = vpop.permute.xlu0 %717
        %719 = vrot.lane.b32.xlu0 %v669, 19
        %v720 = vpop.permute.xlu0 %719
        %721 = vrot.lane.b32.xlu0 %v689, 19
        %v722 = vpop.permute.xlu0 %721
        %723 = vrot.lane.b32.xlu0 %v692, 19
        %v724 = vpop.permute.xlu0 %723
        %725 = vrot.lane.b32.xlu0 %v712, 19
        %v726 = vpop.permute.xlu0 %725
        %727 = vrot.lane.b32.xlu0 %v715, 19
        %v728 = vpop.permute.xlu0 %727
        %v729 = vlaneseq
        %v730 = vand.u32 %v729, 127
        %vm731 = vcmp.lt.s32.totalorder %v730, 19
        %v732 = vsel %vm731, %v722, %v726
        %v733 = vsel %vm731, %v724, %v728
        %v734 = vsel %vm731, %v718, %v722
        %v735 = vsel %vm731, %v720, %v724
        %v736 = vsel %vm731, %v726, %v718
        %v737 = vsel %vm731, %v728, %v720
        %738 = vst [vmem:[#allocation2] sm:$0xff] %v736
        %739 = vst [vmem:[#allocation2 + $0x8] sm:$0xff] %v734
        %740 = vst [vmem:[#allocation2 + $0x10] sm:$0xff] %v732
        %741 = vst [vmem:[#allocation2 + $0x18] sm:$0xff] %v737
        %742 = vst [vmem:[#allocation2 + $0x20] sm:$0xff] %v735
        %743 = vst [vmem:[#allocation2 + $0x28] sm:$0xff] %v733
        %744 = vrot.lane.b32.xlu0 %v666, 18
        %v745 = vpop.permute.xlu0 %744
        %746 = vrot.lane.b32.xlu0 %v669, 18
        %v747 = vpop.permute.xlu0 %746
        %748 = vrot.lane.b32.xlu0 %v689, 18
        %v749 = vpop.permute.xlu0 %748
        %750 = vrot.lane.b32.xlu0 %v692, 18
        %v751 = vpop.permute.xlu0 %750
        %752 = vrot.lane.b32.xlu0 %v712, 18
        %v753 = vpop.permute.xlu0 %752
        %754 = vrot.lane.b32.xlu0 %v715, 18
        %v755 = vpop.permute.xlu0 %754
        %vm756 = vcmp.lt.s32.totalorder %v730, 18
        %v757 = vsel %vm756, %v749, %v753
        %v758 = vsel %vm756, %v751, %v755
        %v759 = vsel %vm756, %v745, %v749
        %v760 = vsel %vm756, %v747, %v751
        %v761 = vsel %vm756, %v753, %v745
        %v762 = vsel %vm756, %v755, %v747
        %763 = vst [vmem:[#allocation2 + $0x30] sm:$0xff] %v761
        %764 = vst [vmem:[#allocation2 + $0x38] sm:$0xff] %v759
        %765 = vst [vmem:[#allocation2 + $0x40] sm:$0xff] %v757
        %766 = vst [vmem:[#allocation2 + $0x48] sm:$0xff] %v762
        %767 = vst [vmem:[#allocation2 + $0x50] sm:$0xff] %v760
        %768 = vst [vmem:[#allocation2 + $0x58] sm:$0xff] %v758
        %769 = vrot.lane.b32.xlu0 %v666, 17
        %v770 = vpop.permute.xlu0 %769
        %771 = vrot.lane.b32.xlu0 %v669, 17
        %v772 = vpop.permute.xlu0 %771
        %773 = vrot.lane.b32.xlu0 %v689, 17
        %v774 = vpop.permute.xlu0 %773
        %775 = vrot.lane.b32.xlu0 %v692, 17
        %v776 = vpop.permute.xlu0 %775
        %777 = vrot.lane.b32.xlu0 %v712, 17
        %v778 = vpop.permute.xlu0 %777
        %779 = vrot.lane.b32.xlu0 %v715, 17
        %v780 = vpop.permute.xlu0 %779
        %vm781 = vcmp.lt.s32.totalorder %v730, 17
        %v782 = vsel %vm781, %v774, %v778
        %v783 = vsel %vm781, %v776, %v780
        %v784 = vsel %vm781, %v770, %v774
        %v785 = vsel %vm781, %v772, %v776
        %v786 = vsel %vm781, %v778, %v770
        %v787 = vsel %vm781, %v780, %v772
        %788 = vst [vmem:[#allocation2 + $0x60] sm:$0xff] %v786
        %789 = vst [vmem:[#allocation2 + $0x68] sm:$0xff] %v784
        %790 = vst [vmem:[#allocation2 + $0x70] sm:$0xff] %v782
        %791 = vst [vmem:[#allocation2 + $0x78] sm:$0xff] %v787
        %792 = vst [vmem:[#allocation2 + $0x80] sm:$0xff] %v785
        %793 = vst [vmem:[#allocation2 + $0x88] sm:$0xff] %v783
        %794 = vrot.lane.b32.xlu0 %v666, 1
        %v795 = vpop.permute.xlu0 %794
        %796 = vrot.lane.b32.xlu0 %v669, 1
        %v797 = vpop.permute.xlu0 %796
        %798 = vrot.lane.b32.xlu0 %v689, 1
        %v799 = vpop.permute.xlu0 %798
        %800 = vrot.lane.b32.xlu0 %v692, 1
        %v801 = vpop.permute.xlu0 %800
        %802 = vrot.lane.b32.xlu0 %v712, 1
        %v803 = vpop.permute.xlu0 %802
        %804 = vrot.lane.b32.xlu0 %v715, 1
        %v805 = vpop.permute.xlu0 %804
        %vm806 = vcmp.lt.s32.totalorder %v730, 1
        %v807 = vsel %vm806, %v799, %v803
        %v808 = vsel %vm806, %v801, %v805
        %v809 = vsel %vm806, %v795, %v799
        %v810 = vsel %vm806, %v797, %v801
        %v811 = vsel %vm806, %v803, %v795
        %v812 = vsel %vm806, %v805, %v797
        %813 = vst [vmem:[#allocation2 + $0x90] sm:$0xff] %v811
        %814 = vst [vmem:[#allocation2 + $0x98] sm:$0xff] %v809
        %815 = vst [vmem:[#allocation2 + $0xa0] sm:$0xff] %v807
        %816 = vst [vmem:[#allocation2 + $0xa8] sm:$0xff] %v812
        %817 = vst [vmem:[#allocation2 + $0xb0] sm:$0xff] %v810
        %818 = vst [vmem:[#allocation2 + $0xb8] sm:$0xff] %v808
        %819 = vst [vmem:[#allocation2 + $0xc0] sm:$0xff] %v666
        %820 = vst [vmem:[#allocation2 + $0xc8] sm:$0xff] %v689
        %821 = vst [vmem:[#allocation2 + $0xd0] sm:$0xff] %v712
        %822 = vst [vmem:[#allocation2 + $0xd8] sm:$0xff] %v669
        %823 = vst [vmem:[#allocation2 + $0xe0] sm:$0xff] %v692
        %824 = vst [vmem:[#allocation2 + $0xe8] sm:$0xff] %v715
        %825 = vrot.lane.b32.xlu0 %v666, 127
        %v826 = vpop.permute.xlu0 %825
        %827 = vrot.lane.b32.xlu0 %v669, 127
        %v828 = vpop.permute.xlu0 %827
        %829 = vrot.lane.b32.xlu0 %v689, 127
        %v830 = vpop.permute.xlu0 %829
        %831 = vrot.lane.b32.xlu0 %v692, 127
        %v832 = vpop.permute.xlu0 %831
        %833 = vrot.lane.b32.xlu0 %v712, 127
        %v834 = vpop.permute.xlu0 %833
        %835 = vrot.lane.b32.xlu0 %v715, 127
        %v836 = vpop.permute.xlu0 %835
        %vm837 = vcmp.lt.s32.totalorder %v730, 127
        %v838 = vsel %vm837, %v830, %v834
        %v839 = vsel %vm837, %v832, %v836
        %v840 = vsel %vm837, %v826, %v830
        %v841 = vsel %vm837, %v828, %v832
        %v842 = vsel %vm837, %v834, %v826
        %v843 = vsel %vm837, %v836, %v828
        %844 = vst [vmem:[#allocation2 + $0xf0] sm:$0xff] %v840
        %845 = vst [vmem:[#allocation2 + $0xf8] sm:$0xff] %v838
        %846 = vst [vmem:[#allocation2 + $0x100] sm:$0xff] %v842
        %847 = vst [vmem:[#allocation2 + $0x108] sm:$0xff] %v841
        %848 = vst [vmem:[#allocation2 + $0x110] sm:$0xff] %v839
        %849 = vst [vmem:[#allocation2 + $0x118] sm:$0xff] %v843
        %850 = vrot.lane.b32.xlu0 %v666, 111
        %v851 = vpop.permute.xlu0 %850
        %852 = vrot.lane.b32.xlu0 %v669, 111
        %v853 = vpop.permute.xlu0 %852
        %854 = vrot.lane.b32.xlu0 %v689, 111
        %v855 = vpop.permute.xlu0 %854
        %856 = vrot.lane.b32.xlu0 %v692, 111
        %v857 = vpop.permute.xlu0 %856
        %858 = vrot.lane.b32.xlu0 %v712, 111
        %v859 = vpop.permute.xlu0 %858
        %860 = vrot.lane.b32.xlu0 %v715, 111
        %v861 = vpop.permute.xlu0 %860
        %vm862 = vcmp.lt.s32.totalorder %v730, 111
        %v863 = vsel %vm862, %v855, %v859
        %v864 = vsel %vm862, %v857, %v861
        %v865 = vsel %vm862, %v851, %v855
        %v866 = vsel %vm862, %v853, %v857
        %v867 = vsel %vm862, %v859, %v851
        %v868 = vsel %vm862, %v861, %v853
        %869 = vst [vmem:[#allocation2 + $0x120] sm:$0xff] %v865
        %870 = vst [vmem:[#allocation2 + $0x128] sm:$0xff] %v863
        %871 = vst [vmem:[#allocation2 + $0x130] sm:$0xff] %v867
        %872 = vst [vmem:[#allocation2 + $0x138] sm:$0xff] %v866
        %873 = vst [vmem:[#allocation2 + $0x140] sm:$0xff] %v864
        %874 = vst [vmem:[#allocation2 + $0x148] sm:$0xff] %v868
        %875 = vrot.lane.b32.xlu0 %v666, 110
        %v876 = vpop.permute.xlu0 %875
        %877 = vrot.lane.b32.xlu0 %v669, 110
        %v878 = vpop.permute.xlu0 %877
        %879 = vrot.lane.b32.xlu0 %v689, 110
        %v880 = vpop.permute.xlu0 %879
        %881 = vrot.lane.b32.xlu0 %v692, 110
        %v882 = vpop.permute.xlu0 %881
        %883 = vrot.lane.b32.xlu0 %v712, 110
        %v884 = vpop.permute.xlu0 %883
        %885 = vrot.lane.b32.xlu0 %v715, 110
        %v886 = vpop.permute.xlu0 %885
        %vm887 = vcmp.lt.s32.totalorder %v730, 110
        %v888 = vsel %vm887, %v880, %v884
        %v889 = vsel %vm887, %v882, %v886
        %v890 = vsel %vm887, %v876, %v880
        %v891 = vsel %vm887, %v878, %v882
        %v892 = vsel %vm887, %v884, %v876
        %v893 = vsel %vm887, %v886, %v878
        %894 = vst [vmem:[#allocation2 + $0x150] sm:$0xff] %v890
        %895 = vst [vmem:[#allocation2 + $0x158] sm:$0xff] %v888
        %896 = vst [vmem:[#allocation2 + $0x160] sm:$0xff] %v892
        %897 = vst [vmem:[#allocation2 + $0x168] sm:$0xff] %v891
        %898 = vst [vmem:[#allocation2 + $0x170] sm:$0xff] %v889
        %899 = vst [vmem:[#allocation2 + $0x178] sm:$0xff] %v893
        %900 = vrot.lane.b32.xlu0 %v666, 109
        %v901 = vpop.permute.xlu0 %900
        %902 = vrot.lane.b32.xlu0 %v669, 109
        %v903 = vpop.permute.xlu0 %902
        %904 = vrot.lane.b32.xlu0 %v689, 109
        %v905 = vpop.permute.xlu0 %904
        %906 = vrot.lane.b32.xlu0 %v692, 109
        %v907 = vpop.permute.xlu0 %906
        %908 = vrot.lane.b32.xlu0 %v712, 109
        %v909 = vpop.permute.xlu0 %908
        %910 = vrot.lane.b32.xlu0 %v715, 109
        %v911 = vpop.permute.xlu0 %910
        %vm912 = vcmp.lt.s32.totalorder %v730, 109
        %v913 = vsel %vm912, %v905, %v909
        %v914 = vsel %vm912, %v907, %v911
        %v915 = vsel %vm912, %v901, %v905
        %v916 = vsel %vm912, %v903, %v907
        %v917 = vsel %vm912, %v909, %v901
        %v918 = vsel %vm912, %v911, %v903
        %919 = vst [vmem:[#allocation2 + $0x180] sm:$0xff] %v915
        %920 = vst [vmem:[#allocation2 + $0x188] sm:$0xff] %v913
        %921 = vst [vmem:[#allocation2 + $0x190] sm:$0xff] %v917
        %922 = vst [vmem:[#allocation2 + $0x198] sm:$0xff] %v916
        %923 = vst [vmem:[#allocation2 + $0x1a0] sm:$0xff] %v914
        %924 = vst [vmem:[#allocation2 + $0x1a8] sm:$0xff] %v918
        %v925 = vld [vmem:[%s2] sm:$0xff]
        %v926 = vld [vmem:[%s2 + $0x8] sm:$0xff]
        %v927 = vld [vmem:[#allocation2] sm:$0xff]
        %v928 = vld [vmem:[#allocation2 + $0x8] sm:$0xff]
        %v929 = vld [vmem:[#allocation2 + $0x10] sm:$0xff]
        %v930 = vld [vmem:[#allocation2 + $0x18] sm:$0xff]
        %v931 = vld [vmem:[#allocation2 + $0x20] sm:$0xff]
        %v932 = vld [vmem:[#allocation2 + $0x28] sm:$0xff]
        %v933 = vld [vmem:[#allocation2 + $0x30] sm:$0xff]
        %v934 = vld [vmem:[#allocation2 + $0x38] sm:$0xff]
        %v935 = vld [vmem:[#allocation2 + $0x40] sm:$0xff]
        %v936 = vld [vmem:[#allocation2 + $0x48] sm:$0xff]
        %v937 = vld [vmem:[#allocation2 + $0x50] sm:$0xff]
        %v938 = vld [vmem:[#allocation2 + $0x58] sm:$0xff]
        %v939 = vld [vmem:[#allocation2 + $0x60] sm:$0xff]
        %v940 = vld [vmem:[#allocation2 + $0x68] sm:$0xff]
        %v941 = vld [vmem:[#allocation2 + $0x70] sm:$0xff]
        %v942 = vld [vmem:[#allocation2 + $0x78] sm:$0xff]
        %v943 = vld [vmem:[#allocation2 + $0x80] sm:$0xff]
        %v944 = vld [vmem:[#allocation2 + $0x88] sm:$0xff]
        %v945 = vld [vmem:[#allocation2 + $0x90] sm:$0xff]
        %v946 = vld [vmem:[#allocation2 + $0x98] sm:$0xff]
        %v947 = vld [vmem:[#allocation2 + $0xa0] sm:$0xff]
        %v948 = vld [vmem:[#allocation2 + $0xa8] sm:$0xff]
        %v949 = vld [vmem:[#allocation2 + $0xb0] sm:$0xff]
        %v950 = vld [vmem:[#allocation2 + $0xb8] sm:$0xff]
        %v951 = vld [vmem:[#allocation2 + $0xc0] sm:$0xff]
        %v952 = vld [vmem:[#allocation2 + $0xc8] sm:$0xff]
        %v953 = vld [vmem:[#allocation2 + $0xd0] sm:$0xff]
        %v954 = vld [vmem:[#allocation2 + $0xd8] sm:$0xff]
        %v955 = vld [vmem:[#allocation2 + $0xe0] sm:$0xff]
        %v956 = vld [vmem:[#allocation2 + $0xe8] sm:$0xff]
        %v957 = vld [vmem:[#allocation2 + $0xf0] sm:$0xff]
        %v958 = vld [vmem:[#allocation2 + $0xf8] sm:$0xff]
        %v959 = vld [vmem:[#allocation2 + $0x100] sm:$0xff]
        %v960 = vld [vmem:[#allocation2 + $0x108] sm:$0xff]
        %v961 = vld [vmem:[#allocation2 + $0x110] sm:$0xff]
        %v962 = vld [vmem:[#allocation2 + $0x118] sm:$0xff]
        %v963 = vld [vmem:[#allocation2 + $0x120] sm:$0xff]
        %v964 = vld [vmem:[#allocation2 + $0x128] sm:$0xff]
        %v965 = vld [vmem:[#allocation2 + $0x130] sm:$0xff]
        %v966 = vld [vmem:[#allocation2 + $0x138] sm:$0xff]
        %v967 = vld [vmem:[#allocation2 + $0x140] sm:$0xff]
        %v968 = vld [vmem:[#allocation2 + $0x148] sm:$0xff]
        %v969 = vld [vmem:[#allocation2 + $0x150] sm:$0xff]
        %v970 = vld [vmem:[#allocation2 + $0x158] sm:$0xff]
        %v971 = vld [vmem:[#allocation2 + $0x160] sm:$0xff]
        %v972 = vld [vmem:[#allocation2 + $0x168] sm:$0xff]
        %v973 = vld [vmem:[#allocation2 + $0x170] sm:$0xff]
        %v974 = vld [vmem:[#allocation2 + $0x178] sm:$0xff]
        %v975 = vld [vmem:[#allocation2 + $0x180] sm:$0xff]
        %v976 = vld [vmem:[#allocation2 + $0x188] sm:$0xff]
        %v977 = vld [vmem:[#allocation2 + $0x190] sm:$0xff]
        %v978 = vld [vmem:[#allocation2 + $0x198] sm:$0xff]
        %v979 = vld [vmem:[#allocation2 + $0x1a0] sm:$0xff]
        %v980 = vld [vmem:[#allocation2 + $0x1a8] sm:$0xff]
        %v981 = vld [vmem:[%s3] sm:$0xff]
        %983 = vset.pattern.permute.xlu0 0
        %984 = vperm.xlu0 %983, %v981
        %v985 = vpop.permute.xlu0 %984
        %vm987 = vcmask 130048
        %v989 = vsel %vm987, %v926, 0
        %991 = vmatpush.msra.mxu0 %v972
        %992 = vmatpush.msra.mxu0 %v969
        %993 = vmatpush.msra.mxu0 %v966
        %994 = vmatpush.msra.mxu0 %v963
        %995 = vmatpush.msra.mxu0 %v960
        %996 = vmatpush.msra.mxu0 %v957
        %997 = vmatpush.msra.mxu0 %v954
        %998 = vmatpush.msra.mxu0 %v951
        %999 = vmatpush.msra.mxu0 %v948
        %1000 = vmatpush.msra.mxu0 %v945
        %1001 = vmatpush.msra.mxu0 %v942
        %1002 = vmatpush.msra.mxu0 %v939
        %1003 = vmatpush.msra.mxu0 %v936
        %1004 = vmatpush.msra.mxu0 %v933
        %1005 = vmatpush.msra.mxu0 %v930
        %1006 = vmatpush.msra.mxu0 %v927
        %1007 = vmatmul.f32.gmra.mxu0 %v925
        %v1008 = vpop.f32.mrf.mxu0
        %v1009 = vadd.f32 %v985, %v1008
        %1010 = vdwg.mxu0
        %1011 = vmatpush.msra.mxu0 0.0
        %1012 = vmatpush.msra.mxu0 0.0
        %1013 = vmatpush.msra.mxu0 0.0
        %1014 = vmatpush.msra.mxu0 0.0
        %1015 = vmatpush.msra.mxu0 0.0
        %1016 = vmatpush.msra.mxu0 0.0
        %1017 = vmatpush.msra.mxu0 0.0
        %1018 = vmatpush.msra.mxu0 0.0
        %1019 = vmatpush.msra.mxu0 0.0
        %1020 = vmatpush.msra.mxu0 0.0
        %1021 = vmatpush.msra.mxu0 0.0
        %1022 = vmatpush.msra.mxu0 0.0
        %1023 = vmatpush.msra.mxu0 0.0
        %1024 = vmatpush.msra.mxu0 0.0
        %1025 = vmatpush.msra.mxu0 %v978
        %1026 = vmatpush.msra.mxu0 %v975
        %1027 = vmatmul.f32.gmra.mxu0 %v989
        %v1028 = vpop.f32.mrf.mxu0
        %v1029 = vadd.f32 %v1009, %v1028
        %1030 = vdwg.mxu0
        %1031 = vmatpush.msra.mxu0 %v973
        %1032 = vmatpush.msra.mxu0 %v970
        %1033 = vmatpush.msra.mxu0 %v967
        %1034 = vmatpush.msra.mxu0 %v964
        %1035 = vmatpush.msra.mxu0 %v961
        %1036 = vmatpush.msra.mxu0 %v958
        %1037 = vmatpush.msra.mxu0 %v955
        %1038 = vmatpush.msra.mxu0 %v952
        %1039 = vmatpush.msra.mxu0 %v949
        %1040 = vmatpush.msra.mxu0 %v946
        %1041 = vmatpush.msra.mxu0 %v943
        %1042 = vmatpush.msra.mxu0 %v940
        %1043 = vmatpush.msra.mxu0 %v937
        %1044 = vmatpush.msra.mxu0 %v934
        %1045 = vmatpush.msra.mxu0 %v931
        %1046 = vmatpush.msra.mxu0 %v928
        %1047 = vmatmul.f32.gmra.mxu0 %v925
        %v1048 = vpop.f32.mrf.mxu0
        %v1049 = vadd.f32 %v985, %v1048
        %1050 = vdwg.mxu0
        %1051 = vmatpush.msra.mxu0 0.0
        %1052 = vmatpush.msra.mxu0 0.0
        %1053 = vmatpush.msra.mxu0 0.0
        %1054 = vmatpush.msra.mxu0 0.0
        %1055 = vmatpush.msra.mxu0 0.0
        %1056 = vmatpush.msra.mxu0 0.0
        %1057 = vmatpush.msra.mxu0 0.0
        %1058 = vmatpush.msra.mxu0 0.0
        %1059 = vmatpush.msra.mxu0 0.0
        %1060 = vmatpush.msra.mxu0 0.0
        %1061 = vmatpush.msra.mxu0 0.0
        %1062 = vmatpush.msra.mxu0 0.0
        %1063 = vmatpush.msra.mxu0 0.0
        %1064 = vmatpush.msra.mxu0 0.0
        %1065 = vmatpush.msra.mxu0 %v979
        %1066 = vmatpush.msra.mxu0 %v976
        %1067 = vmatmul.f32.gmra.mxu0 %v989
        %v1068 = vpop.f32.mrf.mxu0
        %v1069 = vadd.f32 %v1049, %v1068
        %1070 = vdwg.mxu0
        %1071 = vmatpush.msra.mxu0 %v974
        %1072 = vmatpush.msra.mxu0 %v971
        %1073 = vmatpush.msra.mxu0 %v968
        %1074 = vmatpush.msra.mxu0 %v965
        %1075 = vmatpush.msra.mxu0 %v962
        %1076 = vmatpush.msra.mxu0 %v959
        %1077 = vmatpush.msra.mxu0 %v956
        %1078 = vmatpush.msra.mxu0 %v953
        %1079 = vmatpush.msra.mxu0 %v950
        %1080 = vmatpush.msra.mxu0 %v947
        %1081 = vmatpush.msra.mxu0 %v944
        %1082 = vmatpush.msra.mxu0 %v941
        %1083 = vmatpush.msra.mxu0 %v938
        %1084 = vmatpush.msra.mxu0 %v935
        %1085 = vmatpush.msra.mxu0 %v932
        %1086 = vmatpush.msra.mxu0 %v929
        %1087 = vmatmul.f32.gmra.mxu0 %v925
        %v1088 = vpop.f32.mrf.mxu0
        %v1089 = vadd.f32 %v985, %v1088
        %1090 = vdwg.mxu0
        %1091 = vmatpush.msra.mxu0 0.0
        %1092 = vmatpush.msra.mxu0 0.0
        %1093 = vmatpush.msra.mxu0 0.0
        %1094 = vmatpush.msra.mxu0 0.0
        %1095 = vmatpush.msra.mxu0 0.0
        %1096 = vmatpush.msra.mxu0 0.0
        %1097 = vmatpush.msra.mxu0 0.0
        %1098 = vmatpush.msra.mxu0 0.0
        %1099 = vmatpush.msra.mxu0 0.0
        %1100 = vmatpush.msra.mxu0 0.0
        %1101 = vmatpush.msra.mxu0 0.0
        %1102 = vmatpush.msra.mxu0 0.0
        %1103 = vmatpush.msra.mxu0 0.0
        %1104 = vmatpush.msra.mxu0 0.0
        %1105 = vmatpush.msra.mxu0 %v980
        %1106 = vmatpush.msra.mxu0 %v977
        %1107 = vmatmul.f32.gmra.mxu0 %v989
        %v1108 = vpop.f32.mrf.mxu0
        %v1109 = vadd.f32 %v1089, %v1108
        %1110 = vdwg.mxu0
        %v1111 = vld [vmem:[#allocation7] sm:$0x7]
        %v1112 = vld [vmem:[%s4] sm:$0xff]
        %v1113 = vld [vmem:[%s5] sm:$0xff]
        %v1115 = vperm.slane %v1111, 0
        %v1116 = vperm.slane %v1111, 1
        %v1117 = vperm.slane %v1111, 2
        %v1121 = vmul.f32 %v1029, %v1115
        %v1122 = vmul.f32 %v1069, %v1116
        %v1123 = vmul.f32 %v1109, %v1117
        %v1124 = vadd.f32 %v1121, %v1122
        %v1125 = vadd.f32 %v1124, %v1123
        %1126 = vadd.xlane.f32.xlu0 %v1125
        %v1127 = vpop.xlane.xlu0 %1126
        %v1128 = vrot.slane %v1127, 4
        %v1129 = vadd.f32 %v1127, %v1128
        %v1130 = vrot.slane %v1129, 2
        %v1131 = vadd.f32 %v1129, %v1130
        %v1132 = vrot.slane %v1131, 1
        %v1133 = vadd.f32 %v1131, %v1132
        %s1134 = vtos %v1133
        %v1135 = vmul.f32 %v1121, %v1029
        %v1136 = vmul.f32 %v1122, %v1069
        %v1137 = vmul.f32 %v1123, %v1109
        %v1138 = vadd.f32 %v1135, %v1136
        %v1139 = vadd.f32 %v1138, %v1137
        %1140 = vadd.xlane.f32.xlu0 %v1139
        %v1141 = vpop.xlane.xlu0 %1140
        %v1142 = vrot.slane %v1141, 4
        %v1143 = vadd.f32 %v1141, %v1142
        %v1144 = vrot.slane %v1143, 2
        %v1145 = vadd.f32 %v1143, %v1144
        %v1146 = vrot.slane %v1145, 1
        %v1147 = vadd.f32 %v1145, %v1146
        %s1148 = vtos %v1147
        %v1149 = vrcp.pop 2048.0
        %v1150 = vmul.f32 2048.0, %v1149
        %v1151 = vsub.f32 1.0, %v1150
        %v1152 = vmul.f32 %v1149, %v1151
        %v1153 = vadd.f32 %v1149, %v1152
        %vm1154 = vweird.f32 %v1149
        %v1155 = vsel %vm1154, %v1149, %v1153
        %s1156 = vtos %v1155
        %s1157 = smul.f32 %s1134, %s1156
        %s1158 = smul.f32 %s1134, %s1157
        %s1159 = ssub.f32 %s1148, %s1158
        %v1160 = vrcp.pop 2047.0
        %v1161 = vmul.f32 2047.0, %v1160
        %v1162 = vsub.f32 1.0, %v1161
        %v1163 = vmul.f32 %v1160, %v1162
        %v1164 = vadd.f32 %v1160, %v1163
        %vm1165 = vweird.f32 %v1160
        %v1166 = vsel %vm1165, %v1160, %v1164
        %s1167 = vtos %v1166
        %s1168 = smul.f32 %s1159, %s1167
        %s1169 = smax.f32 %s1168, 0.0
        %v1170 = vstv %s1169
        %v1171 = vrsqrt.pop %v1170
        %v1172 = vmul.f32 %v1171, %v1170
        %v1173 = vmul.f32 %v1172, %v1171
        %v1174 = vmul.f32 0.5, %v1173
        %v1175 = vsub.f32 1.5, %v1174
        %v1176 = vmul.f32 %v1171, %v1175
        %v1177 = vmul.f32 %v1170, %v1176
        %vm1178 = vcmp.eq.f32.partialorder %v1170, inf
        %v1179 = vsel %vm1178, %v1170, %v1177
        %vm1180 = vcmp.eq.f32.partialorder %v1170, 0.0
        %v1181 = vand.u32 %v1170, 2147483648
        %v1182 = vsel %vm1180, %v1181, %v1179
        %s1183 = vtos %v1182
        %s1184 = sadd.f32 %s1183, 1e-05
        %v1185 = vstv %s1184
        %v1186 = vrcp.pop %v1185
        %v1187 = vmul.f32 %v1185, %v1186
        %v1188 = vsub.f32 1.0, %v1187
        %v1189 = vmul.f32 %v1186, %v1188
        %v1190 = vadd.f32 %v1186, %v1189
        %vm1191 = vweird.f32 %v1185
        %vm1192 = vweird.f32 %v1186
        %vm1193 = vmor %vm1191, %vm1192
        %v1194 = vsel %vm1193, %v1186, %v1190
        %v1195 = vand.u32 2147483647, %v1185
        %vm1196 = vcmp.eq.f32.partialorder %v1195, 8.507059e+37
        %v1197 = vand.u32 %v1185, 2147483648
        %v1198 = vor.u32 1.1754944e-38, %v1197
        %v1199 = vsel %vm1196, %v1198, %v1194
        %s1200 = vtos %v1199
        %v1201 = vstv %s1157
        %v1202 = vsub.f32 %v1029, %v1201
        %v1203 = vsub.f32 %v1069, %v1201
        %v1204 = vsub.f32 %v1109, %v1201
        %v1205 = vstv %s1200
        %v1206 = vmul.f32 %v1202, %v1205
        %v1207 = vmul.f32 %v1203, %v1205
        %v1208 = vmul.f32 %v1204, %v1205
        %1210 = vset.pattern.permute.xlu0 0
        %1211 = vperm.xlu0 %1210, %v1112
        %v1212 = vpop.permute.xlu0 %1211
        %v1214 = vmul.f32 %v1206, %v1212
        %v1215 = vmul.f32 %v1207, %v1212
        %v1216 = vmul.f32 %v1208, %v1212
        %1218 = vset.pattern.permute.xlu0 0
        %1219 = vperm.xlu0 %1218, %v1113
        %v1220 = vpop.permute.xlu0 %1219
        %v1222 = vadd.f32 %v1214, %v1220
        %v1223 = vadd.f32 %v1215, %v1220
        %v1224 = vadd.f32 %v1216, %v1220
        %v1225 = vmax.f32 %v1222, 0.0
        %v1226 = vmax.f32 %v1223, 0.0
        %v1227 = vmax.f32 %v1224, 0.0
        %v1228 = vld [vmem:[#allocation9] sm:$0xff]
        %v1229 = vld [vmem:[#allocation9 + $0x8] sm:$0xff]
        %v1230 = vld [vmem:[#allocation9 + $0x10] sm:$0xff]
        %v1231 = vld [vmem:[#allocation9 + $0x18] sm:$0xff]
        %v1232 = vld [vmem:[#allocation9 + $0x20] sm:$0xff]
        %v1233 = vld [vmem:[#allocation9 + $0x28] sm:$0xf]
        %v1234 = vld [vmem:[#allocation9 + $0x2c] sm:$0xff]
        %v1235 = vld [vmem:[#allocation9 + $0x34] sm:$0xff]
        %v1236 = vld [vmem:[#allocation9 + $0x3c] sm:$0xff]
        %v1237 = vld [vmem:[#allocation9 + $0x44] sm:$0xff]
        %v1238 = vld [vmem:[#allocation9 + $0x4c] sm:$0xff]
        %v1239 = vld [vmem:[#allocation9 + $0x54] sm:$0xf]
        %v1240 = vld [vmem:[#allocation9 + $0x58] sm:$0xff]
        %v1241 = vld [vmem:[#allocation9 + $0x60] sm:$0xff]
        %v1242 = vld [vmem:[#allocation9 + $0x68] sm:$0xff]
        %v1243 = vld [vmem:[#allocation9 + $0x70] sm:$0xff]
        %v1244 = vld [vmem:[#allocation9 + $0x78] sm:$0xff]
        %v1245 = vld [vmem:[#allocation9 + $0x80] sm:$0xf]
        %v1246 = vld [vmem:[#allocation9 + $0x84] sm:$0xff]
        %v1247 = vld [vmem:[#allocation9 + $0x8c] sm:$0xff]
        %v1248 = vld [vmem:[#allocation9 + $0x94] sm:$0xff]
        %v1249 = vld [vmem:[#allocation9 + $0x9c] sm:$0xff]
        %v1250 = vld [vmem:[#allocation9 + $0xa4] sm:$0xff]
        %v1251 = vld [vmem:[#allocation9 + $0xac] sm:$0xf]
        %v1252 = vld [vmem:[#allocation9 + $0xb0] sm:$0xff]
        %v1253 = vld [vmem:[#allocation9 + $0xb8] sm:$0xff]
        %v1254 = vld [vmem:[#allocation9 + $0xc0] sm:$0xff]
        %v1255 = vld [vmem:[#allocation9 + $0xc8] sm:$0xff]
        %v1256 = vld [vmem:[#allocation9 + $0xd0] sm:$0xff]
        %v1257 = vld [vmem:[#allocation9 + $0xd8] sm:$0xf]
        %v1258 = vld [vmem:[#allocation9 + $0xdc] sm:$0xff]
        %v1259 = vld [vmem:[#allocation9 + $0xe4] sm:$0xff]
        %v1260 = vld [vmem:[#allocation9 + $0xec] sm:$0xff]
        %v1261 = vld [vmem:[#allocation9 + $0xf4] sm:$0xff]
        %v1262 = vld [vmem:[#allocation9 + $0xfc] sm:$0xff]
        %v1263 = vld [vmem:[#allocation9 + $0x104] sm:$0xf]
        %v1264 = vld [vmem:[#allocation9 + $0x108] sm:$0xff]
        %v1265 = vld [vmem:[#allocation9 + $0x110] sm:$0xff]
        %v1266 = vld [vmem:[#allocation9 + $0x118] sm:$0xff]
        %v1267 = vld [vmem:[#allocation9 + $0x120] sm:$0xff]
        %v1268 = vld [vmem:[#allocation9 + $0x128] sm:$0xff]
        %v1269 = vld [vmem:[#allocation9 + $0x130] sm:$0xf]
        %v1270 = vld [vmem:[#allocation9 + $0x134] sm:$0xff]
        %v1271 = vld [vmem:[#allocation9 + $0x13c] sm:$0xff]
        %v1272 = vld [vmem:[#allocation9 + $0x144] sm:$0xff]
        %v1273 = vld [vmem:[#allocation9 + $0x14c] sm:$0xff]
        %v1274 = vld [vmem:[#allocation9 + $0x154] sm:$0xff]
        %v1275 = vld [vmem:[#allocation9 + $0x15c] sm:$0xf]
        %v1276 = vld [vmem:[#allocation9 + $0x160] sm:$0xff]
        %v1277 = vld [vmem:[#allocation9 + $0x168] sm:$0xff]
        %v1278 = vld [vmem:[#allocation9 + $0x170] sm:$0xff]
        %v1279 = vld [vmem:[#allocation9 + $0x178] sm:$0xff]
        %v1280 = vld [vmem:[#allocation9 + $0x180] sm:$0xff]
        %v1281 = vld [vmem:[#allocation9 + $0x188] sm:$0xf]
        %v1282 = vld [vmem:[#allocation9 + $0x18c] sm:$0xff]
        %v1283 = vld [vmem:[#allocation9 + $0x194] sm:$0xff]
        %v1284 = vld [vmem:[#allocation9 + $0x19c] sm:$0xff]
        %v1285 = vld [vmem:[#allocation9 + $0x1a4] sm:$0xff]
        %v1286 = vld [vmem:[#allocation9 + $0x1ac] sm:$0xff]
        %v1287 = vld [vmem:[#allocation9 + $0x1b4] sm:$0xf]
        %v1288 = vld [vmem:[#allocation9 + $0x1b8] sm:$0xff]
        %v1289 = vld [vmem:[#allocation9 + $0x1c0] sm:$0xff]
        %v1290 = vld [vmem:[#allocation9 + $0x1c8] sm:$0xff]
        %v1291 = vld [vmem:[#allocation9 + $0x1d0] sm:$0xff]
        %v1292 = vld [vmem:[#allocation9 + $0x1d8] sm:$0xff]
        %v1293 = vld [vmem:[#allocation9 + $0x1e0] sm:$0xf]
        %v1294 = vld [vmem:[#allocation9 + $0x1e4] sm:$0xff]
        %v1295 = vld [vmem:[#allocation9 + $0x1ec] sm:$0xff]
        %v1296 = vld [vmem:[#allocation9 + $0x1f4] sm:$0xff]
        %v1297 = vld [vmem:[#allocation9 + $0x1fc] sm:$0xff]
        %v1298 = vld [vmem:[#allocation9 + $0x204] sm:$0xff]
        %v1299 = vld [vmem:[#allocation9 + $0x20c] sm:$0xf]
        %v1300 = vld [vmem:[#allocation9 + $0x210] sm:$0xff]
        %v1301 = vld [vmem:[#allocation9 + $0x218] sm:$0xff]
        %v1302 = vld [vmem:[#allocation9 + $0x220] sm:$0xff]
        %v1303 = vld [vmem:[#allocation9 + $0x228] sm:$0xff]
        %v1304 = vld [vmem:[#allocation9 + $0x230] sm:$0xff]
        %v1305 = vld [vmem:[#allocation9 + $0x238] sm:$0xf]
        %v1306 = vld [vmem:[#allocation9 + $0x23c] sm:$0xff]
        %v1307 = vld [vmem:[#allocation9 + $0x244] sm:$0xff]
        %v1308 = vld [vmem:[#allocation9 + $0x24c] sm:$0xff]
        %v1309 = vld [vmem:[#allocation9 + $0x254] sm:$0xff]
        %v1310 = vld [vmem:[#allocation9 + $0x25c] sm:$0xff]
        %v1311 = vld [vmem:[#allocation9 + $0x264] sm:$0xf]
        %v1312 = vld [vmem:[#allocation9 + $0x268] sm:$0xff]
        %v1313 = vld [vmem:[#allocation9 + $0x270] sm:$0xff]
        %v1314 = vld [vmem:[#allocation9 + $0x278] sm:$0xff]
        %v1315 = vld [vmem:[#allocation9 + $0x280] sm:$0xff]
        %v1316 = vld [vmem:[#allocation9 + $0x288] sm:$0xff]
        %v1317 = vld [vmem:[#allocation9 + $0x290] sm:$0xf]
        %v1318 = vld [vmem:[#allocation9 + $0x294] sm:$0xff]
        %v1319 = vld [vmem:[#allocation9 + $0x29c] sm:$0xff]
        %v1320 = vld [vmem:[#allocation9 + $0x2a4] sm:$0xff]
        %v1321 = vld [vmem:[#allocation9 + $0x2ac] sm:$0xff]
        %v1322 = vld [vmem:[#allocation9 + $0x2b4] sm:$0xff]
        %v1323 = vld [vmem:[#allocation9 + $0x2bc] sm:$0xf]
        %v1324 = vld [vmem:[#allocation9 + $0x2c0] sm:$0xff]
        %v1325 = vld [vmem:[#allocation9 + $0x2c8] sm:$0xff]
        %v1326 = vld [vmem:[#allocation9 + $0x2d0] sm:$0xff]
        %v1327 = vld [vmem:[#allocation9 + $0x2d8] sm:$0xff]
        %v1328 = vld [vmem:[#allocation9 + $0x2e0] sm:$0xff]
        %v1329 = vld [vmem:[#allocation9 + $0x2e8] sm:$0xf]
        %v1330 = vld [vmem:[#allocation9 + $0x2ec] sm:$0xff]
        %v1331 = vld [vmem:[#allocation9 + $0x2f4] sm:$0xff]
        %v1332 = vld [vmem:[#allocation9 + $0x2fc] sm:$0xff]
        %v1333 = vld [vmem:[#allocation9 + $0x304] sm:$0xff]
        %v1334 = vld [vmem:[#allocation9 + $0x30c] sm:$0xff]
        %v1335 = vld [vmem:[#allocation9 + $0x314] sm:$0xf]
        %v1336 = vld [vmem:[#allocation9 + $0x318] sm:$0xff]
        %v1337 = vld [vmem:[#allocation9 + $0x320] sm:$0xff]
        %v1338 = vld [vmem:[#allocation9 + $0x328] sm:$0xff]
        %v1339 = vld [vmem:[#allocation9 + $0x330] sm:$0xff]
        %v1340 = vld [vmem:[#allocation9 + $0x338] sm:$0xff]
        %v1341 = vld [vmem:[#allocation9 + $0x340] sm:$0xf]
        %v1342 = vld [vmem:[#allocation9 + $0x344] sm:$0xff]
        %v1343 = vld [vmem:[#allocation9 + $0x34c] sm:$0xff]
        %v1344 = vld [vmem:[#allocation9 + $0x354] sm:$0xff]
        %v1345 = vld [vmem:[#allocation9 + $0x35c] sm:$0xff]
        %v1346 = vld [vmem:[#allocation9 + $0x364] sm:$0xff]
        %v1347 = vld [vmem:[#allocation9 + $0x36c] sm:$0xf]
        %v1348 = vld [vmem:[#allocation9 + $0x370] sm:$0xff]
        %v1349 = vld [vmem:[#allocation9 + $0x378] sm:$0xff]
        %v1350 = vld [vmem:[#allocation9 + $0x380] sm:$0xff]
        %v1351 = vld [vmem:[#allocation9 + $0x388] sm:$0xff]
        %v1352 = vld [vmem:[#allocation9 + $0x390] sm:$0xff]
        %v1353 = vld [vmem:[#allocation9 + $0x398] sm:$0xf]
        %v1354 = vld [vmem:[#allocation9 + $0x39c] sm:$0xff]
        %v1355 = vld [vmem:[#allocation9 + $0x3a4] sm:$0xff]
        %v1356 = vld [vmem:[#allocation9 + $0x3ac] sm:$0xff]
        %v1357 = vld [vmem:[#allocation9 + $0x3b4] sm:$0xff]
        %v1358 = vld [vmem:[#allocation9 + $0x3bc] sm:$0xff]
        %v1359 = vld [vmem:[#allocation9 + $0x3c4] sm:$0xf]
        %v1360 = vld [vmem:[#allocation9 + $0x3c8] sm:$0xff]
        %v1361 = vld [vmem:[#allocation9 + $0x3d0] sm:$0xff]
        %v1362 = vld [vmem:[#allocation9 + $0x3d8] sm:$0xff]
        %v1363 = vld [vmem:[#allocation9 + $0x3e0] sm:$0xff]
        %v1364 = vld [vmem:[#allocation9 + $0x3e8] sm:$0xff]
        %v1365 = vld [vmem:[#allocation9 + $0x3f0] sm:$0xf]
        %v1366 = vld [vmem:[#allocation9 + $0x3f4] sm:$0xff]
        %v1367 = vld [vmem:[#allocation9 + $0x3fc] sm:$0xff]
        %v1368 = vld [vmem:[#allocation9 + $0x404] sm:$0xff]
        %v1369 = vld [vmem:[#allocation9 + $0x40c] sm:$0xff]
        %v1370 = vld [vmem:[#allocation9 + $0x414] sm:$0xff]
        %v1371 = vld [vmem:[#allocation9 + $0x41c] sm:$0xf]
        %v1372 = vld [vmem:[#allocation9 + $0x420] sm:$0xff]
        %v1373 = vld [vmem:[#allocation9 + $0x428] sm:$0xff]
        %v1374 = vld [vmem:[#allocation9 + $0x430] sm:$0xff]
        %v1375 = vld [vmem:[#allocation9 + $0x438] sm:$0xff]
        %v1376 = vld [vmem:[#allocation9 + $0x440] sm:$0xff]
        %v1377 = vld [vmem:[#allocation9 + $0x448] sm:$0xf]
        %v1378 = vld [vmem:[#allocation9 + $0x44c] sm:$0xff]
        %v1379 = vld [vmem:[#allocation9 + $0x454] sm:$0xff]
        %v1380 = vld [vmem:[#allocation9 + $0x45c] sm:$0xff]
        %v1381 = vld [vmem:[#allocation9 + $0x464] sm:$0xff]
        %v1382 = vld [vmem:[#allocation9 + $0x46c] sm:$0xff]
        %v1383 = vld [vmem:[#allocation9 + $0x474] sm:$0xf]
        %v1384 = vld [vmem:[#allocation9 + $0x478] sm:$0xff]
        %v1385 = vld [vmem:[#allocation9 + $0x480] sm:$0xff]
        %v1386 = vld [vmem:[#allocation9 + $0x488] sm:$0xff]
        %v1387 = vld [vmem:[#allocation9 + $0x490] sm:$0xff]
        %v1388 = vld [vmem:[#allocation9 + $0x498] sm:$0xff]
        %v1389 = vld [vmem:[#allocation9 + $0x4a0] sm:$0xf]
        %v1390 = vld [vmem:[#allocation9 + $0x4a4] sm:$0xff]
        %v1391 = vld [vmem:[#allocation9 + $0x4ac] sm:$0xff]
        %v1392 = vld [vmem:[#allocation9 + $0x4b4] sm:$0xff]
        %v1393 = vld [vmem:[#allocation9 + $0x4bc] sm:$0xff]
        %v1394 = vld [vmem:[#allocation9 + $0x4c4] sm:$0xff]
        %v1395 = vld [vmem:[#allocation9 + $0x4cc] sm:$0xf]
        %v1396 = vld [vmem:[#allocation9 + $0x4d0] sm:$0xff]
        %v1397 = vld [vmem:[#allocation9 + $0x4d8] sm:$0xff]
        %v1398 = vld [vmem:[#allocation9 + $0x4e0] sm:$0xff]
        %v1399 = vld [vmem:[#allocation9 + $0x4e8] sm:$0xff]
        %v1400 = vld [vmem:[#allocation9 + $0x4f0] sm:$0xff]
        %v1401 = vld [vmem:[#allocation9 + $0x4f8] sm:$0xf]
        %v1402 = vld [vmem:[#allocation9 + $0x4fc] sm:$0xff]
        %v1403 = vld [vmem:[#allocation9 + $0x504] sm:$0xff]
        %v1404 = vld [vmem:[#allocation9 + $0x50c] sm:$0xff]
        %v1405 = vld [vmem:[#allocation9 + $0x514] sm:$0xff]
        %v1406 = vld [vmem:[#allocation9 + $0x51c] sm:$0xff]
        %v1407 = vld [vmem:[#allocation9 + $0x524] sm:$0xf]
        %v1408 = vld [vmem:[#allocation9 + $0x528] sm:$0xff]
        %v1409 = vld [vmem:[#allocation9 + $0x530] sm:$0xff]
        %v1410 = vld [vmem:[#allocation9 + $0x538] sm:$0xff]
        %v1411 = vld [vmem:[#allocation9 + $0x540] sm:$0xff]
        %v1412 = vld [vmem:[#allocation9 + $0x548] sm:$0xff]
        %v1413 = vld [vmem:[#allocation9 + $0x550] sm:$0xf]
        %v1414 = vld [vmem:[#allocation9 + $0x554] sm:$0xff]
        %v1415 = vld [vmem:[#allocation9 + $0x55c] sm:$0xff]
        %v1416 = vld [vmem:[#allocation9 + $0x564] sm:$0xff]
        %v1417 = vld [vmem:[#allocation9 + $0x56c] sm:$0xff]
        %v1418 = vld [vmem:[#allocation9 + $0x574] sm:$0xff]
        %v1419 = vld [vmem:[#allocation9 + $0x57c] sm:$0xf]
        %v1420 = vld [vmem:[#allocation9 + $0x580] sm:$0xff]
        %v1421 = vld [vmem:[#allocation9 + $0x588] sm:$0xff]
        %v1422 = vld [vmem:[#allocation9 + $0x590] sm:$0xff]
        %v1423 = vld [vmem:[#allocation9 + $0x598] sm:$0xff]
        %v1424 = vld [vmem:[#allocation9 + $0x5a0] sm:$0xff]
        %v1425 = vld [vmem:[#allocation9 + $0x5a8] sm:$0xf]
        %v1426 = vld [vmem:[#allocation9 + $0x5ac] sm:$0xff]
        %v1427 = vld [vmem:[#allocation9 + $0x5b4] sm:$0xff]
        %v1428 = vld [vmem:[#allocation9 + $0x5bc] sm:$0xff]
        %v1429 = vld [vmem:[#allocation9 + $0x5c4] sm:$0xff]
        %v1430 = vld [vmem:[#allocation9 + $0x5cc] sm:$0xff]
        %v1431 = vld [vmem:[#allocation9 + $0x5d4] sm:$0xf]
        %v1432 = vld [vmem:[#allocation9 + $0x5d8] sm:$0xff]
        %v1433 = vld [vmem:[#allocation9 + $0x5e0] sm:$0xff]
        %v1434 = vld [vmem:[#allocation9 + $0x5e8] sm:$0xff]
        %v1435 = vld [vmem:[#allocation9 + $0x5f0] sm:$0xff]
        %v1436 = vld [vmem:[#allocation9 + $0x5f8] sm:$0xff]
        %v1437 = vld [vmem:[#allocation9 + $0x600] sm:$0xf]
        %v1438 = vld [vmem:[#allocation9 + $0x604] sm:$0xff]
        %v1439 = vld [vmem:[#allocation9 + $0x60c] sm:$0xff]
        %v1440 = vld [vmem:[#allocation9 + $0x614] sm:$0xff]
        %v1441 = vld [vmem:[#allocation9 + $0x61c] sm:$0xff]
        %v1442 = vld [vmem:[#allocation9 + $0x624] sm:$0xff]
        %v1443 = vld [vmem:[#allocation9 + $0x62c] sm:$0xf]
        %v1444 = vld [vmem:[#allocation9 + $0x630] sm:$0xff]
        %v1445 = vld [vmem:[#allocation9 + $0x638] sm:$0xff]
        %v1446 = vld [vmem:[#allocation9 + $0x640] sm:$0xff]
        %v1447 = vld [vmem:[#allocation9 + $0x648] sm:$0xff]
        %v1448 = vld [vmem:[#allocation9 + $0x650] sm:$0xff]
        %v1449 = vld [vmem:[#allocation9 + $0x658] sm:$0xf]
        %v1450 = vld [vmem:[#allocation9 + $0x65c] sm:$0xff]
        %v1451 = vld [vmem:[#allocation9 + $0x664] sm:$0xff]
        %v1452 = vld [vmem:[#allocation9 + $0x66c] sm:$0xff]
        %v1453 = vld [vmem:[#allocation9 + $0x674] sm:$0xff]
        %v1454 = vld [vmem:[#allocation9 + $0x67c] sm:$0xff]
        %v1455 = vld [vmem:[#allocation9 + $0x684] sm:$0xf]
        %v1456 = vld [vmem:[#allocation9 + $0x688] sm:$0xff]
        %v1457 = vld [vmem:[#allocation9 + $0x690] sm:$0xff]
        %v1458 = vld [vmem:[#allocation9 + $0x698] sm:$0xff]
        %v1459 = vld [vmem:[#allocation9 + $0x6a0] sm:$0xff]
        %v1460 = vld [vmem:[#allocation9 + $0x6a8] sm:$0xff]
        %v1461 = vld [vmem:[#allocation9 + $0x6b0] sm:$0xf]
        %v1462 = vld [vmem:[#allocation9 + $0x6b4] sm:$0xff]
        %v1463 = vld [vmem:[#allocation9 + $0x6bc] sm:$0xff]
        %v1464 = vld [vmem:[#allocation9 + $0x6c4] sm:$0xff]
        %v1465 = vld [vmem:[#allocation9 + $0x6cc] sm:$0xff]
        %v1466 = vld [vmem:[#allocation9 + $0x6d4] sm:$0xff]
        %v1467 = vld [vmem:[#allocation9 + $0x6dc] sm:$0xf]
        %v1468 = vld [vmem:[#allocation9 + $0x6e0] sm:$0xff]
        %v1469 = vld [vmem:[#allocation9 + $0x6e8] sm:$0xff]
        %v1470 = vld [vmem:[#allocation9 + $0x6f0] sm:$0xff]
        %v1471 = vld [vmem:[#allocation9 + $0x6f8] sm:$0xff]
        %v1472 = vld [vmem:[#allocation9 + $0x700] sm:$0xff]
        %v1473 = vld [vmem:[#allocation9 + $0x708] sm:$0xf]
        %v1474 = vld [vmem:[#allocation9 + $0x70c] sm:$0xff]
        %v1475 = vld [vmem:[#allocation9 + $0x714] sm:$0xff]
        %v1476 = vld [vmem:[#allocation9 + $0x71c] sm:$0xff]
        %v1477 = vld [vmem:[#allocation9 + $0x724] sm:$0xff]
        %v1478 = vld [vmem:[#allocation9 + $0x72c] sm:$0xff]
        %v1479 = vld [vmem:[#allocation9 + $0x734] sm:$0xf]
        %v1480 = vld [vmem:[#allocation9 + $0x738] sm:$0xff]
        %v1481 = vld [vmem:[#allocation9 + $0x740] sm:$0xff]
        %v1482 = vld [vmem:[#allocation9 + $0x748] sm:$0xff]
        %v1483 = vld [vmem:[#allocation9 + $0x750] sm:$0xff]
        %v1484 = vld [vmem:[#allocation9 + $0x758] sm:$0xff]
        %v1485 = vld [vmem:[#allocation9 + $0x760] sm:$0xf]
        %v1486 = vld [vmem:[#allocation9 + $0x764] sm:$0xff]
        %v1487 = vld [vmem:[#allocation9 + $0x76c] sm:$0xff]
        %v1488 = vld [vmem:[#allocation9 + $0x774] sm:$0xff]
        %v1489 = vld [vmem:[#allocation9 + $0x77c] sm:$0xff]
        %v1490 = vld [vmem:[#allocation9 + $0x784] sm:$0xff]
        %v1491 = vld [vmem:[#allocation9 + $0x78c] sm:$0xf]
        %v1492 = vld [vmem:[#allocation9 + $0x790] sm:$0xff]
        %v1493 = vld [vmem:[#allocation9 + $0x798] sm:$0xff]
        %v1494 = vld [vmem:[#allocation9 + $0x7a0] sm:$0xff]
        %v1495 = vld [vmem:[#allocation9 + $0x7a8] sm:$0xff]
        %v1496 = vld [vmem:[#allocation9 + $0x7b0] sm:$0xff]
        %v1497 = vld [vmem:[#allocation9 + $0x7b8] sm:$0xf]
        %v1498 = vld [vmem:[#allocation9 + $0x7bc] sm:$0xff]
        %v1499 = vld [vmem:[#allocation9 + $0x7c4] sm:$0xff]
        %v1500 = vld [vmem:[#allocation9 + $0x7cc] sm:$0xff]
        %v1501 = vld [vmem:[#allocation9 + $0x7d4] sm:$0xff]
        %v1502 = vld [vmem:[#allocation9 + $0x7dc] sm:$0xff]
        %v1503 = vld [vmem:[#allocation9 + $0x7e4] sm:$0xf]
        %v1504 = vld [vmem:[#allocation9 + $0x7e8] sm:$0xff]
        %v1505 = vld [vmem:[#allocation9 + $0x7f0] sm:$0xff]
        %v1506 = vld [vmem:[#allocation9 + $0x7f8] sm:$0xff]
        %v1507 = vld [vmem:[#allocation9 + $0x800] sm:$0xff]
        %v1508 = vld [vmem:[#allocation9 + $0x808] sm:$0xff]
        %v1509 = vld [vmem:[#allocation9 + $0x810] sm:$0xf]
        %v1510 = vld [vmem:[#allocation9 + $0x814] sm:$0xff]
        %v1511 = vld [vmem:[#allocation9 + $0x81c] sm:$0xff]
        %v1512 = vld [vmem:[#allocation9 + $0x824] sm:$0xff]
        %v1513 = vld [vmem:[#allocation9 + $0x82c] sm:$0xff]
        %v1514 = vld [vmem:[#allocation9 + $0x834] sm:$0xff]
        %v1515 = vld [vmem:[#allocation9 + $0x83c] sm:$0xf]
        %v1516 = vunpack.c.l.bf16 %v1228
        %v1517 = vunpack.c.h.bf16 %v1228
        %v1518 = vunpack.c.l.bf16 %v1229
        %v1519 = vunpack.c.h.bf16 %v1229
        %v1520 = vunpack.c.l.bf16 %v1230
        %v1521 = vunpack.c.h.bf16 %v1230
        %v1522 = vunpack.c.l.bf16 %v1231
        %v1523 = vunpack.c.h.bf16 %v1231
        %v1524 = vunpack.c.l.bf16 %v1232
        %v1525 = vunpack.c.h.bf16 %v1232
        %v1526 = vunpack.c.l.bf16 %v1233
        %v1527 = vunpack.c.l.bf16 %v1234
        %v1528 = vunpack.c.h.bf16 %v1234
        %v1529 = vunpack.c.l.bf16 %v1235
        %v1530 = vunpack.c.h.bf16 %v1235
        %v1531 = vunpack.c.l.bf16 %v1236
        %v1532 = vunpack.c.h.bf16 %v1236
        %v1533 = vunpack.c.l.bf16 %v1237
        %v1534 = vunpack.c.h.bf16 %v1237
        %v1535 = vunpack.c.l.bf16 %v1238
        %v1536 = vunpack.c.h.bf16 %v1238
        %v1537 = vunpack.c.l.bf16 %v1239
        %v1538 = vunpack.c.l.bf16 %v1240
        %v1539 = vunpack.c.h.bf16 %v1240
        %v1540 = vunpack.c.l.bf16 %v1241
        %v1541 = vunpack.c.h.bf16 %v1241
        %v1542 = vunpack.c.l.bf16 %v1242
        %v1543 = vunpack.c.h.bf16 %v1242
        %v1544 = vunpack.c.l.bf16 %v1243
        %v1545 = vunpack.c.h.bf16 %v1243
        %v1546 = vunpack.c.l.bf16 %v1244
        %v1547 = vunpack.c.h.bf16 %v1244
        %v1548 = vunpack.c.l.bf16 %v1245
        %v1549 = vunpack.c.l.bf16 %v1246
        %v1550 = vunpack.c.h.bf16 %v1246
        %v1551 = vunpack.c.l.bf16 %v1247
        %v1552 = vunpack.c.h.bf16 %v1247
        %v1553 = vunpack.c.l.bf16 %v1248
        %v1554 = vunpack.c.h.bf16 %v1248
        %v1555 = vunpack.c.l.bf16 %v1249
        %v1556 = vunpack.c.h.bf16 %v1249
        %v1557 = vunpack.c.l.bf16 %v1250
        %v1558 = vunpack.c.h.bf16 %v1250
        %v1559 = vunpack.c.l.bf16 %v1251
        %v1560 = vunpack.c.l.bf16 %v1252
        %v1561 = vunpack.c.h.bf16 %v1252
        %v1562 = vunpack.c.l.bf16 %v1253
        %v1563 = vunpack.c.h.bf16 %v1253
        %v1564 = vunpack.c.l.bf16 %v1254
        %v1565 = vunpack.c.h.bf16 %v1254
        %v1566 = vunpack.c.l.bf16 %v1255
        %v1567 = vunpack.c.h.bf16 %v1255
        %v1568 = vunpack.c.l.bf16 %v1256
        %v1569 = vunpack.c.h.bf16 %v1256
        %v1570 = vunpack.c.l.bf16 %v1257
        %v1571 = vunpack.c.l.bf16 %v1258
        %v1572 = vunpack.c.h.bf16 %v1258
        %v1573 = vunpack.c.l.bf16 %v1259
        %v1574 = vunpack.c.h.bf16 %v1259
        %v1575 = vunpack.c.l.bf16 %v1260
        %v1576 = vunpack.c.h.bf16 %v1260
        %v1577 = vunpack.c.l.bf16 %v1261
        %v1578 = vunpack.c.h.bf16 %v1261
        %v1579 = vunpack.c.l.bf16 %v1262
        %v1580 = vunpack.c.h.bf16 %v1262
        %v1581 = vunpack.c.l.bf16 %v1263
        %v1582 = vunpack.c.l.bf16 %v1264
        %v1583 = vunpack.c.h.bf16 %v1264
        %v1584 = vunpack.c.l.bf16 %v1265
        %v1585 = vunpack.c.h.bf16 %v1265
        %v1586 = vunpack.c.l.bf16 %v1266
        %v1587 = vunpack.c.h.bf16 %v1266
        %v1588 = vunpack.c.l.bf16 %v1267
        %v1589 = vunpack.c.h.bf16 %v1267
        %v1590 = vunpack.c.l.bf16 %v1268
        %v1591 = vunpack.c.h.bf16 %v1268
        %v1592 = vunpack.c.l.bf16 %v1269
        %v1593 = vunpack.c.l.bf16 %v1270
        %v1594 = vunpack.c.h.bf16 %v1270
        %v1595 = vunpack.c.l.bf16 %v1271
        %v1596 = vunpack.c.h.bf16 %v1271
        %v1597 = vunpack.c.l.bf16 %v1272
        %v1598 = vunpack.c.h.bf16 %v1272
        %v1599 = vunpack.c.l.bf16 %v1273
        %v1600 = vunpack.c.h.bf16 %v1273
        %v1601 = vunpack.c.l.bf16 %v1274
        %v1602 = vunpack.c.h.bf16 %v1274
        %v1603 = vunpack.c.l.bf16 %v1275
        %v1604 = vunpack.c.l.bf16 %v1276
        %v1605 = vunpack.c.h.bf16 %v1276
        %v1606 = vunpack.c.l.bf16 %v1277
        %v1607 = vunpack.c.h.bf16 %v1277
        %v1608 = vunpack.c.l.bf16 %v1278
        %v1609 = vunpack.c.h.bf16 %v1278
        %v1610 = vunpack.c.l.bf16 %v1279
        %v1611 = vunpack.c.h.bf16 %v1279
        %v1612 = vunpack.c.l.bf16 %v1280
        %v1613 = vunpack.c.h.bf16 %v1280
        %v1614 = vunpack.c.l.bf16 %v1281
        %v1615 = vunpack.c.l.bf16 %v1282
        %v1616 = vunpack.c.h.bf16 %v1282
        %v1617 = vunpack.c.l.bf16 %v1283
        %v1618 = vunpack.c.h.bf16 %v1283
        %v1619 = vunpack.c.l.bf16 %v1284
        %v1620 = vunpack.c.h.bf16 %v1284
        %v1621 = vunpack.c.l.bf16 %v1285
        %v1622 = vunpack.c.h.bf16 %v1285
        %v1623 = vunpack.c.l.bf16 %v1286
        %v1624 = vunpack.c.h.bf16 %v1286
        %v1625 = vunpack.c.l.bf16 %v1287
        %v1626 = vunpack.c.l.bf16 %v1288
        %v1627 = vunpack.c.h.bf16 %v1288
        %v1628 = vunpack.c.l.bf16 %v1289
        %v1629 = vunpack.c.h.bf16 %v1289
        %v1630 = vunpack.c.l.bf16 %v1290
        %v1631 = vunpack.c.h.bf16 %v1290
        %v1632 = vunpack.c.l.bf16 %v1291
        %v1633 = vunpack.c.h.bf16 %v1291
        %v1634 = vunpack.c.l.bf16 %v1292
        %v1635 = vunpack.c.h.bf16 %v1292
        %v1636 = vunpack.c.l.bf16 %v1293
        %v1637 = vunpack.c.l.bf16 %v1294
        %v1638 = vunpack.c.h.bf16 %v1294
        %v1639 = vunpack.c.l.bf16 %v1295
        %v1640 = vunpack.c.h.bf16 %v1295
        %v1641 = vunpack.c.l.bf16 %v1296
        %v1642 = vunpack.c.h.bf16 %v1296
        %v1643 = vunpack.c.l.bf16 %v1297
        %v1644 = vunpack.c.h.bf16 %v1297
        %v1645 = vunpack.c.l.bf16 %v1298
        %v1646 = vunpack.c.h.bf16 %v1298
        %v1647 = vunpack.c.l.bf16 %v1299
        %v1648 = vunpack.c.l.bf16 %v1300
        %v1649 = vunpack.c.h.bf16 %v1300
        %v1650 = vunpack.c.l.bf16 %v1301
        %v1651 = vunpack.c.h.bf16 %v1301
        %v1652 = vunpack.c.l.bf16 %v1302
        %v1653 = vunpack.c.h.bf16 %v1302
        %v1654 = vunpack.c.l.bf16 %v1303
        %v1655 = vunpack.c.h.bf16 %v1303
        %v1656 = vunpack.c.l.bf16 %v1304
        %v1657 = vunpack.c.h.bf16 %v1304
        %v1658 = vunpack.c.l.bf16 %v1305
        %v1659 = vunpack.c.l.bf16 %v1306
        %v1660 = vunpack.c.h.bf16 %v1306
        %v1661 = vunpack.c.l.bf16 %v1307
        %v1662 = vunpack.c.h.bf16 %v1307
        %v1663 = vunpack.c.l.bf16 %v1308
        %v1664 = vunpack.c.h.bf16 %v1308
        %v1665 = vunpack.c.l.bf16 %v1309
        %v1666 = vunpack.c.h.bf16 %v1309
        %v1667 = vunpack.c.l.bf16 %v1310
        %v1668 = vunpack.c.h.bf16 %v1310
        %v1669 = vunpack.c.l.bf16 %v1311
        %v1670 = vunpack.c.l.bf16 %v1312
        %v1671 = vunpack.c.h.bf16 %v1312
        %v1672 = vunpack.c.l.bf16 %v1313
        %v1673 = vunpack.c.h.bf16 %v1313
        %v1674 = vunpack.c.l.bf16 %v1314
        %v1675 = vunpack.c.h.bf16 %v1314
        %v1676 = vunpack.c.l.bf16 %v1315
        %v1677 = vunpack.c.h.bf16 %v1315
        %v1678 = vunpack.c.l.bf16 %v1316
        %v1679 = vunpack.c.h.bf16 %v1316
        %v1680 = vunpack.c.l.bf16 %v1317
        %v1681 = vunpack.c.l.bf16 %v1318
        %v1682 = vunpack.c.h.bf16 %v1318
        %v1683 = vunpack.c.l.bf16 %v1319
        %v1684 = vunpack.c.h.bf16 %v1319
        %v1685 = vunpack.c.l.bf16 %v1320
        %v1686 = vunpack.c.h.bf16 %v1320
        %v1687 = vunpack.c.l.bf16 %v1321
        %v1688 = vunpack.c.h.bf16 %v1321
        %v1689 = vunpack.c.l.bf16 %v1322
        %v1690 = vunpack.c.h.bf16 %v1322
        %v1691 = vunpack.c.l.bf16 %v1323
        %v1692 = vunpack.c.l.bf16 %v1324
        %v1693 = vunpack.c.h.bf16 %v1324
        %v1694 = vunpack.c.l.bf16 %v1325
        %v1695 = vunpack.c.h.bf16 %v1325
        %v1696 = vunpack.c.l.bf16 %v1326
        %v1697 = vunpack.c.h.bf16 %v1326
        %v1698 = vunpack.c.l.bf16 %v1327
        %v1699 = vunpack.c.h.bf16 %v1327
        %v1700 = vunpack.c.l.bf16 %v1328
        %v1701 = vunpack.c.h.bf16 %v1328
        %v1702 = vunpack.c.l.bf16 %v1329
        %v1703 = vunpack.c.l.bf16 %v1330
        %v1704 = vunpack.c.h.bf16 %v1330
        %v1705 = vunpack.c.l.bf16 %v1331
        %v1706 = vunpack.c.h.bf16 %v1331
        %v1707 = vunpack.c.l.bf16 %v1332
        %v1708 = vunpack.c.h.bf16 %v1332
        %v1709 = vunpack.c.l.bf16 %v1333
        %v1710 = vunpack.c.h.bf16 %v1333
        %v1711 = vunpack.c.l.bf16 %v1334
        %v1712 = vunpack.c.h.bf16 %v1334
        %v1713 = vunpack.c.l.bf16 %v1335
        %v1714 = vunpack.c.l.bf16 %v1336
        %v1715 = vunpack.c.h.bf16 %v1336
        %v1716 = vunpack.c.l.bf16 %v1337
        %v1717 = vunpack.c.h.bf16 %v1337
        %v1718 = vunpack.c.l.bf16 %v1338
        %v1719 = vunpack.c.h.bf16 %v1338
        %v1720 = vunpack.c.l.bf16 %v1339
        %v1721 = vunpack.c.h.bf16 %v1339
        %v1722 = vunpack.c.l.bf16 %v1340
        %v1723 = vunpack.c.h.bf16 %v1340
        %v1724 = vunpack.c.l.bf16 %v1341
        %v1725 = vunpack.c.l.bf16 %v1342
        %v1726 = vunpack.c.h.bf16 %v1342
        %v1727 = vunpack.c.l.bf16 %v1343
        %v1728 = vunpack.c.h.bf16 %v1343
        %v1729 = vunpack.c.l.bf16 %v1344
        %v1730 = vunpack.c.h.bf16 %v1344
        %v1731 = vunpack.c.l.bf16 %v1345
        %v1732 = vunpack.c.h.bf16 %v1345
        %v1733 = vunpack.c.l.bf16 %v1346
        %v1734 = vunpack.c.h.bf16 %v1346
        %v1735 = vunpack.c.l.bf16 %v1347
        %v1736 = vunpack.c.l.bf16 %v1348
        %v1737 = vunpack.c.h.bf16 %v1348
        %v1738 = vunpack.c.l.bf16 %v1349
        %v1739 = vunpack.c.h.bf16 %v1349
        %v1740 = vunpack.c.l.bf16 %v1350
        %v1741 = vunpack.c.h.bf16 %v1350
        %v1742 = vunpack.c.l.bf16 %v1351
        %v1743 = vunpack.c.h.bf16 %v1351
        %v1744 = vunpack.c.l.bf16 %v1352
        %v1745 = vunpack.c.h.bf16 %v1352
        %v1746 = vunpack.c.l.bf16 %v1353
        %v1747 = vunpack.c.l.bf16 %v1354
        %v1748 = vunpack.c.h.bf16 %v1354
        %v1749 = vunpack.c.l.bf16 %v1355
        %v1750 = vunpack.c.h.bf16 %v1355
        %v1751 = vunpack.c.l.bf16 %v1356
        %v1752 = vunpack.c.h.bf16 %v1356
        %v1753 = vunpack.c.l.bf16 %v1357
        %v1754 = vunpack.c.h.bf16 %v1357
        %v1755 = vunpack.c.l.bf16 %v1358
        %v1756 = vunpack.c.h.bf16 %v1358
        %v1757 = vunpack.c.l.bf16 %v1359
        %v1758 = vunpack.c.l.bf16 %v1360
        %v1759 = vunpack.c.h.bf16 %v1360
        %v1760 = vunpack.c.l.bf16 %v1361
        %v1761 = vunpack.c.h.bf16 %v1361
        %v1762 = vunpack.c.l.bf16 %v1362
        %v1763 = vunpack.c.h.bf16 %v1362
        %v1764 = vunpack.c.l.bf16 %v1363
        %v1765 = vunpack.c.h.bf16 %v1363
        %v1766 = vunpack.c.l.bf16 %v1364
        %v1767 = vunpack.c.h.bf16 %v1364
        %v1768 = vunpack.c.l.bf16 %v1365
        %v1769 = vunpack.c.l.bf16 %v1366
        %v1770 = vunpack.c.h.bf16 %v1366
        %v1771 = vunpack.c.l.bf16 %v1367
        %v1772 = vunpack.c.h.bf16 %v1367
        %v1773 = vunpack.c.l.bf16 %v1368
        %v1774 = vunpack.c.h.bf16 %v1368
        %v1775 = vunpack.c.l.bf16 %v1369
        %v1776 = vunpack.c.h.bf16 %v1369
        %v1777 = vunpack.c.l.bf16 %v1370
        %v1778 = vunpack.c.h.bf16 %v1370
        %v1779 = vunpack.c.l.bf16 %v1371
        %v1780 = vunpack.c.l.bf16 %v1372
        %v1781 = vunpack.c.h.bf16 %v1372
        %v1782 = vunpack.c.l.bf16 %v1373
        %v1783 = vunpack.c.h.bf16 %v1373
        %v1784 = vunpack.c.l.bf16 %v1374
        %v1785 = vunpack.c.h.bf16 %v1374
        %v1786 = vunpack.c.l.bf16 %v1375
        %v1787 = vunpack.c.h.bf16 %v1375
        %v1788 = vunpack.c.l.bf16 %v1376
        %v1789 = vunpack.c.h.bf16 %v1376
        %v1790 = vunpack.c.l.bf16 %v1377
        %v1791 = vunpack.c.l.bf16 %v1378
        %v1792 = vunpack.c.h.bf16 %v1378
        %v1793 = vunpack.c.l.bf16 %v1379
        %v1794 = vunpack.c.h.bf16 %v1379
        %v1795 = vunpack.c.l.bf16 %v1380
        %v1796 = vunpack.c.h.bf16 %v1380
        %v1797 = vunpack.c.l.bf16 %v1381
        %v1798 = vunpack.c.h.bf16 %v1381
        %v1799 = vunpack.c.l.bf16 %v1382
        %v1800 = vunpack.c.h.bf16 %v1382
        %v1801 = vunpack.c.l.bf16 %v1383
        %v1802 = vunpack.c.l.bf16 %v1384
        %v1803 = vunpack.c.h.bf16 %v1384
        %v1804 = vunpack.c.l.bf16 %v1385
        %v1805 = vunpack.c.h.bf16 %v1385
        %v1806 = vunpack.c.l.bf16 %v1386
        %v1807 = vunpack.c.h.bf16 %v1386
        %v1808 = vunpack.c.l.bf16 %v1387
        %v1809 = vunpack.c.h.bf16 %v1387
        %v1810 = vunpack.c.l.bf16 %v1388
        %v1811 = vunpack.c.h.bf16 %v1388
        %v1812 = vunpack.c.l.bf16 %v1389
        %v1813 = vunpack.c.l.bf16 %v1390
        %v1814 = vunpack.c.h.bf16 %v1390
        %v1815 = vunpack.c.l.bf16 %v1391
        %v1816 = vunpack.c.h.bf16 %v1391
        %v1817 = vunpack.c.l.bf16 %v1392
        %v1818 = vunpack.c.h.bf16 %v1392
        %v1819 = vunpack.c.l.bf16 %v1393
        %v1820 = vunpack.c.h.bf16 %v1393
        %v1821 = vunpack.c.l.bf16 %v1394
        %v1822 = vunpack.c.h.bf16 %v1394
        %v1823 = vunpack.c.l.bf16 %v1395
        %v1824 = vunpack.c.l.bf16 %v1396
        %v1825 = vunpack.c.h.bf16 %v1396
        %v1826 = vunpack.c.l.bf16 %v1397
        %v1827 = vunpack.c.h.bf16 %v1397
        %v1828 = vunpack.c.l.bf16 %v1398
        %v1829 = vunpack.c.h.bf16 %v1398
        %v1830 = vunpack.c.l.bf16 %v1399
        %v1831 = vunpack.c.h.bf16 %v1399
        %v1832 = vunpack.c.l.bf16 %v1400
        %v1833 = vunpack.c.h.bf16 %v1400
        %v1834 = vunpack.c.l.bf16 %v1401
        %v1835 = vunpack.c.l.bf16 %v1402
        %v1836 = vunpack.c.h.bf16 %v1402
        %v1837 = vunpack.c.l.bf16 %v1403
        %v1838 = vunpack.c.h.bf16 %v1403
        %v1839 = vunpack.c.l.bf16 %v1404
        %v1840 = vunpack.c.h.bf16 %v1404
        %v1841 = vunpack.c.l.bf16 %v1405
        %v1842 = vunpack.c.h.bf16 %v1405
        %v1843 = vunpack.c.l.bf16 %v1406
        %v1844 = vunpack.c.h.bf16 %v1406
        %v1845 = vunpack.c.l.bf16 %v1407
        %v1846 = vunpack.c.l.bf16 %v1408
        %v1847 = vunpack.c.h.bf16 %v1408
        %v1848 = vunpack.c.l.bf16 %v1409
        %v1849 = vunpack.c.h.bf16 %v1409
        %v1850 = vunpack.c.l.bf16 %v1410
        %v1851 = vunpack.c.h.bf16 %v1410
        %v1852 = vunpack.c.l.bf16 %v1411
        %v1853 = vunpack.c.h.bf16 %v1411
        %v1854 = vunpack.c.l.bf16 %v1412
        %v1855 = vunpack.c.h.bf16 %v1412
        %v1856 = vunpack.c.l.bf16 %v1413
        %v1857 = vunpack.c.l.bf16 %v1414
        %v1858 = vunpack.c.h.bf16 %v1414
        %v1859 = vunpack.c.l.bf16 %v1415
        %v1860 = vunpack.c.h.bf16 %v1415
        %v1861 = vunpack.c.l.bf16 %v1416
        %v1862 = vunpack.c.h.bf16 %v1416
        %v1863 = vunpack.c.l.bf16 %v1417
        %v1864 = vunpack.c.h.bf16 %v1417
        %v1865 = vunpack.c.l.bf16 %v1418
        %v1866 = vunpack.c.h.bf16 %v1418
        %v1867 = vunpack.c.l.bf16 %v1419
        %v1868 = vunpack.c.l.bf16 %v1420
        %v1869 = vunpack.c.h.bf16 %v1420
        %v1870 = vunpack.c.l.bf16 %v1421
        %v1871 = vunpack.c.h.bf16 %v1421
        %v1872 = vunpack.c.l.bf16 %v1422
        %v1873 = vunpack.c.h.bf16 %v1422
        %v1874 = vunpack.c.l.bf16 %v1423
        %v1875 = vunpack.c.h.bf16 %v1423
        %v1876 = vunpack.c.l.bf16 %v1424
        %v1877 = vunpack.c.h.bf16 %v1424
        %v1878 = vunpack.c.l.bf16 %v1425
        %v1879 = vunpack.c.l.bf16 %v1426
        %v1880 = vunpack.c.h.bf16 %v1426
        %v1881 = vunpack.c.l.bf16 %v1427
        %v1882 = vunpack.c.h.bf16 %v1427
        %v1883 = vunpack.c.l.bf16 %v1428
        %v1884 = vunpack.c.h.bf16 %v1428
        %v1885 = vunpack.c.l.bf16 %v1429
        %v1886 = vunpack.c.h.bf16 %v1429
        %v1887 = vunpack.c.l.bf16 %v1430
        %v1888 = vunpack.c.h.bf16 %v1430
        %v1889 = vunpack.c.l.bf16 %v1431
        %v1890 = vunpack.c.l.bf16 %v1432
        %v1891 = vunpack.c.h.bf16 %v1432
        %v1892 = vunpack.c.l.bf16 %v1433
        %v1893 = vunpack.c.h.bf16 %v1433
        %v1894 = vunpack.c.l.bf16 %v1434
        %v1895 = vunpack.c.h.bf16 %v1434
        %v1896 = vunpack.c.l.bf16 %v1435
        %v1897 = vunpack.c.h.bf16 %v1435
        %v1898 = vunpack.c.l.bf16 %v1436
        %v1899 = vunpack.c.h.bf16 %v1436
        %v1900 = vunpack.c.l.bf16 %v1437
        %v1901 = vunpack.c.l.bf16 %v1438
        %v1902 = vunpack.c.h.bf16 %v1438
        %v1903 = vunpack.c.l.bf16 %v1439
        %v1904 = vunpack.c.h.bf16 %v1439
        %v1905 = vunpack.c.l.bf16 %v1440
        %v1906 = vunpack.c.h.bf16 %v1440
        %v1907 = vunpack.c.l.bf16 %v1441
        %v1908 = vunpack.c.h.bf16 %v1441
        %v1909 = vunpack.c.l.bf16 %v1442
        %v1910 = vunpack.c.h.bf16 %v1442
        %v1911 = vunpack.c.l.bf16 %v1443
        %v1912 = vunpack.c.l.bf16 %v1444
        %v1913 = vunpack.c.h.bf16 %v1444
        %v1914 = vunpack.c.l.bf16 %v1445
        %v1915 = vunpack.c.h.bf16 %v1445
        %v1916 = vunpack.c.l.bf16 %v1446
        %v1917 = vunpack.c.h.bf16 %v1446
        %v1918 = vunpack.c.l.bf16 %v1447
        %v1919 = vunpack.c.h.bf16 %v1447
        %v1920 = vunpack.c.l.bf16 %v1448
        %v1921 = vunpack.c.h.bf16 %v1448
        %v1922 = vunpack.c.l.bf16 %v1449
        %v1923 = vunpack.c.l.bf16 %v1450
        %v1924 = vunpack.c.h.bf16 %v1450
        %v1925 = vunpack.c.l.bf16 %v1451
        %v1926 = vunpack.c.h.bf16 %v1451
        %v1927 = vunpack.c.l.bf16 %v1452
        %v1928 = vunpack.c.h.bf16 %v1452
        %v1929 = vunpack.c.l.bf16 %v1453
        %v1930 = vunpack.c.h.bf16 %v1453
        %v1931 = vunpack.c.l.bf16 %v1454
        %v1932 = vunpack.c.h.bf16 %v1454
        %v1933 = vunpack.c.l.bf16 %v1455
        %v1934 = vunpack.c.l.bf16 %v1456
        %v1935 = vunpack.c.h.bf16 %v1456
        %v1936 = vunpack.c.l.bf16 %v1457
        %v1937 = vunpack.c.h.bf16 %v1457
        %v1938 = vunpack.c.l.bf16 %v1458
        %v1939 = vunpack.c.h.bf16 %v1458
        %v1940 = vunpack.c.l.bf16 %v1459
        %v1941 = vunpack.c.h.bf16 %v1459
        %v1942 = vunpack.c.l.bf16 %v1460
        %v1943 = vunpack.c.h.bf16 %v1460
        %v1944 = vunpack.c.l.bf16 %v1461
        %v1945 = vunpack.c.l.bf16 %v1462
        %v1946 = vunpack.c.h.bf16 %v1462
        %v1947 = vunpack.c.l.bf16 %v1463
        %v1948 = vunpack.c.h.bf16 %v1463
        %v1949 = vunpack.c.l.bf16 %v1464
        %v1950 = vunpack.c.h.bf16 %v1464
        %v1951 = vunpack.c.l.bf16 %v1465
        %v1952 = vunpack.c.h.bf16 %v1465
        %v1953 = vunpack.c.l.bf16 %v1466
        %v1954 = vunpack.c.h.bf16 %v1466
        %v1955 = vunpack.c.l.bf16 %v1467
        %v1956 = vunpack.c.l.bf16 %v1468
        %v1957 = vunpack.c.h.bf16 %v1468
        %v1958 = vunpack.c.l.bf16 %v1469
        %v1959 = vunpack.c.h.bf16 %v1469
        %v1960 = vunpack.c.l.bf16 %v1470
        %v1961 = vunpack.c.h.bf16 %v1470
        %v1962 = vunpack.c.l.bf16 %v1471
        %v1963 = vunpack.c.h.bf16 %v1471
        %v1964 = vunpack.c.l.bf16 %v1472
        %v1965 = vunpack.c.h.bf16 %v1472
        %v1966 = vunpack.c.l.bf16 %v1473
        %v1967 = vunpack.c.l.bf16 %v1474
        %v1968 = vunpack.c.h.bf16 %v1474
        %v1969 = vunpack.c.l.bf16 %v1475
        %v1970 = vunpack.c.h.bf16 %v1475
        %v1971 = vunpack.c.l.bf16 %v1476
        %v1972 = vunpack.c.h.bf16 %v1476
        %v1973 = vunpack.c.l.bf16 %v1477
        %v1974 = vunpack.c.h.bf16 %v1477
        %v1975 = vunpack.c.l.bf16 %v1478
        %v1976 = vunpack.c.h.bf16 %v1478
        %v1977 = vunpack.c.l.bf16 %v1479
        %v1978 = vunpack.c.l.bf16 %v1480
        %v1979 = vunpack.c.h.bf16 %v1480
        %v1980 = vunpack.c.l.bf16 %v1481
        %v1981 = vunpack.c.h.bf16 %v1481
        %v1982 = vunpack.c.l.bf16 %v1482
        %v1983 = vunpack.c.h.bf16 %v1482
        %v1984 = vunpack.c.l.bf16 %v1483
        %v1985 = vunpack.c.h.bf16 %v1483
        %v1986 = vunpack.c.l.bf16 %v1484
        %v1987 = vunpack.c.h.bf16 %v1484
        %v1988 = vunpack.c.l.bf16 %v1485
        %v1989 = vunpack.c.l.bf16 %v1486
        %v1990 = vunpack.c.h.bf16 %v1486
        %v1991 = vunpack.c.l.bf16 %v1487
        %v1992 = vunpack.c.h.bf16 %v1487
        %v1993 = vunpack.c.l.bf16 %v1488
        %v1994 = vunpack.c.h.bf16 %v1488
        %v1995 = vunpack.c.l.bf16 %v1489
        %v1996 = vunpack.c.h.bf16 %v1489
        %v1997 = vunpack.c.l.bf16 %v1490
        %v1998 = vunpack.c.h.bf16 %v1490
        %v1999 = vunpack.c.l.bf16 %v1491
        %v2000 = vunpack.c.l.bf16 %v1492
        %v2001 = vunpack.c.h.bf16 %v1492
        %v2002 = vunpack.c.l.bf16 %v1493
        %v2003 = vunpack.c.h.bf16 %v1493
        %v2004 = vunpack.c.l.bf16 %v1494
        %v2005 = vunpack.c.h.bf16 %v1494
        %v2006 = vunpack.c.l.bf16 %v1495
        %v2007 = vunpack.c.h.bf16 %v1495
        %v2008 = vunpack.c.l.bf16 %v1496
        %v2009 = vunpack.c.h.bf16 %v1496
        %v2010 = vunpack.c.l.bf16 %v1497
        %v2011 = vunpack.c.l.bf16 %v1498
        %v2012 = vunpack.c.h.bf16 %v1498
        %v2013 = vunpack.c.l.bf16 %v1499
        %v2014 = vunpack.c.h.bf16 %v1499
        %v2015 = vunpack.c.l.bf16 %v1500
        %v2016 = vunpack.c.h.bf16 %v1500
        %v2017 = vunpack.c.l.bf16 %v1501
        %v2018 = vunpack.c.h.bf16 %v1501
        %v2019 = vunpack.c.l.bf16 %v1502
        %v2020 = vunpack.c.h.bf16 %v1502
        %v2021 = vunpack.c.l.bf16 %v1503
        %v2022 = vunpack.c.l.bf16 %v1504
        %v2023 = vunpack.c.h.bf16 %v1504
        %v2024 = vunpack.c.l.bf16 %v1505
        %v2025 = vunpack.c.h.bf16 %v1505
        %v2026 = vunpack.c.l.bf16 %v1506
        %v2027 = vunpack.c.h.bf16 %v1506
        %v2028 = vunpack.c.l.bf16 %v1507
        %v2029 = vunpack.c.h.bf16 %v1507
        %v2030 = vunpack.c.l.bf16 %v1508
        %v2031 = vunpack.c.h.bf16 %v1508
        %v2032 = vunpack.c.l.bf16 %v1509
        %v2033 = vunpack.c.l.bf16 %v1510
        %v2034 = vunpack.c.h.bf16 %v1510
        %v2035 = vunpack.c.l.bf16 %v1511
        %v2036 = vunpack.c.h.bf16 %v1511
        %v2037 = vunpack.c.l.bf16 %v1512
        %v2038 = vunpack.c.h.bf16 %v1512
        %v2039 = vunpack.c.l.bf16 %v1513
        %v2040 = vunpack.c.h.bf16 %v1513
        %v2041 = vunpack.c.l.bf16 %v1514
        %v2042 = vunpack.c.h.bf16 %v1514
        %v2043 = vunpack.c.l.bf16 %v1515
        %2044 = vmatpush.msra.mxu0 %v1681
        %2045 = vmatpush.msra.mxu0 %v1670
        %2046 = vmatpush.msra.mxu0 %v1659
        %2047 = vmatpush.msra.mxu0 %v1648
        %2048 = vmatpush.msra.mxu0 %v1637
        %2049 = vmatpush.msra.mxu0 %v1626
        %2050 = vmatpush.msra.mxu0 %v1615
        %2051 = vmatpush.msra.mxu0 %v1604
        %2052 = vmatpush.msra.mxu0 %v1593
        %2053 = vmatpush.msra.mxu0 %v1582
        %2054 = vmatpush.msra.mxu0 %v1571
        %2055 = vmatpush.msra.mxu0 %v1560
        %2056 = vmatpush.msra.mxu0 %v1549
        %2057 = vmatpush.msra.mxu0 %v1538
        %2058 = vmatpush.msra.mxu0 %v1527
        %2059 = vmatpush.msra.mxu0 %v1516
        %2060 = vmatmul.f32.gmra.mxu0 %v1225
        %v2061 = vpop.f32.mrf.mxu0
        %v2062 = vadd.f32 0.0, %v2061
        %2063 = vdwg.mxu0
        %2064 = vmatpush.msra.mxu0 %v1857
        %2065 = vmatpush.msra.mxu0 %v1846
        %2066 = vmatpush.msra.mxu0 %v1835
        %2067 = vmatpush.msra.mxu0 %v1824
        %2068 = vmatpush.msra.mxu0 %v1813
        %2069 = vmatpush.msra.mxu0 %v1802
        %2070 = vmatpush.msra.mxu0 %v1791
        %2071 = vmatpush.msra.mxu0 %v1780
        %2072 = vmatpush.msra.mxu0 %v1769
        %2073 = vmatpush.msra.mxu0 %v1758
        %2074 = vmatpush.msra.mxu0 %v1747
        %2075 = vmatpush.msra.mxu0 %v1736
        %2076 = vmatpush.msra.mxu0 %v1725
        %2077 = vmatpush.msra.mxu0 %v1714
        %2078 = vmatpush.msra.mxu0 %v1703
        %2079 = vmatpush.msra.mxu0 %v1692
        %2080 = vmatmul.f32.gmra.mxu0 %v1226
        %v2081 = vpop.f32.mrf.mxu0
        %v2082 = vadd.f32 %v2062, %v2081
        %2083 = vdwg.mxu0
        %2084 = vmatpush.msra.mxu0 %v2033
        %2085 = vmatpush.msra.mxu0 %v2022
        %2086 = vmatpush.msra.mxu0 %v2011
        %2087 = vmatpush.msra.mxu0 %v2000
        %2088 = vmatpush.msra.mxu0 %v1989
        %2089 = vmatpush.msra.mxu0 %v1978
        %2090 = vmatpush.msra.mxu0 %v1967
        %2091 = vmatpush.msra.mxu0 %v1956
        %2092 = vmatpush.msra.mxu0 %v1945
        %2093 = vmatpush.msra.mxu0 %v1934
        %2094 = vmatpush.msra.mxu0 %v1923
        %2095 = vmatpush.msra.mxu0 %v1912
        %2096 = vmatpush.msra.mxu0 %v1901
        %2097 = vmatpush.msra.mxu0 %v1890
        %2098 = vmatpush.msra.mxu0 %v1879
        %2099 = vmatpush.msra.mxu0 %v1868
        %2100 = vmatmul.f32.gmra.mxu0 %v1227
        %v2101 = vpop.f32.mrf.mxu0
        %v2102 = vadd.f32 %v2082, %v2101
        %2103 = vdwg.mxu0
        %2104 = vmatpush.msra.mxu0 %v1682
        %2105 = vmatpush.msra.mxu0 %v1671
        %2106 = vmatpush.msra.mxu0 %v1660
        %2107 = vmatpush.msra.mxu0 %v1649
        %2108 = vmatpush.msra.mxu0 %v1638
        %2109 = vmatpush.msra.mxu0 %v1627
        %2110 = vmatpush.msra.mxu0 %v1616
        %2111 = vmatpush.msra.mxu0 %v1605
        %2112 = vmatpush.msra.mxu0 %v1594
        %2113 = vmatpush.msra.mxu0 %v1583
        %2114 = vmatpush.msra.mxu0 %v1572
        %2115 = vmatpush.msra.mxu0 %v1561
        %2116 = vmatpush.msra.mxu0 %v1550
        %2117 = vmatpush.msra.mxu0 %v1539
        %2118 = vmatpush.msra.mxu0 %v1528
        %2119 = vmatpush.msra.mxu0 %v1517
        %2120 = vmatmul.f32.gmra.mxu0 %v1225
        %v2121 = vpop.f32.mrf.mxu0
        %v2122 = vadd.f32 0.0, %v2121
        %2123 = vdwg.mxu0
        %2124 = vmatpush.msra.mxu0 %v1858
        %2125 = vmatpush.msra.mxu0 %v1847
        %2126 = vmatpush.msra.mxu0 %v1836
        %2127 = vmatpush.msra.mxu0 %v1825
        %2128 = vmatpush.msra.mxu0 %v1814
        %2129 = vmatpush.msra.mxu0 %v1803
        %2130 = vmatpush.msra.mxu0 %v1792
        %2131 = vmatpush.msra.mxu0 %v1781
        %2132 = vmatpush.msra.mxu0 %v1770
        %2133 = vmatpush.msra.mxu0 %v1759
        %2134 = vmatpush.msra.mxu0 %v1748
        %2135 = vmatpush.msra.mxu0 %v1737
        %2136 = vmatpush.msra.mxu0 %v1726
        %2137 = vmatpush.msra.mxu0 %v1715
        %2138 = vmatpush.msra.mxu0 %v1704
        %2139 = vmatpush.msra.mxu0 %v1693
        %2140 = vmatmul.f32.gmra.mxu0 %v1226
        %v2141 = vpop.f32.mrf.mxu0
        %v2142 = vadd.f32 %v2122, %v2141
        %2143 = vdwg.mxu0
        %2144 = vmatpush.msra.mxu0 %v2034
        %2145 = vmatpush.msra.mxu0 %v2023
        %2146 = vmatpush.msra.mxu0 %v2012
        %2147 = vmatpush.msra.mxu0 %v2001
        %2148 = vmatpush.msra.mxu0 %v1990
        %2149 = vmatpush.msra.mxu0 %v1979
        %2150 = vmatpush.msra.mxu0 %v1968
        %2151 = vmatpush.msra.mxu0 %v1957
        %2152 = vmatpush.msra.mxu0 %v1946
        %2153 = vmatpush.msra.mxu0 %v1935
        %2154 = vmatpush.msra.mxu0 %v1924
        %2155 = vmatpush.msra.mxu0 %v1913
        %2156 = vmatpush.msra.mxu0 %v1902
        %2157 = vmatpush.msra.mxu0 %v1891
        %2158 = vmatpush.msra.mxu0 %v1880
        %2159 = vmatpush.msra.mxu0 %v1869
        %2160 = vmatmul.f32.gmra.mxu0 %v1227
        %v2161 = vpop.f32.mrf.mxu0
        %v2162 = vadd.f32 %v2142, %v2161
        %2163 = vdwg.mxu0
        %2164 = vmatpush.msra.mxu0 %v1683
        %2165 = vmatpush.msra.mxu0 %v1672
        %2166 = vmatpush.msra.mxu0 %v1661
        %2167 = vmatpush.msra.mxu0 %v1650
        %2168 = vmatpush.msra.mxu0 %v1639
        %2169 = vmatpush.msra.mxu0 %v1628
        %2170 = vmatpush.msra.mxu0 %v1617
        %2171 = vmatpush.msra.mxu0 %v1606
        %2172 = vmatpush.msra.mxu0 %v1595
        %2173 = vmatpush.msra.mxu0 %v1584
        %2174 = vmatpush.msra.mxu0 %v1573
        %2175 = vmatpush.msra.mxu0 %v1562
        %2176 = vmatpush.msra.mxu0 %v1551
        %2177 = vmatpush.msra.mxu0 %v1540
        %2178 = vmatpush.msra.mxu0 %v1529
        %2179 = vmatpush.msra.mxu0 %v1518
        %2180 = vmatmul.f32.gmra.mxu0 %v1225
        %v2181 = vpop.f32.mrf.mxu0
        %v2182 = vadd.f32 0.0, %v2181
        %2183 = vdwg.mxu0
        %2184 = vmatpush.msra.mxu0 %v1859
        %2185 = vmatpush.msra.mxu0 %v1848
        %2186 = vmatpush.msra.mxu0 %v1837
        %2187 = vmatpush.msra.mxu0 %v1826
        %2188 = vmatpush.msra.mxu0 %v1815
        %2189 = vmatpush.msra.mxu0 %v1804
        %2190 = vmatpush.msra.mxu0 %v1793
        %2191 = vmatpush.msra.mxu0 %v1782
        %2192 = vmatpush.msra.mxu0 %v1771
        %2193 = vmatpush.msra.mxu0 %v1760
        %2194 = vmatpush.msra.mxu0 %v1749
        %2195 = vmatpush.msra.mxu0 %v1738
        %2196 = vmatpush.msra.mxu0 %v1727
        %2197 = vmatpush.msra.mxu0 %v1716
        %2198 = vmatpush.msra.mxu0 %v1705
        %2199 = vmatpush.msra.mxu0 %v1694
        %2200 = vmatmul.f32.gmra.mxu0 %v1226
        %v2201 = vpop.f32.mrf.mxu0
        %v2202 = vadd.f32 %v2182, %v2201
        %2203 = vdwg.mxu0
        %2204 = vmatpush.msra.mxu0 %v2035
        %2205 = vmatpush.msra.mxu0 %v2024
        %2206 = vmatpush.msra.mxu0 %v2013
        %2207 = vmatpush.msra.mxu0 %v2002
        %2208 = vmatpush.msra.mxu0 %v1991
        %2209 = vmatpush.msra.mxu0 %v1980
        %2210 = vmatpush.msra.mxu0 %v1969
        %2211 = vmatpush.msra.mxu0 %v1958
        %2212 = vmatpush.msra.mxu0 %v1947
        %2213 = vmatpush.msra.mxu0 %v1936
        %2214 = vmatpush.msra.mxu0 %v1925
        %2215 = vmatpush.msra.mxu0 %v1914
        %2216 = vmatpush.msra.mxu0 %v1903
        %2217 = vmatpush.msra.mxu0 %v1892
        %2218 = vmatpush.msra.mxu0 %v1881
        %2219 = vmatpush.msra.mxu0 %v1870
        %2220 = vmatmul.f32.gmra.mxu0 %v1227
        %v2221 = vpop.f32.mrf.mxu0
        %v2222 = vadd.f32 %v2202, %v2221
        %2223 = vdwg.mxu0
        %2224 = vmatpush.msra.mxu0 %v1684
        %2225 = vmatpush.msra.mxu0 %v1673
        %2226 = vmatpush.msra.mxu0 %v1662
        %2227 = vmatpush.msra.mxu0 %v1651
        %2228 = vmatpush.msra.mxu0 %v1640
        %2229 = vmatpush.msra.mxu0 %v1629
        %2230 = vmatpush.msra.mxu0 %v1618
        %2231 = vmatpush.msra.mxu0 %v1607
        %2232 = vmatpush.msra.mxu0 %v1596
        %2233 = vmatpush.msra.mxu0 %v1585
        %2234 = vmatpush.msra.mxu0 %v1574
        %2235 = vmatpush.msra.mxu0 %v1563
        %2236 = vmatpush.msra.mxu0 %v1552
        %2237 = vmatpush.msra.mxu0 %v1541
        %2238 = vmatpush.msra.mxu0 %v1530
        %2239 = vmatpush.msra.mxu0 %v1519
        %2240 = vmatmul.f32.gmra.mxu0 %v1225
        %v2241 = vpop.f32.mrf.mxu0
        %v2242 = vadd.f32 0.0, %v2241
        %2243 = vdwg.mxu0
        %2244 = vmatpush.msra.mxu0 %v1860
        %2245 = vmatpush.msra.mxu0 %v1849
        %2246 = vmatpush.msra.mxu0 %v1838
        %2247 = vmatpush.msra.mxu0 %v1827
        %2248 = vmatpush.msra.mxu0 %v1816
        %2249 = vmatpush.msra.mxu0 %v1805
        %2250 = vmatpush.msra.mxu0 %v1794
        %2251 = vmatpush.msra.mxu0 %v1783
        %2252 = vmatpush.msra.mxu0 %v1772
        %2253 = vmatpush.msra.mxu0 %v1761
        %2254 = vmatpush.msra.mxu0 %v1750
        %2255 = vmatpush.msra.mxu0 %v1739
        %2256 = vmatpush.msra.mxu0 %v1728
        %2257 = vmatpush.msra.mxu0 %v1717
        %2258 = vmatpush.msra.mxu0 %v1706
        %2259 = vmatpush.msra.mxu0 %v1695
        %2260 = vmatmul.f32.gmra.mxu0 %v1226
        %v2261 = vpop.f32.mrf.mxu0
        %v2262 = vadd.f32 %v2242, %v2261
        %2263 = vdwg.mxu0
        %2264 = vmatpush.msra.mxu0 %v2036
        %2265 = vmatpush.msra.mxu0 %v2025
        %2266 = vmatpush.msra.mxu0 %v2014
        %2267 = vmatpush.msra.mxu0 %v2003
        %2268 = vmatpush.msra.mxu0 %v1992
        %2269 = vmatpush.msra.mxu0 %v1981
        %2270 = vmatpush.msra.mxu0 %v1970
        %2271 = vmatpush.msra.mxu0 %v1959
        %2272 = vmatpush.msra.mxu0 %v1948
        %2273 = vmatpush.msra.mxu0 %v1937
        %2274 = vmatpush.msra.mxu0 %v1926
        %2275 = vmatpush.msra.mxu0 %v1915
        %2276 = vmatpush.msra.mxu0 %v1904
        %2277 = vmatpush.msra.mxu0 %v1893
        %2278 = vmatpush.msra.mxu0 %v1882
        %2279 = vmatpush.msra.mxu0 %v1871
        %2280 = vmatmul.f32.gmra.mxu0 %v1227
        %v2281 = vpop.f32.mrf.mxu0
        %v2282 = vadd.f32 %v2262, %v2281
        %2283 = vdwg.mxu0
        %2284 = vmatpush.msra.mxu0 %v1685
        %2285 = vmatpush.msra.mxu0 %v1674
        %2286 = vmatpush.msra.mxu0 %v1663
        %2287 = vmatpush.msra.mxu0 %v1652
        %2288 = vmatpush.msra.mxu0 %v1641
        %2289 = vmatpush.msra.mxu0 %v1630
        %2290 = vmatpush.msra.mxu0 %v1619
        %2291 = vmatpush.msra.mxu0 %v1608
        %2292 = vmatpush.msra.mxu0 %v1597
        %2293 = vmatpush.msra.mxu0 %v1586
        %2294 = vmatpush.msra.mxu0 %v1575
        %2295 = vmatpush.msra.mxu0 %v1564
        %2296 = vmatpush.msra.mxu0 %v1553
        %2297 = vmatpush.msra.mxu0 %v1542
        %2298 = vmatpush.msra.mxu0 %v1531
        %2299 = vmatpush.msra.mxu0 %v1520
        %2300 = vmatmul.f32.gmra.mxu0 %v1225
        %v2301 = vpop.f32.mrf.mxu0
        %v2302 = vadd.f32 0.0, %v2301
        %2303 = vdwg.mxu0
        %2304 = vmatpush.msra.mxu0 %v1861
        %2305 = vmatpush.msra.mxu0 %v1850
        %2306 = vmatpush.msra.mxu0 %v1839
        %2307 = vmatpush.msra.mxu0 %v1828
        %2308 = vmatpush.msra.mxu0 %v1817
        %2309 = vmatpush.msra.mxu0 %v1806
        %2310 = vmatpush.msra.mxu0 %v1795
        %2311 = vmatpush.msra.mxu0 %v1784
        %2312 = vmatpush.msra.mxu0 %v1773
        %2313 = vmatpush.msra.mxu0 %v1762
        %2314 = vmatpush.msra.mxu0 %v1751
        %2315 = vmatpush.msra.mxu0 %v1740
        %2316 = vmatpush.msra.mxu0 %v1729
        %2317 = vmatpush.msra.mxu0 %v1718
        %2318 = vmatpush.msra.mxu0 %v1707
        %2319 = vmatpush.msra.mxu0 %v1696
        %2320 = vmatmul.f32.gmra.mxu0 %v1226
        %v2321 = vpop.f32.mrf.mxu0
        %v2322 = vadd.f32 %v2302, %v2321
        %2323 = vdwg.mxu0
        %2324 = vmatpush.msra.mxu0 %v2037
        %2325 = vmatpush.msra.mxu0 %v2026
        %2326 = vmatpush.msra.mxu0 %v2015
        %2327 = vmatpush.msra.mxu0 %v2004
        %2328 = vmatpush.msra.mxu0 %v1993
        %2329 = vmatpush.msra.mxu0 %v1982
        %2330 = vmatpush.msra.mxu0 %v1971
        %2331 = vmatpush.msra.mxu0 %v1960
        %2332 = vmatpush.msra.mxu0 %v1949
        %2333 = vmatpush.msra.mxu0 %v1938
        %2334 = vmatpush.msra.mxu0 %v1927
        %2335 = vmatpush.msra.mxu0 %v1916
        %2336 = vmatpush.msra.mxu0 %v1905
        %2337 = vmatpush.msra.mxu0 %v1894
        %2338 = vmatpush.msra.mxu0 %v1883
        %2339 = vmatpush.msra.mxu0 %v1872
        %2340 = vmatmul.f32.gmra.mxu0 %v1227
        %v2341 = vpop.f32.mrf.mxu0
        %v2342 = vadd.f32 %v2322, %v2341
        %2343 = vdwg.mxu0
        %2344 = vmatpush.msra.mxu0 %v1686
        %2345 = vmatpush.msra.mxu0 %v1675
        %2346 = vmatpush.msra.mxu0 %v1664
        %2347 = vmatpush.msra.mxu0 %v1653
        %2348 = vmatpush.msra.mxu0 %v1642
        %2349 = vmatpush.msra.mxu0 %v1631
        %2350 = vmatpush.msra.mxu0 %v1620
        %2351 = vmatpush.msra.mxu0 %v1609
        %2352 = vmatpush.msra.mxu0 %v1598
        %2353 = vmatpush.msra.mxu0 %v1587
        %2354 = vmatpush.msra.mxu0 %v1576
        %2355 = vmatpush.msra.mxu0 %v1565
        %2356 = vmatpush.msra.mxu0 %v1554
        %2357 = vmatpush.msra.mxu0 %v1543
        %2358 = vmatpush.msra.mxu0 %v1532
        %2359 = vmatpush.msra.mxu0 %v1521
        %2360 = vmatmul.f32.gmra.mxu0 %v1225
        %v2361 = vpop.f32.mrf.mxu0
        %v2362 = vadd.f32 0.0, %v2361
        %2363 = vdwg.mxu0
        %2364 = vmatpush.msra.mxu0 %v1862
        %2365 = vmatpush.msra.mxu0 %v1851
        %2366 = vmatpush.msra.mxu0 %v1840
        %2367 = vmatpush.msra.mxu0 %v1829
        %2368 = vmatpush.msra.mxu0 %v1818
        %2369 = vmatpush.msra.mxu0 %v1807
        %2370 = vmatpush.msra.mxu0 %v1796
        %2371 = vmatpush.msra.mxu0 %v1785
        %2372 = vmatpush.msra.mxu0 %v1774
        %2373 = vmatpush.msra.mxu0 %v1763
        %2374 = vmatpush.msra.mxu0 %v1752
        %2375 = vmatpush.msra.mxu0 %v1741
        %2376 = vmatpush.msra.mxu0 %v1730
        %2377 = vmatpush.msra.mxu0 %v1719
        %2378 = vmatpush.msra.mxu0 %v1708
        %2379 = vmatpush.msra.mxu0 %v1697
        %2380 = vmatmul.f32.gmra.mxu0 %v1226
        %v2381 = vpop.f32.mrf.mxu0
        %v2382 = vadd.f32 %v2362, %v2381
        %2383 = vdwg.mxu0
        %2384 = vmatpush.msra.mxu0 %v2038
        %2385 = vmatpush.msra.mxu0 %v2027
        %2386 = vmatpush.msra.mxu0 %v2016
        %2387 = vmatpush.msra.mxu0 %v2005
        %2388 = vmatpush.msra.mxu0 %v1994
        %2389 = vmatpush.msra.mxu0 %v1983
        %2390 = vmatpush.msra.mxu0 %v1972
        %2391 = vmatpush.msra.mxu0 %v1961
        %2392 = vmatpush.msra.mxu0 %v1950
        %2393 = vmatpush.msra.mxu0 %v1939
        %2394 = vmatpush.msra.mxu0 %v1928
        %2395 = vmatpush.msra.mxu0 %v1917
        %2396 = vmatpush.msra.mxu0 %v1906
        %2397 = vmatpush.msra.mxu0 %v1895
        %2398 = vmatpush.msra.mxu0 %v1884
        %2399 = vmatpush.msra.mxu0 %v1873
        %2400 = vmatmul.f32.gmra.mxu0 %v1227
        %v2401 = vpop.f32.mrf.mxu0
        %v2402 = vadd.f32 %v2382, %v2401
        %2403 = vdwg.mxu0
        %2404 = vmatpush.msra.mxu0 %v1687
        %2405 = vmatpush.msra.mxu0 %v1676
        %2406 = vmatpush.msra.mxu0 %v1665
        %2407 = vmatpush.msra.mxu0 %v1654
        %2408 = vmatpush.msra.mxu0 %v1643
        %2409 = vmatpush.msra.mxu0 %v1632
        %2410 = vmatpush.msra.mxu0 %v1621
        %2411 = vmatpush.msra.mxu0 %v1610
        %2412 = vmatpush.msra.mxu0 %v1599
        %2413 = vmatpush.msra.mxu0 %v1588
        %2414 = vmatpush.msra.mxu0 %v1577
        %2415 = vmatpush.msra.mxu0 %v1566
        %2416 = vmatpush.msra.mxu0 %v1555
        %2417 = vmatpush.msra.mxu0 %v1544
        %2418 = vmatpush.msra.mxu0 %v1533
        %2419 = vmatpush.msra.mxu0 %v1522
        %2420 = vmatmul.f32.gmra.mxu0 %v1225
        %v2421 = vpop.f32.mrf.mxu0
        %v2422 = vadd.f32 0.0, %v2421
        %2423 = vdwg.mxu0
        %2424 = vmatpush.msra.mxu0 %v1863
        %2425 = vmatpush.msra.mxu0 %v1852
        %2426 = vmatpush.msra.mxu0 %v1841
        %2427 = vmatpush.msra.mxu0 %v1830
        %2428 = vmatpush.msra.mxu0 %v1819
        %2429 = vmatpush.msra.mxu0 %v1808
        %2430 = vmatpush.msra.mxu0 %v1797
        %2431 = vmatpush.msra.mxu0 %v1786
        %2432 = vmatpush.msra.mxu0 %v1775
        %2433 = vmatpush.msra.mxu0 %v1764
        %2434 = vmatpush.msra.mxu0 %v1753
        %2435 = vmatpush.msra.mxu0 %v1742
        %2436 = vmatpush.msra.mxu0 %v1731
        %2437 = vmatpush.msra.mxu0 %v1720
        %2438 = vmatpush.msra.mxu0 %v1709
        %2439 = vmatpush.msra.mxu0 %v1698
        %2440 = vmatmul.f32.gmra.mxu0 %v1226
        %v2441 = vpop.f32.mrf.mxu0
        %v2442 = vadd.f32 %v2422, %v2441
        %2443 = vdwg.mxu0
        %2444 = vmatpush.msra.mxu0 %v2039
        %2445 = vmatpush.msra.mxu0 %v2028
        %2446 = vmatpush.msra.mxu0 %v2017
        %2447 = vmatpush.msra.mxu0 %v2006
        %2448 = vmatpush.msra.mxu0 %v1995
        %2449 = vmatpush.msra.mxu0 %v1984
        %2450 = vmatpush.msra.mxu0 %v1973
        %2451 = vmatpush.msra.mxu0 %v1962
        %2452 = vmatpush.msra.mxu0 %v1951
        %2453 = vmatpush.msra.mxu0 %v1940
        %2454 = vmatpush.msra.mxu0 %v1929
        %2455 = vmatpush.msra.mxu0 %v1918
        %2456 = vmatpush.msra.mxu0 %v1907
        %2457 = vmatpush.msra.mxu0 %v1896
        %2458 = vmatpush.msra.mxu0 %v1885
        %2459 = vmatpush.msra.mxu0 %v1874
        %2460 = vmatmul.f32.gmra.mxu0 %v1227
        %v2461 = vpop.f32.mrf.mxu0
        %v2462 = vadd.f32 %v2442, %v2461
        %2463 = vdwg.mxu0
        %2464 = vmatpush.msra.mxu0 %v1688
        %2465 = vmatpush.msra.mxu0 %v1677
        %2466 = vmatpush.msra.mxu0 %v1666
        %2467 = vmatpush.msra.mxu0 %v1655
        %2468 = vmatpush.msra.mxu0 %v1644
        %2469 = vmatpush.msra.mxu0 %v1633
        %2470 = vmatpush.msra.mxu0 %v1622
        %2471 = vmatpush.msra.mxu0 %v1611
        %2472 = vmatpush.msra.mxu0 %v1600
        %2473 = vmatpush.msra.mxu0 %v1589
        %2474 = vmatpush.msra.mxu0 %v1578
        %2475 = vmatpush.msra.mxu0 %v1567
        %2476 = vmatpush.msra.mxu0 %v1556
        %2477 = vmatpush.msra.mxu0 %v1545
        %2478 = vmatpush.msra.mxu0 %v1534
        %2479 = vmatpush.msra.mxu0 %v1523
        %2480 = vmatmul.f32.gmra.mxu0 %v1225
        %v2481 = vpop.f32.mrf.mxu0
        %v2482 = vadd.f32 0.0, %v2481
        %2483 = vdwg.mxu0
        %2484 = vmatpush.msra.mxu0 %v1864
        %2485 = vmatpush.msra.mxu0 %v1853
        %2486 = vmatpush.msra.mxu0 %v1842
        %2487 = vmatpush.msra.mxu0 %v1831
        %2488 = vmatpush.msra.mxu0 %v1820
        %2489 = vmatpush.msra.mxu0 %v1809
        %2490 = vmatpush.msra.mxu0 %v1798
        %2491 = vmatpush.msra.mxu0 %v1787
        %2492 = vmatpush.msra.mxu0 %v1776
        %2493 = vmatpush.msra.mxu0 %v1765
        %2494 = vmatpush.msra.mxu0 %v1754
        %2495 = vmatpush.msra.mxu0 %v1743
        %2496 = vmatpush.msra.mxu0 %v1732
        %2497 = vmatpush.msra.mxu0 %v1721
        %2498 = vmatpush.msra.mxu0 %v1710
        %2499 = vmatpush.msra.mxu0 %v1699
        %2500 = vmatmul.f32.gmra.mxu0 %v1226
        %v2501 = vpop.f32.mrf.mxu0
        %v2502 = vadd.f32 %v2482, %v2501
        %2503 = vdwg.mxu0
        %2504 = vmatpush.msra.mxu0 %v2040
        %2505 = vmatpush.msra.mxu0 %v2029
        %2506 = vmatpush.msra.mxu0 %v2018
        %2507 = vmatpush.msra.mxu0 %v2007
        %2508 = vmatpush.msra.mxu0 %v1996
        %2509 = vmatpush.msra.mxu0 %v1985
        %2510 = vmatpush.msra.mxu0 %v1974
        %2511 = vmatpush.msra.mxu0 %v1963
        %2512 = vmatpush.msra.mxu0 %v1952
        %2513 = vmatpush.msra.mxu0 %v1941
        %2514 = vmatpush.msra.mxu0 %v1930
        %2515 = vmatpush.msra.mxu0 %v1919
        %2516 = vmatpush.msra.mxu0 %v1908
        %2517 = vmatpush.msra.mxu0 %v1897
        %2518 = vmatpush.msra.mxu0 %v1886
        %2519 = vmatpush.msra.mxu0 %v1875
        %2520 = vmatmul.f32.gmra.mxu0 %v1227
        %v2521 = vpop.f32.mrf.mxu0
        %v2522 = vadd.f32 %v2502, %v2521
        %2523 = vdwg.mxu0
        %2524 = vmatpush.msra.mxu0 %v1689
        %2525 = vmatpush.msra.mxu0 %v1678
        %2526 = vmatpush.msra.mxu0 %v1667
        %2527 = vmatpush.msra.mxu0 %v1656
        %2528 = vmatpush.msra.mxu0 %v1645
        %2529 = vmatpush.msra.mxu0 %v1634
        %2530 = vmatpush.msra.mxu0 %v1623
        %2531 = vmatpush.msra.mxu0 %v1612
        %2532 = vmatpush.msra.mxu0 %v1601
        %2533 = vmatpush.msra.mxu0 %v1590
        %2534 = vmatpush.msra.mxu0 %v1579
        %2535 = vmatpush.msra.mxu0 %v1568
        %2536 = vmatpush.msra.mxu0 %v1557
        %2537 = vmatpush.msra.mxu0 %v1546
        %2538 = vmatpush.msra.mxu0 %v1535
        %2539 = vmatpush.msra.mxu0 %v1524
        %2540 = vmatmul.f32.gmra.mxu0 %v1225
        %v2541 = vpop.f32.mrf.mxu0
        %v2542 = vadd.f32 0.0, %v2541
        %2543 = vdwg.mxu0
        %2544 = vmatpush.msra.mxu0 %v1865
        %2545 = vmatpush.msra.mxu0 %v1854
        %2546 = vmatpush.msra.mxu0 %v1843
        %2547 = vmatpush.msra.mxu0 %v1832
        %2548 = vmatpush.msra.mxu0 %v1821
        %2549 = vmatpush.msra.mxu0 %v1810
        %2550 = vmatpush.msra.mxu0 %v1799
        %2551 = vmatpush.msra.mxu0 %v1788
        %2552 = vmatpush.msra.mxu0 %v1777
        %2553 = vmatpush.msra.mxu0 %v1766
        %2554 = vmatpush.msra.mxu0 %v1755
        %2555 = vmatpush.msra.mxu0 %v1744
        %2556 = vmatpush.msra.mxu0 %v1733
        %2557 = vmatpush.msra.mxu0 %v1722
        %2558 = vmatpush.msra.mxu0 %v1711
        %2559 = vmatpush.msra.mxu0 %v1700
        %2560 = vmatmul.f32.gmra.mxu0 %v1226
        %v2561 = vpop.f32.mrf.mxu0
        %v2562 = vadd.f32 %v2542, %v2561
        %2563 = vdwg.mxu0
        %2564 = vmatpush.msra.mxu0 %v2041
        %2565 = vmatpush.msra.mxu0 %v2030
        %2566 = vmatpush.msra.mxu0 %v2019
        %2567 = vmatpush.msra.mxu0 %v2008
        %2568 = vmatpush.msra.mxu0 %v1997
        %2569 = vmatpush.msra.mxu0 %v1986
        %2570 = vmatpush.msra.mxu0 %v1975
        %2571 = vmatpush.msra.mxu0 %v1964
        %2572 = vmatpush.msra.mxu0 %v1953
        %2573 = vmatpush.msra.mxu0 %v1942
        %2574 = vmatpush.msra.mxu0 %v1931
        %2575 = vmatpush.msra.mxu0 %v1920
        %2576 = vmatpush.msra.mxu0 %v1909
        %2577 = vmatpush.msra.mxu0 %v1898
        %2578 = vmatpush.msra.mxu0 %v1887
        %2579 = vmatpush.msra.mxu0 %v1876
        %2580 = vmatmul.f32.gmra.mxu0 %v1227
        %v2581 = vpop.f32.mrf.mxu0
        %v2582 = vadd.f32 %v2562, %v2581
        %2583 = vdwg.mxu0
        %2584 = vmatpush.msra.mxu0 %v1690
        %2585 = vmatpush.msra.mxu0 %v1679
        %2586 = vmatpush.msra.mxu0 %v1668
        %2587 = vmatpush.msra.mxu0 %v1657
        %2588 = vmatpush.msra.mxu0 %v1646
        %2589 = vmatpush.msra.mxu0 %v1635
        %2590 = vmatpush.msra.mxu0 %v1624
        %2591 = vmatpush.msra.mxu0 %v1613
        %2592 = vmatpush.msra.mxu0 %v1602
        %2593 = vmatpush.msra.mxu0 %v1591
        %2594 = vmatpush.msra.mxu0 %v1580
        %2595 = vmatpush.msra.mxu0 %v1569
        %2596 = vmatpush.msra.mxu0 %v1558
        %2597 = vmatpush.msra.mxu0 %v1547
        %2598 = vmatpush.msra.mxu0 %v1536
        %2599 = vmatpush.msra.mxu0 %v1525
        %2600 = vmatmul.f32.gmra.mxu0 %v1225
        %v2601 = vpop.f32.mrf.mxu0
        %v2602 = vadd.f32 0.0, %v2601
        %2603 = vdwg.mxu0
        %2604 = vmatpush.msra.mxu0 %v1866
        %2605 = vmatpush.msra.mxu0 %v1855
        %2606 = vmatpush.msra.mxu0 %v1844
        %2607 = vmatpush.msra.mxu0 %v1833
        %2608 = vmatpush.msra.mxu0 %v1822
        %2609 = vmatpush.msra.mxu0 %v1811
        %2610 = vmatpush.msra.mxu0 %v1800
        %2611 = vmatpush.msra.mxu0 %v1789
        %2612 = vmatpush.msra.mxu0 %v1778
        %2613 = vmatpush.msra.mxu0 %v1767
        %2614 = vmatpush.msra.mxu0 %v1756
        %2615 = vmatpush.msra.mxu0 %v1745
        %2616 = vmatpush.msra.mxu0 %v1734
        %2617 = vmatpush.msra.mxu0 %v1723
        %2618 = vmatpush.msra.mxu0 %v1712
        %2619 = vmatpush.msra.mxu0 %v1701
        %2620 = vmatmul.f32.gmra.mxu0 %v1226
        %v2621 = vpop.f32.mrf.mxu0
        %v2622 = vadd.f32 %v2602, %v2621
        %2623 = vdwg.mxu0
        %2624 = vmatpush.msra.mxu0 %v2042
        %2625 = vmatpush.msra.mxu0 %v2031
        %2626 = vmatpush.msra.mxu0 %v2020
        %2627 = vmatpush.msra.mxu0 %v2009
        %2628 = vmatpush.msra.mxu0 %v1998
        %2629 = vmatpush.msra.mxu0 %v1987
        %2630 = vmatpush.msra.mxu0 %v1976
        %2631 = vmatpush.msra.mxu0 %v1965
        %2632 = vmatpush.msra.mxu0 %v1954
        %2633 = vmatpush.msra.mxu0 %v1943
        %2634 = vmatpush.msra.mxu0 %v1932
        %2635 = vmatpush.msra.mxu0 %v1921
        %2636 = vmatpush.msra.mxu0 %v1910
        %2637 = vmatpush.msra.mxu0 %v1899
        %2638 = vmatpush.msra.mxu0 %v1888
        %2639 = vmatpush.msra.mxu0 %v1877
        %2640 = vmatmul.f32.gmra.mxu0 %v1227
        %v2641 = vpop.f32.mrf.mxu0
        %v2642 = vadd.f32 %v2622, %v2641
        %2643 = vdwg.mxu0
        %2644 = vmatpush.msra.mxu0 %v1691
        %2645 = vmatpush.msra.mxu0 %v1680
        %2646 = vmatpush.msra.mxu0 %v1669
        %2647 = vmatpush.msra.mxu0 %v1658
        %2648 = vmatpush.msra.mxu0 %v1647
        %2649 = vmatpush.msra.mxu0 %v1636
        %2650 = vmatpush.msra.mxu0 %v1625
        %2651 = vmatpush.msra.mxu0 %v1614
        %2652 = vmatpush.msra.mxu0 %v1603
        %2653 = vmatpush.msra.mxu0 %v1592
        %2654 = vmatpush.msra.mxu0 %v1581
        %2655 = vmatpush.msra.mxu0 %v1570
        %2656 = vmatpush.msra.mxu0 %v1559
        %2657 = vmatpush.msra.mxu0 %v1548
        %2658 = vmatpush.msra.mxu0 %v1537
        %2659 = vmatpush.msra.mxu0 %v1526
        %2660 = vmatmul.f32.gmra.mxu0 %v1225
        %v2661 = vpop.f32.mrf.mxu0
        %v2662 = vadd.f32 0.0, %v2661
        %2663 = vdwg.mxu0
        %2664 = vmatpush.msra.mxu0 %v1867
        %2665 = vmatpush.msra.mxu0 %v1856
        %2666 = vmatpush.msra.mxu0 %v1845
        %2667 = vmatpush.msra.mxu0 %v1834
        %2668 = vmatpush.msra.mxu0 %v1823
        %2669 = vmatpush.msra.mxu0 %v1812
        %2670 = vmatpush.msra.mxu0 %v1801
        %2671 = vmatpush.msra.mxu0 %v1790
        %2672 = vmatpush.msra.mxu0 %v1779
        %2673 = vmatpush.msra.mxu0 %v1768
        %2674 = vmatpush.msra.mxu0 %v1757
        %2675 = vmatpush.msra.mxu0 %v1746
        %2676 = vmatpush.msra.mxu0 %v1735
        %2677 = vmatpush.msra.mxu0 %v1724
        %2678 = vmatpush.msra.mxu0 %v1713
        %2679 = vmatpush.msra.mxu0 %v1702
        %2680 = vmatmul.f32.gmra.mxu0 %v1226
        %v2681 = vpop.f32.mrf.mxu0
        %v2682 = vadd.f32 %v2662, %v2681
        %2683 = vdwg.mxu0
        %2684 = vmatpush.msra.mxu0 %v2043
        %2685 = vmatpush.msra.mxu0 %v2032
        %2686 = vmatpush.msra.mxu0 %v2021
        %2687 = vmatpush.msra.mxu0 %v2010
        %2688 = vmatpush.msra.mxu0 %v1999
        %2689 = vmatpush.msra.mxu0 %v1988
        %2690 = vmatpush.msra.mxu0 %v1977
        %2691 = vmatpush.msra.mxu0 %v1966
        %2692 = vmatpush.msra.mxu0 %v1955
        %2693 = vmatpush.msra.mxu0 %v1944
        %2694 = vmatpush.msra.mxu0 %v1933
        %2695 = vmatpush.msra.mxu0 %v1922
        %2696 = vmatpush.msra.mxu0 %v1911
        %2697 = vmatpush.msra.mxu0 %v1900
        %2698 = vmatpush.msra.mxu0 %v1889
        %2699 = vmatpush.msra.mxu0 %v1878
        %2700 = vmatmul.f32.gmra.mxu0 %v1227
        %v2701 = vpop.f32.mrf.mxu0
        %v2702 = vadd.f32 %v2682, %v2701
        %2703 = vdwg.mxu0
        %2704 = vrot.lane.b32.xlu0 %v2102, 37
        %v2705 = vpop.permute.xlu0 %2704
        %2706 = vrot.lane.b32.xlu0 %v2162, 37
        %v2707 = vpop.permute.xlu0 %2706
        %2708 = vrot.lane.b32.xlu0 %v2222, 37
        %v2709 = vpop.permute.xlu0 %2708
        %2710 = vrot.lane.b32.xlu0 %v2282, 37
        %v2711 = vpop.permute.xlu0 %2710
        %2712 = vrot.lane.b32.xlu0 %v2342, 37
        %v2713 = vpop.permute.xlu0 %2712
        %2714 = vrot.lane.b32.xlu0 %v2402, 37
        %v2715 = vpop.permute.xlu0 %2714
        %2716 = vrot.lane.b32.xlu0 %v2462, 37
        %v2717 = vpop.permute.xlu0 %2716
        %2718 = vrot.lane.b32.xlu0 %v2522, 37
        %v2719 = vpop.permute.xlu0 %2718
        %2720 = vrot.lane.b32.xlu0 %v2582, 37
        %v2721 = vpop.permute.xlu0 %2720
        %2722 = vrot.lane.b32.xlu0 %v2642, 37
        %v2723 = vpop.permute.xlu0 %2722
        %2724 = vrot.lane.b32.xlu0 %v2702, 37
        %v2725 = vpop.permute.xlu0 %2724
        %vm2726 = vcmp.lt.s32.totalorder %v730, 37
        %v2727 = vsel %vm2726, %v2723, %v2725
        %v2728 = vsel %vm2726, %v2721, %v2723
        %v2729 = vsel %vm2726, %v2719, %v2721
        %v2730 = vsel %vm2726, %v2717, %v2719
        %v2731 = vsel %vm2726, %v2715, %v2717
        %v2732 = vsel %vm2726, %v2713, %v2715
        %v2733 = vsel %vm2726, %v2711, %v2713
        %v2734 = vsel %vm2726, %v2709, %v2711
        %v2735 = vsel %vm2726, %v2707, %v2709
        %v2736 = vsel %vm2726, %v2705, %v2707
        %v2737 = vsel %vm2726, %v2725, %v2705
        %2738 = vst [vmem:[#allocation3] sm:$0xff] %v2737
        %2739 = vst [vmem:[#allocation3 + $0x8] sm:$0xff] %v2736
        %2740 = vst [vmem:[#allocation3 + $0x10] sm:$0xff] %v2735
        %2741 = vst [vmem:[#allocation3 + $0x18] sm:$0xff] %v2734
        %2742 = vst [vmem:[#allocation3 + $0x20] sm:$0xff] %v2733
        %2743 = vst [vmem:[#allocation3 + $0x28] sm:$0xff] %v2732
        %2744 = vst [vmem:[#allocation3 + $0x30] sm:$0xff] %v2731
        %2745 = vst [vmem:[#allocation3 + $0x38] sm:$0xff] %v2730
        %2746 = vst [vmem:[#allocation3 + $0x40] sm:$0xff] %v2729
        %2747 = vst [vmem:[#allocation3 + $0x48] sm:$0xff] %v2728
        %2748 = vst [vmem:[#allocation3 + $0x50] sm:$0xff] %v2727
        %2749 = vrot.lane.b32.xlu0 %v2102, 36
        %v2750 = vpop.permute.xlu0 %2749
        %2751 = vrot.lane.b32.xlu0 %v2162, 36
        %v2752 = vpop.permute.xlu0 %2751
        %2753 = vrot.lane.b32.xlu0 %v2222, 36
        %v2754 = vpop.permute.xlu0 %2753
        %2755 = vrot.lane.b32.xlu0 %v2282, 36
        %v2756 = vpop.permute.xlu0 %2755
        %2757 = vrot.lane.b32.xlu0 %v2342, 36
        %v2758 = vpop.permute.xlu0 %2757
        %2759 = vrot.lane.b32.xlu0 %v2402, 36
        %v2760 = vpop.permute.xlu0 %2759
        %2761 = vrot.lane.b32.xlu0 %v2462, 36
        %v2762 = vpop.permute.xlu0 %2761
        %2763 = vrot.lane.b32.xlu0 %v2522, 36
        %v2764 = vpop.permute.xlu0 %2763
        %2765 = vrot.lane.b32.xlu0 %v2582, 36
        %v2766 = vpop.permute.xlu0 %2765
        %2767 = vrot.lane.b32.xlu0 %v2642, 36
        %v2768 = vpop.permute.xlu0 %2767
        %2769 = vrot.lane.b32.xlu0 %v2702, 36
        %v2770 = vpop.permute.xlu0 %2769
        %vm2771 = vcmp.lt.s32.totalorder %v730, 36
        %v2772 = vsel %vm2771, %v2768, %v2770
        %v2773 = vsel %vm2771, %v2766, %v2768
        %v2774 = vsel %vm2771, %v2764, %v2766
        %v2775 = vsel %vm2771, %v2762, %v2764
        %v2776 = vsel %vm2771, %v2760, %v2762
        %v2777 = vsel %vm2771, %v2758, %v2760
        %v2778 = vsel %vm2771, %v2756, %v2758
        %v2779 = vsel %vm2771, %v2754, %v2756
        %v2780 = vsel %vm2771, %v2752, %v2754
        %v2781 = vsel %vm2771, %v2750, %v2752
        %v2782 = vsel %vm2771, %v2770, %v2750
        %2783 = vst [vmem:[#allocation3 + $0x58] sm:$0xff] %v2782
        %2784 = vst [vmem:[#allocation3 + $0x60] sm:$0xff] %v2781
        %2785 = vst [vmem:[#allocation3 + $0x68] sm:$0xff] %v2780
        %2786 = vst [vmem:[#allocation3 + $0x70] sm:$0xff] %v2779
        %2787 = vst [vmem:[#allocation3 + $0x78] sm:$0xff] %v2778
        %2788 = vst [vmem:[#allocation3 + $0x80] sm:$0xff] %v2777
        %2789 = vst [vmem:[#allocation3 + $0x88] sm:$0xff] %v2776
        %2790 = vst [vmem:[#allocation3 + $0x90] sm:$0xff] %v2775
        %2791 = vst [vmem:[#allocation3 + $0x98] sm:$0xff] %v2774
        %2792 = vst [vmem:[#allocation3 + $0xa0] sm:$0xff] %v2773
        %2793 = vst [vmem:[#allocation3 + $0xa8] sm:$0xff] %v2772
        %2794 = vrot.lane.b32.xlu0 %v2102, 35
        %v2795 = vpop.permute.xlu0 %2794
        %2796 = vrot.lane.b32.xlu0 %v2162, 35
        %v2797 = vpop.permute.xlu0 %2796
        %2798 = vrot.lane.b32.xlu0 %v2222, 35
        %v2799 = vpop.permute.xlu0 %2798
        %2800 = vrot.lane.b32.xlu0 %v2282, 35
        %v2801 = vpop.permute.xlu0 %2800
        %2802 = vrot.lane.b32.xlu0 %v2342, 35
        %v2803 = vpop.permute.xlu0 %2802
        %2804 = vrot.lane.b32.xlu0 %v2402, 35
        %v2805 = vpop.permute.xlu0 %2804
        %2806 = vrot.lane.b32.xlu0 %v2462, 35
        %v2807 = vpop.permute.xlu0 %2806
        %2808 = vrot.lane.b32.xlu0 %v2522, 35
        %v2809 = vpop.permute.xlu0 %2808
        %2810 = vrot.lane.b32.xlu0 %v2582, 35
        %v2811 = vpop.permute.xlu0 %2810
        %2812 = vrot.lane.b32.xlu0 %v2642, 35
        %v2813 = vpop.permute.xlu0 %2812
        %2814 = vrot.lane.b32.xlu0 %v2702, 35
        %v2815 = vpop.permute.xlu0 %2814
        %vm2816 = vcmp.lt.s32.totalorder %v730, 35
        %v2817 = vsel %vm2816, %v2813, %v2815
        %v2818 = vsel %vm2816, %v2811, %v2813
        %v2819 = vsel %vm2816, %v2809, %v2811
        %v2820 = vsel %vm2816, %v2807, %v2809
        %v2821 = vsel %vm2816, %v2805, %v2807
        %v2822 = vsel %vm2816, %v2803, %v2805
        %v2823 = vsel %vm2816, %v2801, %v2803
        %v2824 = vsel %vm2816, %v2799, %v2801
        %v2825 = vsel %vm2816, %v2797, %v2799
        %v2826 = vsel %vm2816, %v2795, %v2797
        %v2827 = vsel %vm2816, %v2815, %v2795
        %2828 = vst [vmem:[#allocation3 + $0xb0] sm:$0xff] %v2827
        %2829 = vst [vmem:[#allocation3 + $0xb8] sm:$0xff] %v2826
        %2830 = vst [vmem:[#allocation3 + $0xc0] sm:$0xff] %v2825
        %2831 = vst [vmem:[#allocation3 + $0xc8] sm:$0xff] %v2824
        %2832 = vst [vmem:[#allocation3 + $0xd0] sm:$0xff] %v2823
        %2833 = vst [vmem:[#allocation3 + $0xd8] sm:$0xff] %v2822
        %2834 = vst [vmem:[#allocation3 + $0xe0] sm:$0xff] %v2821
        %2835 = vst [vmem:[#allocation3 + $0xe8] sm:$0xff] %v2820
        %2836 = vst [vmem:[#allocation3 + $0xf0] sm:$0xff] %v2819
        %2837 = vst [vmem:[#allocation3 + $0xf8] sm:$0xff] %v2818
        %2838 = vst [vmem:[#allocation3 + $0x100] sm:$0xff] %v2817
        %2839 = vrot.lane.b32.xlu0 %v2102, 1
        %v2840 = vpop.permute.xlu0 %2839
        %2841 = vrot.lane.b32.xlu0 %v2162, 1
        %v2842 = vpop.permute.xlu0 %2841
        %2843 = vrot.lane.b32.xlu0 %v2222, 1
        %v2844 = vpop.permute.xlu0 %2843
        %2845 = vrot.lane.b32.xlu0 %v2282, 1
        %v2846 = vpop.permute.xlu0 %2845
        %2847 = vrot.lane.b32.xlu0 %v2342, 1
        %v2848 = vpop.permute.xlu0 %2847
        %2849 = vrot.lane.b32.xlu0 %v2402, 1
        %v2850 = vpop.permute.xlu0 %2849
        %2851 = vrot.lane.b32.xlu0 %v2462, 1
        %v2852 = vpop.permute.xlu0 %2851
        %2853 = vrot.lane.b32.xlu0 %v2522, 1
        %v2854 = vpop.permute.xlu0 %2853
        %2855 = vrot.lane.b32.xlu0 %v2582, 1
        %v2856 = vpop.permute.xlu0 %2855
        %2857 = vrot.lane.b32.xlu0 %v2642, 1
        %v2858 = vpop.permute.xlu0 %2857
        %2859 = vrot.lane.b32.xlu0 %v2702, 1
        %v2860 = vpop.permute.xlu0 %2859
        %v2861 = vsel %vm806, %v2858, %v2860
        %v2862 = vsel %vm806, %v2856, %v2858
        %v2863 = vsel %vm806, %v2854, %v2856
        %v2864 = vsel %vm806, %v2852, %v2854
        %v2865 = vsel %vm806, %v2850, %v2852
        %v2866 = vsel %vm806, %v2848, %v2850
        %v2867 = vsel %vm806, %v2846, %v2848
        %v2868 = vsel %vm806, %v2844, %v2846
        %v2869 = vsel %vm806, %v2842, %v2844
        %v2870 = vsel %vm806, %v2840, %v2842
        %v2871 = vsel %vm806, %v2860, %v2840
        %2872 = vst [vmem:[#allocation3 + $0x108] sm:$0xff] %v2871
        %2873 = vst [vmem:[#allocation3 + $0x110] sm:$0xff] %v2870
        %2874 = vst [vmem:[#allocation3 + $0x118] sm:$0xff] %v2869
        %2875 = vst [vmem:[#allocation3 + $0x120] sm:$0xff] %v2868
        %2876 = vst [vmem:[#allocation3 + $0x128] sm:$0xff] %v2867
        %2877 = vst [vmem:[#allocation3 + $0x130] sm:$0xff] %v2866
        %2878 = vst [vmem:[#allocation3 + $0x138] sm:$0xff] %v2865
        %2879 = vst [vmem:[#allocation3 + $0x140] sm:$0xff] %v2864
        %2880 = vst [vmem:[#allocation3 + $0x148] sm:$0xff] %v2863
        %2881 = vst [vmem:[#allocation3 + $0x150] sm:$0xff] %v2862
        %2882 = vst [vmem:[#allocation3 + $0x158] sm:$0xff] %v2861
        %2883 = vst [vmem:[#allocation3 + $0x160] sm:$0xff] %v2102
        %2884 = vst [vmem:[#allocation3 + $0x168] sm:$0xff] %v2162
        %2885 = vst [vmem:[#allocation3 + $0x170] sm:$0xff] %v2222
        %2886 = vst [vmem:[#allocation3 + $0x178] sm:$0xff] %v2282
        %2887 = vst [vmem:[#allocation3 + $0x180] sm:$0xff] %v2342
        %2888 = vst [vmem:[#allocation3 + $0x188] sm:$0xff] %v2402
        %2889 = vst [vmem:[#allocation3 + $0x190] sm:$0xff] %v2462
        %2890 = vst [vmem:[#allocation3 + $0x198] sm:$0xff] %v2522
        %2891 = vst [vmem:[#allocation3 + $0x1a0] sm:$0xff] %v2582
        %2892 = vst [vmem:[#allocation3 + $0x1a8] sm:$0xff] %v2642
        %2893 = vst [vmem:[#allocation3 + $0x1b0] sm:$0xff] %v2702
        %2894 = vrot.lane.b32.xlu0 %v2102, 127
        %v2895 = vpop.permute.xlu0 %2894
        %2896 = vrot.lane.b32.xlu0 %v2162, 127
        %v2897 = vpop.permute.xlu0 %2896
        %2898 = vrot.lane.b32.xlu0 %v2222, 127
        %v2899 = vpop.permute.xlu0 %2898
        %2900 = vrot.lane.b32.xlu0 %v2282, 127
        %v2901 = vpop.permute.xlu0 %2900
        %2902 = vrot.lane.b32.xlu0 %v2342, 127
        %v2903 = vpop.permute.xlu0 %2902
        %2904 = vrot.lane.b32.xlu0 %v2402, 127
        %v2905 = vpop.permute.xlu0 %2904
        %2906 = vrot.lane.b32.xlu0 %v2462, 127
        %v2907 = vpop.permute.xlu0 %2906
        %2908 = vrot.lane.b32.xlu0 %v2522, 127
        %v2909 = vpop.permute.xlu0 %2908
        %2910 = vrot.lane.b32.xlu0 %v2582, 127
        %v2911 = vpop.permute.xlu0 %2910
        %2912 = vrot.lane.b32.xlu0 %v2642, 127
        %v2913 = vpop.permute.xlu0 %2912
        %2914 = vrot.lane.b32.xlu0 %v2702, 127
        %v2915 = vpop.permute.xlu0 %2914
        %v2916 = vsel %vm837, %v2913, %v2915
        %v2917 = vsel %vm837, %v2911, %v2913
        %v2918 = vsel %vm837, %v2909, %v2911
        %v2919 = vsel %vm837, %v2907, %v2909
        %v2920 = vsel %vm837, %v2905, %v2907
        %v2921 = vsel %vm837, %v2903, %v2905
        %v2922 = vsel %vm837, %v2901, %v2903
        %v2923 = vsel %vm837, %v2899, %v2901
        %v2924 = vsel %vm837, %v2897, %v2899
        %v2925 = vsel %vm837, %v2895, %v2897
        %v2926 = vsel %vm837, %v2915, %v2895
        %2927 = vst [vmem:[#allocation3 + $0x1b8] sm:$0xff] %v2925
        %2928 = vst [vmem:[#allocation3 + $0x1c0] sm:$0xff] %v2924
        %2929 = vst [vmem:[#allocation3 + $0x1c8] sm:$0xff] %v2923
        %2930 = vst [vmem:[#allocation3 + $0x1d0] sm:$0xff] %v2922
        %2931 = vst [vmem:[#allocation3 + $0x1d8] sm:$0xff] %v2921
        %2932 = vst [vmem:[#allocation3 + $0x1e0] sm:$0xff] %v2920
        %2933 = vst [vmem:[#allocation3 + $0x1e8] sm:$0xff] %v2919
        %2934 = vst [vmem:[#allocation3 + $0x1f0] sm:$0xff] %v2918
        %2935 = vst [vmem:[#allocation3 + $0x1f8] sm:$0xff] %v2917
        %2936 = vst [vmem:[#allocation3 + $0x200] sm:$0xff] %v2916
        %2937 = vst [vmem:[#allocation3 + $0x208] sm:$0xff] %v2926
        %2938 = vrot.lane.b32.xlu0 %v2102, 93
        %v2939 = vpop.permute.xlu0 %2938
        %2940 = vrot.lane.b32.xlu0 %v2162, 93
        %v2941 = vpop.permute.xlu0 %2940
        %2942 = vrot.lane.b32.xlu0 %v2222, 93
        %v2943 = vpop.permute.xlu0 %2942
        %2944 = vrot.lane.b32.xlu0 %v2282, 93
        %v2945 = vpop.permute.xlu0 %2944
        %2946 = vrot.lane.b32.xlu0 %v2342, 93
        %v2947 = vpop.permute.xlu0 %2946
        %2948 = vrot.lane.b32.xlu0 %v2402, 93
        %v2949 = vpop.permute.xlu0 %2948
        %2950 = vrot.lane.b32.xlu0 %v2462, 93
        %v2951 = vpop.permute.xlu0 %2950
        %2952 = vrot.lane.b32.xlu0 %v2522, 93
        %v2953 = vpop.permute.xlu0 %2952
        %2954 = vrot.lane.b32.xlu0 %v2582, 93
        %v2955 = vpop.permute.xlu0 %2954
        %2956 = vrot.lane.b32.xlu0 %v2642, 93
        %v2957 = vpop.permute.xlu0 %2956
        %2958 = vrot.lane.b32.xlu0 %v2702, 93
        %v2959 = vpop.permute.xlu0 %2958
        %vm2960 = vcmp.lt.s32.totalorder %v730, 93
        %v2961 = vsel %vm2960, %v2957, %v2959
        %v2962 = vsel %vm2960, %v2955, %v2957
        %v2963 = vsel %vm2960, %v2953, %v2955
        %v2964 = vsel %vm2960, %v2951, %v2953
        %v2965 = vsel %vm2960, %v2949, %v2951
        %v2966 = vsel %vm2960, %v2947, %v2949
        %v2967 = vsel %vm2960, %v2945, %v2947
        %v2968 = vsel %vm2960, %v2943, %v2945
        %v2969 = vsel %vm2960, %v2941, %v2943
        %v2970 = vsel %vm2960, %v2939, %v2941
        %v2971 = vsel %vm2960, %v2959, %v2939
        %2972 = vst [vmem:[#allocation3 + $0x210] sm:$0xff] %v2970
        %2973 = vst [vmem:[#allocation3 + $0x218] sm:$0xff] %v2969
        %2974 = vst [vmem:[#allocation3 + $0x220] sm:$0xff] %v2968
        %2975 = vst [vmem:[#allocation3 + $0x228] sm:$0xff] %v2967
        %2976 = vst [vmem:[#allocation3 + $0x230] sm:$0xff] %v2966
        %2977 = vst [vmem:[#allocation3 + $0x238] sm:$0xff] %v2965
        %2978 = vst [vmem:[#allocation3 + $0x240] sm:$0xff] %v2964
        %2979 = vst [vmem:[#allocation3 + $0x248] sm:$0xff] %v2963
        %2980 = vst [vmem:[#allocation3 + $0x250] sm:$0xff] %v2962
        %2981 = vst [vmem:[#allocation3 + $0x258] sm:$0xff] %v2961
        %2982 = vst [vmem:[#allocation3 + $0x260] sm:$0xff] %v2971
        %2983 = vrot.lane.b32.xlu0 %v2102, 92
        %v2984 = vpop.permute.xlu0 %2983
        %2985 = vrot.lane.b32.xlu0 %v2162, 92
        %v2986 = vpop.permute.xlu0 %2985
        %2987 = vrot.lane.b32.xlu0 %v2222, 92
        %v2988 = vpop.permute.xlu0 %2987
        %2989 = vrot.lane.b32.xlu0 %v2282, 92
        %v2990 = vpop.permute.xlu0 %2989
        %2991 = vrot.lane.b32.xlu0 %v2342, 92
        %v2992 = vpop.permute.xlu0 %2991
        %2993 = vrot.lane.b32.xlu0 %v2402, 92
        %v2994 = vpop.permute.xlu0 %2993
        %2995 = vrot.lane.b32.xlu0 %v2462, 92
        %v2996 = vpop.permute.xlu0 %2995
        %2997 = vrot.lane.b32.xlu0 %v2522, 92
        %v2998 = vpop.permute.xlu0 %2997
        %2999 = vrot.lane.b32.xlu0 %v2582, 92
        %v3000 = vpop.permute.xlu0 %2999
        %3001 = vrot.lane.b32.xlu0 %v2642, 92
        %v3002 = vpop.permute.xlu0 %3001
        %3003 = vrot.lane.b32.xlu0 %v2702, 92
        %v3004 = vpop.permute.xlu0 %3003
        %vm3005 = vcmp.lt.s32.totalorder %v730, 92
        %v3006 = vsel %vm3005, %v3002, %v3004
        %v3007 = vsel %vm3005, %v3000, %v3002
        %v3008 = vsel %vm3005, %v2998, %v3000
        %v3009 = vsel %vm3005, %v2996, %v2998
        %v3010 = vsel %vm3005, %v2994, %v2996
        %v3011 = vsel %vm3005, %v2992, %v2994
        %v3012 = vsel %vm3005, %v2990, %v2992
        %v3013 = vsel %vm3005, %v2988, %v2990
        %v3014 = vsel %vm3005, %v2986, %v2988
        %v3015 = vsel %vm3005, %v2984, %v2986
        %v3016 = vsel %vm3005, %v3004, %v2984
        %3017 = vst [vmem:[#allocation3 + $0x268] sm:$0xff] %v3015
        %3018 = vst [vmem:[#allocation3 + $0x270] sm:$0xff] %v3014
        %3019 = vst [vmem:[#allocation3 + $0x278] sm:$0xff] %v3013
        %3020 = vst [vmem:[#allocation3 + $0x280] sm:$0xff] %v3012
        %3021 = vst [vmem:[#allocation3 + $0x288] sm:$0xff] %v3011
        %3022 = vst [vmem:[#allocation3 + $0x290] sm:$0xff] %v3010
        %3023 = vst [vmem:[#allocation3 + $0x298] sm:$0xff] %v3009
        %3024 = vst [vmem:[#allocation3 + $0x2a0] sm:$0xff] %v3008
        %3025 = vst [vmem:[#allocation3 + $0x2a8] sm:$0xff] %v3007
        %3026 = vst [vmem:[#allocation3 + $0x2b0] sm:$0xff] %v3006
        %3027 = vst [vmem:[#allocation3 + $0x2b8] sm:$0xff] %v3016
        %3028 = vrot.lane.b32.xlu0 %v2102, 91
        %v3029 = vpop.permute.xlu0 %3028
        %3030 = vrot.lane.b32.xlu0 %v2162, 91
        %v3031 = vpop.permute.xlu0 %3030
        %3032 = vrot.lane.b32.xlu0 %v2222, 91
        %v3033 = vpop.permute.xlu0 %3032
        %3034 = vrot.lane.b32.xlu0 %v2282, 91
        %v3035 = vpop.permute.xlu0 %3034
        %3036 = vrot.lane.b32.xlu0 %v2342, 91
        %v3037 = vpop.permute.xlu0 %3036
        %3038 = vrot.lane.b32.xlu0 %v2402, 91
        %v3039 = vpop.permute.xlu0 %3038
        %3040 = vrot.lane.b32.xlu0 %v2462, 91
        %v3041 = vpop.permute.xlu0 %3040
        %3042 = vrot.lane.b32.xlu0 %v2522, 91
        %v3043 = vpop.permute.xlu0 %3042
        %3044 = vrot.lane.b32.xlu0 %v2582, 91
        %v3045 = vpop.permute.xlu0 %3044
        %3046 = vrot.lane.b32.xlu0 %v2642, 91
        %v3047 = vpop.permute.xlu0 %3046
        %3048 = vrot.lane.b32.xlu0 %v2702, 91
        %v3049 = vpop.permute.xlu0 %3048
        %vm3050 = vcmp.lt.s32.totalorder %v730, 91
        %v3051 = vsel %vm3050, %v3047, %v3049
        %v3052 = vsel %vm3050, %v3045, %v3047
        %v3053 = vsel %vm3050, %v3043, %v3045
        %v3054 = vsel %vm3050, %v3041, %v3043
        %v3055 = vsel %vm3050, %v3039, %v3041
        %v3056 = vsel %vm3050, %v3037, %v3039
        %v3057 = vsel %vm3050, %v3035, %v3037
        %v3058 = vsel %vm3050, %v3033, %v3035
        %v3059 = vsel %vm3050, %v3031, %v3033
        %v3060 = vsel %vm3050, %v3029, %v3031
        %v3061 = vsel %vm3050, %v3049, %v3029
        %3062 = vst [vmem:[#allocation3 + $0x2c0] sm:$0xff] %v3060
        %3063 = vst [vmem:[#allocation3 + $0x2c8] sm:$0xff] %v3059
        %3064 = vst [vmem:[#allocation3 + $0x2d0] sm:$0xff] %v3058
        %3065 = vst [vmem:[#allocation3 + $0x2d8] sm:$0xff] %v3057
        %3066 = vst [vmem:[#allocation3 + $0x2e0] sm:$0xff] %v3056
        %3067 = vst [vmem:[#allocation3 + $0x2e8] sm:$0xff] %v3055
        %3068 = vst [vmem:[#allocation3 + $0x2f0] sm:$0xff] %v3054
        %3069 = vst [vmem:[#allocation3 + $0x2f8] sm:$0xff] %v3053
        %3070 = vst [vmem:[#allocation3 + $0x300] sm:$0xff] %v3052
        %3071 = vst [vmem:[#allocation3 + $0x308] sm:$0xff] %v3051
        %3072 = vst [vmem:[#allocation3 + $0x310] sm:$0xff] %v3061
        %v3073 = vld [vmem:[%s8] sm:$0xf]
        %v3074 = vld [vmem:[#allocation3] sm:$0xff]
        %v3075 = vld [vmem:[#allocation3 + $0x8] sm:$0xff]
        %v3076 = vld [vmem:[#allocation3 + $0x10] sm:$0xff]
        %v3077 = vld [vmem:[#allocation3 + $0x18] sm:$0xff]
        %v3078 = vld [vmem:[#allocation3 + $0x20] sm:$0xff]
        %v3079 = vld [vmem:[#allocation3 + $0x28] sm:$0xff]
        %v3080 = vld [vmem:[#allocation3 + $0x30] sm:$0xff]
        %v3081 = vld [vmem:[#allocation3 + $0x38] sm:$0xff]
        %v3082 = vld [vmem:[#allocation3 + $0x40] sm:$0xff]
        %v3083 = vld [vmem:[#allocation3 + $0x48] sm:$0xff]
        %v3084 = vld [vmem:[#allocation3 + $0x50] sm:$0xff]
        %v3085 = vld [vmem:[#allocation3 + $0x58] sm:$0xff]
        %v3086 = vld [vmem:[#allocation3 + $0x60] sm:$0xff]
        %v3087 = vld [vmem:[#allocation3 + $0x68] sm:$0xff]
        %v3088 = vld [vmem:[#allocation3 + $0x70] sm:$0xff]
        %v3089 = vld [vmem:[#allocation3 + $0x78] sm:$0xff]
        %v3090 = vld [vmem:[#allocation3 + $0x80] sm:$0xff]
        %v3091 = vld [vmem:[#allocation3 + $0x88] sm:$0xff]
        %v3092 = vld [vmem:[#allocation3 + $0x90] sm:$0xff]
        %v3093 = vld [vmem:[#allocation3 + $0x98] sm:$0xff]
        %v3094 = vld [vmem:[#allocation3 + $0xa0] sm:$0xff]
        %v3095 = vld [vmem:[#allocation3 + $0xa8] sm:$0xff]
        %v3096 = vld [vmem:[#allocation3 + $0xb0] sm:$0xff]
        %v3097 = vld [vmem:[#allocation3 + $0xb8] sm:$0xff]
        %v3098 = vld [vmem:[#allocation3 + $0xc0] sm:$0xff]
        %v3099 = vld [vmem:[#allocation3 + $0xc8] sm:$0xff]
        %v3100 = vld [vmem:[#allocation3 + $0xd0] sm:$0xff]
        %v3101 = vld [vmem:[#allocation3 + $0xd8] sm:$0xff]
        %v3102 = vld [vmem:[#allocation3 + $0xe0] sm:$0xff]
        %v3103 = vld [vmem:[#allocation3 + $0xe8] sm:$0xff]
        %v3104 = vld [vmem:[#allocation3 + $0xf0] sm:$0xff]
        %v3105 = vld [vmem:[#allocation3 + $0xf8] sm:$0xff]
        %v3106 = vld [vmem:[#allocation3 + $0x100] sm:$0xff]
        %v3107 = vld [vmem:[#allocation3 + $0x108] sm:$0xff]
        %v3108 = vld [vmem:[#allocation3 + $0x110] sm:$0xff]
        %v3109 = vld [vmem:[#allocation3 + $0x118] sm:$0xff]
        %v3110 = vld [vmem:[#allocation3 + $0x120] sm:$0xff]
        %v3111 = vld [vmem:[#allocation3 + $0x128] sm:$0xff]
        %v3112 = vld [vmem:[#allocation3 + $0x130] sm:$0xff]
        %v3113 = vld [vmem:[#allocation3 + $0x138] sm:$0xff]
        %v3114 = vld [vmem:[#allocation3 + $0x140] sm:$0xff]
        %v3115 = vld [vmem:[#allocation3 + $0x148] sm:$0xff]
        %v3116 = vld [vmem:[#allocation3 + $0x150] sm:$0xff]
        %v3117 = vld [vmem:[#allocation3 + $0x158] sm:$0xff]
        %v3118 = vld [vmem:[#allocation3 + $0x160] sm:$0xff]
        %v3119 = vld [vmem:[#allocation3 + $0x168] sm:$0xff]
        %v3120 = vld [vmem:[#allocation3 + $0x170] sm:$0xff]
        %v3121 = vld [vmem:[#allocation3 + $0x178] sm:$0xff]
        %v3122 = vld [vmem:[#allocation3 + $0x180] sm:$0xff]
        %v3123 = vld [vmem:[#allocation3 + $0x188] sm:$0xff]
        %v3124 = vld [vmem:[#allocation3 + $0x190] sm:$0xff]
        %v3125 = vld [vmem:[#allocation3 + $0x198] sm:$0xff]
        %v3126 = vld [vmem:[#allocation3 + $0x1a0] sm:$0xff]
        %v3127 = vld [vmem:[#allocation3 + $0x1a8] sm:$0xff]
        %v3128 = vld [vmem:[#allocation3 + $0x1b0] sm:$0xff]
        %v3129 = vld [vmem:[#allocation3 + $0x1b8] sm:$0xff]
        %v3130 = vld [vmem:[#allocation3 + $0x1c0] sm:$0xff]
        %v3131 = vld [vmem:[#allocation3 + $0x1c8] sm:$0xff]
        %v3132 = vld [vmem:[#allocation3 + $0x1d0] sm:$0xff]
        %v3133 = vld [vmem:[#allocation3 + $0x1d8] sm:$0xff]
        %v3134 = vld [vmem:[#allocation3 + $0x1e0] sm:$0xff]
        %v3135 = vld [vmem:[#allocation3 + $0x1e8] sm:$0xff]
        %v3136 = vld [vmem:[#allocation3 + $0x1f0] sm:$0xff]
        %v3137 = vld [vmem:[#allocation3 + $0x1f8] sm:$0xff]
        %v3138 = vld [vmem:[#allocation3 + $0x200] sm:$0xff]
        %v3139 = vld [vmem:[#allocation3 + $0x208] sm:$0xff]
        %v3140 = vld [vmem:[#allocation3 + $0x210] sm:$0xff]
        %v3141 = vld [vmem:[#allocation3 + $0x218] sm:$0xff]
        %v3142 = vld [vmem:[#allocation3 + $0x220] sm:$0xff]
        %v3143 = vld [vmem:[#allocation3 + $0x228] sm:$0xff]
        %v3144 = vld [vmem:[#allocation3 + $0x230] sm:$0xff]
        %v3145 = vld [vmem:[#allocation3 + $0x238] sm:$0xff]
        %v3146 = vld [vmem:[#allocation3 + $0x240] sm:$0xff]
        %v3147 = vld [vmem:[#allocation3 + $0x248] sm:$0xff]
        %v3148 = vld [vmem:[#allocation3 + $0x250] sm:$0xff]
        %v3149 = vld [vmem:[#allocation3 + $0x258] sm:$0xff]
        %v3150 = vld [vmem:[#allocation3 + $0x260] sm:$0xff]
        %v3151 = vld [vmem:[#allocation3 + $0x268] sm:$0xff]
        %v3152 = vld [vmem:[#allocation3 + $0x270] sm:$0xff]
        %v3153 = vld [vmem:[#allocation3 + $0x278] sm:$0xff]
        %v3154 = vld [vmem:[#allocation3 + $0x280] sm:$0xff]
        %v3155 = vld [vmem:[#allocation3 + $0x288] sm:$0xff]
        %v3156 = vld [vmem:[#allocation3 + $0x290] sm:$0xff]
        %v3157 = vld [vmem:[#allocation3 + $0x298] sm:$0xff]
        %v3158 = vld [vmem:[#allocation3 + $0x2a0] sm:$0xff]
        %v3159 = vld [vmem:[#allocation3 + $0x2a8] sm:$0xff]
        %v3160 = vld [vmem:[#allocation3 + $0x2b0] sm:$0xff]
        %v3161 = vld [vmem:[#allocation3 + $0x2b8] sm:$0xff]
        %v3162 = vld [vmem:[#allocation3 + $0x2c0] sm:$0xff]
        %v3163 = vld [vmem:[#allocation3 + $0x2c8] sm:$0xff]
        %v3164 = vld [vmem:[#allocation3 + $0x2d0] sm:$0xff]
        %v3165 = vld [vmem:[#allocation3 + $0x2d8] sm:$0xff]
        %v3166 = vld [vmem:[#allocation3 + $0x2e0] sm:$0xff]
        %v3167 = vld [vmem:[#allocation3 + $0x2e8] sm:$0xff]
        %v3168 = vld [vmem:[#allocation3 + $0x2f0] sm:$0xff]
        %v3169 = vld [vmem:[#allocation3 + $0x2f8] sm:$0xff]
        %v3170 = vld [vmem:[#allocation3 + $0x300] sm:$0xff]
        %v3171 = vld [vmem:[#allocation3 + $0x308] sm:$0xff]
        %v3172 = vld [vmem:[#allocation3 + $0x310] sm:$0xff]
        %v3173 = vld [vmem:[%s9] sm:$0xf]
        %3175 = vset.pattern.permute.xlu0 0
        %3176 = vperm.xlu0 %3175, %v3173
        %v3177 = vpop.permute.xlu0 %3176
        %vm3179 = vcmask 588800
        %v3181 = vsel %vm3179, %v3073, 0
        %3183 = vmatpush.msra.mxu0 0.0
        %3184 = vmatpush.msra.mxu0 0.0
        %3185 = vmatpush.msra.mxu0 0.0
        %3186 = vmatpush.msra.mxu0 0.0
        %3187 = vmatpush.msra.mxu0 0.0
        %3188 = vmatpush.msra.mxu0 0.0
        %3189 = vmatpush.msra.mxu0 0.0
        %3190 = vmatpush.msra.mxu0 %v3162
        %3191 = vmatpush.msra.mxu0 %v3151
        %3192 = vmatpush.msra.mxu0 %v3140
        %3193 = vmatpush.msra.mxu0 %v3129
        %3194 = vmatpush.msra.mxu0 %v3118
        %3195 = vmatpush.msra.mxu0 %v3107
        %3196 = vmatpush.msra.mxu0 %v3096
        %3197 = vmatpush.msra.mxu0 %v3085
        %3198 = vmatpush.msra.mxu0 %v3074
        %3199 = vmatmul.f32.gmra.mxu0 %v3181
        %v3200 = vpop.f32.mrf.mxu0
        %v3201 = vadd.f32 %v3177, %v3200
        %3202 = vdwg.mxu0
        %3203 = vmatpush.msra.mxu0 0.0
        %3204 = vmatpush.msra.mxu0 0.0
        %3205 = vmatpush.msra.mxu0 0.0
        %3206 = vmatpush.msra.mxu0 0.0
        %3207 = vmatpush.msra.mxu0 0.0
        %3208 = vmatpush.msra.mxu0 0.0
        %3209 = vmatpush.msra.mxu0 0.0
        %3210 = vmatpush.msra.mxu0 %v3163
        %3211 = vmatpush.msra.mxu0 %v3152
        %3212 = vmatpush.msra.mxu0 %v3141
        %3213 = vmatpush.msra.mxu0 %v3130
        %3214 = vmatpush.msra.mxu0 %v3119
        %3215 = vmatpush.msra.mxu0 %v3108
        %3216 = vmatpush.msra.mxu0 %v3097
        %3217 = vmatpush.msra.mxu0 %v3086
        %3218 = vmatpush.msra.mxu0 %v3075
        %3219 = vmatmul.f32.gmra.mxu0 %v3181
        %v3220 = vpop.f32.mrf.mxu0
        %v3221 = vadd.f32 %v3177, %v3220
        %3222 = vdwg.mxu0
        %3223 = vmatpush.msra.mxu0 0.0
        %3224 = vmatpush.msra.mxu0 0.0
        %3225 = vmatpush.msra.mxu0 0.0
        %3226 = vmatpush.msra.mxu0 0.0
        %3227 = vmatpush.msra.mxu0 0.0
        %3228 = vmatpush.msra.mxu0 0.0
        %3229 = vmatpush.msra.mxu0 0.0
        %3230 = vmatpush.msra.mxu0 %v3164
        %3231 = vmatpush.msra.mxu0 %v3153
        %3232 = vmatpush.msra.mxu0 %v3142
        %3233 = vmatpush.msra.mxu0 %v3131
        %3234 = vmatpush.msra.mxu0 %v3120
        %3235 = vmatpush.msra.mxu0 %v3109
        %3236 = vmatpush.msra.mxu0 %v3098
        %3237 = vmatpush.msra.mxu0 %v3087
        %3238 = vmatpush.msra.mxu0 %v3076
        %3239 = vmatmul.f32.gmra.mxu0 %v3181
        %v3240 = vpop.f32.mrf.mxu0
        %v3241 = vadd.f32 %v3177, %v3240
        %3242 = vdwg.mxu0
        %3243 = vmatpush.msra.mxu0 0.0
        %3244 = vmatpush.msra.mxu0 0.0
        %3245 = vmatpush.msra.mxu0 0.0
        %3246 = vmatpush.msra.mxu0 0.0
        %3247 = vmatpush.msra.mxu0 0.0
        %3248 = vmatpush.msra.mxu0 0.0
        %3249 = vmatpush.msra.mxu0 0.0
        %3250 = vmatpush.msra.mxu0 %v3165
        %3251 = vmatpush.msra.mxu0 %v3154
        %3252 = vmatpush.msra.mxu0 %v3143
        %3253 = vmatpush.msra.mxu0 %v3132
        %3254 = vmatpush.msra.mxu0 %v3121
        %3255 = vmatpush.msra.mxu0 %v3110
        %3256 = vmatpush.msra.mxu0 %v3099
        %3257 = vmatpush.msra.mxu0 %v3088
        %3258 = vmatpush.msra.mxu0 %v3077
        %3259 = vmatmul.f32.gmra.mxu0 %v3181
        %v3260 = vpop.f32.mrf.mxu0
        %v3261 = vadd.f32 %v3177, %v3260
        %3262 = vdwg.mxu0
        %3263 = vmatpush.msra.mxu0 0.0
        %3264 = vmatpush.msra.mxu0 0.0
        %3265 = vmatpush.msra.mxu0 0.0
        %3266 = vmatpush.msra.mxu0 0.0
        %3267 = vmatpush.msra.mxu0 0.0
        %3268 = vmatpush.msra.mxu0 0.0
        %3269 = vmatpush.msra.mxu0 0.0
        %3270 = vmatpush.msra.mxu0 %v3166
        %3271 = vmatpush.msra.mxu0 %v3155
        %3272 = vmatpush.msra.mxu0 %v3144
        %3273 = vmatpush.msra.mxu0 %v3133
        %3274 = vmatpush.msra.mxu0 %v3122
        %3275 = vmatpush.msra.mxu0 %v3111
        %3276 = vmatpush.msra.mxu0 %v3100
        %3277 = vmatpush.msra.mxu0 %v3089
        %3278 = vmatpush.msra.mxu0 %v3078
        %3279 = vmatmul.f32.gmra.mxu0 %v3181
        %v3280 = vpop.f32.mrf.mxu0
        %v3281 = vadd.f32 %v3177, %v3280
        %3282 = vdwg.mxu0
        %3283 = vmatpush.msra.mxu0 0.0
        %3284 = vmatpush.msra.mxu0 0.0
        %3285 = vmatpush.msra.mxu0 0.0
        %3286 = vmatpush.msra.mxu0 0.0
        %3287 = vmatpush.msra.mxu0 0.0
        %3288 = vmatpush.msra.mxu0 0.0
        %3289 = vmatpush.msra.mxu0 0.0
        %3290 = vmatpush.msra.mxu0 %v3167
        %3291 = vmatpush.msra.mxu0 %v3156
        %3292 = vmatpush.msra.mxu0 %v3145
        %3293 = vmatpush.msra.mxu0 %v3134
        %3294 = vmatpush.msra.mxu0 %v3123
        %3295 = vmatpush.msra.mxu0 %v3112
        %3296 = vmatpush.msra.mxu0 %v3101
        %3297 = vmatpush.msra.mxu0 %v3090
        %3298 = vmatpush.msra.mxu0 %v3079
        %3299 = vmatmul.f32.gmra.mxu0 %v3181
        %v3300 = vpop.f32.mrf.mxu0
        %v3301 = vadd.f32 %v3177, %v3300
        %3302 = vdwg.mxu0
        %3303 = vmatpush.msra.mxu0 0.0
        %3304 = vmatpush.msra.mxu0 0.0
        %3305 = vmatpush.msra.mxu0 0.0
        %3306 = vmatpush.msra.mxu0 0.0
        %3307 = vmatpush.msra.mxu0 0.0
        %3308 = vmatpush.msra.mxu0 0.0
        %3309 = vmatpush.msra.mxu0 0.0
        %3310 = vmatpush.msra.mxu0 %v3168
        %3311 = vmatpush.msra.mxu0 %v3157
        %3312 = vmatpush.msra.mxu0 %v3146
        %3313 = vmatpush.msra.mxu0 %v3135
        %3314 = vmatpush.msra.mxu0 %v3124
        %3315 = vmatpush.msra.mxu0 %v3113
        %3316 = vmatpush.msra.mxu0 %v3102
        %3317 = vmatpush.msra.mxu0 %v3091
        %3318 = vmatpush.msra.mxu0 %v3080
        %3319 = vmatmul.f32.gmra.mxu0 %v3181
        %v3320 = vpop.f32.mrf.mxu0
        %v3321 = vadd.f32 %v3177, %v3320
        %3322 = vdwg.mxu0
        %3323 = vmatpush.msra.mxu0 0.0
        %3324 = vmatpush.msra.mxu0 0.0
        %3325 = vmatpush.msra.mxu0 0.0
        %3326 = vmatpush.msra.mxu0 0.0
        %3327 = vmatpush.msra.mxu0 0.0
        %3328 = vmatpush.msra.mxu0 0.0
        %3329 = vmatpush.msra.mxu0 0.0
        %3330 = vmatpush.msra.mxu0 %v3169
        %3331 = vmatpush.msra.mxu0 %v3158
        %3332 = vmatpush.msra.mxu0 %v3147
        %3333 = vmatpush.msra.mxu0 %v3136
        %3334 = vmatpush.msra.mxu0 %v3125
        %3335 = vmatpush.msra.mxu0 %v3114
        %3336 = vmatpush.msra.mxu0 %v3103
        %3337 = vmatpush.msra.mxu0 %v3092
        %3338 = vmatpush.msra.mxu0 %v3081
        %3339 = vmatmul.f32.gmra.mxu0 %v3181
        %v3340 = vpop.f32.mrf.mxu0
        %v3341 = vadd.f32 %v3177, %v3340
        %3342 = vdwg.mxu0
        %3343 = vmatpush.msra.mxu0 0.0
        %3344 = vmatpush.msra.mxu0 0.0
        %3345 = vmatpush.msra.mxu0 0.0
        %3346 = vmatpush.msra.mxu0 0.0
        %3347 = vmatpush.msra.mxu0 0.0
        %3348 = vmatpush.msra.mxu0 0.0
        %3349 = vmatpush.msra.mxu0 0.0
        %3350 = vmatpush.msra.mxu0 %v3170
        %3351 = vmatpush.msra.mxu0 %v3159
        %3352 = vmatpush.msra.mxu0 %v3148
        %3353 = vmatpush.msra.mxu0 %v3137
        %3354 = vmatpush.msra.mxu0 %v3126
        %3355 = vmatpush.msra.mxu0 %v3115
        %3356 = vmatpush.msra.mxu0 %v3104
        %3357 = vmatpush.msra.mxu0 %v3093
        %3358 = vmatpush.msra.mxu0 %v3082
        %3359 = vmatmul.f32.gmra.mxu0 %v3181
        %v3360 = vpop.f32.mrf.mxu0
        %v3361 = vadd.f32 %v3177, %v3360
        %3362 = vdwg.mxu0
        %3363 = vmatpush.msra.mxu0 0.0
        %3364 = vmatpush.msra.mxu0 0.0
        %3365 = vmatpush.msra.mxu0 0.0
        %3366 = vmatpush.msra.mxu0 0.0
        %3367 = vmatpush.msra.mxu0 0.0
        %3368 = vmatpush.msra.mxu0 0.0
        %3369 = vmatpush.msra.mxu0 0.0
        %3370 = vmatpush.msra.mxu0 %v3171
        %3371 = vmatpush.msra.mxu0 %v3160
        %3372 = vmatpush.msra.mxu0 %v3149
        %3373 = vmatpush.msra.mxu0 %v3138
        %3374 = vmatpush.msra.mxu0 %v3127
        %3375 = vmatpush.msra.mxu0 %v3116
        %3376 = vmatpush.msra.mxu0 %v3105
        %3377 = vmatpush.msra.mxu0 %v3094
        %3378 = vmatpush.msra.mxu0 %v3083
        %3379 = vmatmul.f32.gmra.mxu0 %v3181
        %v3380 = vpop.f32.mrf.mxu0
        %v3381 = vadd.f32 %v3177, %v3380
        %3382 = vdwg.mxu0
        %3383 = vmatpush.msra.mxu0 0.0
        %3384 = vmatpush.msra.mxu0 0.0
        %3385 = vmatpush.msra.mxu0 0.0
        %3386 = vmatpush.msra.mxu0 0.0
        %3387 = vmatpush.msra.mxu0 0.0
        %3388 = vmatpush.msra.mxu0 0.0
        %3389 = vmatpush.msra.mxu0 0.0
        %3390 = vmatpush.msra.mxu0 %v3172
        %3391 = vmatpush.msra.mxu0 %v3161
        %3392 = vmatpush.msra.mxu0 %v3150
        %3393 = vmatpush.msra.mxu0 %v3139
        %3394 = vmatpush.msra.mxu0 %v3128
        %3395 = vmatpush.msra.mxu0 %v3117
        %3396 = vmatpush.msra.mxu0 %v3106
        %3397 = vmatpush.msra.mxu0 %v3095
        %3398 = vmatpush.msra.mxu0 %v3084
        %3399 = vmatmul.f32.gmra.mxu0 %v3181
        %v3400 = vpop.f32.mrf.mxu0
        %v3401 = vadd.f32 %v3177, %v3400
        %3402 = vdwg.mxu0
        %v3403 = vld [vmem:[#allocation10] sm:$0xff]
        %v3404 = vld [vmem:[#allocation10 + $0x8] sm:$0x7]
        %v3405 = vld [vmem:[%s10] sm:$0xf]
        %v3406 = vld [vmem:[%s11] sm:$0xf]
        %v3409 = vperm.slane %v3403, 0
        %v3410 = vperm.slane %v3403, 1
        %v3411 = vperm.slane %v3403, 2
        %v3412 = vperm.slane %v3403, 3
        %v3413 = vperm.slane %v3403, 4
        %v3414 = vperm.slane %v3403, 5
        %v3415 = vperm.slane %v3403, 6
        %v3416 = vperm.slane %v3403, 7
        %v3417 = vperm.slane %v3404, 0
        %v3418 = vperm.slane %v3404, 1
        %v3419 = vperm.slane %v3404, 2
        %v3431 = vmul.f32 %v3201, %v3409
        %v3432 = vmul.f32 %v3221, %v3410
        %v3433 = vmul.f32 %v3241, %v3411
        %v3434 = vmul.f32 %v3261, %v3412
        %v3435 = vmul.f32 %v3281, %v3413
        %v3436 = vmul.f32 %v3301, %v3414
        %v3437 = vmul.f32 %v3321, %v3415
        %v3438 = vmul.f32 %v3341, %v3416
        %v3439 = vmul.f32 %v3361, %v3417
        %v3440 = vmul.f32 %v3381, %v3418
        %v3441 = vmul.f32 %v3401, %v3419
        %vm3442 = vcmask 1043456
        %v3443 = vsel %vm3442, %v3431, 0.0
        %v3444 = vsel %vm3442, %v3432, 0.0
        %v3445 = vadd.f32 %v3443, %v3444
        %v3446 = vsel %vm3442, %v3433, 0.0
        %v3447 = vadd.f32 %v3445, %v3446
        %v3448 = vsel %vm3442, %v3434, 0.0
        %v3449 = vadd.f32 %v3447, %v3448
        %v3450 = vsel %vm3442, %v3435, 0.0
        %v3451 = vadd.f32 %v3449, %v3450
        %v3452 = vsel %vm3442, %v3436, 0.0
        %v3453 = vadd.f32 %v3451, %v3452
        %v3454 = vsel %vm3442, %v3437, 0.0
        %v3455 = vadd.f32 %v3453, %v3454
        %v3456 = vsel %vm3442, %v3438, 0.0
        %v3457 = vadd.f32 %v3455, %v3456
        %v3458 = vsel %vm3442, %v3439, 0.0
        %v3459 = vadd.f32 %v3457, %v3458
        %v3460 = vsel %vm3442, %v3440, 0.0
        %v3461 = vadd.f32 %v3459, %v3460
        %v3462 = vsel %vm3442, %v3441, 0.0
        %v3463 = vadd.f32 %v3461, %v3462
        %3464 = vadd.xlane.f32.xlu0 %v3463
        %v3465 = vpop.xlane.xlu0 %3464
        %v3466 = vrot.slane %v3465, 4
        %v3467 = vadd.f32 %v3465, %v3466
        %v3468 = vrot.slane %v3467, 2
        %v3469 = vadd.f32 %v3467, %v3468
        %v3470 = vrot.slane %v3469, 1
        %v3471 = vadd.f32 %v3469, %v3470
        %s3472 = vtos %v3471
        %v3473 = vmul.f32 %v3431, %v3201
        %v3474 = vmul.f32 %v3432, %v3221
        %v3475 = vmul.f32 %v3433, %v3241
        %v3476 = vmul.f32 %v3434, %v3261
        %v3477 = vmul.f32 %v3435, %v3281
        %v3478 = vmul.f32 %v3436, %v3301
        %v3479 = vmul.f32 %v3437, %v3321
        %v3480 = vmul.f32 %v3438, %v3341
        %v3481 = vmul.f32 %v3439, %v3361
        %v3482 = vmul.f32 %v3440, %v3381
        %v3483 = vmul.f32 %v3441, %v3401
        %v3484 = vsel %vm3442, %v3473, 0.0
        %v3485 = vsel %vm3442, %v3474, 0.0
        %v3486 = vadd.f32 %v3484, %v3485
        %v3487 = vsel %vm3442, %v3475, 0.0
        %v3488 = vadd.f32 %v3486, %v3487
        %v3489 = vsel %vm3442, %v3476, 0.0
        %v3490 = vadd.f32 %v3488, %v3489
        %v3491 = vsel %vm3442, %v3477, 0.0
        %v3492 = vadd.f32 %v3490, %v3491
        %v3493 = vsel %vm3442, %v3478, 0.0
        %v3494 = vadd.f32 %v3492, %v3493
        %v3495 = vsel %vm3442, %v3479, 0.0
        %v3496 = vadd.f32 %v3494, %v3495
        %v3497 = vsel %vm3442, %v3480, 0.0
        %v3498 = vadd.f32 %v3496, %v3497
        %v3499 = vsel %vm3442, %v3481, 0.0
        %v3500 = vadd.f32 %v3498, %v3499
        %v3501 = vsel %vm3442, %v3482, 0.0
        %v3502 = vadd.f32 %v3500, %v3501
        %v3503 = vsel %vm3442, %v3483, 0.0
        %v3504 = vadd.f32 %v3502, %v3503
        %3505 = vadd.xlane.f32.xlu0 %v3504
        %v3506 = vpop.xlane.xlu0 %3505
        %v3507 = vrot.slane %v3506, 4
        %v3508 = vadd.f32 %v3506, %v3507
        %v3509 = vrot.slane %v3508, 2
        %v3510 = vadd.f32 %v3508, %v3509
        %v3511 = vrot.slane %v3510, 1
        %v3512 = vadd.f32 %v3510, %v3511
        %s3513 = vtos %v3512
        %v3514 = vrcp.pop 4096.0
        %v3515 = vmul.f32 4096.0, %v3514
        %v3516 = vsub.f32 1.0, %v3515
        %v3517 = vmul.f32 %v3514, %v3516
        %v3518 = vadd.f32 %v3514, %v3517
        %vm3519 = vweird.f32 %v3514
        %v3520 = vsel %vm3519, %v3514, %v3518
        %s3521 = vtos %v3520
        %s3522 = smul.f32 %s3472, %s3521
        %s3523 = smul.f32 %s3472, %s3522
        %s3524 = ssub.f32 %s3513, %s3523
        %v3525 = vrcp.pop 4095.0
        %v3526 = vmul.f32 4095.0, %v3525
        %v3527 = vsub.f32 1.0, %v3526
        %v3528 = vmul.f32 %v3525, %v3527
        %v3529 = vadd.f32 %v3525, %v3528
        %vm3530 = vweird.f32 %v3525
        %v3531 = vsel %vm3530, %v3525, %v3529
        %s3532 = vtos %v3531
        %s3533 = smul.f32 %s3524, %s3532
        %s3534 = smax.f32 %s3533, 0.0
        %v3535 = vstv %s3534
        %v3536 = vrsqrt.pop %v3535
        %v3537 = vmul.f32 %v3536, %v3535
        %v3538 = vmul.f32 %v3537, %v3536
        %v3539 = vmul.f32 0.5, %v3538
        %v3540 = vsub.f32 1.5, %v3539
        %v3541 = vmul.f32 %v3536, %v3540
        %v3542 = vmul.f32 %v3535, %v3541
        %vm3543 = vcmp.eq.f32.partialorder %v3535, inf
        %v3544 = vsel %vm3543, %v3535, %v3542
        %vm3545 = vcmp.eq.f32.partialorder %v3535, 0.0
        %v3546 = vand.u32 %v3535, 2147483648
        %v3547 = vsel %vm3545, %v3546, %v3544
        %s3548 = vtos %v3547
        %s3549 = sadd.f32 %s3548, 1e-05
        %v3550 = vstv %s3549
        %v3551 = vrcp.pop %v3550
        %v3552 = vmul.f32 %v3550, %v3551
        %v3553 = vsub.f32 1.0, %v3552
        %v3554 = vmul.f32 %v3551, %v3553
        %v3555 = vadd.f32 %v3551, %v3554
        %vm3556 = vweird.f32 %v3550
        %vm3557 = vweird.f32 %v3551
        %vm3558 = vmor %vm3556, %vm3557
        %v3559 = vsel %vm3558, %v3551, %v3555
        %v3560 = vand.u32 2147483647, %v3550
        %vm3561 = vcmp.eq.f32.partialorder %v3560, 8.507059e+37
        %v3562 = vand.u32 %v3550, 2147483648
        %v3563 = vor.u32 1.1754944e-38, %v3562
        %v3564 = vsel %vm3561, %v3563, %v3559
        %s3565 = vtos %v3564
        %v3566 = vstv %s3522
        %v3567 = vsub.f32 %v3201, %v3566
        %v3568 = vsub.f32 %v3221, %v3566
        %v3569 = vsub.f32 %v3241, %v3566
        %v3570 = vsub.f32 %v3261, %v3566
        %v3571 = vsub.f32 %v3281, %v3566
        %v3572 = vsub.f32 %v3301, %v3566
        %v3573 = vsub.f32 %v3321, %v3566
        %v3574 = vsub.f32 %v3341, %v3566
        %v3575 = vsub.f32 %v3361, %v3566
        %v3576 = vsub.f32 %v3381, %v3566
        %v3577 = vsub.f32 %v3401, %v3566
        %v3578 = vstv %s3565
        %v3579 = vmul.f32 %v3567, %v3578
        %v3580 = vmul.f32 %v3568, %v3578
        %v3581 = vmul.f32 %v3569, %v3578
        %v3582 = vmul.f32 %v3570, %v3578
        %v3583 = vmul.f32 %v3571, %v3578
        %v3584 = vmul.f32 %v3572, %v3578
        %v3585 = vmul.f32 %v3573, %v3578
        %v3586 = vmul.f32 %v3574, %v3578
        %v3587 = vmul.f32 %v3575, %v3578
        %v3588 = vmul.f32 %v3576, %v3578
        %v3589 = vmul.f32 %v3577, %v3578
        %3591 = vset.pattern.permute.xlu0 0
        %3592 = vperm.xlu0 %3591, %v3405
        %v3593 = vpop.permute.xlu0 %3592
        %v3595 = vmul.f32 %v3579, %v3593
        %v3596 = vmul.f32 %v3580, %v3593
        %v3597 = vmul.f32 %v3581, %v3593
        %v3598 = vmul.f32 %v3582, %v3593
        %v3599 = vmul.f32 %v3583, %v3593
        %v3600 = vmul.f32 %v3584, %v3593
        %v3601 = vmul.f32 %v3585, %v3593
        %v3602 = vmul.f32 %v3586, %v3593
        %v3603 = vmul.f32 %v3587, %v3593
        %v3604 = vmul.f32 %v3588, %v3593
        %v3605 = vmul.f32 %v3589, %v3593
        %3607 = vset.pattern.permute.xlu0 0
        %3608 = vperm.xlu0 %3607, %v3406
        %v3609 = vpop.permute.xlu0 %3608
        %v3611 = vadd.f32 %v3595, %v3609
        %v3612 = vadd.f32 %v3596, %v3609
        %v3613 = vadd.f32 %v3597, %v3609
        %v3614 = vadd.f32 %v3598, %v3609
        %v3615 = vadd.f32 %v3599, %v3609
        %v3616 = vadd.f32 %v3600, %v3609
        %v3617 = vadd.f32 %v3601, %v3609
        %v3618 = vadd.f32 %v3602, %v3609
        %v3619 = vadd.f32 %v3603, %v3609
        %v3620 = vadd.f32 %v3604, %v3609
        %v3621 = vadd.f32 %v3605, %v3609
        %v3622 = vmax.f32 %v3611, 0.0
        %v3623 = vmax.f32 %v3612, 0.0
        %v3624 = vmax.f32 %v3613, 0.0
        %v3625 = vmax.f32 %v3614, 0.0
        %v3626 = vmax.f32 %v3615, 0.0
        %v3627 = vmax.f32 %v3616, 0.0
        %v3628 = vmax.f32 %v3617, 0.0
        %v3629 = vmax.f32 %v3618, 0.0
        %v3630 = vmax.f32 %v3619, 0.0
        %v3631 = vmax.f32 %v3620, 0.0
        %v3632 = vmax.f32 %v3621, 0.0
        %v3633 = vld [vmem:[#allocation12] sm:$0xff]
        %v3634 = vld [vmem:[#allocation12 + $0x8] sm:$0x7]
        %3635 = vrot.lane.b32.xlu0 %v3622, 37
        %v3636 = vpop.permute.xlu0 %3635
        %3637 = vrot.lane.b32.xlu0 %v3623, 37
        %v3638 = vpop.permute.xlu0 %3637
        %3639 = vrot.lane.b32.xlu0 %v3624, 37
        %v3640 = vpop.permute.xlu0 %3639
        %3641 = vrot.lane.b32.xlu0 %v3625, 37
        %v3642 = vpop.permute.xlu0 %3641
        %3643 = vrot.lane.b32.xlu0 %v3626, 37
        %v3644 = vpop.permute.xlu0 %3643
        %3645 = vrot.lane.b32.xlu0 %v3627, 37
        %v3646 = vpop.permute.xlu0 %3645
        %3647 = vrot.lane.b32.xlu0 %v3628, 37
        %v3648 = vpop.permute.xlu0 %3647
        %3649 = vrot.lane.b32.xlu0 %v3629, 37
        %v3650 = vpop.permute.xlu0 %3649
        %3651 = vrot.lane.b32.xlu0 %v3630, 37
        %v3652 = vpop.permute.xlu0 %3651
        %3653 = vrot.lane.b32.xlu0 %v3631, 37
        %v3654 = vpop.permute.xlu0 %3653
        %3655 = vrot.lane.b32.xlu0 %v3632, 37
        %v3656 = vpop.permute.xlu0 %3655
        %v3657 = vsel %vm2726, %v3654, %v3656
        %v3658 = vsel %vm2726, %v3652, %v3654
        %v3659 = vsel %vm2726, %v3650, %v3652
        %v3660 = vsel %vm2726, %v3648, %v3650
        %v3661 = vsel %vm2726, %v3646, %v3648
        %v3662 = vsel %vm2726, %v3644, %v3646
        %v3663 = vsel %vm2726, %v3642, %v3644
        %v3664 = vsel %vm2726, %v3640, %v3642
        %v3665 = vsel %vm2726, %v3638, %v3640
        %v3666 = vsel %vm2726, %v3636, %v3638
        %v3667 = vsel %vm2726, %v3656, %v3636
        %v3670 = vperm.slane %v3633, 0
        %v3671 = vperm.slane %v3633, 1
        %v3672 = vperm.slane %v3633, 2
        %v3673 = vperm.slane %v3633, 3
        %v3674 = vperm.slane %v3633, 4
        %v3675 = vperm.slane %v3633, 5
        %v3676 = vperm.slane %v3633, 6
        %v3677 = vperm.slane %v3633, 7
        %v3678 = vperm.slane %v3634, 0
        %v3679 = vperm.slane %v3634, 1
        %v3680 = vperm.slane %v3634, 2
        %v3692 = vmul.f32 %v3670, %v3667
        %v3693 = vmul.f32 %v3671, %v3666
        %v3694 = vmul.f32 %v3672, %v3665
        %v3695 = vmul.f32 %v3673, %v3664
        %v3696 = vmul.f32 %v3674, %v3663
        %v3697 = vmul.f32 %v3675, %v3662
        %v3698 = vmul.f32 %v3676, %v3661
        %v3699 = vmul.f32 %v3677, %v3660
        %v3700 = vmul.f32 %v3678, %v3659
        %v3701 = vmul.f32 %v3679, %v3658
        %v3702 = vmul.f32 %v3680, %v3657
        %3703 = vrot.lane.b32.xlu0 %v3692, 74
        %v3704 = vpop.permute.xlu0 %3703
        %3705 = vrot.lane.b32.xlu0 %v3693, 74
        %v3706 = vpop.permute.xlu0 %3705
        %3707 = vrot.lane.b32.xlu0 %v3694, 74
        %v3708 = vpop.permute.xlu0 %3707
        %3709 = vrot.lane.b32.xlu0 %v3695, 74
        %v3710 = vpop.permute.xlu0 %3709
        %3711 = vrot.lane.b32.xlu0 %v3696, 74
        %v3712 = vpop.permute.xlu0 %3711
        %3713 = vrot.lane.b32.xlu0 %v3697, 74
        %v3714 = vpop.permute.xlu0 %3713
        %3715 = vrot.lane.b32.xlu0 %v3698, 74
        %v3716 = vpop.permute.xlu0 %3715
        %3717 = vrot.lane.b32.xlu0 %v3699, 74
        %v3718 = vpop.permute.xlu0 %3717
        %3719 = vrot.lane.b32.xlu0 %v3700, 74
        %v3720 = vpop.permute.xlu0 %3719
        %3721 = vrot.lane.b32.xlu0 %v3701, 74
        %v3722 = vpop.permute.xlu0 %3721
        %3723 = vrot.lane.b32.xlu0 %v3702, 74
        %v3724 = vpop.permute.xlu0 %3723
        %vm3725 = vcmp.lt.s32.totalorder %v730, 74
        %v3726 = vsel %vm3725, %v3722, %v3724
        %v3727 = vsel %vm3725, %v3720, %v3722
        %v3728 = vsel %vm3725, %v3718, %v3720
        %v3729 = vsel %vm3725, %v3716, %v3718
        %v3730 = vsel %vm3725, %v3714, %v3716
        %v3731 = vsel %vm3725, %v3712, %v3714
        %v3732 = vsel %vm3725, %v3710, %v3712
        %v3733 = vsel %vm3725, %v3708, %v3710
        %v3734 = vsel %vm3725, %v3706, %v3708
        %v3735 = vsel %vm3725, %v3704, %v3706
        %v3736 = vsel %vm3725, %v3724, %v3704
        %3737 = vst [vmem:[#allocation4] sm:$0xf] %v3736
        %3738 = vst [vmem:[#allocation4 + $0x8] sm:$0xf] %v3735
        %3739 = vst [vmem:[#allocation4 + $0x10] sm:$0xf] %v3734
        %3740 = vst [vmem:[#allocation4 + $0x18] sm:$0xf] %v3733
        %3741 = vst [vmem:[#allocation4 + $0x20] sm:$0xf] %v3732
        %3742 = vst [vmem:[#allocation4 + $0x28] sm:$0xf] %v3731
        %3743 = vst [vmem:[#allocation4 + $0x30] sm:$0xf] %v3730
        %3744 = vst [vmem:[#allocation4 + $0x38] sm:$0xf] %v3729
        %3745 = vst [vmem:[#allocation4 + $0x40] sm:$0xf] %v3728
        %3746 = vst [vmem:[#allocation4 + $0x48] sm:$0xf] %v3727
        %3747 = vst [vmem:[#allocation4 + $0x50] sm:$0xf] %v3726
        %3748 = vrot.lane.b32.xlu0 %v3692, 73
        %v3749 = vpop.permute.xlu0 %3748
        %3750 = vrot.lane.b32.xlu0 %v3693, 73
        %v3751 = vpop.permute.xlu0 %3750
        %3752 = vrot.lane.b32.xlu0 %v3694, 73
        %v3753 = vpop.permute.xlu0 %3752
        %3754 = vrot.lane.b32.xlu0 %v3695, 73
        %v3755 = vpop.permute.xlu0 %3754
        %3756 = vrot.lane.b32.xlu0 %v3696, 73
        %v3757 = vpop.permute.xlu0 %3756
        %3758 = vrot.lane.b32.xlu0 %v3697, 73
        %v3759 = vpop.permute.xlu0 %3758
        %3760 = vrot.lane.b32.xlu0 %v3698, 73
        %v3761 = vpop.permute.xlu0 %3760
        %3762 = vrot.lane.b32.xlu0 %v3699, 73
        %v3763 = vpop.permute.xlu0 %3762
        %3764 = vrot.lane.b32.xlu0 %v3700, 73
        %v3765 = vpop.permute.xlu0 %3764
        %3766 = vrot.lane.b32.xlu0 %v3701, 73
        %v3767 = vpop.permute.xlu0 %3766
        %3768 = vrot.lane.b32.xlu0 %v3702, 73
        %v3769 = vpop.permute.xlu0 %3768
        %vm3770 = vcmp.lt.s32.totalorder %v730, 73
        %v3771 = vsel %vm3770, %v3767, %v3769
        %v3772 = vsel %vm3770, %v3765, %v3767
        %v3773 = vsel %vm3770, %v3763, %v3765
        %v3774 = vsel %vm3770, %v3761, %v3763
        %v3775 = vsel %vm3770, %v3759, %v3761
        %v3776 = vsel %vm3770, %v3757, %v3759
        %v3777 = vsel %vm3770, %v3755, %v3757
        %v3778 = vsel %vm3770, %v3753, %v3755
        %v3779 = vsel %vm3770, %v3751, %v3753
        %v3780 = vsel %vm3770, %v3749, %v3751
        %v3781 = vsel %vm3770, %v3769, %v3749
        %v3793 = vrot.slane %v3781, 4
        %v3794 = vrot.slane %v3780, 4
        %v3795 = vrot.slane %v3779, 4
        %v3796 = vrot.slane %v3778, 4
        %v3797 = vrot.slane %v3777, 4
        %v3798 = vrot.slane %v3776, 4
        %v3799 = vrot.slane %v3775, 4
        %v3800 = vrot.slane %v3774, 4
        %v3801 = vrot.slane %v3773, 4
        %v3802 = vrot.slane %v3772, 4
        %v3803 = vrot.slane %v3771, 4
        %3815 = vst [vmem:[#allocation4] sm:$0xf0] %v3793
        %3816 = vst [vmem:[#allocation4 + $0x8] sm:$0xf0] %v3794
        %3817 = vst [vmem:[#allocation4 + $0x10] sm:$0xf0] %v3795
        %3818 = vst [vmem:[#allocation4 + $0x18] sm:$0xf0] %v3796
        %3819 = vst [vmem:[#allocation4 + $0x20] sm:$0xf0] %v3797
        %3820 = vst [vmem:[#allocation4 + $0x28] sm:$0xf0] %v3798
        %3821 = vst [vmem:[#allocation4 + $0x30] sm:$0xf0] %v3799
        %3822 = vst [vmem:[#allocation4 + $0x38] sm:$0xf0] %v3800
        %3823 = vst [vmem:[#allocation4 + $0x40] sm:$0xf0] %v3801
        %3824 = vst [vmem:[#allocation4 + $0x48] sm:$0xf0] %v3802
        %3825 = vst [vmem:[#allocation4 + $0x50] sm:$0xf0] %v3803
        %3826 = vrot.lane.b32.xlu0 %v3692, 72
        %v3827 = vpop.permute.xlu0 %3826
        %3828 = vrot.lane.b32.xlu0 %v3693, 72
        %v3829 = vpop.permute.xlu0 %3828
        %3830 = vrot.lane.b32.xlu0 %v3694, 72
        %v3831 = vpop.permute.xlu0 %3830
        %3832 = vrot.lane.b32.xlu0 %v3695, 72
        %v3833 = vpop.permute.xlu0 %3832
        %3834 = vrot.lane.b32.xlu0 %v3696, 72
        %v3835 = vpop.permute.xlu0 %3834
        %3836 = vrot.lane.b32.xlu0 %v3697, 72
        %v3837 = vpop.permute.xlu0 %3836
        %3838 = vrot.lane.b32.xlu0 %v3698, 72
        %v3839 = vpop.permute.xlu0 %3838
        %3840 = vrot.lane.b32.xlu0 %v3699, 72
        %v3841 = vpop.permute.xlu0 %3840
        %3842 = vrot.lane.b32.xlu0 %v3700, 72
        %v3843 = vpop.permute.xlu0 %3842
        %3844 = vrot.lane.b32.xlu0 %v3701, 72
        %v3845 = vpop.permute.xlu0 %3844
        %3846 = vrot.lane.b32.xlu0 %v3702, 72
        %v3847 = vpop.permute.xlu0 %3846
        %vm3848 = vcmp.lt.s32.totalorder %v730, 72
        %v3849 = vsel %vm3848, %v3845, %v3847
        %v3850 = vsel %vm3848, %v3843, %v3845
        %v3851 = vsel %vm3848, %v3841, %v3843
        %v3852 = vsel %vm3848, %v3839, %v3841
        %v3853 = vsel %vm3848, %v3837, %v3839
        %v3854 = vsel %vm3848, %v3835, %v3837
        %v3855 = vsel %vm3848, %v3833, %v3835
        %v3856 = vsel %vm3848, %v3831, %v3833
        %v3857 = vsel %vm3848, %v3829, %v3831
        %v3858 = vsel %vm3848, %v3827, %v3829
        %v3859 = vsel %vm3848, %v3847, %v3827
        %3860 = vst [vmem:[#allocation4 + $0x58] sm:$0xf] %v3859
        %3861 = vst [vmem:[#allocation4 + $0x60] sm:$0xf] %v3858
        %3862 = vst [vmem:[#allocation4 + $0x68] sm:$0xf] %v3857
        %3863 = vst [vmem:[#allocation4 + $0x70] sm:$0xf] %v3856
        %3864 = vst [vmem:[#allocation4 + $0x78] sm:$0xf] %v3855
        %3865 = vst [vmem:[#allocation4 + $0x80] sm:$0xf] %v3854
        %3866 = vst [vmem:[#allocation4 + $0x88] sm:$0xf] %v3853
        %3867 = vst [vmem:[#allocation4 + $0x90] sm:$0xf] %v3852
        %3868 = vst [vmem:[#allocation4 + $0x98] sm:$0xf] %v3851
        %3869 = vst [vmem:[#allocation4 + $0xa0] sm:$0xf] %v3850
        %3870 = vst [vmem:[#allocation4 + $0xa8] sm:$0xf] %v3849
        %3871 = vrot.lane.b32.xlu0 %v3692, 71
        %v3872 = vpop.permute.xlu0 %3871
        %3873 = vrot.lane.b32.xlu0 %v3693, 71
        %v3874 = vpop.permute.xlu0 %3873
        %3875 = vrot.lane.b32.xlu0 %v3694, 71
        %v3876 = vpop.permute.xlu0 %3875
        %3877 = vrot.lane.b32.xlu0 %v3695, 71
        %v3878 = vpop.permute.xlu0 %3877
        %3879 = vrot.lane.b32.xlu0 %v3696, 71
        %v3880 = vpop.permute.xlu0 %3879
        %3881 = vrot.lane.b32.xlu0 %v3697, 71
        %v3882 = vpop.permute.xlu0 %3881
        %3883 = vrot.lane.b32.xlu0 %v3698, 71
        %v3884 = vpop.permute.xlu0 %3883
        %3885 = vrot.lane.b32.xlu0 %v3699, 71
        %v3886 = vpop.permute.xlu0 %3885
        %3887 = vrot.lane.b32.xlu0 %v3700, 71
        %v3888 = vpop.permute.xlu0 %3887
        %3889 = vrot.lane.b32.xlu0 %v3701, 71
        %v3890 = vpop.permute.xlu0 %3889
        %3891 = vrot.lane.b32.xlu0 %v3702, 71
        %v3892 = vpop.permute.xlu0 %3891
        %vm3893 = vcmp.lt.s32.totalorder %v730, 71
        %v3894 = vsel %vm3893, %v3890, %v3892
        %v3895 = vsel %vm3893, %v3888, %v3890
        %v3896 = vsel %vm3893, %v3886, %v3888
        %v3897 = vsel %vm3893, %v3884, %v3886
        %v3898 = vsel %vm3893, %v3882, %v3884
        %v3899 = vsel %vm3893, %v3880, %v3882
        %v3900 = vsel %vm3893, %v3878, %v3880
        %v3901 = vsel %vm3893, %v3876, %v3878
        %v3902 = vsel %vm3893, %v3874, %v3876
        %v3903 = vsel %vm3893, %v3872, %v3874
        %v3904 = vsel %vm3893, %v3892, %v3872
        %v3916 = vrot.slane %v3904, 4
        %v3917 = vrot.slane %v3903, 4
        %v3918 = vrot.slane %v3902, 4
        %v3919 = vrot.slane %v3901, 4
        %v3920 = vrot.slane %v3900, 4
        %v3921 = vrot.slane %v3899, 4
        %v3922 = vrot.slane %v3898, 4
        %v3923 = vrot.slane %v3897, 4
        %v3924 = vrot.slane %v3896, 4
        %v3925 = vrot.slane %v3895, 4
        %v3926 = vrot.slane %v3894, 4
        %3938 = vst [vmem:[#allocation4 + $0x58] sm:$0xf0] %v3916
        %3939 = vst [vmem:[#allocation4 + $0x60] sm:$0xf0] %v3917
        %3940 = vst [vmem:[#allocation4 + $0x68] sm:$0xf0] %v3918
        %3941 = vst [vmem:[#allocation4 + $0x70] sm:$0xf0] %v3919
        %3942 = vst [vmem:[#allocation4 + $0x78] sm:$0xf0] %v3920
        %3943 = vst [vmem:[#allocation4 + $0x80] sm:$0xf0] %v3921
        %3944 = vst [vmem:[#allocation4 + $0x88] sm:$0xf0] %v3922
        %3945 = vst [vmem:[#allocation4 + $0x90] sm:$0xf0] %v3923
        %3946 = vst [vmem:[#allocation4 + $0x98] sm:$0xf0] %v3924
        %3947 = vst [vmem:[#allocation4 + $0xa0] sm:$0xf0] %v3925
        %3948 = vst [vmem:[#allocation4 + $0xa8] sm:$0xf0] %v3926
        %3949 = vrot.lane.b32.xlu0 %v3692, 70
        %v3950 = vpop.permute.xlu0 %3949
        %3951 = vrot.lane.b32.xlu0 %v3693, 70
        %v3952 = vpop.permute.xlu0 %3951
        %3953 = vrot.lane.b32.xlu0 %v3694, 70
        %v3954 = vpop.permute.xlu0 %3953
        %3955 = vrot.lane.b32.xlu0 %v3695, 70
        %v3956 = vpop.permute.xlu0 %3955
        %3957 = vrot.lane.b32.xlu0 %v3696, 70
        %v3958 = vpop.permute.xlu0 %3957
        %3959 = vrot.lane.b32.xlu0 %v3697, 70
        %v3960 = vpop.permute.xlu0 %3959
        %3961 = vrot.lane.b32.xlu0 %v3698, 70
        %v3962 = vpop.permute.xlu0 %3961
        %3963 = vrot.lane.b32.xlu0 %v3699, 70
        %v3964 = vpop.permute.xlu0 %3963
        %3965 = vrot.lane.b32.xlu0 %v3700, 70
        %v3966 = vpop.permute.xlu0 %3965
        %3967 = vrot.lane.b32.xlu0 %v3701, 70
        %v3968 = vpop.permute.xlu0 %3967
        %3969 = vrot.lane.b32.xlu0 %v3702, 70
        %v3970 = vpop.permute.xlu0 %3969
        %vm3971 = vcmp.lt.s32.totalorder %v730, 70
        %v3972 = vsel %vm3971, %v3968, %v3970
        %v3973 = vsel %vm3971, %v3966, %v3968
        %v3974 = vsel %vm3971, %v3964, %v3966
        %v3975 = vsel %vm3971, %v3962, %v3964
        %v3976 = vsel %vm3971, %v3960, %v3962
        %v3977 = vsel %vm3971, %v3958, %v3960
        %v3978 = vsel %vm3971, %v3956, %v3958
        %v3979 = vsel %vm3971, %v3954, %v3956
        %v3980 = vsel %vm3971, %v3952, %v3954
        %v3981 = vsel %vm3971, %v3950, %v3952
        %v3982 = vsel %vm3971, %v3970, %v3950
        %3983 = vst [vmem:[#allocation4 + $0xb0] sm:$0xf] %v3982
        %3984 = vst [vmem:[#allocation4 + $0xb8] sm:$0xf] %v3981
        %3985 = vst [vmem:[#allocation4 + $0xc0] sm:$0xf] %v3980
        %3986 = vst [vmem:[#allocation4 + $0xc8] sm:$0xf] %v3979
        %3987 = vst [vmem:[#allocation4 + $0xd0] sm:$0xf] %v3978
        %3988 = vst [vmem:[#allocation4 + $0xd8] sm:$0xf] %v3977
        %3989 = vst [vmem:[#allocation4 + $0xe0] sm:$0xf] %v3976
        %3990 = vst [vmem:[#allocation4 + $0xe8] sm:$0xf] %v3975
        %3991 = vst [vmem:[#allocation4 + $0xf0] sm:$0xf] %v3974
        %3992 = vst [vmem:[#allocation4 + $0xf8] sm:$0xf] %v3973
        %3993 = vst [vmem:[#allocation4 + $0x100] sm:$0xf] %v3972
        %3994 = vrot.lane.b32.xlu0 %v3692, 38
        %v3995 = vpop.permute.xlu0 %3994
        %3996 = vrot.lane.b32.xlu0 %v3693, 38
        %v3997 = vpop.permute.xlu0 %3996
        %3998 = vrot.lane.b32.xlu0 %v3694, 38
        %v3999 = vpop.permute.xlu0 %3998
        %4000 = vrot.lane.b32.xlu0 %v3695, 38
        %v4001 = vpop.permute.xlu0 %4000
        %4002 = vrot.lane.b32.xlu0 %v3696, 38
        %v4003 = vpop.permute.xlu0 %4002
        %4004 = vrot.lane.b32.xlu0 %v3697, 38
        %v4005 = vpop.permute.xlu0 %4004
        %4006 = vrot.lane.b32.xlu0 %v3698, 38
        %v4007 = vpop.permute.xlu0 %4006
        %4008 = vrot.lane.b32.xlu0 %v3699, 38
        %v4009 = vpop.permute.xlu0 %4008
        %4010 = vrot.lane.b32.xlu0 %v3700, 38
        %v4011 = vpop.permute.xlu0 %4010
        %4012 = vrot.lane.b32.xlu0 %v3701, 38
        %v4013 = vpop.permute.xlu0 %4012
        %4014 = vrot.lane.b32.xlu0 %v3702, 38
        %v4015 = vpop.permute.xlu0 %4014
        %vm4016 = vcmp.lt.s32.totalorder %v730, 38
        %v4017 = vsel %vm4016, %v4013, %v4015
        %v4018 = vsel %vm4016, %v4011, %v4013
        %v4019 = vsel %vm4016, %v4009, %v4011
        %v4020 = vsel %vm4016, %v4007, %v4009
        %v4021 = vsel %vm4016, %v4005, %v4007
        %v4022 = vsel %vm4016, %v4003, %v4005
        %v4023 = vsel %vm4016, %v4001, %v4003
        %v4024 = vsel %vm4016, %v3999, %v4001
        %v4025 = vsel %vm4016, %v3997, %v3999
        %v4026 = vsel %vm4016, %v3995, %v3997
        %v4027 = vsel %vm4016, %v4015, %v3995
        %v4039 = vrot.slane %v4027, 4
        %v4040 = vrot.slane %v4026, 4
        %v4041 = vrot.slane %v4025, 4
        %v4042 = vrot.slane %v4024, 4
        %v4043 = vrot.slane %v4023, 4
        %v4044 = vrot.slane %v4022, 4
        %v4045 = vrot.slane %v4021, 4
        %v4046 = vrot.slane %v4020, 4
        %v4047 = vrot.slane %v4019, 4
        %v4048 = vrot.slane %v4018, 4
        %v4049 = vrot.slane %v4017, 4
        %4061 = vst [vmem:[#allocation4 + $0xb0] sm:$0xf0] %v4039
        %4062 = vst [vmem:[#allocation4 + $0xb8] sm:$0xf0] %v4040
        %4063 = vst [vmem:[#allocation4 + $0xc0] sm:$0xf0] %v4041
        %4064 = vst [vmem:[#allocation4 + $0xc8] sm:$0xf0] %v4042
        %4065 = vst [vmem:[#allocation4 + $0xd0] sm:$0xf0] %v4043
        %4066 = vst [vmem:[#allocation4 + $0xd8] sm:$0xf0] %v4044
        %4067 = vst [vmem:[#allocation4 + $0xe0] sm:$0xf0] %v4045
        %4068 = vst [vmem:[#allocation4 + $0xe8] sm:$0xf0] %v4046
        %4069 = vst [vmem:[#allocation4 + $0xf0] sm:$0xf0] %v4047
        %4070 = vst [vmem:[#allocation4 + $0xf8] sm:$0xf0] %v4048
        %4071 = vst [vmem:[#allocation4 + $0x100] sm:$0xf0] %v4049
        %4072 = vrot.lane.b32.xlu0 %v3692, 37
        %v4073 = vpop.permute.xlu0 %4072
        %4074 = vrot.lane.b32.xlu0 %v3693, 37
        %v4075 = vpop.permute.xlu0 %4074
        %4076 = vrot.lane.b32.xlu0 %v3694, 37
        %v4077 = vpop.permute.xlu0 %4076
        %4078 = vrot.lane.b32.xlu0 %v3695, 37
        %v4079 = vpop.permute.xlu0 %4078
        %4080 = vrot.lane.b32.xlu0 %v3696, 37
        %v4081 = vpop.permute.xlu0 %4080
        %4082 = vrot.lane.b32.xlu0 %v3697, 37
        %v4083 = vpop.permute.xlu0 %4082
        %4084 = vrot.lane.b32.xlu0 %v3698, 37
        %v4085 = vpop.permute.xlu0 %4084
        %4086 = vrot.lane.b32.xlu0 %v3699, 37
        %v4087 = vpop.permute.xlu0 %4086
        %4088 = vrot.lane.b32.xlu0 %v3700, 37
        %v4089 = vpop.permute.xlu0 %4088
        %4090 = vrot.lane.b32.xlu0 %v3701, 37
        %v4091 = vpop.permute.xlu0 %4090
        %4092 = vrot.lane.b32.xlu0 %v3702, 37
        %v4093 = vpop.permute.xlu0 %4092
        %v4094 = vsel %vm2726, %v4091, %v4093
        %v4095 = vsel %vm2726, %v4089, %v4091
        %v4096 = vsel %vm2726, %v4087, %v4089
        %v4097 = vsel %vm2726, %v4085, %v4087
        %v4098 = vsel %vm2726, %v4083, %v4085
        %v4099 = vsel %vm2726, %v4081, %v4083
        %v4100 = vsel %vm2726, %v4079, %v4081
        %v4101 = vsel %vm2726, %v4077, %v4079
        %v4102 = vsel %vm2726, %v4075, %v4077
        %v4103 = vsel %vm2726, %v4073, %v4075
        %v4104 = vsel %vm2726, %v4093, %v4073
        %4105 = vst [vmem:[#allocation4 + $0x108] sm:$0xf] %v4104
        %4106 = vst [vmem:[#allocation4 + $0x110] sm:$0xf] %v4103
        %4107 = vst [vmem:[#allocation4 + $0x118] sm:$0xf] %v4102
        %4108 = vst [vmem:[#allocation4 + $0x120] sm:$0xf] %v4101
        %4109 = vst [vmem:[#allocation4 + $0x128] sm:$0xf] %v4100
        %4110 = vst [vmem:[#allocation4 + $0x130] sm:$0xf] %v4099
        %4111 = vst [vmem:[#allocation4 + $0x138] sm:$0xf] %v4098
        %4112 = vst [vmem:[#allocation4 + $0x140] sm:$0xf] %v4097
        %4113 = vst [vmem:[#allocation4 + $0x148] sm:$0xf] %v4096
        %4114 = vst [vmem:[#allocation4 + $0x150] sm:$0xf] %v4095
        %4115 = vst [vmem:[#allocation4 + $0x158] sm:$0xf] %v4094
        %4116 = vrot.lane.b32.xlu0 %v3692, 36
        %v4117 = vpop.permute.xlu0 %4116
        %4118 = vrot.lane.b32.xlu0 %v3693, 36
        %v4119 = vpop.permute.xlu0 %4118
        %4120 = vrot.lane.b32.xlu0 %v3694, 36
        %v4121 = vpop.permute.xlu0 %4120
        %4122 = vrot.lane.b32.xlu0 %v3695, 36
        %v4123 = vpop.permute.xlu0 %4122
        %4124 = vrot.lane.b32.xlu0 %v3696, 36
        %v4125 = vpop.permute.xlu0 %4124
        %4126 = vrot.lane.b32.xlu0 %v3697, 36
        %v4127 = vpop.permute.xlu0 %4126
        %4128 = vrot.lane.b32.xlu0 %v3698, 36
        %v4129 = vpop.permute.xlu0 %4128
        %4130 = vrot.lane.b32.xlu0 %v3699, 36
        %v4131 = vpop.permute.xlu0 %4130
        %4132 = vrot.lane.b32.xlu0 %v3700, 36
        %v4133 = vpop.permute.xlu0 %4132
        %4134 = vrot.lane.b32.xlu0 %v3701, 36
        %v4135 = vpop.permute.xlu0 %4134
        %4136 = vrot.lane.b32.xlu0 %v3702, 36
        %v4137 = vpop.permute.xlu0 %4136
        %v4138 = vsel %vm2771, %v4135, %v4137
        %v4139 = vsel %vm2771, %v4133, %v4135
        %v4140 = vsel %vm2771, %v4131, %v4133
        %v4141 = vsel %vm2771, %v4129, %v4131
        %v4142 = vsel %vm2771, %v4127, %v4129
        %v4143 = vsel %vm2771, %v4125, %v4127
        %v4144 = vsel %vm2771, %v4123, %v4125
        %v4145 = vsel %vm2771, %v4121, %v4123
        %v4146 = vsel %vm2771, %v4119, %v4121
        %v4147 = vsel %vm2771, %v4117, %v4119
        %v4148 = vsel %vm2771, %v4137, %v4117
        %v4160 = vrot.slane %v4148, 4
        %v4161 = vrot.slane %v4147, 4
        %v4162 = vrot.slane %v4146, 4
        %v4163 = vrot.slane %v4145, 4
        %v4164 = vrot.slane %v4144, 4
        %v4165 = vrot.slane %v4143, 4
        %v4166 = vrot.slane %v4142, 4
        %v4167 = vrot.slane %v4141, 4
        %v4168 = vrot.slane %v4140, 4
        %v4169 = vrot.slane %v4139, 4
        %v4170 = vrot.slane %v4138, 4
        %4182 = vst [vmem:[#allocation4 + $0x108] sm:$0xf0] %v4160
        %4183 = vst [vmem:[#allocation4 + $0x110] sm:$0xf0] %v4161
        %4184 = vst [vmem:[#allocation4 + $0x118] sm:$0xf0] %v4162
        %4185 = vst [vmem:[#allocation4 + $0x120] sm:$0xf0] %v4163
        %4186 = vst [vmem:[#allocation4 + $0x128] sm:$0xf0] %v4164
        %4187 = vst [vmem:[#allocation4 + $0x130] sm:$0xf0] %v4165
        %4188 = vst [vmem:[#allocation4 + $0x138] sm:$0xf0] %v4166
        %4189 = vst [vmem:[#allocation4 + $0x140] sm:$0xf0] %v4167
        %4190 = vst [vmem:[#allocation4 + $0x148] sm:$0xf0] %v4168
        %4191 = vst [vmem:[#allocation4 + $0x150] sm:$0xf0] %v4169
        %4192 = vst [vmem:[#allocation4 + $0x158] sm:$0xf0] %v4170
        %4193 = vrot.lane.b32.xlu0 %v3692, 35
        %v4194 = vpop.permute.xlu0 %4193
        %4195 = vrot.lane.b32.xlu0 %v3693, 35
        %v4196 = vpop.permute.xlu0 %4195
        %4197 = vrot.lane.b32.xlu0 %v3694, 35
        %v4198 = vpop.permute.xlu0 %4197
        %4199 = vrot.lane.b32.xlu0 %v3695, 35
        %v4200 = vpop.permute.xlu0 %4199
        %4201 = vrot.lane.b32.xlu0 %v3696, 35
        %v4202 = vpop.permute.xlu0 %4201
        %4203 = vrot.lane.b32.xlu0 %v3697, 35
        %v4204 = vpop.permute.xlu0 %4203
        %4205 = vrot.lane.b32.xlu0 %v3698, 35
        %v4206 = vpop.permute.xlu0 %4205
        %4207 = vrot.lane.b32.xlu0 %v3699, 35
        %v4208 = vpop.permute.xlu0 %4207
        %4209 = vrot.lane.b32.xlu0 %v3700, 35
        %v4210 = vpop.permute.xlu0 %4209
        %4211 = vrot.lane.b32.xlu0 %v3701, 35
        %v4212 = vpop.permute.xlu0 %4211
        %4213 = vrot.lane.b32.xlu0 %v3702, 35
        %v4214 = vpop.permute.xlu0 %4213
        %v4215 = vsel %vm2816, %v4212, %v4214
        %v4216 = vsel %vm2816, %v4210, %v4212
        %v4217 = vsel %vm2816, %v4208, %v4210
        %v4218 = vsel %vm2816, %v4206, %v4208
        %v4219 = vsel %vm2816, %v4204, %v4206
        %v4220 = vsel %vm2816, %v4202, %v4204
        %v4221 = vsel %vm2816, %v4200, %v4202
        %v4222 = vsel %vm2816, %v4198, %v4200
        %v4223 = vsel %vm2816, %v4196, %v4198
        %v4224 = vsel %vm2816, %v4194, %v4196
        %v4225 = vsel %vm2816, %v4214, %v4194
        %4226 = vst [vmem:[#allocation4 + $0x160] sm:$0xf] %v4225
        %4227 = vst [vmem:[#allocation4 + $0x168] sm:$0xf] %v4224
        %4228 = vst [vmem:[#allocation4 + $0x170] sm:$0xf] %v4223
        %4229 = vst [vmem:[#allocation4 + $0x178] sm:$0xf] %v4222
        %4230 = vst [vmem:[#allocation4 + $0x180] sm:$0xf] %v4221
        %4231 = vst [vmem:[#allocation4 + $0x188] sm:$0xf] %v4220
        %4232 = vst [vmem:[#allocation4 + $0x190] sm:$0xf] %v4219
        %4233 = vst [vmem:[#allocation4 + $0x198] sm:$0xf] %v4218
        %4234 = vst [vmem:[#allocation4 + $0x1a0] sm:$0xf] %v4217
        %4235 = vst [vmem:[#allocation4 + $0x1a8] sm:$0xf] %v4216
        %4236 = vst [vmem:[#allocation4 + $0x1b0] sm:$0xf] %v4215
        %4237 = vrot.lane.b32.xlu0 %v3692, 34
        %v4238 = vpop.permute.xlu0 %4237
        %4239 = vrot.lane.b32.xlu0 %v3693, 34
        %v4240 = vpop.permute.xlu0 %4239
        %4241 = vrot.lane.b32.xlu0 %v3694, 34
        %v4242 = vpop.permute.xlu0 %4241
        %4243 = vrot.lane.b32.xlu0 %v3695, 34
        %v4244 = vpop.permute.xlu0 %4243
        %4245 = vrot.lane.b32.xlu0 %v3696, 34
        %v4246 = vpop.permute.xlu0 %4245
        %4247 = vrot.lane.b32.xlu0 %v3697, 34
        %v4248 = vpop.permute.xlu0 %4247
        %4249 = vrot.lane.b32.xlu0 %v3698, 34
        %v4250 = vpop.permute.xlu0 %4249
        %4251 = vrot.lane.b32.xlu0 %v3699, 34
        %v4252 = vpop.permute.xlu0 %4251
        %4253 = vrot.lane.b32.xlu0 %v3700, 34
        %v4254 = vpop.permute.xlu0 %4253
        %4255 = vrot.lane.b32.xlu0 %v3701, 34
        %v4256 = vpop.permute.xlu0 %4255
        %4257 = vrot.lane.b32.xlu0 %v3702, 34
        %v4258 = vpop.permute.xlu0 %4257
        %vm4259 = vcmp.lt.s32.totalorder %v730, 34
        %v4260 = vsel %vm4259, %v4256, %v4258
        %v4261 = vsel %vm4259, %v4254, %v4256
        %v4262 = vsel %vm4259, %v4252, %v4254
        %v4263 = vsel %vm4259, %v4250, %v4252
        %v4264 = vsel %vm4259, %v4248, %v4250
        %v4265 = vsel %vm4259, %v4246, %v4248
        %v4266 = vsel %vm4259, %v4244, %v4246
        %v4267 = vsel %vm4259, %v4242, %v4244
        %v4268 = vsel %vm4259, %v4240, %v4242
        %v4269 = vsel %vm4259, %v4238, %v4240
        %v4270 = vsel %vm4259, %v4258, %v4238
        %v4282 = vrot.slane %v4270, 4
        %v4283 = vrot.slane %v4269, 4
        %v4284 = vrot.slane %v4268, 4
        %v4285 = vrot.slane %v4267, 4
        %v4286 = vrot.slane %v4266, 4
        %v4287 = vrot.slane %v4265, 4
        %v4288 = vrot.slane %v4264, 4
        %v4289 = vrot.slane %v4263, 4
        %v4290 = vrot.slane %v4262, 4
        %v4291 = vrot.slane %v4261, 4
        %v4292 = vrot.slane %v4260, 4
        %4304 = vst [vmem:[#allocation4 + $0x160] sm:$0xf0] %v4282
        %4305 = vst [vmem:[#allocation4 + $0x168] sm:$0xf0] %v4283
        %4306 = vst [vmem:[#allocation4 + $0x170] sm:$0xf0] %v4284
        %4307 = vst [vmem:[#allocation4 + $0x178] sm:$0xf0] %v4285
        %4308 = vst [vmem:[#allocation4 + $0x180] sm:$0xf0] %v4286
        %4309 = vst [vmem:[#allocation4 + $0x188] sm:$0xf0] %v4287
        %4310 = vst [vmem:[#allocation4 + $0x190] sm:$0xf0] %v4288
        %4311 = vst [vmem:[#allocation4 + $0x198] sm:$0xf0] %v4289
        %4312 = vst [vmem:[#allocation4 + $0x1a0] sm:$0xf0] %v4290
        %4313 = vst [vmem:[#allocation4 + $0x1a8] sm:$0xf0] %v4291
        %4314 = vst [vmem:[#allocation4 + $0x1b0] sm:$0xf0] %v4292
        %4315 = vrot.lane.b32.xlu0 %v3692, 2
        %v4316 = vpop.permute.xlu0 %4315
        %4317 = vrot.lane.b32.xlu0 %v3693, 2
        %v4318 = vpop.permute.xlu0 %4317
        %4319 = vrot.lane.b32.xlu0 %v3694, 2
        %v4320 = vpop.permute.xlu0 %4319
        %4321 = vrot.lane.b32.xlu0 %v3695, 2
        %v4322 = vpop.permute.xlu0 %4321
        %4323 = vrot.lane.b32.xlu0 %v3696, 2
        %v4324 = vpop.permute.xlu0 %4323
        %4325 = vrot.lane.b32.xlu0 %v3697, 2
        %v4326 = vpop.permute.xlu0 %4325
        %4327 = vrot.lane.b32.xlu0 %v3698, 2
        %v4328 = vpop.permute.xlu0 %4327
        %4329 = vrot.lane.b32.xlu0 %v3699, 2
        %v4330 = vpop.permute.xlu0 %4329
        %4331 = vrot.lane.b32.xlu0 %v3700, 2
        %v4332 = vpop.permute.xlu0 %4331
        %4333 = vrot.lane.b32.xlu0 %v3701, 2
        %v4334 = vpop.permute.xlu0 %4333
        %4335 = vrot.lane.b32.xlu0 %v3702, 2
        %v4336 = vpop.permute.xlu0 %4335
        %vm4337 = vcmp.lt.s32.totalorder %v730, 2
        %v4338 = vsel %vm4337, %v4334, %v4336
        %v4339 = vsel %vm4337, %v4332, %v4334
        %v4340 = vsel %vm4337, %v4330, %v4332
        %v4341 = vsel %vm4337, %v4328, %v4330
        %v4342 = vsel %vm4337, %v4326, %v4328
        %v4343 = vsel %vm4337, %v4324, %v4326
        %v4344 = vsel %vm4337, %v4322, %v4324
        %v4345 = vsel %vm4337, %v4320, %v4322
        %v4346 = vsel %vm4337, %v4318, %v4320
        %v4347 = vsel %vm4337, %v4316, %v4318
        %v4348 = vsel %vm4337, %v4336, %v4316
        %4349 = vst [vmem:[#allocation4 + $0x1b8] sm:$0xf] %v4348
        %4350 = vst [vmem:[#allocation4 + $0x1c0] sm:$0xf] %v4347
        %4351 = vst [vmem:[#allocation4 + $0x1c8] sm:$0xf] %v4346
        %4352 = vst [vmem:[#allocation4 + $0x1d0] sm:$0xf] %v4345
        %4353 = vst [vmem:[#allocation4 + $0x1d8] sm:$0xf] %v4344
        %4354 = vst [vmem:[#allocation4 + $0x1e0] sm:$0xf] %v4343
        %4355 = vst [vmem:[#allocation4 + $0x1e8] sm:$0xf] %v4342
        %4356 = vst [vmem:[#allocation4 + $0x1f0] sm:$0xf] %v4341
        %4357 = vst [vmem:[#allocation4 + $0x1f8] sm:$0xf] %v4340
        %4358 = vst [vmem:[#allocation4 + $0x200] sm:$0xf] %v4339
        %4359 = vst [vmem:[#allocation4 + $0x208] sm:$0xf] %v4338
        %4360 = vrot.lane.b32.xlu0 %v3692, 1
        %v4361 = vpop.permute.xlu0 %4360
        %4362 = vrot.lane.b32.xlu0 %v3693, 1
        %v4363 = vpop.permute.xlu0 %4362
        %4364 = vrot.lane.b32.xlu0 %v3694, 1
        %v4365 = vpop.permute.xlu0 %4364
        %4366 = vrot.lane.b32.xlu0 %v3695, 1
        %v4367 = vpop.permute.xlu0 %4366
        %4368 = vrot.lane.b32.xlu0 %v3696, 1
        %v4369 = vpop.permute.xlu0 %4368
        %4370 = vrot.lane.b32.xlu0 %v3697, 1
        %v4371 = vpop.permute.xlu0 %4370
        %4372 = vrot.lane.b32.xlu0 %v3698, 1
        %v4373 = vpop.permute.xlu0 %4372
        %4374 = vrot.lane.b32.xlu0 %v3699, 1
        %v4375 = vpop.permute.xlu0 %4374
        %4376 = vrot.lane.b32.xlu0 %v3700, 1
        %v4377 = vpop.permute.xlu0 %4376
        %4378 = vrot.lane.b32.xlu0 %v3701, 1
        %v4379 = vpop.permute.xlu0 %4378
        %4380 = vrot.lane.b32.xlu0 %v3702, 1
        %v4381 = vpop.permute.xlu0 %4380
        %v4382 = vsel %vm806, %v4379, %v4381
        %v4383 = vsel %vm806, %v4377, %v4379
        %v4384 = vsel %vm806, %v4375, %v4377
        %v4385 = vsel %vm806, %v4373, %v4375
        %v4386 = vsel %vm806, %v4371, %v4373
        %v4387 = vsel %vm806, %v4369, %v4371
        %v4388 = vsel %vm806, %v4367, %v4369
        %v4389 = vsel %vm806, %v4365, %v4367
        %v4390 = vsel %vm806, %v4363, %v4365
        %v4391 = vsel %vm806, %v4361, %v4363
        %v4392 = vsel %vm806, %v4381, %v4361
        %v4404 = vrot.slane %v4392, 4
        %v4405 = vrot.slane %v4391, 4
        %v4406 = vrot.slane %v4390, 4
        %v4407 = vrot.slane %v4389, 4
        %v4408 = vrot.slane %v4388, 4
        %v4409 = vrot.slane %v4387, 4
        %v4410 = vrot.slane %v4386, 4
        %v4411 = vrot.slane %v4385, 4
        %v4412 = vrot.slane %v4384, 4
        %v4413 = vrot.slane %v4383, 4
        %v4414 = vrot.slane %v4382, 4
        %4426 = vst [vmem:[#allocation4 + $0x1b8] sm:$0xf0] %v4404
        %4427 = vst [vmem:[#allocation4 + $0x1c0] sm:$0xf0] %v4405
        %4428 = vst [vmem:[#allocation4 + $0x1c8] sm:$0xf0] %v4406
        %4429 = vst [vmem:[#allocation4 + $0x1d0] sm:$0xf0] %v4407
        %4430 = vst [vmem:[#allocation4 + $0x1d8] sm:$0xf0] %v4408
        %4431 = vst [vmem:[#allocation4 + $0x1e0] sm:$0xf0] %v4409
        %4432 = vst [vmem:[#allocation4 + $0x1e8] sm:$0xf0] %v4410
        %4433 = vst [vmem:[#allocation4 + $0x1f0] sm:$0xf0] %v4411
        %4434 = vst [vmem:[#allocation4 + $0x1f8] sm:$0xf0] %v4412
        %4435 = vst [vmem:[#allocation4 + $0x200] sm:$0xf0] %v4413
        %4436 = vst [vmem:[#allocation4 + $0x208] sm:$0xf0] %v4414
        %4437 = vst [vmem:[#allocation4 + $0x210] sm:$0xf] %v3692
        %4438 = vst [vmem:[#allocation4 + $0x218] sm:$0xf] %v3693
        %4439 = vst [vmem:[#allocation4 + $0x220] sm:$0xf] %v3694
        %4440 = vst [vmem:[#allocation4 + $0x228] sm:$0xf] %v3695
        %4441 = vst [vmem:[#allocation4 + $0x230] sm:$0xf] %v3696
        %4442 = vst [vmem:[#allocation4 + $0x238] sm:$0xf] %v3697
        %4443 = vst [vmem:[#allocation4 + $0x240] sm:$0xf] %v3698
        %4444 = vst [vmem:[#allocation4 + $0x248] sm:$0xf] %v3699
        %4445 = vst [vmem:[#allocation4 + $0x250] sm:$0xf] %v3700
        %4446 = vst [vmem:[#allocation4 + $0x258] sm:$0xf] %v3701
        %4447 = vst [vmem:[#allocation4 + $0x260] sm:$0xf] %v3702
        %4448 = vrot.lane.b32.xlu0 %v3692, 127
        %v4449 = vpop.permute.xlu0 %4448
        %4450 = vrot.lane.b32.xlu0 %v3693, 127
        %v4451 = vpop.permute.xlu0 %4450
        %4452 = vrot.lane.b32.xlu0 %v3694, 127
        %v4453 = vpop.permute.xlu0 %4452
        %4454 = vrot.lane.b32.xlu0 %v3695, 127
        %v4455 = vpop.permute.xlu0 %4454
        %4456 = vrot.lane.b32.xlu0 %v3696, 127
        %v4457 = vpop.permute.xlu0 %4456
        %4458 = vrot.lane.b32.xlu0 %v3697, 127
        %v4459 = vpop.permute.xlu0 %4458
        %4460 = vrot.lane.b32.xlu0 %v3698, 127
        %v4461 = vpop.permute.xlu0 %4460
        %4462 = vrot.lane.b32.xlu0 %v3699, 127
        %v4463 = vpop.permute.xlu0 %4462
        %4464 = vrot.lane.b32.xlu0 %v3700, 127
        %v4465 = vpop.permute.xlu0 %4464
        %4466 = vrot.lane.b32.xlu0 %v3701, 127
        %v4467 = vpop.permute.xlu0 %4466
        %4468 = vrot.lane.b32.xlu0 %v3702, 127
        %v4469 = vpop.permute.xlu0 %4468
        %v4470 = vsel %vm837, %v4467, %v4469
        %v4471 = vsel %vm837, %v4465, %v4467
        %v4472 = vsel %vm837, %v4463, %v4465
        %v4473 = vsel %vm837, %v4461, %v4463
        %v4474 = vsel %vm837, %v4459, %v4461
        %v4475 = vsel %vm837, %v4457, %v4459
        %v4476 = vsel %vm837, %v4455, %v4457
        %v4477 = vsel %vm837, %v4453, %v4455
        %v4478 = vsel %vm837, %v4451, %v4453
        %v4479 = vsel %vm837, %v4449, %v4451
        %v4480 = vsel %vm837, %v4469, %v4449
        %v4492 = vrot.slane %v4479, 4
        %v4493 = vrot.slane %v4478, 4
        %v4494 = vrot.slane %v4477, 4
        %v4495 = vrot.slane %v4476, 4
        %v4496 = vrot.slane %v4475, 4
        %v4497 = vrot.slane %v4474, 4
        %v4498 = vrot.slane %v4473, 4
        %v4499 = vrot.slane %v4472, 4
        %v4500 = vrot.slane %v4471, 4
        %v4501 = vrot.slane %v4470, 4
        %v4502 = vrot.slane %v4480, 4
        %4514 = vst [vmem:[#allocation4 + $0x210] sm:$0xf0] %v4492
        %4515 = vst [vmem:[#allocation4 + $0x218] sm:$0xf0] %v4493
        %4516 = vst [vmem:[#allocation4 + $0x220] sm:$0xf0] %v4494
        %4517 = vst [vmem:[#allocation4 + $0x228] sm:$0xf0] %v4495
        %4518 = vst [vmem:[#allocation4 + $0x230] sm:$0xf0] %v4496
        %4519 = vst [vmem:[#allocation4 + $0x238] sm:$0xf0] %v4497
        %4520 = vst [vmem:[#allocation4 + $0x240] sm:$0xf0] %v4498
        %4521 = vst [vmem:[#allocation4 + $0x248] sm:$0xf0] %v4499
        %4522 = vst [vmem:[#allocation4 + $0x250] sm:$0xf0] %v4500
        %4523 = vst [vmem:[#allocation4 + $0x258] sm:$0xf0] %v4501
        %4524 = vst [vmem:[#allocation4 + $0x260] sm:$0xf0] %v4502
        %4525 = vrot.lane.b32.xlu0 %v3692, 126
        %v4526 = vpop.permute.xlu0 %4525
        %4527 = vrot.lane.b32.xlu0 %v3693, 126
        %v4528 = vpop.permute.xlu0 %4527
        %4529 = vrot.lane.b32.xlu0 %v3694, 126
        %v4530 = vpop.permute.xlu0 %4529
        %4531 = vrot.lane.b32.xlu0 %v3695, 126
        %v4532 = vpop.permute.xlu0 %4531
        %4533 = vrot.lane.b32.xlu0 %v3696, 126
        %v4534 = vpop.permute.xlu0 %4533
        %4535 = vrot.lane.b32.xlu0 %v3697, 126
        %v4536 = vpop.permute.xlu0 %4535
        %4537 = vrot.lane.b32.xlu0 %v3698, 126
        %v4538 = vpop.permute.xlu0 %4537
        %4539 = vrot.lane.b32.xlu0 %v3699, 126
        %v4540 = vpop.permute.xlu0 %4539
        %4541 = vrot.lane.b32.xlu0 %v3700, 126
        %v4542 = vpop.permute.xlu0 %4541
        %4543 = vrot.lane.b32.xlu0 %v3701, 126
        %v4544 = vpop.permute.xlu0 %4543
        %4545 = vrot.lane.b32.xlu0 %v3702, 126
        %v4546 = vpop.permute.xlu0 %4545
        %vm4547 = vcmp.lt.s32.totalorder %v730, 126
        %v4548 = vsel %vm4547, %v4544, %v4546
        %v4549 = vsel %vm4547, %v4542, %v4544
        %v4550 = vsel %vm4547, %v4540, %v4542
        %v4551 = vsel %vm4547, %v4538, %v4540
        %v4552 = vsel %vm4547, %v4536, %v4538
        %v4553 = vsel %vm4547, %v4534, %v4536
        %v4554 = vsel %vm4547, %v4532, %v4534
        %v4555 = vsel %vm4547, %v4530, %v4532
        %v4556 = vsel %vm4547, %v4528, %v4530
        %v4557 = vsel %vm4547, %v4526, %v4528
        %v4558 = vsel %vm4547, %v4546, %v4526
        %4559 = vst [vmem:[#allocation4 + $0x268] sm:$0xf] %v4557
        %4560 = vst [vmem:[#allocation4 + $0x270] sm:$0xf] %v4556
        %4561 = vst [vmem:[#allocation4 + $0x278] sm:$0xf] %v4555
        %4562 = vst [vmem:[#allocation4 + $0x280] sm:$0xf] %v4554
        %4563 = vst [vmem:[#allocation4 + $0x288] sm:$0xf] %v4553
        %4564 = vst [vmem:[#allocation4 + $0x290] sm:$0xf] %v4552
        %4565 = vst [vmem:[#allocation4 + $0x298] sm:$0xf] %v4551
        %4566 = vst [vmem:[#allocation4 + $0x2a0] sm:$0xf] %v4550
        %4567 = vst [vmem:[#allocation4 + $0x2a8] sm:$0xf] %v4549
        %4568 = vst [vmem:[#allocation4 + $0x2b0] sm:$0xf] %v4548
        %4569 = vst [vmem:[#allocation4 + $0x2b8] sm:$0xf] %v4558
        %4570 = vrot.lane.b32.xlu0 %v3692, 94
        %v4571 = vpop.permute.xlu0 %4570
        %4572 = vrot.lane.b32.xlu0 %v3693, 94
        %v4573 = vpop.permute.xlu0 %4572
        %4574 = vrot.lane.b32.xlu0 %v3694, 94
        %v4575 = vpop.permute.xlu0 %4574
        %4576 = vrot.lane.b32.xlu0 %v3695, 94
        %v4577 = vpop.permute.xlu0 %4576
        %4578 = vrot.lane.b32.xlu0 %v3696, 94
        %v4579 = vpop.permute.xlu0 %4578
        %4580 = vrot.lane.b32.xlu0 %v3697, 94
        %v4581 = vpop.permute.xlu0 %4580
        %4582 = vrot.lane.b32.xlu0 %v3698, 94
        %v4583 = vpop.permute.xlu0 %4582
        %4584 = vrot.lane.b32.xlu0 %v3699, 94
        %v4585 = vpop.permute.xlu0 %4584
        %4586 = vrot.lane.b32.xlu0 %v3700, 94
        %v4587 = vpop.permute.xlu0 %4586
        %4588 = vrot.lane.b32.xlu0 %v3701, 94
        %v4589 = vpop.permute.xlu0 %4588
        %4590 = vrot.lane.b32.xlu0 %v3702, 94
        %v4591 = vpop.permute.xlu0 %4590
        %vm4592 = vcmp.lt.s32.totalorder %v730, 94
        %v4593 = vsel %vm4592, %v4589, %v4591
        %v4594 = vsel %vm4592, %v4587, %v4589
        %v4595 = vsel %vm4592, %v4585, %v4587
        %v4596 = vsel %vm4592, %v4583, %v4585
        %v4597 = vsel %vm4592, %v4581, %v4583
        %v4598 = vsel %vm4592, %v4579, %v4581
        %v4599 = vsel %vm4592, %v4577, %v4579
        %v4600 = vsel %vm4592, %v4575, %v4577
        %v4601 = vsel %vm4592, %v4573, %v4575
        %v4602 = vsel %vm4592, %v4571, %v4573
        %v4603 = vsel %vm4592, %v4591, %v4571
        %v4615 = vrot.slane %v4602, 4
        %v4616 = vrot.slane %v4601, 4
        %v4617 = vrot.slane %v4600, 4
        %v4618 = vrot.slane %v4599, 4
        %v4619 = vrot.slane %v4598, 4
        %v4620 = vrot.slane %v4597, 4
        %v4621 = vrot.slane %v4596, 4
        %v4622 = vrot.slane %v4595, 4
        %v4623 = vrot.slane %v4594, 4
        %v4624 = vrot.slane %v4593, 4
        %v4625 = vrot.slane %v4603, 4
        %4637 = vst [vmem:[#allocation4 + $0x268] sm:$0xf0] %v4615
        %4638 = vst [vmem:[#allocation4 + $0x270] sm:$0xf0] %v4616
        %4639 = vst [vmem:[#allocation4 + $0x278] sm:$0xf0] %v4617
        %4640 = vst [vmem:[#allocation4 + $0x280] sm:$0xf0] %v4618
        %4641 = vst [vmem:[#allocation4 + $0x288] sm:$0xf0] %v4619
        %4642 = vst [vmem:[#allocation4 + $0x290] sm:$0xf0] %v4620
        %4643 = vst [vmem:[#allocation4 + $0x298] sm:$0xf0] %v4621
        %4644 = vst [vmem:[#allocation4 + $0x2a0] sm:$0xf0] %v4622
        %4645 = vst [vmem:[#allocation4 + $0x2a8] sm:$0xf0] %v4623
        %4646 = vst [vmem:[#allocation4 + $0x2b0] sm:$0xf0] %v4624
        %4647 = vst [vmem:[#allocation4 + $0x2b8] sm:$0xf0] %v4625
        %4648 = vrot.lane.b32.xlu0 %v3692, 93
        %v4649 = vpop.permute.xlu0 %4648
        %4650 = vrot.lane.b32.xlu0 %v3693, 93
        %v4651 = vpop.permute.xlu0 %4650
        %4652 = vrot.lane.b32.xlu0 %v3694, 93
        %v4653 = vpop.permute.xlu0 %4652
        %4654 = vrot.lane.b32.xlu0 %v3695, 93
        %v4655 = vpop.permute.xlu0 %4654
        %4656 = vrot.lane.b32.xlu0 %v3696, 93
        %v4657 = vpop.permute.xlu0 %4656
        %4658 = vrot.lane.b32.xlu0 %v3697, 93
        %v4659 = vpop.permute.xlu0 %4658
        %4660 = vrot.lane.b32.xlu0 %v3698, 93
        %v4661 = vpop.permute.xlu0 %4660
        %4662 = vrot.lane.b32.xlu0 %v3699, 93
        %v4663 = vpop.permute.xlu0 %4662
        %4664 = vrot.lane.b32.xlu0 %v3700, 93
        %v4665 = vpop.permute.xlu0 %4664
        %4666 = vrot.lane.b32.xlu0 %v3701, 93
        %v4667 = vpop.permute.xlu0 %4666
        %4668 = vrot.lane.b32.xlu0 %v3702, 93
        %v4669 = vpop.permute.xlu0 %4668
        %v4670 = vsel %vm2960, %v4667, %v4669
        %v4671 = vsel %vm2960, %v4665, %v4667
        %v4672 = vsel %vm2960, %v4663, %v4665
        %v4673 = vsel %vm2960, %v4661, %v4663
        %v4674 = vsel %vm2960, %v4659, %v4661
        %v4675 = vsel %vm2960, %v4657, %v4659
        %v4676 = vsel %vm2960, %v4655, %v4657
        %v4677 = vsel %vm2960, %v4653, %v4655
        %v4678 = vsel %vm2960, %v4651, %v4653
        %v4679 = vsel %vm2960, %v4649, %v4651
        %v4680 = vsel %vm2960, %v4669, %v4649
        %4681 = vst [vmem:[#allocation4 + $0x2c0] sm:$0xf] %v4679
        %4682 = vst [vmem:[#allocation4 + $0x2c8] sm:$0xf] %v4678
        %4683 = vst [vmem:[#allocation4 + $0x2d0] sm:$0xf] %v4677
        %4684 = vst [vmem:[#allocation4 + $0x2d8] sm:$0xf] %v4676
        %4685 = vst [vmem:[#allocation4 + $0x2e0] sm:$0xf] %v4675
        %4686 = vst [vmem:[#allocation4 + $0x2e8] sm:$0xf] %v4674
        %4687 = vst [vmem:[#allocation4 + $0x2f0] sm:$0xf] %v4673
        %4688 = vst [vmem:[#allocation4 + $0x2f8] sm:$0xf] %v4672
        %4689 = vst [vmem:[#allocation4 + $0x300] sm:$0xf] %v4671
        %4690 = vst [vmem:[#allocation4 + $0x308] sm:$0xf] %v4670
        %4691 = vst [vmem:[#allocation4 + $0x310] sm:$0xf] %v4680
        %4692 = vrot.lane.b32.xlu0 %v3692, 92
        %v4693 = vpop.permute.xlu0 %4692
        %4694 = vrot.lane.b32.xlu0 %v3693, 92
        %v4695 = vpop.permute.xlu0 %4694
        %4696 = vrot.lane.b32.xlu0 %v3694, 92
        %v4697 = vpop.permute.xlu0 %4696
        %4698 = vrot.lane.b32.xlu0 %v3695, 92
        %v4699 = vpop.permute.xlu0 %4698
        %4700 = vrot.lane.b32.xlu0 %v3696, 92
        %v4701 = vpop.permute.xlu0 %4700
        %4702 = vrot.lane.b32.xlu0 %v3697, 92
        %v4703 = vpop.permute.xlu0 %4702
        %4704 = vrot.lane.b32.xlu0 %v3698, 92
        %v4705 = vpop.permute.xlu0 %4704
        %4706 = vrot.lane.b32.xlu0 %v3699, 92
        %v4707 = vpop.permute.xlu0 %4706
        %4708 = vrot.lane.b32.xlu0 %v3700, 92
        %v4709 = vpop.permute.xlu0 %4708
        %4710 = vrot.lane.b32.xlu0 %v3701, 92
        %v4711 = vpop.permute.xlu0 %4710
        %4712 = vrot.lane.b32.xlu0 %v3702, 92
        %v4713 = vpop.permute.xlu0 %4712
        %v4714 = vsel %vm3005, %v4711, %v4713
        %v4715 = vsel %vm3005, %v4709, %v4711
        %v4716 = vsel %vm3005, %v4707, %v4709
        %v4717 = vsel %vm3005, %v4705, %v4707
        %v4718 = vsel %vm3005, %v4703, %v4705
        %v4719 = vsel %vm3005, %v4701, %v4703
        %v4720 = vsel %vm3005, %v4699, %v4701
        %v4721 = vsel %vm3005, %v4697, %v4699
        %v4722 = vsel %vm3005, %v4695, %v4697
        %v4723 = vsel %vm3005, %v4693, %v4695
        %v4724 = vsel %vm3005, %v4713, %v4693
        %v4736 = vrot.slane %v4723, 4
        %v4737 = vrot.slane %v4722, 4
        %v4738 = vrot.slane %v4721, 4
        %v4739 = vrot.slane %v4720, 4
        %v4740 = vrot.slane %v4719, 4
        %v4741 = vrot.slane %v4718, 4
        %v4742 = vrot.slane %v4717, 4
        %v4743 = vrot.slane %v4716, 4
        %v4744 = vrot.slane %v4715, 4
        %v4745 = vrot.slane %v4714, 4
        %v4746 = vrot.slane %v4724, 4
        %4758 = vst [vmem:[#allocation4 + $0x2c0] sm:$0xf0] %v4736
        %4759 = vst [vmem:[#allocation4 + $0x2c8] sm:$0xf0] %v4737
        %4760 = vst [vmem:[#allocation4 + $0x2d0] sm:$0xf0] %v4738
        %4761 = vst [vmem:[#allocation4 + $0x2d8] sm:$0xf0] %v4739
        %4762 = vst [vmem:[#allocation4 + $0x2e0] sm:$0xf0] %v4740
        %4763 = vst [vmem:[#allocation4 + $0x2e8] sm:$0xf0] %v4741
        %4764 = vst [vmem:[#allocation4 + $0x2f0] sm:$0xf0] %v4742
        %4765 = vst [vmem:[#allocation4 + $0x2f8] sm:$0xf0] %v4743
        %4766 = vst [vmem:[#allocation4 + $0x300] sm:$0xf0] %v4744
        %4767 = vst [vmem:[#allocation4 + $0x308] sm:$0xf0] %v4745
        %4768 = vst [vmem:[#allocation4 + $0x310] sm:$0xf0] %v4746
        %4769 = vrot.lane.b32.xlu0 %v3692, 91
        %v4770 = vpop.permute.xlu0 %4769
        %4771 = vrot.lane.b32.xlu0 %v3693, 91
        %v4772 = vpop.permute.xlu0 %4771
        %4773 = vrot.lane.b32.xlu0 %v3694, 91
        %v4774 = vpop.permute.xlu0 %4773
        %4775 = vrot.lane.b32.xlu0 %v3695, 91
        %v4776 = vpop.permute.xlu0 %4775
        %4777 = vrot.lane.b32.xlu0 %v3696, 91
        %v4778 = vpop.permute.xlu0 %4777
        %4779 = vrot.lane.b32.xlu0 %v3697, 91
        %v4780 = vpop.permute.xlu0 %4779
        %4781 = vrot.lane.b32.xlu0 %v3698, 91
        %v4782 = vpop.permute.xlu0 %4781
        %4783 = vrot.lane.b32.xlu0 %v3699, 91
        %v4784 = vpop.permute.xlu0 %4783
        %4785 = vrot.lane.b32.xlu0 %v3700, 91
        %v4786 = vpop.permute.xlu0 %4785
        %4787 = vrot.lane.b32.xlu0 %v3701, 91
        %v4788 = vpop.permute.xlu0 %4787
        %4789 = vrot.lane.b32.xlu0 %v3702, 91
        %v4790 = vpop.permute.xlu0 %4789
        %v4791 = vsel %vm3050, %v4788, %v4790
        %v4792 = vsel %vm3050, %v4786, %v4788
        %v4793 = vsel %vm3050, %v4784, %v4786
        %v4794 = vsel %vm3050, %v4782, %v4784
        %v4795 = vsel %vm3050, %v4780, %v4782
        %v4796 = vsel %vm3050, %v4778, %v4780
        %v4797 = vsel %vm3050, %v4776, %v4778
        %v4798 = vsel %vm3050, %v4774, %v4776
        %v4799 = vsel %vm3050, %v4772, %v4774
        %v4800 = vsel %vm3050, %v4770, %v4772
        %v4801 = vsel %vm3050, %v4790, %v4770
        %4802 = vst [vmem:[#allocation4 + $0x318] sm:$0xf] %v4800
        %4803 = vst [vmem:[#allocation4 + $0x320] sm:$0xf] %v4799
        %4804 = vst [vmem:[#allocation4 + $0x328] sm:$0xf] %v4798
        %4805 = vst [vmem:[#allocation4 + $0x330] sm:$0xf] %v4797
        %4806 = vst [vmem:[#allocation4 + $0x338] sm:$0xf] %v4796
        %4807 = vst [vmem:[#allocation4 + $0x340] sm:$0xf] %v4795
        %4808 = vst [vmem:[#allocation4 + $0x348] sm:$0xf] %v4794
        %4809 = vst [vmem:[#allocation4 + $0x350] sm:$0xf] %v4793
        %4810 = vst [vmem:[#allocation4 + $0x358] sm:$0xf] %v4792
        %4811 = vst [vmem:[#allocation4 + $0x360] sm:$0xf] %v4791
        %4812 = vst [vmem:[#allocation4 + $0x368] sm:$0xf] %v4801
        %4813 = vrot.lane.b32.xlu0 %v3692, 90
        %v4814 = vpop.permute.xlu0 %4813
        %4815 = vrot.lane.b32.xlu0 %v3693, 90
        %v4816 = vpop.permute.xlu0 %4815
        %4817 = vrot.lane.b32.xlu0 %v3694, 90
        %v4818 = vpop.permute.xlu0 %4817
        %4819 = vrot.lane.b32.xlu0 %v3695, 90
        %v4820 = vpop.permute.xlu0 %4819
        %4821 = vrot.lane.b32.xlu0 %v3696, 90
        %v4822 = vpop.permute.xlu0 %4821
        %4823 = vrot.lane.b32.xlu0 %v3697, 90
        %v4824 = vpop.permute.xlu0 %4823
        %4825 = vrot.lane.b32.xlu0 %v3698, 90
        %v4826 = vpop.permute.xlu0 %4825
        %4827 = vrot.lane.b32.xlu0 %v3699, 90
        %v4828 = vpop.permute.xlu0 %4827
        %4829 = vrot.lane.b32.xlu0 %v3700, 90
        %v4830 = vpop.permute.xlu0 %4829
        %4831 = vrot.lane.b32.xlu0 %v3701, 90
        %v4832 = vpop.permute.xlu0 %4831
        %4833 = vrot.lane.b32.xlu0 %v3702, 90
        %v4834 = vpop.permute.xlu0 %4833
        %vm4835 = vcmp.lt.s32.totalorder %v730, 90
        %v4836 = vsel %vm4835, %v4832, %v4834
        %v4837 = vsel %vm4835, %v4830, %v4832
        %v4838 = vsel %vm4835, %v4828, %v4830
        %v4839 = vsel %vm4835, %v4826, %v4828
        %v4840 = vsel %vm4835, %v4824, %v4826
        %v4841 = vsel %vm4835, %v4822, %v4824
        %v4842 = vsel %vm4835, %v4820, %v4822
        %v4843 = vsel %vm4835, %v4818, %v4820
        %v4844 = vsel %vm4835, %v4816, %v4818
        %v4845 = vsel %vm4835, %v4814, %v4816
        %v4846 = vsel %vm4835, %v4834, %v4814
        %v4858 = vrot.slane %v4845, 4
        %v4859 = vrot.slane %v4844, 4
        %v4860 = vrot.slane %v4843, 4
        %v4861 = vrot.slane %v4842, 4
        %v4862 = vrot.slane %v4841, 4
        %v4863 = vrot.slane %v4840, 4
        %v4864 = vrot.slane %v4839, 4
        %v4865 = vrot.slane %v4838, 4
        %v4866 = vrot.slane %v4837, 4
        %v4867 = vrot.slane %v4836, 4
        %v4868 = vrot.slane %v4846, 4
        %4880 = vst [vmem:[#allocation4 + $0x318] sm:$0xf0] %v4858
        %4881 = vst [vmem:[#allocation4 + $0x320] sm:$0xf0] %v4859
        %4882 = vst [vmem:[#allocation4 + $0x328] sm:$0xf0] %v4860
        %4883 = vst [vmem:[#allocation4 + $0x330] sm:$0xf0] %v4861
        %4884 = vst [vmem:[#allocation4 + $0x338] sm:$0xf0] %v4862
        %4885 = vst [vmem:[#allocation4 + $0x340] sm:$0xf0] %v4863
        %4886 = vst [vmem:[#allocation4 + $0x348] sm:$0xf0] %v4864
        %4887 = vst [vmem:[#allocation4 + $0x350] sm:$0xf0] %v4865
        %4888 = vst [vmem:[#allocation4 + $0x358] sm:$0xf0] %v4866
        %4889 = vst [vmem:[#allocation4 + $0x360] sm:$0xf0] %v4867
        %4890 = vst [vmem:[#allocation4 + $0x368] sm:$0xf0] %v4868
        %4891 = vrot.lane.b32.xlu0 %v3692, 58
        %v4892 = vpop.permute.xlu0 %4891
        %4893 = vrot.lane.b32.xlu0 %v3693, 58
        %v4894 = vpop.permute.xlu0 %4893
        %4895 = vrot.lane.b32.xlu0 %v3694, 58
        %v4896 = vpop.permute.xlu0 %4895
        %4897 = vrot.lane.b32.xlu0 %v3695, 58
        %v4898 = vpop.permute.xlu0 %4897
        %4899 = vrot.lane.b32.xlu0 %v3696, 58
        %v4900 = vpop.permute.xlu0 %4899
        %4901 = vrot.lane.b32.xlu0 %v3697, 58
        %v4902 = vpop.permute.xlu0 %4901
        %4903 = vrot.lane.b32.xlu0 %v3698, 58
        %v4904 = vpop.permute.xlu0 %4903
        %4905 = vrot.lane.b32.xlu0 %v3699, 58
        %v4906 = vpop.permute.xlu0 %4905
        %4907 = vrot.lane.b32.xlu0 %v3700, 58
        %v4908 = vpop.permute.xlu0 %4907
        %4909 = vrot.lane.b32.xlu0 %v3701, 58
        %v4910 = vpop.permute.xlu0 %4909
        %4911 = vrot.lane.b32.xlu0 %v3702, 58
        %v4912 = vpop.permute.xlu0 %4911
        %vm4913 = vcmp.lt.s32.totalorder %v730, 58
        %v4914 = vsel %vm4913, %v4910, %v4912
        %v4915 = vsel %vm4913, %v4908, %v4910
        %v4916 = vsel %vm4913, %v4906, %v4908
        %v4917 = vsel %vm4913, %v4904, %v4906
        %v4918 = vsel %vm4913, %v4902, %v4904
        %v4919 = vsel %vm4913, %v4900, %v4902
        %v4920 = vsel %vm4913, %v4898, %v4900
        %v4921 = vsel %vm4913, %v4896, %v4898
        %v4922 = vsel %vm4913, %v4894, %v4896
        %v4923 = vsel %vm4913, %v4892, %v4894
        %v4924 = vsel %vm4913, %v4912, %v4892
        %4925 = vst [vmem:[#allocation4 + $0x370] sm:$0xf] %v4923
        %4926 = vst [vmem:[#allocation4 + $0x378] sm:$0xf] %v4922
        %4927 = vst [vmem:[#allocation4 + $0x380] sm:$0xf] %v4921
        %4928 = vst [vmem:[#allocation4 + $0x388] sm:$0xf] %v4920
        %4929 = vst [vmem:[#allocation4 + $0x390] sm:$0xf] %v4919
        %4930 = vst [vmem:[#allocation4 + $0x398] sm:$0xf] %v4918
        %4931 = vst [vmem:[#allocation4 + $0x3a0] sm:$0xf] %v4917
        %4932 = vst [vmem:[#allocation4 + $0x3a8] sm:$0xf] %v4916
        %4933 = vst [vmem:[#allocation4 + $0x3b0] sm:$0xf] %v4915
        %4934 = vst [vmem:[#allocation4 + $0x3b8] sm:$0xf] %v4914
        %4935 = vst [vmem:[#allocation4 + $0x3c0] sm:$0xf] %v4924
        %4936 = vrot.lane.b32.xlu0 %v3692, 57
        %v4937 = vpop.permute.xlu0 %4936
        %4938 = vrot.lane.b32.xlu0 %v3693, 57
        %v4939 = vpop.permute.xlu0 %4938
        %4940 = vrot.lane.b32.xlu0 %v3694, 57
        %v4941 = vpop.permute.xlu0 %4940
        %4942 = vrot.lane.b32.xlu0 %v3695, 57
        %v4943 = vpop.permute.xlu0 %4942
        %4944 = vrot.lane.b32.xlu0 %v3696, 57
        %v4945 = vpop.permute.xlu0 %4944
        %4946 = vrot.lane.b32.xlu0 %v3697, 57
        %v4947 = vpop.permute.xlu0 %4946
        %4948 = vrot.lane.b32.xlu0 %v3698, 57
        %v4949 = vpop.permute.xlu0 %4948
        %4950 = vrot.lane.b32.xlu0 %v3699, 57
        %v4951 = vpop.permute.xlu0 %4950
        %4952 = vrot.lane.b32.xlu0 %v3700, 57
        %v4953 = vpop.permute.xlu0 %4952
        %4954 = vrot.lane.b32.xlu0 %v3701, 57
        %v4955 = vpop.permute.xlu0 %4954
        %4956 = vrot.lane.b32.xlu0 %v3702, 57
        %v4957 = vpop.permute.xlu0 %4956
        %vm4958 = vcmp.lt.s32.totalorder %v730, 57
        %v4959 = vsel %vm4958, %v4955, %v4957
        %v4960 = vsel %vm4958, %v4953, %v4955
        %v4961 = vsel %vm4958, %v4951, %v4953
        %v4962 = vsel %vm4958, %v4949, %v4951
        %v4963 = vsel %vm4958, %v4947, %v4949
        %v4964 = vsel %vm4958, %v4945, %v4947
        %v4965 = vsel %vm4958, %v4943, %v4945
        %v4966 = vsel %vm4958, %v4941, %v4943
        %v4967 = vsel %vm4958, %v4939, %v4941
        %v4968 = vsel %vm4958, %v4937, %v4939
        %v4969 = vsel %vm4958, %v4957, %v4937
        %v4981 = vrot.slane %v4968, 4
        %v4982 = vrot.slane %v4967, 4
        %v4983 = vrot.slane %v4966, 4
        %v4984 = vrot.slane %v4965, 4
        %v4985 = vrot.slane %v4964, 4
        %v4986 = vrot.slane %v4963, 4
        %v4987 = vrot.slane %v4962, 4
        %v4988 = vrot.slane %v4961, 4
        %v4989 = vrot.slane %v4960, 4
        %v4990 = vrot.slane %v4959, 4
        %v4991 = vrot.slane %v4969, 4
        %5003 = vst [vmem:[#allocation4 + $0x370] sm:$0xf0] %v4981
        %5004 = vst [vmem:[#allocation4 + $0x378] sm:$0xf0] %v4982
        %5005 = vst [vmem:[#allocation4 + $0x380] sm:$0xf0] %v4983
        %5006 = vst [vmem:[#allocation4 + $0x388] sm:$0xf0] %v4984
        %5007 = vst [vmem:[#allocation4 + $0x390] sm:$0xf0] %v4985
        %5008 = vst [vmem:[#allocation4 + $0x398] sm:$0xf0] %v4986
        %5009 = vst [vmem:[#allocation4 + $0x3a0] sm:$0xf0] %v4987
        %5010 = vst [vmem:[#allocation4 + $0x3a8] sm:$0xf0] %v4988
        %5011 = vst [vmem:[#allocation4 + $0x3b0] sm:$0xf0] %v4989
        %5012 = vst [vmem:[#allocation4 + $0x3b8] sm:$0xf0] %v4990
        %5013 = vst [vmem:[#allocation4 + $0x3c0] sm:$0xf0] %v4991
        %5014 = vrot.lane.b32.xlu0 %v3692, 56
        %v5015 = vpop.permute.xlu0 %5014
        %5016 = vrot.lane.b32.xlu0 %v3693, 56
        %v5017 = vpop.permute.xlu0 %5016
        %5018 = vrot.lane.b32.xlu0 %v3694, 56
        %v5019 = vpop.permute.xlu0 %5018
        %5020 = vrot.lane.b32.xlu0 %v3695, 56
        %v5021 = vpop.permute.xlu0 %5020
        %5022 = vrot.lane.b32.xlu0 %v3696, 56
        %v5023 = vpop.permute.xlu0 %5022
        %5024 = vrot.lane.b32.xlu0 %v3697, 56
        %v5025 = vpop.permute.xlu0 %5024
        %5026 = vrot.lane.b32.xlu0 %v3698, 56
        %v5027 = vpop.permute.xlu0 %5026
        %5028 = vrot.lane.b32.xlu0 %v3699, 56
        %v5029 = vpop.permute.xlu0 %5028
        %5030 = vrot.lane.b32.xlu0 %v3700, 56
        %v5031 = vpop.permute.xlu0 %5030
        %5032 = vrot.lane.b32.xlu0 %v3701, 56
        %v5033 = vpop.permute.xlu0 %5032
        %5034 = vrot.lane.b32.xlu0 %v3702, 56
        %v5035 = vpop.permute.xlu0 %5034
        %vm5036 = vcmp.lt.s32.totalorder %v730, 56
        %v5037 = vsel %vm5036, %v5033, %v5035
        %v5038 = vsel %vm5036, %v5031, %v5033
        %v5039 = vsel %vm5036, %v5029, %v5031
        %v5040 = vsel %vm5036, %v5027, %v5029
        %v5041 = vsel %vm5036, %v5025, %v5027
        %v5042 = vsel %vm5036, %v5023, %v5025
        %v5043 = vsel %vm5036, %v5021, %v5023
        %v5044 = vsel %vm5036, %v5019, %v5021
        %v5045 = vsel %vm5036, %v5017, %v5019
        %v5046 = vsel %vm5036, %v5015, %v5017
        %v5047 = vsel %vm5036, %v5035, %v5015
        %5048 = vst [vmem:[#allocation4 + $0x3c8] sm:$0xf] %v5046
        %5049 = vst [vmem:[#allocation4 + $0x3d0] sm:$0xf] %v5045
        %5050 = vst [vmem:[#allocation4 + $0x3d8] sm:$0xf] %v5044
        %5051 = vst [vmem:[#allocation4 + $0x3e0] sm:$0xf] %v5043
        %5052 = vst [vmem:[#allocation4 + $0x3e8] sm:$0xf] %v5042
        %5053 = vst [vmem:[#allocation4 + $0x3f0] sm:$0xf] %v5041
        %5054 = vst [vmem:[#allocation4 + $0x3f8] sm:$0xf] %v5040
        %5055 = vst [vmem:[#allocation4 + $0x400] sm:$0xf] %v5039
        %5056 = vst [vmem:[#allocation4 + $0x408] sm:$0xf] %v5038
        %5057 = vst [vmem:[#allocation4 + $0x410] sm:$0xf] %v5037
        %5058 = vst [vmem:[#allocation4 + $0x418] sm:$0xf] %v5047
        %5059 = vrot.lane.b32.xlu0 %v3692, 55
        %v5060 = vpop.permute.xlu0 %5059
        %5061 = vrot.lane.b32.xlu0 %v3693, 55
        %v5062 = vpop.permute.xlu0 %5061
        %5063 = vrot.lane.b32.xlu0 %v3694, 55
        %v5064 = vpop.permute.xlu0 %5063
        %5065 = vrot.lane.b32.xlu0 %v3695, 55
        %v5066 = vpop.permute.xlu0 %5065
        %5067 = vrot.lane.b32.xlu0 %v3696, 55
        %v5068 = vpop.permute.xlu0 %5067
        %5069 = vrot.lane.b32.xlu0 %v3697, 55
        %v5070 = vpop.permute.xlu0 %5069
        %5071 = vrot.lane.b32.xlu0 %v3698, 55
        %v5072 = vpop.permute.xlu0 %5071
        %5073 = vrot.lane.b32.xlu0 %v3699, 55
        %v5074 = vpop.permute.xlu0 %5073
        %5075 = vrot.lane.b32.xlu0 %v3700, 55
        %v5076 = vpop.permute.xlu0 %5075
        %5077 = vrot.lane.b32.xlu0 %v3701, 55
        %v5078 = vpop.permute.xlu0 %5077
        %5079 = vrot.lane.b32.xlu0 %v3702, 55
        %v5080 = vpop.permute.xlu0 %5079
        %vm5081 = vcmp.lt.s32.totalorder %v730, 55
        %v5082 = vsel %vm5081, %v5078, %v5080
        %v5083 = vsel %vm5081, %v5076, %v5078
        %v5084 = vsel %vm5081, %v5074, %v5076
        %v5085 = vsel %vm5081, %v5072, %v5074
        %v5086 = vsel %vm5081, %v5070, %v5072
        %v5087 = vsel %vm5081, %v5068, %v5070
        %v5088 = vsel %vm5081, %v5066, %v5068
        %v5089 = vsel %vm5081, %v5064, %v5066
        %v5090 = vsel %vm5081, %v5062, %v5064
        %v5091 = vsel %vm5081, %v5060, %v5062
        %v5092 = vsel %vm5081, %v5080, %v5060
        %v5104 = vrot.slane %v5091, 4
        %v5105 = vrot.slane %v5090, 4
        %v5106 = vrot.slane %v5089, 4
        %v5107 = vrot.slane %v5088, 4
        %v5108 = vrot.slane %v5087, 4
        %v5109 = vrot.slane %v5086, 4
        %v5110 = vrot.slane %v5085, 4
        %v5111 = vrot.slane %v5084, 4
        %v5112 = vrot.slane %v5083, 4
        %v5113 = vrot.slane %v5082, 4
        %v5114 = vrot.slane %v5092, 4
        %5126 = vst [vmem:[#allocation4 + $0x3c8] sm:$0xf0] %v5104
        %5127 = vst [vmem:[#allocation4 + $0x3d0] sm:$0xf0] %v5105
        %5128 = vst [vmem:[#allocation4 + $0x3d8] sm:$0xf0] %v5106
        %5129 = vst [vmem:[#allocation4 + $0x3e0] sm:$0xf0] %v5107
        %5130 = vst [vmem:[#allocation4 + $0x3e8] sm:$0xf0] %v5108
        %5131 = vst [vmem:[#allocation4 + $0x3f0] sm:$0xf0] %v5109
        %5132 = vst [vmem:[#allocation4 + $0x3f8] sm:$0xf0] %v5110
        %5133 = vst [vmem:[#allocation4 + $0x400] sm:$0xf0] %v5111
        %5134 = vst [vmem:[#allocation4 + $0x408] sm:$0xf0] %v5112
        %5135 = vst [vmem:[#allocation4 + $0x410] sm:$0xf0] %v5113
        %5136 = vst [vmem:[#allocation4 + $0x418] sm:$0xf0] %v5114
        %5137 = vrot.lane.b32.xlu0 %v3692, 54
        %v5138 = vpop.permute.xlu0 %5137
        %5139 = vrot.lane.b32.xlu0 %v3693, 54
        %v5140 = vpop.permute.xlu0 %5139
        %5141 = vrot.lane.b32.xlu0 %v3694, 54
        %v5142 = vpop.permute.xlu0 %5141
        %5143 = vrot.lane.b32.xlu0 %v3695, 54
        %v5144 = vpop.permute.xlu0 %5143
        %5145 = vrot.lane.b32.xlu0 %v3696, 54
        %v5146 = vpop.permute.xlu0 %5145
        %5147 = vrot.lane.b32.xlu0 %v3697, 54
        %v5148 = vpop.permute.xlu0 %5147
        %5149 = vrot.lane.b32.xlu0 %v3698, 54
        %v5150 = vpop.permute.xlu0 %5149
        %5151 = vrot.lane.b32.xlu0 %v3699, 54
        %v5152 = vpop.permute.xlu0 %5151
        %5153 = vrot.lane.b32.xlu0 %v3700, 54
        %v5154 = vpop.permute.xlu0 %5153
        %5155 = vrot.lane.b32.xlu0 %v3701, 54
        %v5156 = vpop.permute.xlu0 %5155
        %5157 = vrot.lane.b32.xlu0 %v3702, 54
        %v5158 = vpop.permute.xlu0 %5157
        %vm5159 = vcmp.lt.s32.totalorder %v730, 54
        %v5160 = vsel %vm5159, %v5156, %v5158
        %v5161 = vsel %vm5159, %v5154, %v5156
        %v5162 = vsel %vm5159, %v5152, %v5154
        %v5163 = vsel %vm5159, %v5150, %v5152
        %v5164 = vsel %vm5159, %v5148, %v5150
        %v5165 = vsel %vm5159, %v5146, %v5148
        %v5166 = vsel %vm5159, %v5144, %v5146
        %v5167 = vsel %vm5159, %v5142, %v5144
        %v5168 = vsel %vm5159, %v5140, %v5142
        %v5169 = vsel %vm5159, %v5138, %v5140
        %v5170 = vsel %vm5159, %v5158, %v5138
        %5171 = vst [vmem:[#allocation4 + $0x420] sm:$0xf] %v5169
        %5172 = vst [vmem:[#allocation4 + $0x428] sm:$0xf] %v5168
        %5173 = vst [vmem:[#allocation4 + $0x430] sm:$0xf] %v5167
        %5174 = vst [vmem:[#allocation4 + $0x438] sm:$0xf] %v5166
        %5175 = vst [vmem:[#allocation4 + $0x440] sm:$0xf] %v5165
        %5176 = vst [vmem:[#allocation4 + $0x448] sm:$0xf] %v5164
        %5177 = vst [vmem:[#allocation4 + $0x450] sm:$0xf] %v5163
        %5178 = vst [vmem:[#allocation4 + $0x458] sm:$0xf] %v5162
        %5179 = vst [vmem:[#allocation4 + $0x460] sm:$0xf] %v5161
        %5180 = vst [vmem:[#allocation4 + $0x468] sm:$0xf] %v5160
        %5181 = vst [vmem:[#allocation4 + $0x470] sm:$0xf] %v5170
        %v5182 = vld [vmem:[%s14] sm:$0x7]
        %v5183 = vld [vmem:[#allocation4] sm:$0xff]
        %v5184 = vld [vmem:[#allocation4 + $0x8] sm:$0xff]
        %v5185 = vld [vmem:[#allocation4 + $0x10] sm:$0xff]
        %v5186 = vld [vmem:[#allocation4 + $0x18] sm:$0xff]
        %v5187 = vld [vmem:[#allocation4 + $0x20] sm:$0xff]
        %v5188 = vld [vmem:[#allocation4 + $0x28] sm:$0xff]
        %v5189 = vld [vmem:[#allocation4 + $0x30] sm:$0xff]
        %v5190 = vld [vmem:[#allocation4 + $0x38] sm:$0xff]
        %v5191 = vld [vmem:[#allocation4 + $0x40] sm:$0xff]
        %v5192 = vld [vmem:[#allocation4 + $0x48] sm:$0xff]
        %v5193 = vld [vmem:[#allocation4 + $0x58] sm:$0xff]
        %v5194 = vld [vmem:[#allocation4 + $0x60] sm:$0xff]
        %v5195 = vld [vmem:[#allocation4 + $0x68] sm:$0xff]
        %v5196 = vld [vmem:[#allocation4 + $0x70] sm:$0xff]
        %v5197 = vld [vmem:[#allocation4 + $0x78] sm:$0xff]
        %v5198 = vld [vmem:[#allocation4 + $0x80] sm:$0xff]
        %v5199 = vld [vmem:[#allocation4 + $0x88] sm:$0xff]
        %v5200 = vld [vmem:[#allocation4 + $0x90] sm:$0xff]
        %v5201 = vld [vmem:[#allocation4 + $0x98] sm:$0xff]
        %v5202 = vld [vmem:[#allocation4 + $0xa0] sm:$0xff]
        %v5203 = vld [vmem:[#allocation4 + $0xb0] sm:$0xff]
        %v5204 = vld [vmem:[#allocation4 + $0xb8] sm:$0xff]
        %v5205 = vld [vmem:[#allocation4 + $0xc0] sm:$0xff]
        %v5206 = vld [vmem:[#allocation4 + $0xc8] sm:$0xff]
        %v5207 = vld [vmem:[#allocation4 + $0xd0] sm:$0xff]
        %v5208 = vld [vmem:[#allocation4 + $0xd8] sm:$0xff]
        %v5209 = vld [vmem:[#allocation4 + $0xe0] sm:$0xff]
        %v5210 = vld [vmem:[#allocation4 + $0xe8] sm:$0xff]
        %v5211 = vld [vmem:[#allocation4 + $0xf0] sm:$0xff]
        %v5212 = vld [vmem:[#allocation4 + $0xf8] sm:$0xff]
        %v5213 = vld [vmem:[#allocation4 + $0x108] sm:$0xff]
        %v5214 = vld [vmem:[#allocation4 + $0x110] sm:$0xff]
        %v5215 = vld [vmem:[#allocation4 + $0x118] sm:$0xff]
        %v5216 = vld [vmem:[#allocation4 + $0x120] sm:$0xff]
        %v5217 = vld [vmem:[#allocation4 + $0x128] sm:$0xff]
        %v5218 = vld [vmem:[#allocation4 + $0x130] sm:$0xff]
        %v5219 = vld [vmem:[#allocation4 + $0x138] sm:$0xff]
        %v5220 = vld [vmem:[#allocation4 + $0x140] sm:$0xff]
        %v5221 = vld [vmem:[#allocation4 + $0x148] sm:$0xff]
        %v5222 = vld [vmem:[#allocation4 + $0x150] sm:$0xff]
        %v5223 = vld [vmem:[#allocation4 + $0x160] sm:$0xff]
        %v5224 = vld [vmem:[#allocation4 + $0x168] sm:$0xff]
        %v5225 = vld [vmem:[#allocation4 + $0x170] sm:$0xff]
        %v5226 = vld [vmem:[#allocation4 + $0x178] sm:$0xff]
        %v5227 = vld [vmem:[#allocation4 + $0x180] sm:$0xff]
        %v5228 = vld [vmem:[#allocation4 + $0x188] sm:$0xff]
        %v5229 = vld [vmem:[#allocation4 + $0x190] sm:$0xff]
        %v5230 = vld [vmem:[#allocation4 + $0x198] sm:$0xff]
        %v5231 = vld [vmem:[#allocation4 + $0x1a0] sm:$0xff]
        %v5232 = vld [vmem:[#allocation4 + $0x1a8] sm:$0xff]
        %v5233 = vld [vmem:[#allocation4 + $0x1b8] sm:$0xff]
        %v5234 = vld [vmem:[#allocation4 + $0x1c0] sm:$0xff]
        %v5235 = vld [vmem:[#allocation4 + $0x1c8] sm:$0xff]
        %v5236 = vld [vmem:[#allocation4 + $0x1d0] sm:$0xff]
        %v5237 = vld [vmem:[#allocation4 + $0x1d8] sm:$0xff]
        %v5238 = vld [vmem:[#allocation4 + $0x1e0] sm:$0xff]
        %v5239 = vld [vmem:[#allocation4 + $0x1e8] sm:$0xff]
        %v5240 = vld [vmem:[#allocation4 + $0x1f0] sm:$0xff]
        %v5241 = vld [vmem:[#allocation4 + $0x1f8] sm:$0xff]
        %v5242 = vld [vmem:[#allocation4 + $0x200] sm:$0xff]
        %v5243 = vld [vmem:[#allocation4 + $0x210] sm:$0xff]
        %v5244 = vld [vmem:[#allocation4 + $0x218] sm:$0xff]
        %v5245 = vld [vmem:[#allocation4 + $0x220] sm:$0xff]
        %v5246 = vld [vmem:[#allocation4 + $0x228] sm:$0xff]
        %v5247 = vld [vmem:[#allocation4 + $0x230] sm:$0xff]
        %v5248 = vld [vmem:[#allocation4 + $0x238] sm:$0xff]
        %v5249 = vld [vmem:[#allocation4 + $0x240] sm:$0xff]
        %v5250 = vld [vmem:[#allocation4 + $0x248] sm:$0xff]
        %v5251 = vld [vmem:[#allocation4 + $0x250] sm:$0xff]
        %v5252 = vld [vmem:[#allocation4 + $0x258] sm:$0xff]
        %v5253 = vld [vmem:[#allocation4 + $0x268] sm:$0xff]
        %v5254 = vld [vmem:[#allocation4 + $0x270] sm:$0xff]
        %v5255 = vld [vmem:[#allocation4 + $0x278] sm:$0xff]
        %v5256 = vld [vmem:[#allocation4 + $0x280] sm:$0xff]
        %v5257 = vld [vmem:[#allocation4 + $0x288] sm:$0xff]
        %v5258 = vld [vmem:[#allocation4 + $0x290] sm:$0xff]
        %v5259 = vld [vmem:[#allocation4 + $0x298] sm:$0xff]
        %v5260 = vld [vmem:[#allocation4 + $0x2a0] sm:$0xff]
        %v5261 = vld [vmem:[#allocation4 + $0x2a8] sm:$0xff]
        %v5262 = vld [vmem:[#allocation4 + $0x2b0] sm:$0xff]
        %v5263 = vld [vmem:[#allocation4 + $0x2c0] sm:$0xff]
        %v5264 = vld [vmem:[#allocation4 + $0x2c8] sm:$0xff]
        %v5265 = vld [vmem:[#allocation4 + $0x2d0] sm:$0xff]
        %v5266 = vld [vmem:[#allocation4 + $0x2d8] sm:$0xff]
        %v5267 = vld [vmem:[#allocation4 + $0x2e0] sm:$0xff]
        %v5268 = vld [vmem:[#allocation4 + $0x2e8] sm:$0xff]
        %v5269 = vld [vmem:[#allocation4 + $0x2f0] sm:$0xff]
        %v5270 = vld [vmem:[#allocation4 + $0x2f8] sm:$0xff]
        %v5271 = vld [vmem:[#allocation4 + $0x300] sm:$0xff]
        %v5272 = vld [vmem:[#allocation4 + $0x308] sm:$0xff]
        %v5273 = vld [vmem:[#allocation4 + $0x318] sm:$0xff]
        %v5274 = vld [vmem:[#allocation4 + $0x320] sm:$0xff]
        %v5275 = vld [vmem:[#allocation4 + $0x328] sm:$0xff]
        %v5276 = vld [vmem:[#allocation4 + $0x330] sm:$0xff]
        %v5277 = vld [vmem:[#allocation4 + $0x338] sm:$0xff]
        %v5278 = vld [vmem:[#allocation4 + $0x340] sm:$0xff]
        %v5279 = vld [vmem:[#allocation4 + $0x348] sm:$0xff]
        %v5280 = vld [vmem:[#allocation4 + $0x350] sm:$0xff]
        %v5281 = vld [vmem:[#allocation4 + $0x358] sm:$0xff]
        %v5282 = vld [vmem:[#allocation4 + $0x360] sm:$0xff]
        %v5283 = vld [vmem:[#allocation4 + $0x370] sm:$0xff]
        %v5284 = vld [vmem:[#allocation4 + $0x378] sm:$0xff]
        %v5285 = vld [vmem:[#allocation4 + $0x380] sm:$0xff]
        %v5286 = vld [vmem:[#allocation4 + $0x388] sm:$0xff]
        %v5287 = vld [vmem:[#allocation4 + $0x390] sm:$0xff]
        %v5288 = vld [vmem:[#allocation4 + $0x398] sm:$0xff]
        %v5289 = vld [vmem:[#allocation4 + $0x3a0] sm:$0xff]
        %v5290 = vld [vmem:[#allocation4 + $0x3a8] sm:$0xff]
        %v5291 = vld [vmem:[#allocation4 + $0x3b0] sm:$0xff]
        %v5292 = vld [vmem:[#allocation4 + $0x3b8] sm:$0xff]
        %v5293 = vld [vmem:[#allocation4 + $0x3c8] sm:$0xff]
        %v5294 = vld [vmem:[#allocation4 + $0x3d0] sm:$0xff]
        %v5295 = vld [vmem:[#allocation4 + $0x3d8] sm:$0xff]
        %v5296 = vld [vmem:[#allocation4 + $0x3e0] sm:$0xff]
        %v5297 = vld [vmem:[#allocation4 + $0x3e8] sm:$0xff]
        %v5298 = vld [vmem:[#allocation4 + $0x3f0] sm:$0xff]
        %v5299 = vld [vmem:[#allocation4 + $0x3f8] sm:$0xff]
        %v5300 = vld [vmem:[#allocation4 + $0x400] sm:$0xff]
        %v5301 = vld [vmem:[#allocation4 + $0x408] sm:$0xff]
        %v5302 = vld [vmem:[#allocation4 + $0x410] sm:$0xff]
        %v5303 = vld [vmem:[#allocation4 + $0x420] sm:$0xf]
        %v5304 = vld [vmem:[#allocation4 + $0x428] sm:$0xf]
        %v5305 = vld [vmem:[#allocation4 + $0x430] sm:$0xf]
        %v5306 = vld [vmem:[#allocation4 + $0x438] sm:$0xf]
        %v5307 = vld [vmem:[#allocation4 + $0x440] sm:$0xf]
        %v5308 = vld [vmem:[#allocation4 + $0x448] sm:$0xf]
        %v5309 = vld [vmem:[#allocation4 + $0x450] sm:$0xf]
        %v5310 = vld [vmem:[#allocation4 + $0x458] sm:$0xf]
        %v5311 = vld [vmem:[#allocation4 + $0x460] sm:$0xf]
        %v5312 = vld [vmem:[#allocation4 + $0x468] sm:$0xf]
        %v5313 = vld [vmem:[%s15] sm:$0x7]
        %5315 = vset.pattern.permute.xlu0 0
        %5316 = vperm.xlu0 %5315, %v5313
        %v5317 = vpop.permute.xlu0 %5316
        %vm5319 = vcmask 818176
        %v5321 = vsel %vm5319, %v5182, 0
        %v5324 = vsel %vm3442, %v5303, 0
        %v5327 = vsel %vm3442, %v5304, 0
        %v5330 = vsel %vm3442, %v5305, 0
        %v5333 = vsel %vm3442, %v5306, 0
        %v5336 = vsel %vm3442, %v5307, 0
        %v5339 = vsel %vm3442, %v5308, 0
        %v5342 = vsel %vm3442, %v5309, 0
        %v5345 = vsel %vm3442, %v5310, 0
        %v5348 = vsel %vm3442, %v5311, 0
        %v5351 = vsel %vm3442, %v5312, 0
        %5353 = vmatpush.msra.mxu0 0.0
        %5354 = vmatpush.msra.mxu0 0.0
        %5355 = vmatpush.msra.mxu0 0.0
        %5356 = vmatpush.msra.mxu0 %v5324
        %5357 = vmatpush.msra.mxu0 %v5293
        %5358 = vmatpush.msra.mxu0 %v5283
        %5359 = vmatpush.msra.mxu0 %v5273
        %5360 = vmatpush.msra.mxu0 %v5263
        %5361 = vmatpush.msra.mxu0 %v5253
        %5362 = vmatpush.msra.mxu0 %v5243
        %5363 = vmatpush.msra.mxu0 %v5233
        %5364 = vmatpush.msra.mxu0 %v5223
        %5365 = vmatpush.msra.mxu0 %v5213
        %5366 = vmatpush.msra.mxu0 %v5203
        %5367 = vmatpush.msra.mxu0 %v5193
        %5368 = vmatpush.msra.mxu0 %v5183
        %5369 = vmatmul.f32.gmra.mxu0 %v5321
        %v5370 = vpop.f32.mrf.mxu0
        %v5371 = vadd.f32 %v5317, %v5370
        %5372 = vdwg.mxu0
        %5373 = vmatpush.msra.mxu0 0.0
        %5374 = vmatpush.msra.mxu0 0.0
        %5375 = vmatpush.msra.mxu0 0.0
        %5376 = vmatpush.msra.mxu0 %v5327
        %5377 = vmatpush.msra.mxu0 %v5294
        %5378 = vmatpush.msra.mxu0 %v5284
        %5379 = vmatpush.msra.mxu0 %v5274
        %5380 = vmatpush.msra.mxu0 %v5264
        %5381 = vmatpush.msra.mxu0 %v5254
        %5382 = vmatpush.msra.mxu0 %v5244
        %5383 = vmatpush.msra.mxu0 %v5234
        %5384 = vmatpush.msra.mxu0 %v5224
        %5385 = vmatpush.msra.mxu0 %v5214
        %5386 = vmatpush.msra.mxu0 %v5204
        %5387 = vmatpush.msra.mxu0 %v5194
        %5388 = vmatpush.msra.mxu0 %v5184
        %5389 = vmatmul.f32.gmra.mxu0 %v5321
        %v5390 = vpop.f32.mrf.mxu0
        %v5391 = vadd.f32 %v5317, %v5390
        %5392 = vdwg.mxu0
        %5393 = vmatpush.msra.mxu0 0.0
        %5394 = vmatpush.msra.mxu0 0.0
        %5395 = vmatpush.msra.mxu0 0.0
        %5396 = vmatpush.msra.mxu0 %v5330
        %5397 = vmatpush.msra.mxu0 %v5295
        %5398 = vmatpush.msra.mxu0 %v5285
        %5399 = vmatpush.msra.mxu0 %v5275
        %5400 = vmatpush.msra.mxu0 %v5265
        %5401 = vmatpush.msra.mxu0 %v5255
        %5402 = vmatpush.msra.mxu0 %v5245
        %5403 = vmatpush.msra.mxu0 %v5235
        %5404 = vmatpush.msra.mxu0 %v5225
        %5405 = vmatpush.msra.mxu0 %v5215
        %5406 = vmatpush.msra.mxu0 %v5205
        %5407 = vmatpush.msra.mxu0 %v5195
        %5408 = vmatpush.msra.mxu0 %v5185
        %5409 = vmatmul.f32.gmra.mxu0 %v5321
        %v5410 = vpop.f32.mrf.mxu0
        %v5411 = vadd.f32 %v5317, %v5410
        %5412 = vdwg.mxu0
        %5413 = vmatpush.msra.mxu0 0.0
        %5414 = vmatpush.msra.mxu0 0.0
        %5415 = vmatpush.msra.mxu0 0.0
        %5416 = vmatpush.msra.mxu0 %v5333
        %5417 = vmatpush.msra.mxu0 %v5296
        %5418 = vmatpush.msra.mxu0 %v5286
        %5419 = vmatpush.msra.mxu0 %v5276
        %5420 = vmatpush.msra.mxu0 %v5266
        %5421 = vmatpush.msra.mxu0 %v5256
        %5422 = vmatpush.msra.mxu0 %v5246
        %5423 = vmatpush.msra.mxu0 %v5236
        %5424 = vmatpush.msra.mxu0 %v5226
        %5425 = vmatpush.msra.mxu0 %v5216
        %5426 = vmatpush.msra.mxu0 %v5206
        %5427 = vmatpush.msra.mxu0 %v5196
        %5428 = vmatpush.msra.mxu0 %v5186
        %5429 = vmatmul.f32.gmra.mxu0 %v5321
        %v5430 = vpop.f32.mrf.mxu0
        %v5431 = vadd.f32 %v5317, %v5430
        %5432 = vdwg.mxu0
        %5433 = vmatpush.msra.mxu0 0.0
        %5434 = vmatpush.msra.mxu0 0.0
        %5435 = vmatpush.msra.mxu0 0.0
        %5436 = vmatpush.msra.mxu0 %v5336
        %5437 = vmatpush.msra.mxu0 %v5297
        %5438 = vmatpush.msra.mxu0 %v5287
        %5439 = vmatpush.msra.mxu0 %v5277
        %5440 = vmatpush.msra.mxu0 %v5267
        %5441 = vmatpush.msra.mxu0 %v5257
        %5442 = vmatpush.msra.mxu0 %v5247
        %5443 = vmatpush.msra.mxu0 %v5237
        %5444 = vmatpush.msra.mxu0 %v5227
        %5445 = vmatpush.msra.mxu0 %v5217
        %5446 = vmatpush.msra.mxu0 %v5207
        %5447 = vmatpush.msra.mxu0 %v5197
        %5448 = vmatpush.msra.mxu0 %v5187
        %5449 = vmatmul.f32.gmra.mxu0 %v5321
        %v5450 = vpop.f32.mrf.mxu0
        %v5451 = vadd.f32 %v5317, %v5450
        %5452 = vdwg.mxu0
        %5453 = vmatpush.msra.mxu0 0.0
        %5454 = vmatpush.msra.mxu0 0.0
        %5455 = vmatpush.msra.mxu0 0.0
        %5456 = vmatpush.msra.mxu0 %v5339
        %5457 = vmatpush.msra.mxu0 %v5298
        %5458 = vmatpush.msra.mxu0 %v5288
        %5459 = vmatpush.msra.mxu0 %v5278
        %5460 = vmatpush.msra.mxu0 %v5268
        %5461 = vmatpush.msra.mxu0 %v5258
        %5462 = vmatpush.msra.mxu0 %v5248
        %5463 = vmatpush.msra.mxu0 %v5238
        %5464 = vmatpush.msra.mxu0 %v5228
        %5465 = vmatpush.msra.mxu0 %v5218
        %5466 = vmatpush.msra.mxu0 %v5208
        %5467 = vmatpush.msra.mxu0 %v5198
        %5468 = vmatpush.msra.mxu0 %v5188
        %5469 = vmatmul.f32.gmra.mxu0 %v5321
        %v5470 = vpop.f32.mrf.mxu0
        %v5471 = vadd.f32 %v5317, %v5470
        %5472 = vdwg.mxu0
        %5473 = vmatpush.msra.mxu0 0.0
        %5474 = vmatpush.msra.mxu0 0.0
        %5475 = vmatpush.msra.mxu0 0.0
        %5476 = vmatpush.msra.mxu0 %v5342
        %5477 = vmatpush.msra.mxu0 %v5299
        %5478 = vmatpush.msra.mxu0 %v5289
        %5479 = vmatpush.msra.mxu0 %v5279
        %5480 = vmatpush.msra.mxu0 %v5269
        %5481 = vmatpush.msra.mxu0 %v5259
        %5482 = vmatpush.msra.mxu0 %v5249
        %5483 = vmatpush.msra.mxu0 %v5239
        %5484 = vmatpush.msra.mxu0 %v5229
        %5485 = vmatpush.msra.mxu0 %v5219
        %5486 = vmatpush.msra.mxu0 %v5209
        %5487 = vmatpush.msra.mxu0 %v5199
        %5488 = vmatpush.msra.mxu0 %v5189
        %5489 = vmatmul.f32.gmra.mxu0 %v5321
        %v5490 = vpop.f32.mrf.mxu0
        %v5491 = vadd.f32 %v5317, %v5490
        %5492 = vdwg.mxu0
        %5493 = vmatpush.msra.mxu0 0.0
        %5494 = vmatpush.msra.mxu0 0.0
        %5495 = vmatpush.msra.mxu0 0.0
        %5496 = vmatpush.msra.mxu0 %v5345
        %5497 = vmatpush.msra.mxu0 %v5300
        %5498 = vmatpush.msra.mxu0 %v5290
        %5499 = vmatpush.msra.mxu0 %v5280
        %5500 = vmatpush.msra.mxu0 %v5270
        %5501 = vmatpush.msra.mxu0 %v5260
        %5502 = vmatpush.msra.mxu0 %v5250
        %5503 = vmatpush.msra.mxu0 %v5240
        %5504 = vmatpush.msra.mxu0 %v5230
        %5505 = vmatpush.msra.mxu0 %v5220
        %5506 = vmatpush.msra.mxu0 %v5210
        %5507 = vmatpush.msra.mxu0 %v5200
        %5508 = vmatpush.msra.mxu0 %v5190
        %5509 = vmatmul.f32.gmra.mxu0 %v5321
        %v5510 = vpop.f32.mrf.mxu0
        %v5511 = vadd.f32 %v5317, %v5510
        %5512 = vdwg.mxu0
        %5513 = vmatpush.msra.mxu0 0.0
        %5514 = vmatpush.msra.mxu0 0.0
        %5515 = vmatpush.msra.mxu0 0.0
        %5516 = vmatpush.msra.mxu0 %v5348
        %5517 = vmatpush.msra.mxu0 %v5301
        %5518 = vmatpush.msra.mxu0 %v5291
        %5519 = vmatpush.msra.mxu0 %v5281
        %5520 = vmatpush.msra.mxu0 %v5271
        %5521 = vmatpush.msra.mxu0 %v5261
        %5522 = vmatpush.msra.mxu0 %v5251
        %5523 = vmatpush.msra.mxu0 %v5241
        %5524 = vmatpush.msra.mxu0 %v5231
        %5525 = vmatpush.msra.mxu0 %v5221
        %5526 = vmatpush.msra.mxu0 %v5211
        %5527 = vmatpush.msra.mxu0 %v5201
        %5528 = vmatpush.msra.mxu0 %v5191
        %5529 = vmatmul.f32.gmra.mxu0 %v5321
        %v5530 = vpop.f32.mrf.mxu0
        %v5531 = vadd.f32 %v5317, %v5530
        %5532 = vdwg.mxu0
        %5533 = vmatpush.msra.mxu0 0.0
        %5534 = vmatpush.msra.mxu0 0.0
        %5535 = vmatpush.msra.mxu0 0.0
        %5536 = vmatpush.msra.mxu0 %v5351
        %5537 = vmatpush.msra.mxu0 %v5302
        %5538 = vmatpush.msra.mxu0 %v5292
        %5539 = vmatpush.msra.mxu0 %v5282
        %5540 = vmatpush.msra.mxu0 %v5272
        %5541 = vmatpush.msra.mxu0 %v5262
        %5542 = vmatpush.msra.mxu0 %v5252
        %5543 = vmatpush.msra.mxu0 %v5242
        %5544 = vmatpush.msra.mxu0 %v5232
        %5545 = vmatpush.msra.mxu0 %v5222
        %5546 = vmatpush.msra.mxu0 %v5212
        %5547 = vmatpush.msra.mxu0 %v5202
        %5548 = vmatpush.msra.mxu0 %v5192
        %5549 = vmatmul.f32.gmra.mxu0 %v5321
        %v5550 = vpop.f32.mrf.mxu0
        %v5551 = vadd.f32 %v5317, %v5550
        %5552 = vdwg.mxu0
        %v5553 = vtanh.pop %v5371
        %v5554 = vtanh.pop %v5391
        %v5555 = vtanh.pop %v5411
        %v5556 = vtanh.pop %v5431
        %v5557 = vtanh.pop %v5451
        %v5558 = vtanh.pop %v5471
        %v5559 = vtanh.pop %v5491
        %v5560 = vtanh.pop %v5511
        %v5561 = vtanh.pop %v5531
        %v5562 = vtanh.pop %v5551
        %5563 = vrot.lane.b32.xlu0 %v5553, 56
        %v5564 = vpop.permute.xlu0 %5563
        %5565 = vrot.lane.b32.xlu0 %v5554, 56
        %v5566 = vpop.permute.xlu0 %5565
        %5567 = vrot.lane.b32.xlu0 %v5555, 56
        %v5568 = vpop.permute.xlu0 %5567
        %5569 = vrot.lane.b32.xlu0 %v5556, 56
        %v5570 = vpop.permute.xlu0 %5569
        %5571 = vrot.lane.b32.xlu0 %v5557, 56
        %v5572 = vpop.permute.xlu0 %5571
        %5573 = vrot.lane.b32.xlu0 %v5558, 56
        %v5574 = vpop.permute.xlu0 %5573
        %5575 = vrot.lane.b32.xlu0 %v5559, 56
        %v5576 = vpop.permute.xlu0 %5575
        %5577 = vrot.lane.b32.xlu0 %v5560, 56
        %v5578 = vpop.permute.xlu0 %5577
        %5579 = vrot.lane.b32.xlu0 %v5561, 56
        %v5580 = vpop.permute.xlu0 %5579
        %5581 = vrot.lane.b32.xlu0 %v5562, 56
        %v5582 = vpop.permute.xlu0 %5581
        %v5583 = vsel %vm5036, %v5580, %v5582
        %v5584 = vsel %vm5036, %v5578, %v5580
        %v5585 = vsel %vm5036, %v5576, %v5578
        %v5586 = vsel %vm5036, %v5574, %v5576
        %v5587 = vsel %vm5036, %v5572, %v5574
        %v5588 = vsel %vm5036, %v5570, %v5572
        %v5589 = vsel %vm5036, %v5568, %v5570
        %v5590 = vsel %vm5036, %v5566, %v5568
        %v5591 = vsel %vm5036, %v5564, %v5566
        %v5600 = vrot.slane %v5590, 4
        %v5601 = vrot.slane %v5588, 4
        %v5602 = vrot.slane %v5586, 4
        %v5603 = vrot.slane %v5584, 4
        %v5604 = vsel %vm3442, %v5591, %v5600
        %v5605 = vsel %vm3442, %v5589, %v5601
        %v5606 = vsel %vm3442, %v5587, %v5602
        %v5607 = vsel %vm3442, %v5585, %v5603
        %5612 = vst [vmem:[%s598] sm:$0x77] %v5604
        %5613 = vst [vmem:[%s598 + $0x8] sm:$0x77] %v5605
        %5614 = vst [vmem:[%s598 + $0x10] sm:$0x77] %v5606
        %5615 = vst [vmem:[%s598 + $0x18] sm:$0x77] %v5607
        %5616 = vst [vmem:[%s598 + $0x20] sm:$0x7] %v5583
        %p5617 = scmp.lt.s32.totalorder %s30, 1
        %s5618 = scalar_select %p5617, %s30, 1
        %s5619 = smul.addr %s5618, 9
        %s5620 = smul.addr %s5619, 4
        %s5621 = scalar_lea.vmem %s16, %s5620
        // Predicated region
        $region105: #{cnn_decoder_forward.1} parent=83 // pred_check
          %p5622 = pneg %p389
        $region106: #{cnn_decoder_forward.1} parent=83 // pred_check_branch
          %5624 = sbr.rel (%p5622) target = $region108
        $region107: #{cnn_decoder_forward.1} parent=83 // pred_region
          _
        $region108: #{cnn_decoder_forward.1} parent=83 // pred_fallthru
          _
      $region84: #{cnn_decoder_forward.1} parent=5 // pred_fallthru
        _
      %p5625 = scmp.le.s32.totalorder 2, %s25
      // Predicated region
      $region109: #{cnn_decoder_forward.1} parent=5 // pred_check
        %p5626 = pneg %p5625
      $region110: #{cnn_decoder_forward.1} parent=5 // pred_check_branch
        %5628 = sbr.rel (%p5626) target = $region112
      $region111: #{cnn_decoder_forward.1} parent=5 // pred_region
        %s5629 = ssub.s32 %s25, 2
        // Predicated region
        $region113: #{cnn_decoder_forward.1} parent=111 // pred_check
          %p5630 = pneg %p395
        $region114: #{cnn_decoder_forward.1} parent=111 // pred_check_branch
          %5632 = sbr.rel (%p5630) target = $region116
        $region115: #{cnn_decoder_forward.1} parent=111 // pred_region
          %p5633 = scmp.lt.s32.totalorder %s31, 1
          %s5634 = scalar_select %p5633, %s31, 1
          %s5635 = smul.addr %s5634, 9
          %s5636 = smul.addr %s5635, 4
          %s5637 = scalar_lea.vmem %s16, %s5636
        $region116: #{cnn_decoder_forward.1} parent=111 // pred_fallthru
          _
      $region112: #{cnn_decoder_forward.1} parent=5 // pred_fallthru
        _
    $region6: #{cnn_decoder_forward.1} parent=1 // loop_footer
      %s29 = sadd.s32 1, %s25
    $region7: #{cnn_decoder_forward.1} parent=1 // loop_footer_branch
      %24 = sbr.rel target = $region3
    $region8: #{cnn_decoder_forward.1} parent=1 // loop_exit
      _
    %5638 = vsyncpa [#allocation6], 1
    %s5639 = scalar_lea.sflag [#allocation6], 1
    %5640 = vsyncpa %s5639, 1
    %5641 = vsyncpa [#allocation8], 1
    %5642 = vsyncpa [#allocation11], 1

</llo_original>
